<compile_context>
chip_gen: v5e
topology: v5e:2x2
jax: 0.10.0
libtpu: 0.0.40
codegen_flags: <defaults>
</compile_context>

<pallas_src>
import functools

import numpy as np
import jax
import jax.numpy as jnp
from jax.experimental import pallas as pl
from jax.experimental.pallas import tpu as pltpu

_MARGIN = 1e-5


def _round_up(x, m):
    return (x + m - 1) // m * m


def _roipoint_pool3d_kernel(params_ref, data_ref, pooled_ref, flag_ref,
                            acc_ref, cnt_ref, *,
                            num_boxes, num_points, num_chunks, chunk_pts,
                            num_sampled):
    b = pl.program_id(0)
    m = pl.program_id(1)
    c = pl.program_id(2)
    S = num_sampled
    NT = chunk_pts

    # reset the per-(b, m) accumulators at the first point-chunk
    @pl.when(c == 0)
    def _():
        acc_ref[...] = jnp.zeros_like(acc_ref)
        cnt_ref[...] = jnp.zeros_like(cnt_ref)

    # ---- 8 box scalars from SMEM: centre, half-dims (enlarged, xy incl. margin),
    # ---- cos/sin of the heading (precomputed in the wrapper) --------------------
    bm = b * num_boxes + m
    cx = params_ref[bm, 0]
    cy = params_ref[bm, 1]
    cz = params_ref[bm, 2]
    hx = params_ref[bm, 3]
    hy = params_ref[bm, 4]
    hz = params_ref[bm, 5]
    cosa = params_ref[bm, 6]
    sina = params_ref[bm, 7]

    data = data_ref[0]                       # (3+C, NT), channel-major, lane-dense
    x = data[0:1, :]                         # (1, NT)
    y = data[1:2, :]
    z = data[2:3, :]

    # ---- point-in-rotated-box test (matches roipoint_pool3d_kernel.cu) ----------
    sx = x - cx
    sy = y - cy
    local_x = sx * cosa + sy * sina
    local_y = sy * cosa - sx * sina
    in_box = ((jnp.abs(z - cz) <= hz) &
              (local_x > -hx) & (local_x < hx) &
              (local_y > -hy) & (local_y < hy))

    lane = jax.lax.broadcasted_iota(jnp.int32, (1, NT), 1)
    valid = (c * NT + lane) < num_points                 # mask padded tail lanes
    mask = jnp.where(in_box & valid, 1.0, 0.0)           # (1, NT) f32

    # ---- exclusive prefix count: Hillis-Steele scan, log2(NT) lane rolls + adds --
    incl = mask
    shift = 1
    while shift < NT:
        rolled = pltpu.roll(incl, shift, axis=1)          # rolled[i] = incl[i - shift]
        incl = incl + jnp.where(lane >= shift, rolled, 0.0)
        shift *= 2
    local_cnt = jnp.sum(mask, axis=1, keepdims=True)      # (1, 1) in-box count, this chunk
    base = cnt_ref[...]                                   # (1, 1) count of previous chunks
    gex = (incl - mask) + base                            # global exclusive rank, (1, NT)

    # ---- one in-box point per output slot (ranks >= S are dropped) ---------------
    slot = jax.lax.broadcasted_iota(jnp.int32, (S, 1), 0).astype(jnp.float32)
    onehot = jnp.where((gex == slot) & (mask > 0.5), 1.0, 0.0)        # (S, NT)

    # gather xyz+features with S on the MXU/lane axis: (3+C, NT) x (S, NT)^T
    acc_ref[...] += jax.lax.dot_general(
        data, onehot,
        dimension_numbers=(((1,), (1,)), ((), ())),
        preferred_element_type=jnp.float32,
        precision=jax.lax.Precision.HIGHEST)                          # (3+C, S)
    cnt_ref[...] = base + local_cnt

    # ---- finalize: cyclic duplication for cnt < S, write outputs -----------------
    @pl.when(c == num_chunks - 1)
    def _():
        cnt = cnt_ref[...]                                # (1, 1) total in-box count
        cnt_safe = jnp.maximum(cnt, 1.0)
        dst = jax.lax.broadcasted_iota(jnp.int32, (1, S), 1).astype(jnp.float32)
        wrapped = dst - cnt_safe * jnp.floor(dst / cnt_safe)   # j % cnt (exact in f32)
        src = jax.lax.broadcasted_iota(jnp.int32, (S, 1), 0).astype(jnp.float32)
        dup = jnp.where(src == wrapped, 1.0, 0.0)              # (S, S) duplication map
        pooled = jnp.dot(acc_ref[...], dup,
                         preferred_element_type=jnp.float32,
                         precision=jax.lax.Precision.HIGHEST)  # (3+C, S)
        pooled_ref[0, 0] = pooled.astype(pooled_ref.dtype)
        flag_ref[0, 0] = jnp.broadcast_to((cnt < 0.5).astype(jnp.int32), (1, 128))


def roipoint_pool3d(points, point_features, boxes3d, pool_extra_width=1.0,
                    num_sampled_points=512, point_chunk=512):
    B, N, _ = points.shape
    M = boxes3d.shape[1]
    C = point_features.shape[2]
    S = int(num_sampled_points)
    D = 3 + C
    f32 = jnp.float32

    points = points.astype(f32)
    point_features = point_features.astype(f32)
    boxes3d = boxes3d.astype(f32)

    # per-box scalar table for SMEM: [cx, cy, cz, hx+eps, hy+eps, hz, cos, sin]
    extra = jnp.asarray(pool_extra_width, f32)
    rz = boxes3d[..., 6]
    params = jnp.stack([
        boxes3d[..., 0], boxes3d[..., 1], boxes3d[..., 2],
        boxes3d[..., 3] * 0.5 + extra + _MARGIN,
        boxes3d[..., 4] * 0.5 + extra + _MARGIN,
        boxes3d[..., 5] * 0.5 + extra,
        jnp.cos(rz), jnp.sin(rz),
    ], axis=-1).reshape(B * M, 8)                            # (B*M, 8)

    # channel-major point data: one transpose feeds both the mask math and the
    # MXU gather ((3+C, NT) tiles, points on the 128-lane axis).
    data_t = jnp.concatenate(
        [jnp.transpose(points, (0, 2, 1)),
         jnp.transpose(point_features, (0, 2, 1))], axis=1)  # (B, 3+C, N)

    NT = min(int(point_chunk), _round_up(N, 128))
    NT = _round_up(NT, 128)
    Np = _round_up(N, NT)
    if Np != N:
        data_t = jnp.pad(data_t, ((0, 0), (0, 0), (0, Np - N)))
    nc = Np // NT

    kernel = functools.partial(
        _roipoint_pool3d_kernel, num_boxes=M, num_points=N, num_chunks=nc,
        chunk_pts=NT, num_sampled=S)

    pooled_t, flag = pl.pallas_call(
        kernel,
        grid=(B, M, nc),
        in_specs=[
            pl.BlockSpec(memory_space=pltpu.MemorySpace.SMEM),           # box scalars
            pl.BlockSpec((1, D, NT), lambda b, m, c: (b, 0, c)),         # point chunk
        ],
        out_specs=[
            pl.BlockSpec((1, 1, D, S), lambda b, m, c: (b, m, 0, 0)),    # lane-dense S
            pl.BlockSpec((1, 1, 1, 128), lambda b, m, c: (b, m, 0, 0)),  # per-(b,m) flag
        ],
        out_shape=[
            jax.ShapeDtypeStruct((B, M, D, S), f32),
            jax.ShapeDtypeStruct((B, M, 1, 128), jnp.int32),
        ],
        scratch_shapes=[
            pltpu.VMEM((D, S), f32),     # pooled accumulator
            pltpu.VMEM((1, 1), f32),     # running in-box count
        ],
        compiler_params=pltpu.CompilerParams(
            dimension_semantics=("parallel", "parallel", "arbitrary"),
            vmem_limit_bytes=32 * 1024 * 1024),
    )(params, data_t)

    pooled = jnp.transpose(pooled_t, (0, 1, 3, 2)).astype(point_features.dtype)
    return pooled, flag[:, :, 0, 0]


class RoIPointPool3d:
    """JAX/Pallas equivalent of pcdet.ops.roipoint_pool3d.RoIPointPool3d (forward only)."""

    def __init__(self, num_sampled_points=512, pool_extra_width=1.0, point_chunk=512):
        self.num_sampled_points = num_sampled_points
        self.pool_extra_width = pool_extra_width
        self.point_chunk = point_chunk

    def __call__(self, points, point_features, boxes3d):
        return roipoint_pool3d(points, point_features, boxes3d,
                               self.pool_extra_width, self.num_sampled_points,
                               self.point_chunk)


def _reference(points, feats, boxes, extra, S):
    """Pure-numpy reference mirroring the CUDA kernel semantics (f32 math)."""
    B, N, _ = points.shape
    M = boxes.shape[1]
    C = feats.shape[2]
    half = np.float32(0.5)
    extra32 = np.float32(extra)
    margin = np.float32(_MARGIN)
    pooled = np.zeros((B, M, S, 3 + C), np.float32)
    flag = np.zeros((B, M), np.int32)
    for b in range(B):
        for m in range(M):
            cx, cy, cz, dx, dy, dz, rz = boxes[b, m]
            hx = dx * half + extra32 + margin
            hy = dy * half + extra32 + margin
            hz = dz * half + extra32
            c, s = np.float32(np.cos(rz)), np.float32(np.sin(rz))
            idxs = []
            for k in range(N):
                x, y, z = points[b, k]
                if abs(z - cz) > hz:
                    continue
                lx = (x - cx) * c + (y - cy) * s
                ly = (y - cy) * c - (x - cx) * s
                if (-hx < lx < hx) and (-hy < ly < hy):
                    idxs.append(k)
                    if len(idxs) == S:
                        break
            if not idxs:
                flag[b, m] = 1
                continue
            sel = [idxs[j % len(idxs)] for j in range(S)]
            pooled[b, m, :, :3] = points[b, sel]
            pooled[b, m, :, 3:] = feats[b, sel]
    return pooled, flag


if __name__ == "__main__":
    key = jax.random.PRNGKey(0)
    B, N, C, M, S = 2, 320, 4, 3, 512
    k1, k2, k3, k4, k5 = jax.random.split(key, 5)

    points = jax.random.uniform(k1, (B, N, 3), jnp.float32, -5.0, 5.0)
    point_features = jax.random.normal(k2, (B, N, C), jnp.float32)
    centers = jax.random.uniform(k3, (B, M, 3), jnp.float32, -3.0, 3.0)
    sizes = jax.random.uniform(k4, (B, M, 3), jnp.float32, 1.0, 3.0)
    heading = jax.random.uniform(k5, (B, M, 1), jnp.float32, -3.14, 3.14)
    boxes3d = jnp.concatenate([centers, sizes, heading], axis=-1)
    # push one box far away so the empty-flag path is exercised
    boxes3d = boxes3d.at[0, 0, 0:3].set(jnp.array([50.0, 50.0, 50.0], jnp.float32))

    # point_chunk=128 -> 3 point chunks (with a masked tail), exercising the
    # chunked accumulation path.
    module = RoIPointPool3d(num_sampled_points=S, pool_extra_width=1.0, point_chunk=128)
    pooled, flag = module(points, point_features, boxes3d)
    jax.block_until_ready((pooled, flag))

    ref_pooled, ref_flag = _reference(np.asarray(points), np.asarray(point_features),
                                      np.asarray(boxes3d), 1.0, S)
    assert pooled.shape == (B, M, S, 3 + C) and pooled.dtype == jnp.float32
    assert flag.shape == (B, M) and flag.dtype == jnp.int32
    assert np.array_equal(np.asarray(flag), ref_flag)
    assert np.allclose(np.asarray(pooled), ref_pooled, atol=1e-4)
    print("KERNEL_OK")
</pallas_src>

<mosaic_0001>
module attributes {stable_mosaic.version = 11 : i64} {
  func.func @_roipoint_pool3d_kernel(%arg0: i32, %arg1: i32, %arg2: i32, %arg3: memref<6x8xf32, #tpu.memory_space<smem>>, %arg4: memref<1x7x128xf32, #tpu.memory_space<vmem>>, %arg5: memref<1x1x7x512xf32, #tpu.memory_space<vmem>>, %arg6: memref<1x1x1x128xi32, #tpu.memory_space<vmem>>, %arg7: memref<7x512xf32, #tpu.memory_space<vmem>>, %arg8: memref<1x1xf32, #tpu.memory_space<vmem>>) attributes {dimension_semantics = [#tpu.dimension_semantics<parallel>, #tpu.dimension_semantics<parallel>, #tpu.dimension_semantics<arbitrary>], iteration_bounds = array<i64: 2, 3, 3>, scalar_prefetch = 0 : i64, scratch_operands = 2 : i64, tpu.core_type = #tpu.core_type<tc>, window_params = [{transform_indices = @transform_0, window_bounds = array<i64: 6, 8>}, {transform_indices = @transform_1, window_bounds = array<i64: 1, 7, 128>}, {transform_indices = @transform_2, window_bounds = array<i64: 1, 1, 7, 512>}, {transform_indices = @transform_3, window_bounds = array<i64: 1, 1, 1, 128>}]} {
    %c0_i32 = arith.constant 0 : i32
    %0 = arith.cmpi eq, %arg2, %c0_i32 : i32
    %1 = arith.extui %0 : i1 to i32
    %c0_i32_0 = arith.constant 0 : i32
    %2 = arith.cmpi ne, %1, %c0_i32_0 : i32
    scf.if %2 {
      %cst_36 = arith.constant 0.000000e+00 : f32
      %138 = vector.broadcast %cst_36 : f32 to vector<7x512xf32>
      %c0_37 = arith.constant 0 : index
      %c0_38 = arith.constant 0 : index
      %139 = vector.load %arg7[%c0_37, %c0_38] : memref<7x512xf32, #tpu.memory_space<vmem>>, vector<7x512xf32>
      tpu.vector_store %arg7[%c0_37, %c0_38], %138 {strides = array<i32>} : memref<7x512xf32, #tpu.memory_space<vmem>>, vector<7x512xf32>,
      %cst_39 = arith.constant 0.000000e+00 : f32
      %140 = vector.broadcast %cst_39 : f32 to vector<1x1xf32>
      %c0_40 = arith.constant 0 : index
      %c0_41 = arith.constant 0 : index
      %141 = vector.load %arg8[%c0_40, %c0_41] : memref<1x1xf32, #tpu.memory_space<vmem>>, vector<1x1xf32>
      tpu.vector_store %arg8[%c0_40, %c0_41], %140 {strides = array<i32>} : memref<1x1xf32, #tpu.memory_space<vmem>>, vector<1x1xf32>,
    } else {
    }
    %c3_i32 = arith.constant 3 : i32
    %3 = arith.muli %arg0, %c3_i32 : i32
    %4 = arith.addi %3, %arg1 : i32
    %5 = arith.index_cast %4 : i32 to index
    %c0 = arith.constant 0 : index
    %6 = memref.load %arg3[%5, %c0] : memref<6x8xf32, #tpu.memory_space<smem>>
    %7 = arith.index_cast %4 : i32 to index
    %c1 = arith.constant 1 : index
    %8 = memref.load %arg3[%7, %c1] : memref<6x8xf32, #tpu.memory_space<smem>>
    %9 = arith.index_cast %4 : i32 to index
    %c2 = arith.constant 2 : index
    %10 = memref.load %arg3[%9, %c2] : memref<6x8xf32, #tpu.memory_space<smem>>
    %11 = arith.index_cast %4 : i32 to index
    %c3 = arith.constant 3 : index
    %12 = memref.load %arg3[%11, %c3] : memref<6x8xf32, #tpu.memory_space<smem>>
    %13 = arith.index_cast %4 : i32 to index
    %c4 = arith.constant 4 : index
    %14 = memref.load %arg3[%13, %c4] : memref<6x8xf32, #tpu.memory_space<smem>>
    %15 = arith.index_cast %4 : i32 to index
    %c5 = arith.constant 5 : index
    %16 = memref.load %arg3[%15, %c5] : memref<6x8xf32, #tpu.memory_space<smem>>
    %17 = arith.index_cast %4 : i32 to index
    %c6 = arith.constant 6 : index
    %18 = memref.load %arg3[%17, %c6] : memref<6x8xf32, #tpu.memory_space<smem>>
    %19 = arith.index_cast %4 : i32 to index
    %c7 = arith.constant 7 : index
    %20 = memref.load %arg3[%19, %c7] : memref<6x8xf32, #tpu.memory_space<smem>>
    %c0_1 = arith.constant 0 : index
    %c0_2 = arith.constant 0 : index
    %c0_3 = arith.constant 0 : index
    %21 = vector.load %arg4[%c0_1, %c0_2, %c0_3] : memref<1x7x128xf32, #tpu.memory_space<vmem>>, vector<1x7x128xf32>
    %22 = vector.shape_cast %21 : vector<1x7x128xf32> to vector<7x128xf32>
    %23 = vector.extract_strided_slice %22 {offsets = [0, 0], sizes = [1, 128], strides = [1, 1]} : vector<7x128xf32> to vector<1x128xf32>
    %24 = vector.extract_strided_slice %22 {offsets = [1, 0], sizes = [1, 128], strides = [1, 1]} : vector<7x128xf32> to vector<1x128xf32>
    %25 = vector.extract_strided_slice %22 {offsets = [2, 0], sizes = [1, 128], strides = [1, 1]} : vector<7x128xf32> to vector<1x128xf32>
    %26 = vector.broadcast %6 : f32 to vector<1x128xf32>
    %27 = arith.subf %23, %26 : vector<1x128xf32>
    %28 = vector.broadcast %8 : f32 to vector<1x128xf32>
    %29 = arith.subf %24, %28 : vector<1x128xf32>
    %30 = vector.broadcast %18 : f32 to vector<1x128xf32>
    %31 = arith.mulf %27, %30 : vector<1x128xf32>
    %32 = vector.broadcast %20 : f32 to vector<1x128xf32>
    %33 = arith.mulf %29, %32 : vector<1x128xf32>
    %34 = arith.addf %31, %33 : vector<1x128xf32>
    %35 = vector.broadcast %18 : f32 to vector<1x128xf32>
    %36 = arith.mulf %29, %35 : vector<1x128xf32>
    %37 = vector.broadcast %20 : f32 to vector<1x128xf32>
    %38 = arith.mulf %27, %37 : vector<1x128xf32>
    %39 = arith.subf %36, %38 : vector<1x128xf32>
    %40 = vector.broadcast %10 : f32 to vector<1x128xf32>
    %41 = arith.subf %25, %40 : vector<1x128xf32>
    %42 = math.absf %41 : vector<1x128xf32>
    %43 = vector.broadcast %16 : f32 to vector<1x128xf32>
    %44 = arith.cmpf ole, %42, %43 : vector<1x128xf32>
    %cst = arith.constant 0.000000e+00 : f32
    %45 = arith.subf %cst, %12 : f32
    %46 = vector.broadcast %45 : f32 to vector<1x128xf32>
    %47 = arith.cmpf ogt, %34, %46 : vector<1x128xf32>
    %48 = arith.andi %44, %47 : vector<1x128xi1>
    %49 = vector.broadcast %12 : f32 to vector<1x128xf32>
    %50 = arith.cmpf olt, %34, %49 : vector<1x128xf32>
    %51 = arith.andi %48, %50 : vector<1x128xi1>
    %cst_4 = arith.constant 0.000000e+00 : f32
    %52 = arith.subf %cst_4, %14 : f32
    %53 = vector.broadcast %52 : f32 to vector<1x128xf32>
    %54 = arith.cmpf ogt, %39, %53 : vector<1x128xf32>
    %55 = arith.andi %51, %54 : vector<1x128xi1>
    %56 = vector.broadcast %14 : f32 to vector<1x128xf32>
    %57 = arith.cmpf olt, %39, %56 : vector<1x128xf32>
    %58 = arith.andi %55, %57 : vector<1x128xi1>
    %59 = tpu.iota {dimensions = array<i32: 1>} : vector<1x128xi32>
    %c128_i32 = arith.constant 128 : i32
    %60 = arith.muli %arg2, %c128_i32 : i32
    %61 = vector.broadcast %60 : i32 to vector<1x128xi32>
    %62 = arith.addi %61, %59 : vector<1x128xi32>
    %c320_i32 = arith.constant 320 : i32
    %63 = vector.broadcast %c320_i32 : i32 to vector<1x128xi32>
    %64 = arith.cmpi slt, %62, %63 : vector<1x128xi32>
    %65 = arith.andi %58, %64 : vector<1x128xi1>
    %cst_5 = arith.constant 1.000000e+00 : f32
    %cst_6 = arith.constant 0.000000e+00 : f32
    %66 = vector.broadcast %cst_5 : f32 to vector<1x128xf32>
    %67 = vector.broadcast %cst_6 : f32 to vector<1x128xf32>
    %68 = arith.select %65, %66, %67 : vector<1x128xi1>, vector<1x128xf32>
    %c1_i32 = arith.constant 1 : i32
    %69 = tpu.dynamic_rotate %68 by %c1_i32 dim 1 : vector<1x128xf32>, i32 -> vector<1x128xf32>
    %c1_i32_7 = arith.constant 1 : i32
    %70 = vector.broadcast %c1_i32_7 : i32 to vector<1x128xi32>
    %71 = arith.cmpi sge, %59, %70 : vector<1x128xi32>
    %cst_8 = arith.constant 0.000000e+00 : f32
    %72 = vector.broadcast %cst_8 : f32 to vector<1x128xf32>
    %73 = arith.select %71, %69, %72 : vector<1x128xi1>, vector<1x128xf32>
    %74 = arith.addf %68, %73 : vector<1x128xf32>
    %c2_i32 = arith.constant 2 : i32
    %75 = tpu.dynamic_rotate %74 by %c2_i32 dim 1 : vector<1x128xf32>, i32 -> vector<1x128xf32>
    %c2_i32_9 = arith.constant 2 : i32
    %76 = vector.broadcast %c2_i32_9 : i32 to vector<1x128xi32>
    %77 = arith.cmpi sge, %59, %76 : vector<1x128xi32>
    %cst_10 = arith.constant 0.000000e+00 : f32
    %78 = vector.broadcast %cst_10 : f32 to vector<1x128xf32>
    %79 = arith.select %77, %75, %78 : vector<1x128xi1>, vector<1x128xf32>
    %80 = arith.addf %74, %79 : vector<1x128xf32>
    %c4_i32 = arith.constant 4 : i32
    %81 = tpu.dynamic_rotate %80 by %c4_i32 dim 1 : vector<1x128xf32>, i32 -> vector<1x128xf32>
    %c4_i32_11 = arith.constant 4 : i32
    %82 = vector.broadcast %c4_i32_11 : i32 to vector<1x128xi32>
    %83 = arith.cmpi sge, %59, %82 : vector<1x128xi32>
    %cst_12 = arith.constant 0.000000e+00 : f32
    %84 = vector.broadcast %cst_12 : f32 to vector<1x128xf32>
    %85 = arith.select %83, %81, %84 : vector<1x128xi1>, vector<1x128xf32>
    %86 = arith.addf %80, %85 : vector<1x128xf32>
    %c8_i32 = arith.constant 8 : i32
    %87 = tpu.dynamic_rotate %86 by %c8_i32 dim 1 : vector<1x128xf32>, i32 -> vector<1x128xf32>
    %c8_i32_13 = arith.constant 8 : i32
    %88 = vector.broadcast %c8_i32_13 : i32 to vector<1x128xi32>
    %89 = arith.cmpi sge, %59, %88 : vector<1x128xi32>
    %cst_14 = arith.constant 0.000000e+00 : f32
    %90 = vector.broadcast %cst_14 : f32 to vector<1x128xf32>
    %91 = arith.select %89, %87, %90 : vector<1x128xi1>, vector<1x128xf32>
    %92 = arith.addf %86, %91 : vector<1x128xf32>
    %c16_i32 = arith.constant 16 : i32
    %93 = tpu.dynamic_rotate %92 by %c16_i32 dim 1 : vector<1x128xf32>, i32 -> vector<1x128xf32>
    %c16_i32_15 = arith.constant 16 : i32
    %94 = vector.broadcast %c16_i32_15 : i32 to vector<1x128xi32>
    %95 = arith.cmpi sge, %59, %94 : vector<1x128xi32>
    %cst_16 = arith.constant 0.000000e+00 : f32
    %96 = vector.broadcast %cst_16 : f32 to vector<1x128xf32>
    %97 = arith.select %95, %93, %96 : vector<1x128xi1>, vector<1x128xf32>
    %98 = arith.addf %92, %97 : vector<1x128xf32>
    %c32_i32 = arith.constant 32 : i32
    %99 = tpu.dynamic_rotate %98 by %c32_i32 dim 1 : vector<1x128xf32>, i32 -> vector<1x128xf32>
    %c32_i32_17 = arith.constant 32 : i32
    %100 = vector.broadcast %c32_i32_17 : i32 to vector<1x128xi32>
    %101 = arith.cmpi sge, %59, %100 : vector<1x128xi32>
    %cst_18 = arith.constant 0.000000e+00 : f32
    %102 = vector.broadcast %cst_18 : f32 to vector<1x128xf32>
    %103 = arith.select %101, %99, %102 : vector<1x128xi1>, vector<1x128xf32>
    %104 = arith.addf %98, %103 : vector<1x128xf32>
    %c64_i32 = arith.constant 64 : i32
    %105 = tpu.dynamic_rotate %104 by %c64_i32 dim 1 : vector<1x128xf32>, i32 -> vector<1x128xf32>
    %c64_i32_19 = arith.constant 64 : i32
    %106 = vector.broadcast %c64_i32_19 : i32 to vector<1x128xi32>
    %107 = arith.cmpi sge, %59, %106 : vector<1x128xi32>
    %cst_20 = arith.constant 0.000000e+00 : f32
    %108 = vector.broadcast %cst_20 : f32 to vector<1x128xf32>
    %109 = arith.select %107, %105, %108 : vector<1x128xi1>, vector<1x128xf32>
    %110 = arith.addf %104, %109 : vector<1x128xf32>
    %cst_21 = arith.constant dense<0.000000e+00> : vector<1xf32>
    %111 = vector.multi_reduction <add>, %68, %cst_21 [1] : vector<1x128xf32> to vector<1xf32>
    %112 = vector.shape_cast %111 : vector<1xf32> to vector<1x1xf32>
    %c0_22 = arith.constant 0 : index
    %c0_23 = arith.constant 0 : index
    %113 = vector.load %arg8[%c0_22, %c0_23] : memref<1x1xf32, #tpu.memory_space<vmem>>, vector<1x1xf32>
    %114 = arith.subf %110, %68 : vector<1x128xf32>
    %115 = vector.broadcast %113 : vector<1x1xf32> to vector<1x128xf32>
    %116 = arith.addf %114, %115 : vector<1x128xf32>
    %117 = tpu.iota {dimensions = array<i32: 0>} : vector<512x1xi32>
    %118 = arith.sitofp %117 : vector<512x1xi32> to vector<512x1xf32>
    %119 = vector.broadcast %116 : vector<1x128xf32> to vector<512x128xf32>
    %120 = vector.broadcast %118 : vector<512x1xf32> to vector<512x128xf32>
    %121 = arith.cmpf oeq, %119, %120 : vector<512x128xf32>
    %cst_24 = arith.constant 5.000000e-01 : f32
    %122 = vector.broadcast %cst_24 : f32 to vector<1x128xf32>
    %123 = arith.cmpf ogt, %68, %122 : vector<1x128xf32>
    %124 = vector.broadcast %123 : vector<1x128xi1> to vector<512x128xi1>
    %125 = arith.andi %121, %124 : vector<512x128xi1>
    %cst_25 = arith.constant 1.000000e+00 : f32
    %cst_26 = arith.constant 0.000000e+00 : f32
    %126 = vector.broadcast %cst_25 : f32 to vector<512x128xf32>
    %127 = vector.broadcast %cst_26 : f32 to vector<512x128xf32>
    %128 = arith.select %125, %126, %127 : vector<512x128xi1>, vector<512x128xf32>
    %c0_27 = arith.constant 0 : index
    %c0_28 = arith.constant 0 : index
    %129 = vector.load %arg7[%c0_27, %c0_28] : memref<7x512xf32, #tpu.memory_space<vmem>>, vector<7x512xf32>
    %cst_29 = arith.constant dense<0.000000e+00> : vector<7x512xf32>
    %130 = tpu.matmul %22, %128, %cst_29 {dimension_numbers = #tpu.dot_dimension_numbers<[1], [1], [0], [0], [0, 0, 1, 0], [], []>, precision = #tpu.contract_precision<fp32>} : vector<7x128xf32>, vector<512x128xf32>, vector<7x512xf32> -> vector<7x512xf32>
    %131 = arith.addf %129, %130 : vector<7x512xf32>
    %c0_30 = arith.constant 0 : index
    %c0_31 = arith.constant 0 : index
    %132 = vector.load %arg7[%c0_30, %c0_31] : memref<7x512xf32, #tpu.memory_space<vmem>>, vector<7x512xf32>
    tpu.vector_store %arg7[%c0_30, %c0_31], %131 {strides = array<i32>} : memref<7x512xf32, #tpu.memory_space<vmem>>, vector<7x512xf32>,
    %133 = arith.addf %113, %112 : vector<1x1xf32>
    %c0_32 = arith.constant 0 : index
    %c0_33 = arith.constant 0 : index
    %134 = vector.load %arg8[%c0_32, %c0_33] : memref<1x1xf32, #tpu.memory_space<vmem>>, vector<1x1xf32>
    tpu.vector_store %arg8[%c0_32, %c0_33], %133 {strides = array<i32>} : memref<1x1xf32, #tpu.memory_space<vmem>>, vector<1x1xf32>,
    %c2_i32_34 = arith.constant 2 : i32
    %135 = arith.cmpi eq, %arg2, %c2_i32_34 : i32
    %136 = arith.extui %135 : i1 to i32
    %c0_i32_35 = arith.constant 0 : i32
    %137 = arith.cmpi ne, %136, %c0_i32_35 : i32
    scf.if %137 {
      %c0_36 = arith.constant 0 : index
      %c0_37 = arith.constant 0 : index
      %138 = vector.load %arg8[%c0_36, %c0_37] : memref<1x1xf32, #tpu.memory_space<vmem>>, vector<1x1xf32>
      %cst_38 = arith.constant 1.000000e+00 : f32
      %139 = vector.broadcast %cst_38 : f32 to vector<1x1xf32>
      %140 = arith.maximumf %138, %139 : vector<1x1xf32>
      %141 = tpu.iota {dimensions = array<i32: 1>} : vector<1x512xi32>
      %142 = arith.sitofp %141 : vector<1x512xi32> to vector<1x512xf32>
      %143 = vector.broadcast %140 : vector<1x1xf32> to vector<1x512xf32>
      %144 = arith.divf %142, %143 : vector<1x512xf32>
      %145 = math.floor %144 : vector<1x512xf32>
      %146 = vector.broadcast %140 : vector<1x1xf32> to vector<1x512xf32>
      %147 = arith.mulf %146, %145 : vector<1x512xf32>
      %148 = arith.subf %142, %147 : vector<1x512xf32>
      %149 = tpu.iota {dimensions = array<i32: 0>} : vector<512x1xi32>
      %150 = arith.sitofp %149 : vector<512x1xi32> to vector<512x1xf32>
      %151 = vector.broadcast %150 : vector<512x1xf32> to vector<512x512xf32>
      %152 = vector.broadcast %148 : vector<1x512xf32> to vector<512x512xf32>
      %153 = arith.cmpf oeq, %151, %152 : vector<512x512xf32>
      %cst_39 = arith.constant 1.000000e+00 : f32
      %cst_40 = arith.constant 0.000000e+00 : f32
      %154 = vector.broadcast %cst_39 : f32 to vector<512x512xf32>
      %155 = vector.broadcast %cst_40 : f32 to vector<512x512xf32>
      %156 = arith.select %153, %154, %155 : vector<512x512xi1>, vector<512x512xf32>
      %c0_41 = arith.constant 0 : index
      %c0_42 = arith.constant 0 : index
      %157 = vector.load %arg7[%c0_41, %c0_42] : memref<7x512xf32, #tpu.memory_space<vmem>>, vector<7x512xf32>
      %cst_43 = arith.constant dense<0.000000e+00> : vector<7x512xf32>
      %158 = tpu.matmul %157, %156, %cst_43 {dimension_numbers = #tpu.dot_dimension_numbers<[1], [0], [0], [1], [0, 0, 1, 1], [], []>, precision = #tpu.contract_precision<fp32>} : vector<7x512xf32>, vector<512x512xf32>, vector<7x512xf32> -> vector<7x512xf32>
      %c0_44 = arith.constant 0 : index
      %c0_45 = arith.constant 0 : index
      %c0_46 = arith.constant 0 : index
      %c0_47 = arith.constant 0 : index
      %159 = vector.load %arg5[%c0_44, %c0_45, %c0_46, %c0_47] : memref<1x1x7x512xf32, #tpu.memory_space<vmem>>, vector<1x1x7x512xf32>
      %160 = vector.shape_cast %159 : vector<1x1x7x512xf32> to vector<7x512xf32>
      %161 = vector.shape_cast %158 : vector<7x512xf32> to vector<1x1x7x512xf32>
      tpu.vector_store %arg5[%c0_44, %c0_45, %c0_46, %c0_47], %161 {strides = array<i32>} : memref<1x1x7x512xf32, #tpu.memory_space<vmem>>, vector<1x1x7x512xf32>,
      %cst_48 = arith.constant 5.000000e-01 : f32
      %162 = vector.broadcast %cst_48 : f32 to vector<1x1xf32>
      %163 = arith.cmpf olt, %138, %162 : vector<1x1xf32>
      %164 = arith.extui %163 : vector<1x1xi1> to vector<1x1xi32>
      %165 = vector.shape_cast %164 : vector<1x1xi32> to vector<1x1xi32>
      %166 = vector.broadcast %165 : vector<1x1xi32> to vector<1x128xi32>
      %c0_49 = arith.constant 0 : index
      %c0_50 = arith.constant 0 : index
      %c0_51 = arith.constant 0 : index
      %c0_52 = arith.constant 0 : index
      %167 = vector.load %arg6[%c0_49, %c0_50, %c0_51, %c0_52] : memref<1x1x1x128xi32, #tpu.memory_space<vmem>>, vector<1x1x1x128xi32>
      %168 = vector.shape_cast %167 : vector<1x1x1x128xi32> to vector<1x128xi32>
      %169 = vector.shape_cast %166 : vector<1x128xi32> to vector<1x1x1x128xi32>
      tpu.vector_store %arg6[%c0_49, %c0_50, %c0_51, %c0_52], %169 {strides = array<i32>} : memref<1x1x1x128xi32, #tpu.memory_space<vmem>>, vector<1x1x1x128xi32>,
    } else {
    }
    return
  }
  func.func @transform_0(%arg0: i32, %arg1: i32, %arg2: i32) -> (i32, i32) {
    %c0_i32 = arith.constant 0 : i32
    %c0_i32_0 = arith.constant 0 : i32
    %c0_i32_1 = arith.constant 0 : i32
    return %c0_i32, %c0_i32_0 : i32, i32
  }
  func.func @transform_1(%arg0: i32, %arg1: i32, %arg2: i32) -> (i32, i32, i32) {
    %c0_i32 = arith.constant 0 : i32
    %c0_i32_0 = arith.constant 0 : i32
    return %arg0, %c0_i32, %arg2 : i32, i32, i32
  }
  func.func @transform_2(%arg0: i32, %arg1: i32, %arg2: i32) -> (i32, i32, i32, i32) {
    %c0_i32 = arith.constant 0 : i32
    %c0_i32_0 = arith.constant 0 : i32
    %c0_i32_1 = arith.constant 0 : i32
    return %arg0, %arg1, %c0_i32, %c0_i32_0 : i32, i32, i32, i32
  }
  func.func @transform_3(%arg0: i32, %arg1: i32, %arg2: i32) -> (i32, i32, i32, i32) {
    %c0_i32 = arith.constant 0 : i32
    %c0_i32_0 = arith.constant 0 : i32
    %c0_i32_1 = arith.constant 0 : i32
    return %arg0, %arg1, %c0_i32, %c0_i32_0 : i32, i32, i32, i32
  }
}

</mosaic_0001>

<llo_original>
// kernel: tpu_custom_call.1
$region0: #{tpu_custom_call.1}
  #allocation0 [shape = 'u32[]', space=smem, size = 0x4, offset = 0x4, fixed_abs, tag = 'smem constant byte address 0x4 - core index']
  #allocation1 [shape = 'u32[72,128]{1,0:T(1,128)}', space=vmem, size = 0x9000, scoped, tag = 'internal scratch']
  #allocation2 [shape = 'f32[7,512]{1,0:T(8,128)}', space=vmem, size = 0x4000, scoped, tag = 'scratch operand']
  #allocation3 [shape = 'f32[1,1]{1,0:T(1,128)}', space=vmem, size = 0x200, scoped, tag = 'scratch operand']
  %s0 = inlined_call_operand.vmem [shape: f32[6,8], index: 0, kind: input, shape index: {}]
  %s1 = inlined_call_operand.vmem [shape: f32[2,7,384], index: 1, kind: input, shape index: {}]
  %s2 = inlined_call_operand.vmem [shape: f32[2,3,7,512], index: 2, kind: output, shape index: {0}]
  %s3 = inlined_call_operand.hbm [shape: s32[2,3,1,128], index: 3, kind: output, shape index: {1}]
  %4 = xla_tuple %s2, %s3
  %s5 = sld [smem:[#allocation0]]
  $region61: #{tpu_custom_call.1} parent=0
    _
  %s7 = ssub.s32 1, %s5
  %s8 = scalar_select 0, %s7, %s5
  $region1: #{tpu_custom_call.1} parent=0
    #allocation4 [shape = 'u8[4096]{0}', space=smem, size = 0x1000, scoped, tag = 'input window, operand 0, single buffered']
    #allocation5 [shape = 's32[2]{0}', space=sflag, size = 0x8, scoped, tag = 'scoped memory for tpu_custom_call.1']
    #allocation6 [shape = 's32[2]{0}', space=sflag, size = 0x8, scoped, tag = 'scoped memory for tpu_custom_call.1']
    #allocation7 [shape = 'u8[1024]{0}', space=vmem, size = 0x400, scoped, tag = 'output window, operand 1']
    %9 = vsyncpa [#allocation6], 0
    %10 = vsyncpa [#allocation5], 0
    %s11 = scalar_lea.sflag [#allocation5], 1
    %12 = vsyncpa %s11, 0
    loop: start=0, step=1, limit=20
    $region2: #{tpu_custom_call.1} parent=1 // loop_pre_header
      _
    $region3: #{tpu_custom_call.1} parent=1 // loop_header
      %s14 = sphi 0, %s18
      %p15 = scmp.ge.s32.totalorder %s14, 20
      %s21 = sphi 0, %s40
      %s22 = sphi 0, %s36
      %s23 = sphi 0, %s32
      %s24 = sphi 0, %s21
      %s25 = sphi 0, %s22
      %s26 = sphi 0, %s23
      %s27 = sphi 0, %s24
      %s28 = sphi 0, %s25
      %s29 = sphi 0, %s26
      %s41 = sphi 0, %s41
      %s43 = sphi 0, %s41
      %s44 = sphi 0, %s43
      %s58 = sphi 0, %s44
      %s66 = sphi 0, %s68
      %s69 = sphi 0, %s66
      %s70 = sphi 0, %s69
      %s86 = sphi 0, %s70
      %s94 = sphi 0, %s96
      %s97 = sphi 0, %s94
      %s98 = sphi 0, %s97
      %s114 = sphi 0, %s98
      %s122 = sphi 0, %s124
      %s125 = sphi 0, %s122
      %s126 = sphi 0, %s125
      %s142 = sphi 0, %s126
    $region4: #{tpu_custom_call.1} parent=1 // loop_header_branch
      %17 = sbr.rel (%p15) target = $region8
    $region5: #{tpu_custom_call.1} parent=1 // loop_body
      %s19 = ssub.s32 %s14, 1
      %s20 = ssub.s32 %s14, 2
      %s30 = sadd.s32 1, %s23
      %p31 = scmp.ge.s32.totalorder %s30, 3
      %s32 = scalar_select %p31, 0, %s30
      %s33 = sadd.s32 1, %s22
      %s34 = scalar_select %p31, %s33, %s22
      %p35 = scmp.ge.s32.totalorder %s34, 3
      %s36 = scalar_select %p35, 0, %s34
      %s37 = sadd.s32 1, %s21
      %s38 = scalar_select %p35, %s37, %s21
      %p39 = scmp.ge.s32.totalorder %s38, 2
      %s40 = scalar_select %p39, 0, %s38
      %s42 = sadd.s32 %s41, 1
      %p45 = scmp.eq.s32.totalorder %s14, 17
      %p46 = scmp.ne.s32.totalorder %s41, %s43
      %p47 = scmp.eq.s32.totalorder %s14, 0
      %p48 = por %p46, %p47
      %p49 = scmp.ne.s32.totalorder %s41, %s43
      %p50 = scmp.eq.s32.totalorder %s19, 17
      %p51 = por %p49, %p50
      %p52 = scmp.ne.s32.totalorder %s43, %s44
      %p53 = scmp.eq.s32.totalorder %s19, 0
      %p54 = por %p52, %p53
      %p55 = scmp.ne.s32.totalorder %s43, %s44
      %p56 = scmp.eq.s32.totalorder %s20, 17
      %p57 = por %p55, %p56
      %p59 = scmp.ne.s32.totalorder %s44, %s58
      %p60 = scmp.eq.s32.totalorder %s20, 0
      %p61 = por %p59, %p60
      %s62 = ssub.s32 %s21, %s40
      %s63 = ssub.s32 %s23, %s32
      %s64 = sor.u32 %s62, %s63
      %p65 = scmp.eq.s32.totalorder %s64, 0
      %s67 = sadd.s32 %s66, 1
      %s68 = scalar_select %p65, %s66, %s67
      %p71 = pneg %p65
      %p72 = scmp.eq.s32.totalorder %s14, 17
      %p73 = por %p71, %p72
      %p74 = scmp.ne.s32.totalorder %s66, %s69
      %p75 = scmp.eq.s32.totalorder %s14, 0
      %p76 = por %p74, %p75
      %p77 = scmp.ne.s32.totalorder %s66, %s69
      %p78 = scmp.eq.s32.totalorder %s19, 17
      %p79 = por %p77, %p78
      %p80 = scmp.ne.s32.totalorder %s69, %s70
      %p81 = scmp.eq.s32.totalorder %s19, 0
      %p82 = por %p80, %p81
      %p83 = scmp.ne.s32.totalorder %s69, %s70
      %p84 = scmp.eq.s32.totalorder %s20, 17
      %p85 = por %p83, %p84
      %p87 = scmp.ne.s32.totalorder %s70, %s86
      %p88 = scmp.eq.s32.totalorder %s20, 0
      %p89 = por %p87, %p88
      %s90 = ssub.s32 %s21, %s40
      %s91 = ssub.s32 %s22, %s36
      %s92 = sor.u32 %s90, %s91
      %p93 = scmp.eq.s32.totalorder %s92, 0
      %s95 = sadd.s32 %s94, 1
      %s96 = scalar_select %p93, %s94, %s95
      %p99 = pneg %p93
      %p100 = scmp.eq.s32.totalorder %s14, 17
      %p101 = por %p99, %p100
      %p102 = scmp.ne.s32.totalorder %s94, %s97
      %p103 = scmp.eq.s32.totalorder %s14, 0
      %p104 = por %p102, %p103
      %p105 = scmp.ne.s32.totalorder %s94, %s97
      %p106 = scmp.eq.s32.totalorder %s19, 17
      %p107 = por %p105, %p106
      %p108 = scmp.ne.s32.totalorder %s97, %s98
      %p109 = scmp.eq.s32.totalorder %s19, 0
      %p110 = por %p108, %p109
      %p111 = scmp.ne.s32.totalorder %s97, %s98
      %p112 = scmp.eq.s32.totalorder %s20, 17
      %p113 = por %p111, %p112
      %p115 = scmp.ne.s32.totalorder %s98, %s114
      %p116 = scmp.eq.s32.totalorder %s20, 0
      %p117 = por %p115, %p116
      %s118 = ssub.s32 %s21, %s40
      %s119 = ssub.s32 %s22, %s36
      %s120 = sor.u32 %s118, %s119
      %p121 = scmp.eq.s32.totalorder %s120, 0
      %s123 = sadd.s32 %s122, 1
      %s124 = scalar_select %p121, %s122, %s123
      %p127 = pneg %p121
      %p128 = scmp.eq.s32.totalorder %s14, 17
      %p129 = por %p127, %p128
      %p130 = scmp.ne.s32.totalorder %s122, %s125
      %p131 = scmp.eq.s32.totalorder %s14, 0
      %p132 = por %p130, %p131
      %p133 = scmp.ne.s32.totalorder %s122, %s125
      %p134 = scmp.eq.s32.totalorder %s19, 17
      %p135 = por %p133, %p134
      %p136 = scmp.ne.s32.totalorder %s125, %s126
      %p137 = scmp.eq.s32.totalorder %s19, 0
      %p138 = por %p136, %p137
      %p139 = scmp.ne.s32.totalorder %s125, %s126
      %p140 = scmp.eq.s32.totalorder %s20, 17
      %p141 = por %p139, %p140
      %p143 = scmp.ne.s32.totalorder %s126, %s142
      %p144 = scmp.eq.s32.totalorder %s20, 0
      %p145 = por %p143, %p144
      %p146 = scmp.le.s32.totalorder 1, %s14
      %p147 = scmp.lt.s32.totalorder %s14, 19
      %p148 = pnand %p146, %p147
      %p149 = pneg %p148
      // Predicated region
      $region9: #{tpu_custom_call.1} parent=5 // pred_check
        _
      $region10: #{tpu_custom_call.1} parent=5 // pred_check_branch
        %151 = sbr.rel (%p148) target = $region12
      $region11: #{tpu_custom_call.1} parent=5 // pred_region
        %s152 = ssub.s32 %s14, 1
        // Predicated region
        $region13: #{tpu_custom_call.1} parent=11 // pred_check
          %p153 = pneg %p54
        $region14: #{tpu_custom_call.1} parent=11 // pred_check_branch
          %155 = sbr.rel (%p153) target = $region16
        $region15: #{tpu_custom_call.1} parent=11 // pred_region
          %157 = vsyncadd [#allocation6], 0
          %s159 = sshll.u32 %s0, 4
          %s160 = int_to_ptr.vmem [resolvable:$true] %s159
          %162 = dma.vmem_to_smem %s160, 128, [#allocation4], [#allocation6]
        $region16: #{tpu_custom_call.1} parent=11 // pred_fallthru
          _
      $region12: #{tpu_custom_call.1} parent=5 // pred_fallthru
        _
      %p163 = scmp.lt.s32.totalorder %s14, 18
      // Predicated region
      $region17: #{tpu_custom_call.1} parent=5 // pred_check
        %p164 = pneg %p163
      $region18: #{tpu_custom_call.1} parent=5 // pred_check_branch
        %166 = sbr.rel (%p164) target = $region20
      $region19: #{tpu_custom_call.1} parent=5 // pred_region
        // Predicated region
        $region21: #{tpu_custom_call.1} parent=19 // pred_check
          %p167 = pneg %p76
        $region22: #{tpu_custom_call.1} parent=19 // pred_check_branch
          %169 = sbr.rel (%p167) target = $region24
        $region23: #{tpu_custom_call.1} parent=19 // pred_region
          %p170 = scmp.lt.s32.totalorder %s21, 1
          %s171 = scalar_select %p170, %s21, 1
          %p172 = scmp.lt.s32.totalorder %s23, 2
          %s173 = scalar_select %p172, %s23, 2
          %s174 = smul.addr %s171, 3
          %s175 = sadd.s32 %s173, %s174
          %s176 = smul.addr %s175, 8
          %s177 = scalar_lea.vmem %s1, %s176
        $region24: #{tpu_custom_call.1} parent=19 // pred_fallthru
          _
      $region20: #{tpu_custom_call.1} parent=5 // pred_fallthru
        _
      %p178 = scmp.le.s32.totalorder 1, %s14
      %p179 = scmp.lt.s32.totalorder %s14, 19
      %p180 = pnand %p178, %p179
      %p181 = pneg %p180
      // Predicated region
      $region25: #{tpu_custom_call.1} parent=5 // pred_check
        _
      $region26: #{tpu_custom_call.1} parent=5 // pred_check_branch
        %183 = sbr.rel (%p180) target = $region28
      $region27: #{tpu_custom_call.1} parent=5 // pred_region
        %s184 = ssub.s32 %s14, 1
        // Predicated region
        $region29: #{tpu_custom_call.1} parent=27 // pred_check
          %p185 = pneg %p54
        $region30: #{tpu_custom_call.1} parent=27 // pred_check_branch
          %187 = sbr.rel (%p185) target = $region32
        $region31: #{tpu_custom_call.1} parent=27 // pred_region
          %189 = dma.done [#allocation6], 128
        $region32: #{tpu_custom_call.1} parent=27 // pred_fallthru
          _
        %190 = sfence
        %p191 = pneg %p54
        %p192 = pneg %p51
        %p193 = scmp.lt.s32.totalorder %s24, 1
        %s194 = scalar_select %p193, %s24, 1
        %p195 = scmp.lt.s32.totalorder %s26, 2
        %s196 = scalar_select %p195, %s26, 2
        %s197 = smul.addr %s194, 3
        %s198 = sadd.s32 %s196, %s197
        %s199 = smul.addr %s198, 8
        %s200 = scalar_lea.vmem %s1, %s199
        %p201 = pneg %p82
        %p202 = pneg %p79
        %p203 = pneg %p110
        %p204 = pneg %p107
        %p205 = scmp.lt.s32.totalorder %s24, 1
        %s206 = scalar_select %p205, %s24, 1
        %p207 = scmp.lt.s32.totalorder %s25, 2
        %s208 = scalar_select %p207, %s25, 2
        %s209 = smul.addr %s208, 4
        %s210 = smul.addr %s206, 12
        %s211 = sadd.s32 %s209, %s210
        %s212 = smul.addr %s211, 8
        %s213 = scalar_lea.vmem %s2, %s212
        %p214 = pneg %p138
        %p215 = pneg %p135
        %s216 = sand.u32 %s125, 1
        %s217 = scalar_lea.sflag [#allocation5], %s216
        %s218 = sand.u32 %s125, 1
        %s219 = scalar_lea.vmem [#allocation7], %s218
        %p220 = scmp.lt.s32.totalorder %s24, 1
        %s221 = scalar_select %p220, %s24, 1
        %p222 = scmp.lt.s32.totalorder %s26, 2
        %s223 = scalar_select %p222, %s26, 2
        %s224 = smul.addr %s221, 3
        %s225 = sadd.s32 %s223, %s224
        %s226 = smul.addr %s225, 8
        %s227 = scalar_lea.vmem %s1, %s226
        %p228 = scmp.lt.s32.totalorder %s24, 1
        %s229 = scalar_select %p228, %s24, 1
        %p230 = scmp.lt.s32.totalorder %s25, 2
        %s231 = scalar_select %p230, %s25, 2
        %s232 = smul.addr %s231, 4
        %s233 = smul.addr %s229, 12
        %s234 = sadd.s32 %s232, %s233
        %s235 = smul.addr %s234, 8
        %s236 = scalar_lea.vmem %s2, %s235
        %p237 = scmp.eq.s32.totalorder %s26, 0
        // Predicated region
        $region33: #{tpu_custom_call.1} parent=27 // pred_check
          %p238 = pneg %p237
        $region34: #{tpu_custom_call.1} parent=27 // pred_check_branch
          %240 = sbr.rel (%p238) target = $region36
        $region35: #{tpu_custom_call.1} parent=27 // pred_region
          %241 = vst [vmem:[#allocation2] sm:$0x7f] 0.0
          %242 = vst [vmem:[#allocation2 + $0x8] sm:$0x7f] 0.0
          %243 = vst [vmem:[#allocation2 + $0x10] sm:$0x7f] 0.0
          %244 = vst [vmem:[#allocation2 + $0x18] sm:$0x7f] 0.0
          %vm245 = vcmask 0
          %246 = vst.msk [vmem:[#allocation3] sm:$0x1] %vm245, 0.0
        $region36: #{tpu_custom_call.1} parent=27 // pred_fallthru
          _
        %s247 = smul.u32 %s24, 3
        %s248 = sadd.s32 %s247, %s25
        %s249 = smul.u32 %s248, 128
        %s250 = sld [smem:[#allocation4 + %s249]]
        %s251 = sadd.s32 %s249, 1
        %s252 = sld [smem:[#allocation4 + %s251]]
        %s253 = sadd.s32 %s249, 2
        %s254 = sld [smem:[#allocation4 + %s253]]
        %s255 = sadd.s32 %s249, 3
        %s256 = sld [smem:[#allocation4 + %s255]]
        %s257 = sadd.s32 %s249, 4
        %s258 = sld [smem:[#allocation4 + %s257]]
        %s259 = sadd.s32 %s249, 5
        %s260 = sld [smem:[#allocation4 + %s259]]
        %s261 = sadd.s32 %s249, 6
        %s262 = sld [smem:[#allocation4 + %s261]]
        %s263 = sadd.s32 %s249, 7
        %s264 = sld [smem:[#allocation4 + %s263]]
        %v265 = vld [vmem:[%s227] sm:$0x7f]
        %v266 = vstv %s250
        %v267 = vsub.f32 %v265, %v266
        %v268 = vstv %s252
        %v269 = vsub.f32 %v265, %v268
        %v270 = vstv %s262
        %v271 = vmul.f32 %v267, %v270
        %v272 = vstv %s264
        %v273 = vmul.f32 %v269, %v272
        %v275 = vrot.slane %v273, 1
        %v277 = vadd.f32 %v271, %v275
        %v278 = vmul.f32 %v269, %v270
        %v279 = vmul.f32 %v267, %v272
        %v281 = vrot.slane %v279, 7
        %v283 = vsub.f32 %v278, %v281
        %v284 = vstv %s254
        %v285 = vsub.f32 %v265, %v284
        %v286 = vand.u32 2147483647, %v285
        %v287 = vstv %s260
        %vm288 = vcmp.le.f32.partialorder %v286, %v287
        %s289 = ssub.f32 0.0, %s256
        %v290 = vstv %s289
        %vm291 = vcmp.gt.f32.partialorder %v277, %v290
        %v292 = vsel %vm291, 1, 0
        %v293 = vrot.slane %v292, 6
        %vm294 = vcmp.ne.s32.totalorder %v293, 0
        %vm295 = vmand %vm288, %vm294
        %v296 = vstv %s256
        %vm297 = vcmp.lt.f32.partialorder %v277, %v296
        %v298 = vsel %vm297, 1, 0
        %v299 = vrot.slane %v298, 6
        %vm300 = vcmp.ne.s32.totalorder %v299, 0
        %vm301 = vmand %vm295, %vm300
        %s302 = ssub.f32 0.0, %s258
        %v303 = vstv %s302
        %vm304 = vcmp.gt.f32.partialorder %v283, %v303
        %v305 = vsel %vm304, 1, 0
        %v306 = vrot.slane %v305, 7
        %vm307 = vcmp.ne.s32.totalorder %v306, 0
        %vm308 = vmand %vm301, %vm307
        %v309 = vstv %s258
        %vm310 = vcmp.lt.f32.partialorder %v283, %v309
        %v311 = vsel %vm310, 1, 0
        %v312 = vrot.slane %v311, 7
        %vm313 = vcmp.ne.s32.totalorder %v312, 0
        %vm314 = vmand %vm308, %vm313
        %v315 = vlaneseq
        %v316 = vand.u32 %v315, 127
        %s317 = smul.u32 %s26, 128
        %v318 = vstv %s317
        %v319 = vadd.s32 %v318, %v316
        %vm320 = vcmp.lt.s32.totalorder %v319, 320
        %vm321 = vmand %vm314, %vm320
        %v322 = vsel %vm321, 1.0, 0.0
        %v324 = vrot.slane %v322, 2
        %326 = vrot.lane.b32.xlu0 %v324, 1
        %v327 = vpop.permute.xlu0 %326
        %vm328 = vcmp.ge.s32.totalorder %v316, 1
        %v329 = vsel %vm328, %v327, 0.0
        %v331 = vrot.slane %v329, 6
        %v333 = vadd.f32 %v322, %v331
        %v335 = vrot.slane %v333, 2
        %337 = vrot.lane.b32.xlu0 %v335, 2
        %v338 = vpop.permute.xlu0 %337
        %vm339 = vcmp.ge.s32.totalorder %v316, 2
        %v340 = vsel %vm339, %v338, 0.0
        %v342 = vrot.slane %v340, 6
        %v344 = vadd.f32 %v333, %v342
        %v346 = vrot.slane %v344, 2
        %348 = vrot.lane.b32.xlu0 %v346, 4
        %v349 = vpop.permute.xlu0 %348
        %vm350 = vcmp.ge.s32.totalorder %v316, 4
        %v351 = vsel %vm350, %v349, 0.0
        %v353 = vrot.slane %v351, 6
        %v355 = vadd.f32 %v344, %v353
        %v357 = vrot.slane %v355, 2
        %359 = vrot.lane.b32.xlu0 %v357, 8
        %v360 = vpop.permute.xlu0 %359
        %vm361 = vcmp.ge.s32.totalorder %v316, 8
        %v362 = vsel %vm361, %v360, 0.0
        %v364 = vrot.slane %v362, 6
        %v366 = vadd.f32 %v355, %v364
        %v368 = vrot.slane %v366, 2
        %370 = vrot.lane.b32.xlu0 %v368, 16
        %v371 = vpop.permute.xlu0 %370
        %vm372 = vcmp.ge.s32.totalorder %v316, 16
        %v373 = vsel %vm372, %v371, 0.0
        %v375 = vrot.slane %v373, 6
        %v377 = vadd.f32 %v366, %v375
        %v379 = vrot.slane %v377, 2
        %381 = vrot.lane.b32.xlu0 %v379, 32
        %v382 = vpop.permute.xlu0 %381
        %vm383 = vcmp.ge.s32.totalorder %v316, 32
        %v384 = vsel %vm383, %v382, 0.0
        %v386 = vrot.slane %v384, 6
        %v388 = vadd.f32 %v377, %v386
        %v390 = vrot.slane %v388, 2
        %392 = vrot.lane.b32.xlu0 %v390, 64
        %v393 = vpop.permute.xlu0 %392
        %vm394 = vcmp.ge.s32.totalorder %v316, 64
        %v395 = vsel %vm394, %v393, 0.0
        %v397 = vrot.slane %v395, 6
        %v399 = vadd.f32 %v388, %v397
        %vm400 = vcmask 1042434
        %v401 = vsel %vm400, %v322, 0.0
        %402 = vadd.xlane.f32.xlu0 %v401
        %v403 = vpop.xlane.xlu0 %402
        %v404 = vld [vmem:[#allocation3] sm:$0x1]
        %v405 = vsub.f32 %v399, %v322
        %407 = vset.pattern.permute.xlu0 0
        %408 = vperm.xlu0 %407, %v404
        %v409 = vpop.permute.xlu0 %408
        %v411 = vperm.slane %v409, 0
        %v412 = vadd.f32 %v405, %v411
        %v413 = vlaneseq
        %v414 = vshrl.u32 %v413, 7
        %v415 = vadd.s32 %v414, 8
        %v416 = vadd.s32 %v414, 16
        %v417 = vadd.s32 %v414, 24
        %v418 = vadd.s32 %v414, 32
        %v419 = vadd.s32 %v414, 40
        %v420 = vadd.s32 %v414, 48
        %v421 = vadd.s32 %v414, 56
        %v422 = vadd.s32 %v414, 64
        %v423 = vadd.s32 %v414, 72
        %v424 = vadd.s32 %v414, 80
        %v425 = vadd.s32 %v414, 88
        %v426 = vadd.s32 %v414, 96
        %v427 = vadd.s32 %v414, 104
        %v428 = vadd.s32 %v414, 112
        %v429 = vadd.s32 %v414, 120
        %v430 = vadd.s32 %v414, 128
        %v431 = vadd.s32 %v414, 136
        %v432 = vadd.s32 %v414, 144
        %v433 = vadd.s32 %v414, 152
        %v434 = vadd.s32 %v414, 160
        %v435 = vadd.s32 %v414, 168
        %v436 = vadd.s32 %v414, 176
        %v437 = vadd.s32 %v414, 184
        %v438 = vadd.s32 %v414, 192
        %v439 = vadd.s32 %v414, 200
        %v440 = vadd.s32 %v414, 208
        %v441 = vadd.s32 %v414, 216
        %v442 = vadd.s32 %v414, 224
        %v443 = vadd.s32 %v414, 232
        %v444 = vadd.s32 %v414, 240
        %v445 = vadd.s32 %v414, 248
        %v446 = vadd.s32 %v414, 256
        %v447 = vadd.s32 %v414, 264
        %v448 = vadd.s32 %v414, 272
        %v449 = vadd.s32 %v414, 280
        %v450 = vadd.s32 %v414, 288
        %v451 = vadd.s32 %v414, 296
        %v452 = vadd.s32 %v414, 304
        %v453 = vadd.s32 %v414, 312
        %v454 = vadd.s32 %v414, 320
        %v455 = vadd.s32 %v414, 328
        %v456 = vadd.s32 %v414, 336
        %v457 = vadd.s32 %v414, 344
        %v458 = vadd.s32 %v414, 352
        %v459 = vadd.s32 %v414, 360
        %v460 = vadd.s32 %v414, 368
        %v461 = vadd.s32 %v414, 376
        %v462 = vadd.s32 %v414, 384
        %v463 = vadd.s32 %v414, 392
        %v464 = vadd.s32 %v414, 400
        %v465 = vadd.s32 %v414, 408
        %v466 = vadd.s32 %v414, 416
        %v467 = vadd.s32 %v414, 424
        %v468 = vadd.s32 %v414, 432
        %v469 = vadd.s32 %v414, 440
        %v470 = vadd.s32 %v414, 448
        %v471 = vadd.s32 %v414, 456
        %v472 = vadd.s32 %v414, 464
        %v473 = vadd.s32 %v414, 472
        %v474 = vadd.s32 %v414, 480
        %v475 = vadd.s32 %v414, 488
        %v476 = vadd.s32 %v414, 496
        %v477 = vadd.s32 %v414, 504
        %v478 = vcvt.s32.f32 %v414
        %v479 = vcvt.s32.f32 %v415
        %v480 = vcvt.s32.f32 %v416
        %v481 = vcvt.s32.f32 %v417
        %v482 = vcvt.s32.f32 %v418
        %v483 = vcvt.s32.f32 %v419
        %v484 = vcvt.s32.f32 %v420
        %v485 = vcvt.s32.f32 %v421
        %v486 = vcvt.s32.f32 %v422
        %v487 = vcvt.s32.f32 %v423
        %v488 = vcvt.s32.f32 %v424
        %v489 = vcvt.s32.f32 %v425
        %v490 = vcvt.s32.f32 %v426
        %v491 = vcvt.s32.f32 %v427
        %v492 = vcvt.s32.f32 %v428
        %v493 = vcvt.s32.f32 %v429
        %v494 = vcvt.s32.f32 %v430
        %v495 = vcvt.s32.f32 %v431
        %v496 = vcvt.s32.f32 %v432
        %v497 = vcvt.s32.f32 %v433
        %v498 = vcvt.s32.f32 %v434
        %v499 = vcvt.s32.f32 %v435
        %v500 = vcvt.s32.f32 %v436
        %v501 = vcvt.s32.f32 %v437
        %v502 = vcvt.s32.f32 %v438
        %v503 = vcvt.s32.f32 %v439
        %v504 = vcvt.s32.f32 %v440
        %v505 = vcvt.s32.f32 %v441
        %v506 = vcvt.s32.f32 %v442
        %v507 = vcvt.s32.f32 %v443
        %v508 = vcvt.s32.f32 %v444
        %v509 = vcvt.s32.f32 %v445
        %v510 = vcvt.s32.f32 %v446
        %v511 = vcvt.s32.f32 %v447
        %v512 = vcvt.s32.f32 %v448
        %v513 = vcvt.s32.f32 %v449
        %v514 = vcvt.s32.f32 %v450
        %v515 = vcvt.s32.f32 %v451
        %v516 = vcvt.s32.f32 %v452
        %v517 = vcvt.s32.f32 %v453
        %v518 = vcvt.s32.f32 %v454
        %v519 = vcvt.s32.f32 %v455
        %v520 = vcvt.s32.f32 %v456
        %v521 = vcvt.s32.f32 %v457
        %v522 = vcvt.s32.f32 %v458
        %v523 = vcvt.s32.f32 %v459
        %v524 = vcvt.s32.f32 %v460
        %v525 = vcvt.s32.f32 %v461
        %v526 = vcvt.s32.f32 %v462
        %v527 = vcvt.s32.f32 %v463
        %v528 = vcvt.s32.f32 %v464
        %v529 = vcvt.s32.f32 %v465
        %v530 = vcvt.s32.f32 %v466
        %v531 = vcvt.s32.f32 %v467
        %v532 = vcvt.s32.f32 %v468
        %v533 = vcvt.s32.f32 %v469
        %v534 = vcvt.s32.f32 %v470
        %v535 = vcvt.s32.f32 %v471
        %v536 = vcvt.s32.f32 %v472
        %v537 = vcvt.s32.f32 %v473
        %v538 = vcvt.s32.f32 %v474
        %v539 = vcvt.s32.f32 %v475
        %v540 = vcvt.s32.f32 %v476
        %v541 = vcvt.s32.f32 %v477
        %v542 = vperm.slane %v412, 2
        %vm543 = vcmp.eq.f32.partialorder %v542, %v478
        %vm544 = vcmp.eq.f32.partialorder %v542, %v479
        %vm545 = vcmp.eq.f32.partialorder %v542, %v480
        %vm546 = vcmp.eq.f32.partialorder %v542, %v481
        %vm547 = vcmp.eq.f32.partialorder %v542, %v482
        %vm548 = vcmp.eq.f32.partialorder %v542, %v483
        %vm549 = vcmp.eq.f32.partialorder %v542, %v484
        %vm550 = vcmp.eq.f32.partialorder %v542, %v485
        %vm551 = vcmp.eq.f32.partialorder %v542, %v486
        %vm552 = vcmp.eq.f32.partialorder %v542, %v487
        %vm553 = vcmp.eq.f32.partialorder %v542, %v488
        %vm554 = vcmp.eq.f32.partialorder %v542, %v489
        %vm555 = vcmp.eq.f32.partialorder %v542, %v490
        %vm556 = vcmp.eq.f32.partialorder %v542, %v491
        %vm557 = vcmp.eq.f32.partialorder %v542, %v492
        %vm558 = vcmp.eq.f32.partialorder %v542, %v493
        %vm559 = vcmp.eq.f32.partialorder %v542, %v494
        %vm560 = vcmp.eq.f32.partialorder %v542, %v495
        %vm561 = vcmp.eq.f32.partialorder %v542, %v496
        %vm562 = vcmp.eq.f32.partialorder %v542, %v497
        %vm563 = vcmp.eq.f32.partialorder %v542, %v498
        %vm564 = vcmp.eq.f32.partialorder %v542, %v499
        %vm565 = vcmp.eq.f32.partialorder %v542, %v500
        %vm566 = vcmp.eq.f32.partialorder %v542, %v501
        %vm567 = vcmp.eq.f32.partialorder %v542, %v502
        %vm568 = vcmp.eq.f32.partialorder %v542, %v503
        %vm569 = vcmp.eq.f32.partialorder %v542, %v504
        %vm570 = vcmp.eq.f32.partialorder %v542, %v505
        %vm571 = vcmp.eq.f32.partialorder %v542, %v506
        %vm572 = vcmp.eq.f32.partialorder %v542, %v507
        %vm573 = vcmp.eq.f32.partialorder %v542, %v508
        %vm574 = vcmp.eq.f32.partialorder %v542, %v509
        %vm575 = vcmp.eq.f32.partialorder %v542, %v510
        %vm576 = vcmp.eq.f32.partialorder %v542, %v511
        %vm577 = vcmp.eq.f32.partialorder %v542, %v512
        %vm578 = vcmp.eq.f32.partialorder %v542, %v513
        %vm579 = vcmp.eq.f32.partialorder %v542, %v514
        %vm580 = vcmp.eq.f32.partialorder %v542, %v515
        %vm581 = vcmp.eq.f32.partialorder %v542, %v516
        %vm582 = vcmp.eq.f32.partialorder %v542, %v517
        %vm583 = vcmp.eq.f32.partialorder %v542, %v518
        %vm584 = vcmp.eq.f32.partialorder %v542, %v519
        %vm585 = vcmp.eq.f32.partialorder %v542, %v520
        %vm586 = vcmp.eq.f32.partialorder %v542, %v521
        %vm587 = vcmp.eq.f32.partialorder %v542, %v522
        %vm588 = vcmp.eq.f32.partialorder %v542, %v523
        %vm589 = vcmp.eq.f32.partialorder %v542, %v524
        %vm590 = vcmp.eq.f32.partialorder %v542, %v525
        %vm591 = vcmp.eq.f32.partialorder %v542, %v526
        %vm592 = vcmp.eq.f32.partialorder %v542, %v527
        %vm593 = vcmp.eq.f32.partialorder %v542, %v528
        %vm594 = vcmp.eq.f32.partialorder %v542, %v529
        %vm595 = vcmp.eq.f32.partialorder %v542, %v530
        %vm596 = vcmp.eq.f32.partialorder %v542, %v531
        %vm597 = vcmp.eq.f32.partialorder %v542, %v532
        %vm598 = vcmp.eq.f32.partialorder %v542, %v533
        %vm599 = vcmp.eq.f32.partialorder %v542, %v534
        %vm600 = vcmp.eq.f32.partialorder %v542, %v535
        %vm601 = vcmp.eq.f32.partialorder %v542, %v536
        %vm602 = vcmp.eq.f32.partialorder %v542, %v537
        %vm603 = vcmp.eq.f32.partialorder %v542, %v538
        %vm604 = vcmp.eq.f32.partialorder %v542, %v539
        %vm605 = vcmp.eq.f32.partialorder %v542, %v540
        %vm606 = vcmp.eq.f32.partialorder %v542, %v541
        %vm607 = vcmp.gt.f32.partialorder %v322, 0.5
        %v608 = vsel %vm607, 1, 0
        %v609 = vperm.slane %v608, 2
        %vm610 = vcmp.eq.s32.totalorder %v609, 1
        %vm611 = vmand %vm543, %vm610
        %vm612 = vmand %vm544, %vm610
        %vm613 = vmand %vm545, %vm610
        %vm614 = vmand %vm546, %vm610
        %vm615 = vmand %vm547, %vm610
        %vm616 = vmand %vm548, %vm610
        %vm617 = vmand %vm549, %vm610
        %vm618 = vmand %vm550, %vm610
        %vm619 = vmand %vm551, %vm610
        %vm620 = vmand %vm552, %vm610
        %vm621 = vmand %vm553, %vm610
        %vm622 = vmand %vm554, %vm610
        %vm623 = vmand %vm555, %vm610
        %vm624 = vmand %vm556, %vm610
        %vm625 = vmand %vm557, %vm610
        %vm626 = vmand %vm558, %vm610
        %vm627 = vmand %vm559, %vm610
        %vm628 = vmand %vm560, %vm610
        %vm629 = vmand %vm561, %vm610
        %vm630 = vmand %vm562, %vm610
        %vm631 = vmand %vm563, %vm610
        %vm632 = vmand %vm564, %vm610
        %vm633 = vmand %vm565, %vm610
        %vm634 = vmand %vm566, %vm610
        %vm635 = vmand %vm567, %vm610
        %vm636 = vmand %vm568, %vm610
        %vm637 = vmand %vm569, %vm610
        %vm638 = vmand %vm570, %vm610
        %vm639 = vmand %vm571, %vm610
        %vm640 = vmand %vm572, %vm610
        %vm641 = vmand %vm573, %vm610
        %vm642 = vmand %vm574, %vm610
        %vm643 = vmand %vm575, %vm610
        %vm644 = vmand %vm576, %vm610
        %vm645 = vmand %vm577, %vm610
        %vm646 = vmand %vm578, %vm610
        %vm647 = vmand %vm579, %vm610
        %vm648 = vmand %vm580, %vm610
        %vm649 = vmand %vm581, %vm610
        %vm650 = vmand %vm582, %vm610
        %vm651 = vmand %vm583, %vm610
        %vm652 = vmand %vm584, %vm610
        %vm653 = vmand %vm585, %vm610
        %vm654 = vmand %vm586, %vm610
        %vm655 = vmand %vm587, %vm610
        %vm656 = vmand %vm588, %vm610
        %vm657 = vmand %vm589, %vm610
        %vm658 = vmand %vm590, %vm610
        %vm659 = vmand %vm591, %vm610
        %vm660 = vmand %vm592, %vm610
        %vm661 = vmand %vm593, %vm610
        %vm662 = vmand %vm594, %vm610
        %vm663 = vmand %vm595, %vm610
        %vm664 = vmand %vm596, %vm610
        %vm665 = vmand %vm597, %vm610
        %vm666 = vmand %vm598, %vm610
        %vm667 = vmand %vm599, %vm610
        %vm668 = vmand %vm600, %vm610
        %vm669 = vmand %vm601, %vm610
        %vm670 = vmand %vm602, %vm610
        %vm671 = vmand %vm603, %vm610
        %vm672 = vmand %vm604, %vm610
        %vm673 = vmand %vm605, %vm610
        %vm674 = vmand %vm606, %vm610
        %v675 = vsel %vm611, 1.0, 0.0
        %v676 = vsel %vm612, 1.0, 0.0
        %v677 = vsel %vm613, 1.0, 0.0
        %v678 = vsel %vm614, 1.0, 0.0
        %v679 = vsel %vm615, 1.0, 0.0
        %v680 = vsel %vm616, 1.0, 0.0
        %v681 = vsel %vm617, 1.0, 0.0
        %v682 = vsel %vm618, 1.0, 0.0
        %v683 = vsel %vm619, 1.0, 0.0
        %v684 = vsel %vm620, 1.0, 0.0
        %v685 = vsel %vm621, 1.0, 0.0
        %v686 = vsel %vm622, 1.0, 0.0
        %v687 = vsel %vm623, 1.0, 0.0
        %v688 = vsel %vm624, 1.0, 0.0
        %v689 = vsel %vm625, 1.0, 0.0
        %v690 = vsel %vm626, 1.0, 0.0
        %v691 = vsel %vm627, 1.0, 0.0
        %v692 = vsel %vm628, 1.0, 0.0
        %v693 = vsel %vm629, 1.0, 0.0
        %v694 = vsel %vm630, 1.0, 0.0
        %v695 = vsel %vm631, 1.0, 0.0
        %v696 = vsel %vm632, 1.0, 0.0
        %v697 = vsel %vm633, 1.0, 0.0
        %v698 = vsel %vm634, 1.0, 0.0
        %v699 = vsel %vm635, 1.0, 0.0
        %v700 = vsel %vm636, 1.0, 0.0
        %v701 = vsel %vm637, 1.0, 0.0
        %v702 = vsel %vm638, 1.0, 0.0
        %v703 = vsel %vm639, 1.0, 0.0
        %v704 = vsel %vm640, 1.0, 0.0
        %v705 = vsel %vm641, 1.0, 0.0
        %v706 = vsel %vm642, 1.0, 0.0
        %v707 = vsel %vm643, 1.0, 0.0
        %v708 = vsel %vm644, 1.0, 0.0
        %v709 = vsel %vm645, 1.0, 0.0
        %v710 = vsel %vm646, 1.0, 0.0
        %v711 = vsel %vm647, 1.0, 0.0
        %v712 = vsel %vm648, 1.0, 0.0
        %v713 = vsel %vm649, 1.0, 0.0
        %v714 = vsel %vm650, 1.0, 0.0
        %v715 = vsel %vm651, 1.0, 0.0
        %v716 = vsel %vm652, 1.0, 0.0
        %v717 = vsel %vm653, 1.0, 0.0
        %v718 = vsel %vm654, 1.0, 0.0
        %v719 = vsel %vm655, 1.0, 0.0
        %v720 = vsel %vm656, 1.0, 0.0
        %v721 = vsel %vm657, 1.0, 0.0
        %v722 = vsel %vm658, 1.0, 0.0
        %v723 = vsel %vm659, 1.0, 0.0
        %v724 = vsel %vm660, 1.0, 0.0
        %v725 = vsel %vm661, 1.0, 0.0
        %v726 = vsel %vm662, 1.0, 0.0
        %v727 = vsel %vm663, 1.0, 0.0
        %v728 = vsel %vm664, 1.0, 0.0
        %v729 = vsel %vm665, 1.0, 0.0
        %v730 = vsel %vm666, 1.0, 0.0
        %v731 = vsel %vm667, 1.0, 0.0
        %v732 = vsel %vm668, 1.0, 0.0
        %v733 = vsel %vm669, 1.0, 0.0
        %v734 = vsel %vm670, 1.0, 0.0
        %v735 = vsel %vm671, 1.0, 0.0
        %v736 = vsel %vm672, 1.0, 0.0
        %v737 = vsel %vm673, 1.0, 0.0
        %v738 = vsel %vm674, 1.0, 0.0
        %v739 = vld [vmem:[#allocation2] sm:$0x7f]
        %v740 = vld [vmem:[#allocation2 + $0x8] sm:$0x7f]
        %v741 = vld [vmem:[#allocation2 + $0x10] sm:$0x7f]
        %v742 = vld [vmem:[#allocation2 + $0x18] sm:$0x7f]
        %743 = vmatpush.xpose.msra.mxu0 %v690
        %744 = vmatpush.xpose.msra.mxu0 %v689
        %745 = vmatpush.xpose.msra.mxu0 %v688
        %746 = vmatpush.xpose.msra.mxu0 %v687
        %747 = vmatpush.xpose.msra.mxu0 %v686
        %748 = vmatpush.xpose.msra.mxu0 %v685
        %749 = vmatpush.xpose.msra.mxu0 %v684
        %750 = vmatpush.xpose.msra.mxu0 %v683
        %751 = vmatpush.xpose.msra.mxu0 %v682
        %752 = vmatpush.xpose.msra.mxu0 %v681
        %753 = vmatpush.xpose.msra.mxu0 %v680
        %754 = vmatpush.xpose.msra.mxu0 %v679
        %755 = vmatpush.xpose.msra.mxu0 %v678
        %756 = vmatpush.xpose.msra.mxu0 %v677
        %757 = vmatpush.xpose.msra.mxu0 %v676
        %758 = vmatpush.xpose.msra.mxu0 %v675
        %v759 = vand.u32 %v265, 4294901760
        %v760 = vsub.f32 %v265, %v759
        %v761 = vand.u32 %v760, 4294901760
        %v762 = vsub.f32 %v760, %v761
        %v763 = vand.u32 %v762, 4294901760
        %764 = vmatmul.f32.gmra.mxu0 %v763
        %v765 = vpop.f32.mrf.mxu0
        %v766 = vadd.f32 0.0, %v765
        %767 = vdwg.mxu0
        %v768 = vsub.f32 %v690, %v690
        %v769 = vand.u32 %v768, 4294901760
        %v770 = vsub.f32 %v768, %v769
        %v771 = vand.u32 %v770, 4294901760
        %772 = vmatpush.xpose.msra.mxu0 %v771
        %v773 = vsub.f32 %v689, %v689
        %v774 = vand.u32 %v773, 4294901760
        %v775 = vsub.f32 %v773, %v774
        %v776 = vand.u32 %v775, 4294901760
        %777 = vmatpush.xpose.msra.mxu0 %v776
        %v778 = vsub.f32 %v688, %v688
        %v779 = vand.u32 %v778, 4294901760
        %v780 = vsub.f32 %v778, %v779
        %v781 = vand.u32 %v780, 4294901760
        %782 = vmatpush.xpose.msra.mxu0 %v781
        %v783 = vsub.f32 %v687, %v687
        %v784 = vand.u32 %v783, 4294901760
        %v785 = vsub.f32 %v783, %v784
        %v786 = vand.u32 %v785, 4294901760
        %787 = vmatpush.xpose.msra.mxu0 %v786
        %v788 = vsub.f32 %v686, %v686
        %v789 = vand.u32 %v788, 4294901760
        %v790 = vsub.f32 %v788, %v789
        %v791 = vand.u32 %v790, 4294901760
        %792 = vmatpush.xpose.msra.mxu0 %v791
        %v793 = vsub.f32 %v685, %v685
        %v794 = vand.u32 %v793, 4294901760
        %v795 = vsub.f32 %v793, %v794
        %v796 = vand.u32 %v795, 4294901760
        %797 = vmatpush.xpose.msra.mxu0 %v796
        %v798 = vsub.f32 %v684, %v684
        %v799 = vand.u32 %v798, 4294901760
        %v800 = vsub.f32 %v798, %v799
        %v801 = vand.u32 %v800, 4294901760
        %802 = vmatpush.xpose.msra.mxu0 %v801
        %v803 = vsub.f32 %v683, %v683
        %v804 = vand.u32 %v803, 4294901760
        %v805 = vsub.f32 %v803, %v804
        %v806 = vand.u32 %v805, 4294901760
        %807 = vmatpush.xpose.msra.mxu0 %v806
        %v808 = vsub.f32 %v682, %v682
        %v809 = vand.u32 %v808, 4294901760
        %v810 = vsub.f32 %v808, %v809
        %v811 = vand.u32 %v810, 4294901760
        %812 = vmatpush.xpose.msra.mxu0 %v811
        %v813 = vsub.f32 %v681, %v681
        %v814 = vand.u32 %v813, 4294901760
        %v815 = vsub.f32 %v813, %v814
        %v816 = vand.u32 %v815, 4294901760
        %817 = vmatpush.xpose.msra.mxu0 %v816
        %v818 = vsub.f32 %v680, %v680
        %v819 = vand.u32 %v818, 4294901760
        %v820 = vsub.f32 %v818, %v819
        %v821 = vand.u32 %v820, 4294901760
        %822 = vmatpush.xpose.msra.mxu0 %v821
        %v823 = vsub.f32 %v679, %v679
        %v824 = vand.u32 %v823, 4294901760
        %v825 = vsub.f32 %v823, %v824
        %v826 = vand.u32 %v825, 4294901760
        %827 = vmatpush.xpose.msra.mxu0 %v826
        %v828 = vsub.f32 %v678, %v678
        %v829 = vand.u32 %v828, 4294901760
        %v830 = vsub.f32 %v828, %v829
        %v831 = vand.u32 %v830, 4294901760
        %832 = vmatpush.xpose.msra.mxu0 %v831
        %v833 = vsub.f32 %v677, %v677
        %v834 = vand.u32 %v833, 4294901760
        %v835 = vsub.f32 %v833, %v834
        %v836 = vand.u32 %v835, 4294901760
        %837 = vmatpush.xpose.msra.mxu0 %v836
        %v838 = vsub.f32 %v676, %v676
        %v839 = vand.u32 %v838, 4294901760
        %v840 = vsub.f32 %v838, %v839
        %v841 = vand.u32 %v840, 4294901760
        %842 = vmatpush.xpose.msra.mxu0 %v841
        %v843 = vsub.f32 %v675, %v675
        %v844 = vand.u32 %v843, 4294901760
        %v845 = vsub.f32 %v843, %v844
        %v846 = vand.u32 %v845, 4294901760
        %847 = vmatpush.xpose.msra.mxu0 %v846
        %v848 = vand.u32 %v265, 4294901760
        %849 = vmatmul.f32.gmra.mxu0 %v848
        %v850 = vpop.f32.mrf.mxu0
        %v851 = vadd.f32 %v766, %v850
        %852 = vdwg.mxu0
        %v853 = vsub.f32 %v690, %v690
        %854 = vmatpush.xpose.msra.mxu0 %v853
        %v855 = vsub.f32 %v689, %v689
        %856 = vmatpush.xpose.msra.mxu0 %v855
        %v857 = vsub.f32 %v688, %v688
        %858 = vmatpush.xpose.msra.mxu0 %v857
        %v859 = vsub.f32 %v687, %v687
        %860 = vmatpush.xpose.msra.mxu0 %v859
        %v861 = vsub.f32 %v686, %v686
        %862 = vmatpush.xpose.msra.mxu0 %v861
        %v863 = vsub.f32 %v685, %v685
        %864 = vmatpush.xpose.msra.mxu0 %v863
        %v865 = vsub.f32 %v684, %v684
        %866 = vmatpush.xpose.msra.mxu0 %v865
        %v867 = vsub.f32 %v683, %v683
        %868 = vmatpush.xpose.msra.mxu0 %v867
        %v869 = vsub.f32 %v682, %v682
        %870 = vmatpush.xpose.msra.mxu0 %v869
        %v871 = vsub.f32 %v681, %v681
        %872 = vmatpush.xpose.msra.mxu0 %v871
        %v873 = vsub.f32 %v680, %v680
        %874 = vmatpush.xpose.msra.mxu0 %v873
        %v875 = vsub.f32 %v679, %v679
        %876 = vmatpush.xpose.msra.mxu0 %v875
        %v877 = vsub.f32 %v678, %v678
        %878 = vmatpush.xpose.msra.mxu0 %v877
        %v879 = vsub.f32 %v677, %v677
        %880 = vmatpush.xpose.msra.mxu0 %v879
        %v881 = vsub.f32 %v676, %v676
        %882 = vmatpush.xpose.msra.mxu0 %v881
        %v883 = vsub.f32 %v675, %v675
        %884 = vmatpush.xpose.msra.mxu0 %v883
        %v885 = vand.u32 %v265, 4294901760
        %v886 = vsub.f32 %v265, %v885
        %887 = vmatmul.f32.gmra.mxu0 %v886
        %v888 = vpop.f32.mrf.mxu0
        %v889 = vadd.f32 %v851, %v888
        %890 = vdwg.mxu0
        %891 = vmatpush.xpose.msra.mxu0 %v690
        %892 = vmatpush.xpose.msra.mxu0 %v689
        %893 = vmatpush.xpose.msra.mxu0 %v688
        %894 = vmatpush.xpose.msra.mxu0 %v687
        %895 = vmatpush.xpose.msra.mxu0 %v686
        %896 = vmatpush.xpose.msra.mxu0 %v685
        %897 = vmatpush.xpose.msra.mxu0 %v684
        %898 = vmatpush.xpose.msra.mxu0 %v683
        %899 = vmatpush.xpose.msra.mxu0 %v682
        %900 = vmatpush.xpose.msra.mxu0 %v681
        %901 = vmatpush.xpose.msra.mxu0 %v680
        %902 = vmatpush.xpose.msra.mxu0 %v679
        %903 = vmatpush.xpose.msra.mxu0 %v678
        %904 = vmatpush.xpose.msra.mxu0 %v677
        %905 = vmatpush.xpose.msra.mxu0 %v676
        %906 = vmatpush.xpose.msra.mxu0 %v675
        %v907 = vand.u32 %v265, 4294901760
        %v908 = vsub.f32 %v265, %v907
        %v909 = vand.u32 %v908, 4294901760
        %910 = vmatmul.f32.gmra.mxu0 %v909
        %v911 = vpop.f32.mrf.mxu0
        %v912 = vadd.f32 %v889, %v911
        %913 = vdwg.mxu0
        %v914 = vsub.f32 %v690, %v690
        %v915 = vand.u32 %v914, 4294901760
        %916 = vmatpush.xpose.msra.mxu0 %v915
        %v917 = vsub.f32 %v689, %v689
        %v918 = vand.u32 %v917, 4294901760
        %919 = vmatpush.xpose.msra.mxu0 %v918
        %v920 = vsub.f32 %v688, %v688
        %v921 = vand.u32 %v920, 4294901760
        %922 = vmatpush.xpose.msra.mxu0 %v921
        %v923 = vsub.f32 %v687, %v687
        %v924 = vand.u32 %v923, 4294901760
        %925 = vmatpush.xpose.msra.mxu0 %v924
        %v926 = vsub.f32 %v686, %v686
        %v927 = vand.u32 %v926, 4294901760
        %928 = vmatpush.xpose.msra.mxu0 %v927
        %v929 = vsub.f32 %v685, %v685
        %v930 = vand.u32 %v929, 4294901760
        %931 = vmatpush.xpose.msra.mxu0 %v930
        %v932 = vsub.f32 %v684, %v684
        %v933 = vand.u32 %v932, 4294901760
        %934 = vmatpush.xpose.msra.mxu0 %v933
        %v935 = vsub.f32 %v683, %v683
        %v936 = vand.u32 %v935, 4294901760
        %937 = vmatpush.xpose.msra.mxu0 %v936
        %v938 = vsub.f32 %v682, %v682
        %v939 = vand.u32 %v938, 4294901760
        %940 = vmatpush.xpose.msra.mxu0 %v939
        %v941 = vsub.f32 %v681, %v681
        %v942 = vand.u32 %v941, 4294901760
        %943 = vmatpush.xpose.msra.mxu0 %v942
        %v944 = vsub.f32 %v680, %v680
        %v945 = vand.u32 %v944, 4294901760
        %946 = vmatpush.xpose.msra.mxu0 %v945
        %v947 = vsub.f32 %v679, %v679
        %v948 = vand.u32 %v947, 4294901760
        %949 = vmatpush.xpose.msra.mxu0 %v948
        %v950 = vsub.f32 %v678, %v678
        %v951 = vand.u32 %v950, 4294901760
        %952 = vmatpush.xpose.msra.mxu0 %v951
        %v953 = vsub.f32 %v677, %v677
        %v954 = vand.u32 %v953, 4294901760
        %955 = vmatpush.xpose.msra.mxu0 %v954
        %v956 = vsub.f32 %v676, %v676
        %v957 = vand.u32 %v956, 4294901760
        %958 = vmatpush.xpose.msra.mxu0 %v957
        %v959 = vsub.f32 %v675, %v675
        %v960 = vand.u32 %v959, 4294901760
        %961 = vmatpush.xpose.msra.mxu0 %v960
        %v962 = vand.u32 %v265, 4294901760
        %963 = vmatmul.f32.gmra.mxu0 %v962
        %v964 = vpop.f32.mrf.mxu0
        %v965 = vadd.f32 %v912, %v964
        %966 = vdwg.mxu0
        %967 = vmatpush.xpose.msra.mxu0 %v690
        %968 = vmatpush.xpose.msra.mxu0 %v689
        %969 = vmatpush.xpose.msra.mxu0 %v688
        %970 = vmatpush.xpose.msra.mxu0 %v687
        %971 = vmatpush.xpose.msra.mxu0 %v686
        %972 = vmatpush.xpose.msra.mxu0 %v685
        %973 = vmatpush.xpose.msra.mxu0 %v684
        %974 = vmatpush.xpose.msra.mxu0 %v683
        %975 = vmatpush.xpose.msra.mxu0 %v682
        %976 = vmatpush.xpose.msra.mxu0 %v681
        %977 = vmatpush.xpose.msra.mxu0 %v680
        %978 = vmatpush.xpose.msra.mxu0 %v679
        %979 = vmatpush.xpose.msra.mxu0 %v678
        %980 = vmatpush.xpose.msra.mxu0 %v677
        %981 = vmatpush.xpose.msra.mxu0 %v676
        %982 = vmatpush.xpose.msra.mxu0 %v675
        %v983 = vand.u32 %v265, 4294901760
        %984 = vmatmul.f32.gmra.mxu0 %v983
        %v985 = vpop.f32.mrf.mxu0
        %v986 = vadd.f32 %v965, %v985
        %987 = vdwg.mxu0
        %988 = vmatpush.xpose.msra.mxu0 %v706
        %989 = vmatpush.xpose.msra.mxu0 %v705
        %990 = vmatpush.xpose.msra.mxu0 %v704
        %991 = vmatpush.xpose.msra.mxu0 %v703
        %992 = vmatpush.xpose.msra.mxu0 %v702
        %993 = vmatpush.xpose.msra.mxu0 %v701
        %994 = vmatpush.xpose.msra.mxu0 %v700
        %995 = vmatpush.xpose.msra.mxu0 %v699
        %996 = vmatpush.xpose.msra.mxu0 %v698
        %997 = vmatpush.xpose.msra.mxu0 %v697
        %998 = vmatpush.xpose.msra.mxu0 %v696
        %999 = vmatpush.xpose.msra.mxu0 %v695
        %1000 = vmatpush.xpose.msra.mxu0 %v694
        %1001 = vmatpush.xpose.msra.mxu0 %v693
        %1002 = vmatpush.xpose.msra.mxu0 %v692
        %1003 = vmatpush.xpose.msra.mxu0 %v691
        %v1004 = vand.u32 %v265, 4294901760
        %v1005 = vsub.f32 %v265, %v1004
        %v1006 = vand.u32 %v1005, 4294901760
        %v1007 = vsub.f32 %v1005, %v1006
        %v1008 = vand.u32 %v1007, 4294901760
        %1009 = vmatmul.f32.gmra.mxu0 %v1008
        %v1010 = vpop.f32.mrf.mxu0
        %v1011 = vadd.f32 0.0, %v1010
        %1012 = vdwg.mxu0
        %v1013 = vsub.f32 %v706, %v706
        %v1014 = vand.u32 %v1013, 4294901760
        %v1015 = vsub.f32 %v1013, %v1014
        %v1016 = vand.u32 %v1015, 4294901760
        %1017 = vmatpush.xpose.msra.mxu0 %v1016
        %v1018 = vsub.f32 %v705, %v705
        %v1019 = vand.u32 %v1018, 4294901760
        %v1020 = vsub.f32 %v1018, %v1019
        %v1021 = vand.u32 %v1020, 4294901760
        %1022 = vmatpush.xpose.msra.mxu0 %v1021
        %v1023 = vsub.f32 %v704, %v704
        %v1024 = vand.u32 %v1023, 4294901760
        %v1025 = vsub.f32 %v1023, %v1024
        %v1026 = vand.u32 %v1025, 4294901760
        %1027 = vmatpush.xpose.msra.mxu0 %v1026
        %v1028 = vsub.f32 %v703, %v703
        %v1029 = vand.u32 %v1028, 4294901760
        %v1030 = vsub.f32 %v1028, %v1029
        %v1031 = vand.u32 %v1030, 4294901760
        %1032 = vmatpush.xpose.msra.mxu0 %v1031
        %v1033 = vsub.f32 %v702, %v702
        %v1034 = vand.u32 %v1033, 4294901760
        %v1035 = vsub.f32 %v1033, %v1034
        %v1036 = vand.u32 %v1035, 4294901760
        %1037 = vmatpush.xpose.msra.mxu0 %v1036
        %v1038 = vsub.f32 %v701, %v701
        %v1039 = vand.u32 %v1038, 4294901760
        %v1040 = vsub.f32 %v1038, %v1039
        %v1041 = vand.u32 %v1040, 4294901760
        %1042 = vmatpush.xpose.msra.mxu0 %v1041
        %v1043 = vsub.f32 %v700, %v700
        %v1044 = vand.u32 %v1043, 4294901760
        %v1045 = vsub.f32 %v1043, %v1044
        %v1046 = vand.u32 %v1045, 4294901760
        %1047 = vmatpush.xpose.msra.mxu0 %v1046
        %v1048 = vsub.f32 %v699, %v699
        %v1049 = vand.u32 %v1048, 4294901760
        %v1050 = vsub.f32 %v1048, %v1049
        %v1051 = vand.u32 %v1050, 4294901760
        %1052 = vmatpush.xpose.msra.mxu0 %v1051
        %v1053 = vsub.f32 %v698, %v698
        %v1054 = vand.u32 %v1053, 4294901760
        %v1055 = vsub.f32 %v1053, %v1054
        %v1056 = vand.u32 %v1055, 4294901760
        %1057 = vmatpush.xpose.msra.mxu0 %v1056
        %v1058 = vsub.f32 %v697, %v697
        %v1059 = vand.u32 %v1058, 4294901760
        %v1060 = vsub.f32 %v1058, %v1059
        %v1061 = vand.u32 %v1060, 4294901760
        %1062 = vmatpush.xpose.msra.mxu0 %v1061
        %v1063 = vsub.f32 %v696, %v696
        %v1064 = vand.u32 %v1063, 4294901760
        %v1065 = vsub.f32 %v1063, %v1064
        %v1066 = vand.u32 %v1065, 4294901760
        %1067 = vmatpush.xpose.msra.mxu0 %v1066
        %v1068 = vsub.f32 %v695, %v695
        %v1069 = vand.u32 %v1068, 4294901760
        %v1070 = vsub.f32 %v1068, %v1069
        %v1071 = vand.u32 %v1070, 4294901760
        %1072 = vmatpush.xpose.msra.mxu0 %v1071
        %v1073 = vsub.f32 %v694, %v694
        %v1074 = vand.u32 %v1073, 4294901760
        %v1075 = vsub.f32 %v1073, %v1074
        %v1076 = vand.u32 %v1075, 4294901760
        %1077 = vmatpush.xpose.msra.mxu0 %v1076
        %v1078 = vsub.f32 %v693, %v693
        %v1079 = vand.u32 %v1078, 4294901760
        %v1080 = vsub.f32 %v1078, %v1079
        %v1081 = vand.u32 %v1080, 4294901760
        %1082 = vmatpush.xpose.msra.mxu0 %v1081
        %v1083 = vsub.f32 %v692, %v692
        %v1084 = vand.u32 %v1083, 4294901760
        %v1085 = vsub.f32 %v1083, %v1084
        %v1086 = vand.u32 %v1085, 4294901760
        %1087 = vmatpush.xpose.msra.mxu0 %v1086
        %v1088 = vsub.f32 %v691, %v691
        %v1089 = vand.u32 %v1088, 4294901760
        %v1090 = vsub.f32 %v1088, %v1089
        %v1091 = vand.u32 %v1090, 4294901760
        %1092 = vmatpush.xpose.msra.mxu0 %v1091
        %v1093 = vand.u32 %v265, 4294901760
        %1094 = vmatmul.f32.gmra.mxu0 %v1093
        %v1095 = vpop.f32.mrf.mxu0
        %v1096 = vadd.f32 %v1011, %v1095
        %1097 = vdwg.mxu0
        %v1098 = vsub.f32 %v706, %v706
        %1099 = vmatpush.xpose.msra.mxu0 %v1098
        %v1100 = vsub.f32 %v705, %v705
        %1101 = vmatpush.xpose.msra.mxu0 %v1100
        %v1102 = vsub.f32 %v704, %v704
        %1103 = vmatpush.xpose.msra.mxu0 %v1102
        %v1104 = vsub.f32 %v703, %v703
        %1105 = vmatpush.xpose.msra.mxu0 %v1104
        %v1106 = vsub.f32 %v702, %v702
        %1107 = vmatpush.xpose.msra.mxu0 %v1106
        %v1108 = vsub.f32 %v701, %v701
        %1109 = vmatpush.xpose.msra.mxu0 %v1108
        %v1110 = vsub.f32 %v700, %v700
        %1111 = vmatpush.xpose.msra.mxu0 %v1110
        %v1112 = vsub.f32 %v699, %v699
        %1113 = vmatpush.xpose.msra.mxu0 %v1112
        %v1114 = vsub.f32 %v698, %v698
        %1115 = vmatpush.xpose.msra.mxu0 %v1114
        %v1116 = vsub.f32 %v697, %v697
        %1117 = vmatpush.xpose.msra.mxu0 %v1116
        %v1118 = vsub.f32 %v696, %v696
        %1119 = vmatpush.xpose.msra.mxu0 %v1118
        %v1120 = vsub.f32 %v695, %v695
        %1121 = vmatpush.xpose.msra.mxu0 %v1120
        %v1122 = vsub.f32 %v694, %v694
        %1123 = vmatpush.xpose.msra.mxu0 %v1122
        %v1124 = vsub.f32 %v693, %v693
        %1125 = vmatpush.xpose.msra.mxu0 %v1124
        %v1126 = vsub.f32 %v692, %v692
        %1127 = vmatpush.xpose.msra.mxu0 %v1126
        %v1128 = vsub.f32 %v691, %v691
        %1129 = vmatpush.xpose.msra.mxu0 %v1128
        %v1130 = vand.u32 %v265, 4294901760
        %v1131 = vsub.f32 %v265, %v1130
        %1132 = vmatmul.f32.gmra.mxu0 %v1131
        %v1133 = vpop.f32.mrf.mxu0
        %v1134 = vadd.f32 %v1096, %v1133
        %1135 = vdwg.mxu0
        %1136 = vmatpush.xpose.msra.mxu0 %v706
        %1137 = vmatpush.xpose.msra.mxu0 %v705
        %1138 = vmatpush.xpose.msra.mxu0 %v704
        %1139 = vmatpush.xpose.msra.mxu0 %v703
        %1140 = vmatpush.xpose.msra.mxu0 %v702
        %1141 = vmatpush.xpose.msra.mxu0 %v701
        %1142 = vmatpush.xpose.msra.mxu0 %v700
        %1143 = vmatpush.xpose.msra.mxu0 %v699
        %1144 = vmatpush.xpose.msra.mxu0 %v698
        %1145 = vmatpush.xpose.msra.mxu0 %v697
        %1146 = vmatpush.xpose.msra.mxu0 %v696
        %1147 = vmatpush.xpose.msra.mxu0 %v695
        %1148 = vmatpush.xpose.msra.mxu0 %v694
        %1149 = vmatpush.xpose.msra.mxu0 %v693
        %1150 = vmatpush.xpose.msra.mxu0 %v692
        %1151 = vmatpush.xpose.msra.mxu0 %v691
        %v1152 = vand.u32 %v265, 4294901760
        %v1153 = vsub.f32 %v265, %v1152
        %v1154 = vand.u32 %v1153, 4294901760
        %1155 = vmatmul.f32.gmra.mxu0 %v1154
        %v1156 = vpop.f32.mrf.mxu0
        %v1157 = vadd.f32 %v1134, %v1156
        %1158 = vdwg.mxu0
        %v1159 = vsub.f32 %v706, %v706
        %v1160 = vand.u32 %v1159, 4294901760
        %1161 = vmatpush.xpose.msra.mxu0 %v1160
        %v1162 = vsub.f32 %v705, %v705
        %v1163 = vand.u32 %v1162, 4294901760
        %1164 = vmatpush.xpose.msra.mxu0 %v1163
        %v1165 = vsub.f32 %v704, %v704
        %v1166 = vand.u32 %v1165, 4294901760
        %1167 = vmatpush.xpose.msra.mxu0 %v1166
        %v1168 = vsub.f32 %v703, %v703
        %v1169 = vand.u32 %v1168, 4294901760
        %1170 = vmatpush.xpose.msra.mxu0 %v1169
        %v1171 = vsub.f32 %v702, %v702
        %v1172 = vand.u32 %v1171, 4294901760
        %1173 = vmatpush.xpose.msra.mxu0 %v1172
        %v1174 = vsub.f32 %v701, %v701
        %v1175 = vand.u32 %v1174, 4294901760
        %1176 = vmatpush.xpose.msra.mxu0 %v1175
        %v1177 = vsub.f32 %v700, %v700
        %v1178 = vand.u32 %v1177, 4294901760
        %1179 = vmatpush.xpose.msra.mxu0 %v1178
        %v1180 = vsub.f32 %v699, %v699
        %v1181 = vand.u32 %v1180, 4294901760
        %1182 = vmatpush.xpose.msra.mxu0 %v1181
        %v1183 = vsub.f32 %v698, %v698
        %v1184 = vand.u32 %v1183, 4294901760
        %1185 = vmatpush.xpose.msra.mxu0 %v1184
        %v1186 = vsub.f32 %v697, %v697
        %v1187 = vand.u32 %v1186, 4294901760
        %1188 = vmatpush.xpose.msra.mxu0 %v1187
        %v1189 = vsub.f32 %v696, %v696
        %v1190 = vand.u32 %v1189, 4294901760
        %1191 = vmatpush.xpose.msra.mxu0 %v1190
        %v1192 = vsub.f32 %v695, %v695
        %v1193 = vand.u32 %v1192, 4294901760
        %1194 = vmatpush.xpose.msra.mxu0 %v1193
        %v1195 = vsub.f32 %v694, %v694
        %v1196 = vand.u32 %v1195, 4294901760
        %1197 = vmatpush.xpose.msra.mxu0 %v1196
        %v1198 = vsub.f32 %v693, %v693
        %v1199 = vand.u32 %v1198, 4294901760
        %1200 = vmatpush.xpose.msra.mxu0 %v1199
        %v1201 = vsub.f32 %v692, %v692
        %v1202 = vand.u32 %v1201, 4294901760
        %1203 = vmatpush.xpose.msra.mxu0 %v1202
        %v1204 = vsub.f32 %v691, %v691
        %v1205 = vand.u32 %v1204, 4294901760
        %1206 = vmatpush.xpose.msra.mxu0 %v1205
        %v1207 = vand.u32 %v265, 4294901760
        %1208 = vmatmul.f32.gmra.mxu0 %v1207
        %v1209 = vpop.f32.mrf.mxu0
        %v1210 = vadd.f32 %v1157, %v1209
        %1211 = vdwg.mxu0
        %1212 = vmatpush.xpose.msra.mxu0 %v706
        %1213 = vmatpush.xpose.msra.mxu0 %v705
        %1214 = vmatpush.xpose.msra.mxu0 %v704
        %1215 = vmatpush.xpose.msra.mxu0 %v703
        %1216 = vmatpush.xpose.msra.mxu0 %v702
        %1217 = vmatpush.xpose.msra.mxu0 %v701
        %1218 = vmatpush.xpose.msra.mxu0 %v700
        %1219 = vmatpush.xpose.msra.mxu0 %v699
        %1220 = vmatpush.xpose.msra.mxu0 %v698
        %1221 = vmatpush.xpose.msra.mxu0 %v697
        %1222 = vmatpush.xpose.msra.mxu0 %v696
        %1223 = vmatpush.xpose.msra.mxu0 %v695
        %1224 = vmatpush.xpose.msra.mxu0 %v694
        %1225 = vmatpush.xpose.msra.mxu0 %v693
        %1226 = vmatpush.xpose.msra.mxu0 %v692
        %1227 = vmatpush.xpose.msra.mxu0 %v691
        %v1228 = vand.u32 %v265, 4294901760
        %1229 = vmatmul.f32.gmra.mxu0 %v1228
        %v1230 = vpop.f32.mrf.mxu0
        %v1231 = vadd.f32 %v1210, %v1230
        %1232 = vdwg.mxu0
        %1233 = vmatpush.xpose.msra.mxu0 %v722
        %1234 = vmatpush.xpose.msra.mxu0 %v721
        %1235 = vmatpush.xpose.msra.mxu0 %v720
        %1236 = vmatpush.xpose.msra.mxu0 %v719
        %1237 = vmatpush.xpose.msra.mxu0 %v718
        %1238 = vmatpush.xpose.msra.mxu0 %v717
        %1239 = vmatpush.xpose.msra.mxu0 %v716
        %1240 = vmatpush.xpose.msra.mxu0 %v715
        %1241 = vmatpush.xpose.msra.mxu0 %v714
        %1242 = vmatpush.xpose.msra.mxu0 %v713
        %1243 = vmatpush.xpose.msra.mxu0 %v712
        %1244 = vmatpush.xpose.msra.mxu0 %v711
        %1245 = vmatpush.xpose.msra.mxu0 %v710
        %1246 = vmatpush.xpose.msra.mxu0 %v709
        %1247 = vmatpush.xpose.msra.mxu0 %v708
        %1248 = vmatpush.xpose.msra.mxu0 %v707
        %v1249 = vand.u32 %v265, 4294901760
        %v1250 = vsub.f32 %v265, %v1249
        %v1251 = vand.u32 %v1250, 4294901760
        %v1252 = vsub.f32 %v1250, %v1251
        %v1253 = vand.u32 %v1252, 4294901760
        %1254 = vmatmul.f32.gmra.mxu0 %v1253
        %v1255 = vpop.f32.mrf.mxu0
        %v1256 = vadd.f32 0.0, %v1255
        %1257 = vdwg.mxu0
        %v1258 = vsub.f32 %v722, %v722
        %v1259 = vand.u32 %v1258, 4294901760
        %v1260 = vsub.f32 %v1258, %v1259
        %v1261 = vand.u32 %v1260, 4294901760
        %1262 = vmatpush.xpose.msra.mxu0 %v1261
        %v1263 = vsub.f32 %v721, %v721
        %v1264 = vand.u32 %v1263, 4294901760
        %v1265 = vsub.f32 %v1263, %v1264
        %v1266 = vand.u32 %v1265, 4294901760
        %1267 = vmatpush.xpose.msra.mxu0 %v1266
        %v1268 = vsub.f32 %v720, %v720
        %v1269 = vand.u32 %v1268, 4294901760
        %v1270 = vsub.f32 %v1268, %v1269
        %v1271 = vand.u32 %v1270, 4294901760
        %1272 = vmatpush.xpose.msra.mxu0 %v1271
        %v1273 = vsub.f32 %v719, %v719
        %v1274 = vand.u32 %v1273, 4294901760
        %v1275 = vsub.f32 %v1273, %v1274
        %v1276 = vand.u32 %v1275, 4294901760
        %1277 = vmatpush.xpose.msra.mxu0 %v1276
        %v1278 = vsub.f32 %v718, %v718
        %v1279 = vand.u32 %v1278, 4294901760
        %v1280 = vsub.f32 %v1278, %v1279
        %v1281 = vand.u32 %v1280, 4294901760
        %1282 = vmatpush.xpose.msra.mxu0 %v1281
        %v1283 = vsub.f32 %v717, %v717
        %v1284 = vand.u32 %v1283, 4294901760
        %v1285 = vsub.f32 %v1283, %v1284
        %v1286 = vand.u32 %v1285, 4294901760
        %1287 = vmatpush.xpose.msra.mxu0 %v1286
        %v1288 = vsub.f32 %v716, %v716
        %v1289 = vand.u32 %v1288, 4294901760
        %v1290 = vsub.f32 %v1288, %v1289
        %v1291 = vand.u32 %v1290, 4294901760
        %1292 = vmatpush.xpose.msra.mxu0 %v1291
        %v1293 = vsub.f32 %v715, %v715
        %v1294 = vand.u32 %v1293, 4294901760
        %v1295 = vsub.f32 %v1293, %v1294
        %v1296 = vand.u32 %v1295, 4294901760
        %1297 = vmatpush.xpose.msra.mxu0 %v1296
        %v1298 = vsub.f32 %v714, %v714
        %v1299 = vand.u32 %v1298, 4294901760
        %v1300 = vsub.f32 %v1298, %v1299
        %v1301 = vand.u32 %v1300, 4294901760
        %1302 = vmatpush.xpose.msra.mxu0 %v1301
        %v1303 = vsub.f32 %v713, %v713
        %v1304 = vand.u32 %v1303, 4294901760
        %v1305 = vsub.f32 %v1303, %v1304
        %v1306 = vand.u32 %v1305, 4294901760
        %1307 = vmatpush.xpose.msra.mxu0 %v1306
        %v1308 = vsub.f32 %v712, %v712
        %v1309 = vand.u32 %v1308, 4294901760
        %v1310 = vsub.f32 %v1308, %v1309
        %v1311 = vand.u32 %v1310, 4294901760
        %1312 = vmatpush.xpose.msra.mxu0 %v1311
        %v1313 = vsub.f32 %v711, %v711
        %v1314 = vand.u32 %v1313, 4294901760
        %v1315 = vsub.f32 %v1313, %v1314
        %v1316 = vand.u32 %v1315, 4294901760
        %1317 = vmatpush.xpose.msra.mxu0 %v1316
        %v1318 = vsub.f32 %v710, %v710
        %v1319 = vand.u32 %v1318, 4294901760
        %v1320 = vsub.f32 %v1318, %v1319
        %v1321 = vand.u32 %v1320, 4294901760
        %1322 = vmatpush.xpose.msra.mxu0 %v1321
        %v1323 = vsub.f32 %v709, %v709
        %v1324 = vand.u32 %v1323, 4294901760
        %v1325 = vsub.f32 %v1323, %v1324
        %v1326 = vand.u32 %v1325, 4294901760
        %1327 = vmatpush.xpose.msra.mxu0 %v1326
        %v1328 = vsub.f32 %v708, %v708
        %v1329 = vand.u32 %v1328, 4294901760
        %v1330 = vsub.f32 %v1328, %v1329
        %v1331 = vand.u32 %v1330, 4294901760
        %1332 = vmatpush.xpose.msra.mxu0 %v1331
        %v1333 = vsub.f32 %v707, %v707
        %v1334 = vand.u32 %v1333, 4294901760
        %v1335 = vsub.f32 %v1333, %v1334
        %v1336 = vand.u32 %v1335, 4294901760
        %1337 = vmatpush.xpose.msra.mxu0 %v1336
        %v1338 = vand.u32 %v265, 4294901760
        %1339 = vmatmul.f32.gmra.mxu0 %v1338
        %v1340 = vpop.f32.mrf.mxu0
        %v1341 = vadd.f32 %v1256, %v1340
        %1342 = vdwg.mxu0
        %v1343 = vsub.f32 %v722, %v722
        %1344 = vmatpush.xpose.msra.mxu0 %v1343
        %v1345 = vsub.f32 %v721, %v721
        %1346 = vmatpush.xpose.msra.mxu0 %v1345
        %v1347 = vsub.f32 %v720, %v720
        %1348 = vmatpush.xpose.msra.mxu0 %v1347
        %v1349 = vsub.f32 %v719, %v719
        %1350 = vmatpush.xpose.msra.mxu0 %v1349
        %v1351 = vsub.f32 %v718, %v718
        %1352 = vmatpush.xpose.msra.mxu0 %v1351
        %v1353 = vsub.f32 %v717, %v717
        %1354 = vmatpush.xpose.msra.mxu0 %v1353
        %v1355 = vsub.f32 %v716, %v716
        %1356 = vmatpush.xpose.msra.mxu0 %v1355
        %v1357 = vsub.f32 %v715, %v715
        %1358 = vmatpush.xpose.msra.mxu0 %v1357
        %v1359 = vsub.f32 %v714, %v714
        %1360 = vmatpush.xpose.msra.mxu0 %v1359
        %v1361 = vsub.f32 %v713, %v713
        %1362 = vmatpush.xpose.msra.mxu0 %v1361
        %v1363 = vsub.f32 %v712, %v712
        %1364 = vmatpush.xpose.msra.mxu0 %v1363
        %v1365 = vsub.f32 %v711, %v711
        %1366 = vmatpush.xpose.msra.mxu0 %v1365
        %v1367 = vsub.f32 %v710, %v710
        %1368 = vmatpush.xpose.msra.mxu0 %v1367
        %v1369 = vsub.f32 %v709, %v709
        %1370 = vmatpush.xpose.msra.mxu0 %v1369
        %v1371 = vsub.f32 %v708, %v708
        %1372 = vmatpush.xpose.msra.mxu0 %v1371
        %v1373 = vsub.f32 %v707, %v707
        %1374 = vmatpush.xpose.msra.mxu0 %v1373
        %v1375 = vand.u32 %v265, 4294901760
        %v1376 = vsub.f32 %v265, %v1375
        %1377 = vmatmul.f32.gmra.mxu0 %v1376
        %v1378 = vpop.f32.mrf.mxu0
        %v1379 = vadd.f32 %v1341, %v1378
        %1380 = vdwg.mxu0
        %1381 = vmatpush.xpose.msra.mxu0 %v722
        %1382 = vmatpush.xpose.msra.mxu0 %v721
        %1383 = vmatpush.xpose.msra.mxu0 %v720
        %1384 = vmatpush.xpose.msra.mxu0 %v719
        %1385 = vmatpush.xpose.msra.mxu0 %v718
        %1386 = vmatpush.xpose.msra.mxu0 %v717
        %1387 = vmatpush.xpose.msra.mxu0 %v716
        %1388 = vmatpush.xpose.msra.mxu0 %v715
        %1389 = vmatpush.xpose.msra.mxu0 %v714
        %1390 = vmatpush.xpose.msra.mxu0 %v713
        %1391 = vmatpush.xpose.msra.mxu0 %v712
        %1392 = vmatpush.xpose.msra.mxu0 %v711
        %1393 = vmatpush.xpose.msra.mxu0 %v710
        %1394 = vmatpush.xpose.msra.mxu0 %v709
        %1395 = vmatpush.xpose.msra.mxu0 %v708
        %1396 = vmatpush.xpose.msra.mxu0 %v707
        %v1397 = vand.u32 %v265, 4294901760
        %v1398 = vsub.f32 %v265, %v1397
        %v1399 = vand.u32 %v1398, 4294901760
        %1400 = vmatmul.f32.gmra.mxu0 %v1399
        %v1401 = vpop.f32.mrf.mxu0
        %v1402 = vadd.f32 %v1379, %v1401
        %1403 = vdwg.mxu0
        %v1404 = vsub.f32 %v722, %v722
        %v1405 = vand.u32 %v1404, 4294901760
        %1406 = vmatpush.xpose.msra.mxu0 %v1405
        %v1407 = vsub.f32 %v721, %v721
        %v1408 = vand.u32 %v1407, 4294901760
        %1409 = vmatpush.xpose.msra.mxu0 %v1408
        %v1410 = vsub.f32 %v720, %v720
        %v1411 = vand.u32 %v1410, 4294901760
        %1412 = vmatpush.xpose.msra.mxu0 %v1411
        %v1413 = vsub.f32 %v719, %v719
        %v1414 = vand.u32 %v1413, 4294901760
        %1415 = vmatpush.xpose.msra.mxu0 %v1414
        %v1416 = vsub.f32 %v718, %v718
        %v1417 = vand.u32 %v1416, 4294901760
        %1418 = vmatpush.xpose.msra.mxu0 %v1417
        %v1419 = vsub.f32 %v717, %v717
        %v1420 = vand.u32 %v1419, 4294901760
        %1421 = vmatpush.xpose.msra.mxu0 %v1420
        %v1422 = vsub.f32 %v716, %v716
        %v1423 = vand.u32 %v1422, 4294901760
        %1424 = vmatpush.xpose.msra.mxu0 %v1423
        %v1425 = vsub.f32 %v715, %v715
        %v1426 = vand.u32 %v1425, 4294901760
        %1427 = vmatpush.xpose.msra.mxu0 %v1426
        %v1428 = vsub.f32 %v714, %v714
        %v1429 = vand.u32 %v1428, 4294901760
        %1430 = vmatpush.xpose.msra.mxu0 %v1429
        %v1431 = vsub.f32 %v713, %v713
        %v1432 = vand.u32 %v1431, 4294901760
        %1433 = vmatpush.xpose.msra.mxu0 %v1432
        %v1434 = vsub.f32 %v712, %v712
        %v1435 = vand.u32 %v1434, 4294901760
        %1436 = vmatpush.xpose.msra.mxu0 %v1435
        %v1437 = vsub.f32 %v711, %v711
        %v1438 = vand.u32 %v1437, 4294901760
        %1439 = vmatpush.xpose.msra.mxu0 %v1438
        %v1440 = vsub.f32 %v710, %v710
        %v1441 = vand.u32 %v1440, 4294901760
        %1442 = vmatpush.xpose.msra.mxu0 %v1441
        %v1443 = vsub.f32 %v709, %v709
        %v1444 = vand.u32 %v1443, 4294901760
        %1445 = vmatpush.xpose.msra.mxu0 %v1444
        %v1446 = vsub.f32 %v708, %v708
        %v1447 = vand.u32 %v1446, 4294901760
        %1448 = vmatpush.xpose.msra.mxu0 %v1447
        %v1449 = vsub.f32 %v707, %v707
        %v1450 = vand.u32 %v1449, 4294901760
        %1451 = vmatpush.xpose.msra.mxu0 %v1450
        %v1452 = vand.u32 %v265, 4294901760
        %1453 = vmatmul.f32.gmra.mxu0 %v1452
        %v1454 = vpop.f32.mrf.mxu0
        %v1455 = vadd.f32 %v1402, %v1454
        %1456 = vdwg.mxu0
        %1457 = vmatpush.xpose.msra.mxu0 %v722
        %1458 = vmatpush.xpose.msra.mxu0 %v721
        %1459 = vmatpush.xpose.msra.mxu0 %v720
        %1460 = vmatpush.xpose.msra.mxu0 %v719
        %1461 = vmatpush.xpose.msra.mxu0 %v718
        %1462 = vmatpush.xpose.msra.mxu0 %v717
        %1463 = vmatpush.xpose.msra.mxu0 %v716
        %1464 = vmatpush.xpose.msra.mxu0 %v715
        %1465 = vmatpush.xpose.msra.mxu0 %v714
        %1466 = vmatpush.xpose.msra.mxu0 %v713
        %1467 = vmatpush.xpose.msra.mxu0 %v712
        %1468 = vmatpush.xpose.msra.mxu0 %v711
        %1469 = vmatpush.xpose.msra.mxu0 %v710
        %1470 = vmatpush.xpose.msra.mxu0 %v709
        %1471 = vmatpush.xpose.msra.mxu0 %v708
        %1472 = vmatpush.xpose.msra.mxu0 %v707
        %v1473 = vand.u32 %v265, 4294901760
        %1474 = vmatmul.f32.gmra.mxu0 %v1473
        %v1475 = vpop.f32.mrf.mxu0
        %v1476 = vadd.f32 %v1455, %v1475
        %1477 = vdwg.mxu0
        %1478 = vmatpush.xpose.msra.mxu0 %v738
        %1479 = vmatpush.xpose.msra.mxu0 %v737
        %1480 = vmatpush.xpose.msra.mxu0 %v736
        %1481 = vmatpush.xpose.msra.mxu0 %v735
        %1482 = vmatpush.xpose.msra.mxu0 %v734
        %1483 = vmatpush.xpose.msra.mxu0 %v733
        %1484 = vmatpush.xpose.msra.mxu0 %v732
        %1485 = vmatpush.xpose.msra.mxu0 %v731
        %1486 = vmatpush.xpose.msra.mxu0 %v730
        %1487 = vmatpush.xpose.msra.mxu0 %v729
        %1488 = vmatpush.xpose.msra.mxu0 %v728
        %1489 = vmatpush.xpose.msra.mxu0 %v727
        %1490 = vmatpush.xpose.msra.mxu0 %v726
        %1491 = vmatpush.xpose.msra.mxu0 %v725
        %1492 = vmatpush.xpose.msra.mxu0 %v724
        %1493 = vmatpush.xpose.msra.mxu0 %v723
        %v1494 = vand.u32 %v265, 4294901760
        %v1495 = vsub.f32 %v265, %v1494
        %v1496 = vand.u32 %v1495, 4294901760
        %v1497 = vsub.f32 %v1495, %v1496
        %v1498 = vand.u32 %v1497, 4294901760
        %1499 = vmatmul.f32.gmra.mxu0 %v1498
        %v1500 = vpop.f32.mrf.mxu0
        %v1501 = vadd.f32 0.0, %v1500
        %1502 = vdwg.mxu0
        %v1503 = vsub.f32 %v738, %v738
        %v1504 = vand.u32 %v1503, 4294901760
        %v1505 = vsub.f32 %v1503, %v1504
        %v1506 = vand.u32 %v1505, 4294901760
        %1507 = vmatpush.xpose.msra.mxu0 %v1506
        %v1508 = vsub.f32 %v737, %v737
        %v1509 = vand.u32 %v1508, 4294901760
        %v1510 = vsub.f32 %v1508, %v1509
        %v1511 = vand.u32 %v1510, 4294901760
        %1512 = vmatpush.xpose.msra.mxu0 %v1511
        %v1513 = vsub.f32 %v736, %v736
        %v1514 = vand.u32 %v1513, 4294901760
        %v1515 = vsub.f32 %v1513, %v1514
        %v1516 = vand.u32 %v1515, 4294901760
        %1517 = vmatpush.xpose.msra.mxu0 %v1516
        %v1518 = vsub.f32 %v735, %v735
        %v1519 = vand.u32 %v1518, 4294901760
        %v1520 = vsub.f32 %v1518, %v1519
        %v1521 = vand.u32 %v1520, 4294901760
        %1522 = vmatpush.xpose.msra.mxu0 %v1521
        %v1523 = vsub.f32 %v734, %v734
        %v1524 = vand.u32 %v1523, 4294901760
        %v1525 = vsub.f32 %v1523, %v1524
        %v1526 = vand.u32 %v1525, 4294901760
        %1527 = vmatpush.xpose.msra.mxu0 %v1526
        %v1528 = vsub.f32 %v733, %v733
        %v1529 = vand.u32 %v1528, 4294901760
        %v1530 = vsub.f32 %v1528, %v1529
        %v1531 = vand.u32 %v1530, 4294901760
        %1532 = vmatpush.xpose.msra.mxu0 %v1531
        %v1533 = vsub.f32 %v732, %v732
        %v1534 = vand.u32 %v1533, 4294901760
        %v1535 = vsub.f32 %v1533, %v1534
        %v1536 = vand.u32 %v1535, 4294901760
        %1537 = vmatpush.xpose.msra.mxu0 %v1536
        %v1538 = vsub.f32 %v731, %v731
        %v1539 = vand.u32 %v1538, 4294901760
        %v1540 = vsub.f32 %v1538, %v1539
        %v1541 = vand.u32 %v1540, 4294901760
        %1542 = vmatpush.xpose.msra.mxu0 %v1541
        %v1543 = vsub.f32 %v730, %v730
        %v1544 = vand.u32 %v1543, 4294901760
        %v1545 = vsub.f32 %v1543, %v1544
        %v1546 = vand.u32 %v1545, 4294901760
        %1547 = vmatpush.xpose.msra.mxu0 %v1546
        %v1548 = vsub.f32 %v729, %v729
        %v1549 = vand.u32 %v1548, 4294901760
        %v1550 = vsub.f32 %v1548, %v1549
        %v1551 = vand.u32 %v1550, 4294901760
        %1552 = vmatpush.xpose.msra.mxu0 %v1551
        %v1553 = vsub.f32 %v728, %v728
        %v1554 = vand.u32 %v1553, 4294901760
        %v1555 = vsub.f32 %v1553, %v1554
        %v1556 = vand.u32 %v1555, 4294901760
        %1557 = vmatpush.xpose.msra.mxu0 %v1556
        %v1558 = vsub.f32 %v727, %v727
        %v1559 = vand.u32 %v1558, 4294901760
        %v1560 = vsub.f32 %v1558, %v1559
        %v1561 = vand.u32 %v1560, 4294901760
        %1562 = vmatpush.xpose.msra.mxu0 %v1561
        %v1563 = vsub.f32 %v726, %v726
        %v1564 = vand.u32 %v1563, 4294901760
        %v1565 = vsub.f32 %v1563, %v1564
        %v1566 = vand.u32 %v1565, 4294901760
        %1567 = vmatpush.xpose.msra.mxu0 %v1566
        %v1568 = vsub.f32 %v725, %v725
        %v1569 = vand.u32 %v1568, 4294901760
        %v1570 = vsub.f32 %v1568, %v1569
        %v1571 = vand.u32 %v1570, 4294901760
        %1572 = vmatpush.xpose.msra.mxu0 %v1571
        %v1573 = vsub.f32 %v724, %v724
        %v1574 = vand.u32 %v1573, 4294901760
        %v1575 = vsub.f32 %v1573, %v1574
        %v1576 = vand.u32 %v1575, 4294901760
        %1577 = vmatpush.xpose.msra.mxu0 %v1576
        %v1578 = vsub.f32 %v723, %v723
        %v1579 = vand.u32 %v1578, 4294901760
        %v1580 = vsub.f32 %v1578, %v1579
        %v1581 = vand.u32 %v1580, 4294901760
        %1582 = vmatpush.xpose.msra.mxu0 %v1581
        %v1583 = vand.u32 %v265, 4294901760
        %1584 = vmatmul.f32.gmra.mxu0 %v1583
        %v1585 = vpop.f32.mrf.mxu0
        %v1586 = vadd.f32 %v1501, %v1585
        %1587 = vdwg.mxu0
        %v1588 = vsub.f32 %v738, %v738
        %1589 = vmatpush.xpose.msra.mxu0 %v1588
        %v1590 = vsub.f32 %v737, %v737
        %1591 = vmatpush.xpose.msra.mxu0 %v1590
        %v1592 = vsub.f32 %v736, %v736
        %1593 = vmatpush.xpose.msra.mxu0 %v1592
        %v1594 = vsub.f32 %v735, %v735
        %1595 = vmatpush.xpose.msra.mxu0 %v1594
        %v1596 = vsub.f32 %v734, %v734
        %1597 = vmatpush.xpose.msra.mxu0 %v1596
        %v1598 = vsub.f32 %v733, %v733
        %1599 = vmatpush.xpose.msra.mxu0 %v1598
        %v1600 = vsub.f32 %v732, %v732
        %1601 = vmatpush.xpose.msra.mxu0 %v1600
        %v1602 = vsub.f32 %v731, %v731
        %1603 = vmatpush.xpose.msra.mxu0 %v1602
        %v1604 = vsub.f32 %v730, %v730
        %1605 = vmatpush.xpose.msra.mxu0 %v1604
        %v1606 = vsub.f32 %v729, %v729
        %1607 = vmatpush.xpose.msra.mxu0 %v1606
        %v1608 = vsub.f32 %v728, %v728
        %1609 = vmatpush.xpose.msra.mxu0 %v1608
        %v1610 = vsub.f32 %v727, %v727
        %1611 = vmatpush.xpose.msra.mxu0 %v1610
        %v1612 = vsub.f32 %v726, %v726
        %1613 = vmatpush.xpose.msra.mxu0 %v1612
        %v1614 = vsub.f32 %v725, %v725
        %1615 = vmatpush.xpose.msra.mxu0 %v1614
        %v1616 = vsub.f32 %v724, %v724
        %1617 = vmatpush.xpose.msra.mxu0 %v1616
        %v1618 = vsub.f32 %v723, %v723
        %1619 = vmatpush.xpose.msra.mxu0 %v1618
        %v1620 = vand.u32 %v265, 4294901760
        %v1621 = vsub.f32 %v265, %v1620
        %1622 = vmatmul.f32.gmra.mxu0 %v1621
        %v1623 = vpop.f32.mrf.mxu0
        %v1624 = vadd.f32 %v1586, %v1623
        %1625 = vdwg.mxu0
        %1626 = vmatpush.xpose.msra.mxu0 %v738
        %1627 = vmatpush.xpose.msra.mxu0 %v737
        %1628 = vmatpush.xpose.msra.mxu0 %v736
        %1629 = vmatpush.xpose.msra.mxu0 %v735
        %1630 = vmatpush.xpose.msra.mxu0 %v734
        %1631 = vmatpush.xpose.msra.mxu0 %v733
        %1632 = vmatpush.xpose.msra.mxu0 %v732
        %1633 = vmatpush.xpose.msra.mxu0 %v731
        %1634 = vmatpush.xpose.msra.mxu0 %v730
        %1635 = vmatpush.xpose.msra.mxu0 %v729
        %1636 = vmatpush.xpose.msra.mxu0 %v728
        %1637 = vmatpush.xpose.msra.mxu0 %v727
        %1638 = vmatpush.xpose.msra.mxu0 %v726
        %1639 = vmatpush.xpose.msra.mxu0 %v725
        %1640 = vmatpush.xpose.msra.mxu0 %v724
        %1641 = vmatpush.xpose.msra.mxu0 %v723
        %v1642 = vand.u32 %v265, 4294901760
        %v1643 = vsub.f32 %v265, %v1642
        %v1644 = vand.u32 %v1643, 4294901760
        %1645 = vmatmul.f32.gmra.mxu0 %v1644
        %v1646 = vpop.f32.mrf.mxu0
        %v1647 = vadd.f32 %v1624, %v1646
        %1648 = vdwg.mxu0
        %v1649 = vsub.f32 %v738, %v738
        %v1650 = vand.u32 %v1649, 4294901760
        %1651 = vmatpush.xpose.msra.mxu0 %v1650
        %v1652 = vsub.f32 %v737, %v737
        %v1653 = vand.u32 %v1652, 4294901760
        %1654 = vmatpush.xpose.msra.mxu0 %v1653
        %v1655 = vsub.f32 %v736, %v736
        %v1656 = vand.u32 %v1655, 4294901760
        %1657 = vmatpush.xpose.msra.mxu0 %v1656
        %v1658 = vsub.f32 %v735, %v735
        %v1659 = vand.u32 %v1658, 4294901760
        %1660 = vmatpush.xpose.msra.mxu0 %v1659
        %v1661 = vsub.f32 %v734, %v734
        %v1662 = vand.u32 %v1661, 4294901760
        %1663 = vmatpush.xpose.msra.mxu0 %v1662
        %v1664 = vsub.f32 %v733, %v733
        %v1665 = vand.u32 %v1664, 4294901760
        %1666 = vmatpush.xpose.msra.mxu0 %v1665
        %v1667 = vsub.f32 %v732, %v732
        %v1668 = vand.u32 %v1667, 4294901760
        %1669 = vmatpush.xpose.msra.mxu0 %v1668
        %v1670 = vsub.f32 %v731, %v731
        %v1671 = vand.u32 %v1670, 4294901760
        %1672 = vmatpush.xpose.msra.mxu0 %v1671
        %v1673 = vsub.f32 %v730, %v730
        %v1674 = vand.u32 %v1673, 4294901760
        %1675 = vmatpush.xpose.msra.mxu0 %v1674
        %v1676 = vsub.f32 %v729, %v729
        %v1677 = vand.u32 %v1676, 4294901760
        %1678 = vmatpush.xpose.msra.mxu0 %v1677
        %v1679 = vsub.f32 %v728, %v728
        %v1680 = vand.u32 %v1679, 4294901760
        %1681 = vmatpush.xpose.msra.mxu0 %v1680
        %v1682 = vsub.f32 %v727, %v727
        %v1683 = vand.u32 %v1682, 4294901760
        %1684 = vmatpush.xpose.msra.mxu0 %v1683
        %v1685 = vsub.f32 %v726, %v726
        %v1686 = vand.u32 %v1685, 4294901760
        %1687 = vmatpush.xpose.msra.mxu0 %v1686
        %v1688 = vsub.f32 %v725, %v725
        %v1689 = vand.u32 %v1688, 4294901760
        %1690 = vmatpush.xpose.msra.mxu0 %v1689
        %v1691 = vsub.f32 %v724, %v724
        %v1692 = vand.u32 %v1691, 4294901760
        %1693 = vmatpush.xpose.msra.mxu0 %v1692
        %v1694 = vsub.f32 %v723, %v723
        %v1695 = vand.u32 %v1694, 4294901760
        %1696 = vmatpush.xpose.msra.mxu0 %v1695
        %v1697 = vand.u32 %v265, 4294901760
        %1698 = vmatmul.f32.gmra.mxu0 %v1697
        %v1699 = vpop.f32.mrf.mxu0
        %v1700 = vadd.f32 %v1647, %v1699
        %1701 = vdwg.mxu0
        %1702 = vmatpush.xpose.msra.mxu0 %v738
        %1703 = vmatpush.xpose.msra.mxu0 %v737
        %1704 = vmatpush.xpose.msra.mxu0 %v736
        %1705 = vmatpush.xpose.msra.mxu0 %v735
        %1706 = vmatpush.xpose.msra.mxu0 %v734
        %1707 = vmatpush.xpose.msra.mxu0 %v733
        %1708 = vmatpush.xpose.msra.mxu0 %v732
        %1709 = vmatpush.xpose.msra.mxu0 %v731
        %1710 = vmatpush.xpose.msra.mxu0 %v730
        %1711 = vmatpush.xpose.msra.mxu0 %v729
        %1712 = vmatpush.xpose.msra.mxu0 %v728
        %1713 = vmatpush.xpose.msra.mxu0 %v727
        %1714 = vmatpush.xpose.msra.mxu0 %v726
        %1715 = vmatpush.xpose.msra.mxu0 %v725
        %1716 = vmatpush.xpose.msra.mxu0 %v724
        %1717 = vmatpush.xpose.msra.mxu0 %v723
        %v1718 = vand.u32 %v265, 4294901760
        %1719 = vmatmul.f32.gmra.mxu0 %v1718
        %v1720 = vpop.f32.mrf.mxu0
        %v1721 = vadd.f32 %v1700, %v1720
        %1722 = vdwg.mxu0
        %v1723 = vadd.f32 %v739, %v986
        %v1724 = vadd.f32 %v740, %v1231
        %v1725 = vadd.f32 %v741, %v1476
        %v1726 = vadd.f32 %v742, %v1721
        %1727 = vst [vmem:[#allocation2] sm:$0x7f] %v1723
        %1728 = vst [vmem:[#allocation2 + $0x8] sm:$0x7f] %v1724
        %1729 = vst [vmem:[#allocation2 + $0x10] sm:$0x7f] %v1725
        %1730 = vst [vmem:[#allocation2 + $0x18] sm:$0x7f] %v1726
        %v1732 = vperm.slane %v403, 2
        %v1734 = vadd.f32 %v404, %v1732
        %vm1735 = vcmask 0
        %1736 = vst.msk [vmem:[#allocation3] sm:$0x1] %vm1735, %v1734
        %p1737 = scmp.eq.s32.totalorder %s26, 2
        // Predicated region
        $region37: #{tpu_custom_call.1} parent=27 // pred_check
          %p1738 = pneg %p1737
        $region38: #{tpu_custom_call.1} parent=27 // pred_check_branch
          %1740 = sbr.rel (%p1738) target = $region40
        $region39: #{tpu_custom_call.1} parent=27 // pred_region
          %v1741 = vld [vmem:[#allocation3] sm:$0x1]
          %v1742 = vmax.f32 %v1741, 1.0
          %v1743 = vadd.s32 %v316, 128
          %v1744 = vadd.s32 %v316, 256
          %v1745 = vadd.s32 %v316, 384
          %v1746 = vcvt.s32.f32 %v316
          %v1747 = vcvt.s32.f32 %v1743
          %v1748 = vcvt.s32.f32 %v1744
          %v1749 = vcvt.s32.f32 %v1745
          %1751 = vset.pattern.permute.xlu0 0
          %1752 = vperm.xlu0 %1751, %v1742
          %v1753 = vpop.permute.xlu0 %1752
          %v1755 = vperm.slane %v1753, 0
          %v1756 = vrcp.pop %v1755
          %v1757 = vmul.f32 %v1755, %v1756
          %v1758 = vsub.f32 1.0, %v1757
          %v1759 = vmul.f32 %v1756, %v1758
          %v1760 = vadd.f32 %v1756, %v1759
          %vm1761 = vweird.f32 %v1755
          %vm1762 = vweird.f32 %v1756
          %vm1763 = vmor %vm1761, %vm1762
          %v1764 = vsel %vm1763, %v1756, %v1760
          %v1765 = vand.u32 2147483647, %v1755
          %vm1766 = vcmp.eq.f32.partialorder %v1765, 8.507059e+37
          %v1767 = vand.u32 %v1755, 2147483648
          %v1768 = vor.u32 1.1754944e-38, %v1767
          %v1769 = vsel %vm1766, %v1768, %v1764
          %v1770 = vmul.f32 %v1746, %v1769
          %v1771 = vmul.f32 %v1747, %v1769
          %v1772 = vmul.f32 %v1748, %v1769
          %v1773 = vmul.f32 %v1749, %v1769
          %v1774 = vfloor.f32 %v1770
          %v1775 = vfloor.f32 %v1771
          %v1776 = vfloor.f32 %v1772
          %v1777 = vfloor.f32 %v1773
          %v1778 = vmul.f32 %v1755, %v1774
          %v1779 = vmul.f32 %v1755, %v1775
          %v1780 = vmul.f32 %v1755, %v1776
          %v1781 = vmul.f32 %v1755, %v1777
          %v1782 = vsub.f32 %v1746, %v1778
          %v1783 = vsub.f32 %v1747, %v1779
          %v1784 = vsub.f32 %v1748, %v1780
          %v1785 = vsub.f32 %v1749, %v1781
          %vm1786 = vcmp.eq.f32.partialorder %v478, %v1782
          %vm1787 = vcmp.eq.f32.partialorder %v478, %v1783
          %vm1788 = vcmp.eq.f32.partialorder %v478, %v1784
          %vm1789 = vcmp.eq.f32.partialorder %v478, %v1785
          %vm1790 = vcmp.eq.f32.partialorder %v479, %v1782
          %vm1791 = vcmp.eq.f32.partialorder %v479, %v1783
          %vm1792 = vcmp.eq.f32.partialorder %v479, %v1784
          %vm1793 = vcmp.eq.f32.partialorder %v479, %v1785
          %vm1794 = vcmp.eq.f32.partialorder %v480, %v1782
          %vm1795 = vcmp.eq.f32.partialorder %v480, %v1783
          %vm1796 = vcmp.eq.f32.partialorder %v480, %v1784
          %vm1797 = vcmp.eq.f32.partialorder %v480, %v1785
          %vm1798 = vcmp.eq.f32.partialorder %v481, %v1782
          %vm1799 = vcmp.eq.f32.partialorder %v481, %v1783
          %vm1800 = vcmp.eq.f32.partialorder %v481, %v1784
          %vm1801 = vcmp.eq.f32.partialorder %v481, %v1785
          %vm1802 = vcmp.eq.f32.partialorder %v482, %v1782
          %vm1803 = vcmp.eq.f32.partialorder %v482, %v1783
          %vm1804 = vcmp.eq.f32.partialorder %v482, %v1784
          %vm1805 = vcmp.eq.f32.partialorder %v482, %v1785
          %vm1806 = vcmp.eq.f32.partialorder %v483, %v1782
          %vm1807 = vcmp.eq.f32.partialorder %v483, %v1783
          %vm1808 = vcmp.eq.f32.partialorder %v483, %v1784
          %vm1809 = vcmp.eq.f32.partialorder %v483, %v1785
          %vm1810 = vcmp.eq.f32.partialorder %v484, %v1782
          %vm1811 = vcmp.eq.f32.partialorder %v484, %v1783
          %vm1812 = vcmp.eq.f32.partialorder %v484, %v1784
          %vm1813 = vcmp.eq.f32.partialorder %v484, %v1785
          %vm1814 = vcmp.eq.f32.partialorder %v485, %v1782
          %vm1815 = vcmp.eq.f32.partialorder %v485, %v1783
          %vm1816 = vcmp.eq.f32.partialorder %v485, %v1784
          %vm1817 = vcmp.eq.f32.partialorder %v485, %v1785
          %vm1818 = vcmp.eq.f32.partialorder %v486, %v1782
          %vm1819 = vcmp.eq.f32.partialorder %v486, %v1783
          %vm1820 = vcmp.eq.f32.partialorder %v486, %v1784
          %vm1821 = vcmp.eq.f32.partialorder %v486, %v1785
          %vm1822 = vcmp.eq.f32.partialorder %v487, %v1782
          %vm1823 = vcmp.eq.f32.partialorder %v487, %v1783
          %vm1824 = vcmp.eq.f32.partialorder %v487, %v1784
          %vm1825 = vcmp.eq.f32.partialorder %v487, %v1785
          %vm1826 = vcmp.eq.f32.partialorder %v488, %v1782
          %vm1827 = vcmp.eq.f32.partialorder %v488, %v1783
          %vm1828 = vcmp.eq.f32.partialorder %v488, %v1784
          %vm1829 = vcmp.eq.f32.partialorder %v488, %v1785
          %vm1830 = vcmp.eq.f32.partialorder %v489, %v1782
          %vm1831 = vcmp.eq.f32.partialorder %v489, %v1783
          %vm1832 = vcmp.eq.f32.partialorder %v489, %v1784
          %vm1833 = vcmp.eq.f32.partialorder %v489, %v1785
          %vm1834 = vcmp.eq.f32.partialorder %v490, %v1782
          %vm1835 = vcmp.eq.f32.partialorder %v490, %v1783
          %vm1836 = vcmp.eq.f32.partialorder %v490, %v1784
          %vm1837 = vcmp.eq.f32.partialorder %v490, %v1785
          %vm1838 = vcmp.eq.f32.partialorder %v491, %v1782
          %vm1839 = vcmp.eq.f32.partialorder %v491, %v1783
          %vm1840 = vcmp.eq.f32.partialorder %v491, %v1784
          %vm1841 = vcmp.eq.f32.partialorder %v491, %v1785
          %vm1842 = vcmp.eq.f32.partialorder %v492, %v1782
          %vm1843 = vcmp.eq.f32.partialorder %v492, %v1783
          %vm1844 = vcmp.eq.f32.partialorder %v492, %v1784
          %vm1845 = vcmp.eq.f32.partialorder %v492, %v1785
          %vm1846 = vcmp.eq.f32.partialorder %v493, %v1782
          %vm1847 = vcmp.eq.f32.partialorder %v493, %v1783
          %vm1848 = vcmp.eq.f32.partialorder %v493, %v1784
          %vm1849 = vcmp.eq.f32.partialorder %v493, %v1785
          %vm1850 = vcmp.eq.f32.partialorder %v494, %v1782
          %vm1851 = vcmp.eq.f32.partialorder %v494, %v1783
          %vm1852 = vcmp.eq.f32.partialorder %v494, %v1784
          %vm1853 = vcmp.eq.f32.partialorder %v494, %v1785
          %vm1854 = vcmp.eq.f32.partialorder %v495, %v1782
          %vm1855 = vcmp.eq.f32.partialorder %v495, %v1783
          %vm1856 = vcmp.eq.f32.partialorder %v495, %v1784
          %vm1857 = vcmp.eq.f32.partialorder %v495, %v1785
          %vm1858 = vcmp.eq.f32.partialorder %v496, %v1782
          %vm1859 = vcmp.eq.f32.partialorder %v496, %v1783
          %vm1860 = vcmp.eq.f32.partialorder %v496, %v1784
          %vm1861 = vcmp.eq.f32.partialorder %v496, %v1785
          %vm1862 = vcmp.eq.f32.partialorder %v497, %v1782
          %vm1863 = vcmp.eq.f32.partialorder %v497, %v1783
          %vm1864 = vcmp.eq.f32.partialorder %v497, %v1784
          %vm1865 = vcmp.eq.f32.partialorder %v497, %v1785
          %vm1866 = vcmp.eq.f32.partialorder %v498, %v1782
          %vm1867 = vcmp.eq.f32.partialorder %v498, %v1783
          %vm1868 = vcmp.eq.f32.partialorder %v498, %v1784
          %vm1869 = vcmp.eq.f32.partialorder %v498, %v1785
          %vm1870 = vcmp.eq.f32.partialorder %v499, %v1782
          %vm1871 = vcmp.eq.f32.partialorder %v499, %v1783
          %vm1872 = vcmp.eq.f32.partialorder %v499, %v1784
          %vm1873 = vcmp.eq.f32.partialorder %v499, %v1785
          %vm1874 = vcmp.eq.f32.partialorder %v500, %v1782
          %vm1875 = vcmp.eq.f32.partialorder %v500, %v1783
          %vm1876 = vcmp.eq.f32.partialorder %v500, %v1784
          %vm1877 = vcmp.eq.f32.partialorder %v500, %v1785
          %vm1878 = vcmp.eq.f32.partialorder %v501, %v1782
          %vm1879 = vcmp.eq.f32.partialorder %v501, %v1783
          %vm1880 = vcmp.eq.f32.partialorder %v501, %v1784
          %vm1881 = vcmp.eq.f32.partialorder %v501, %v1785
          %vm1882 = vcmp.eq.f32.partialorder %v502, %v1782
          %vm1883 = vcmp.eq.f32.partialorder %v502, %v1783
          %vm1884 = vcmp.eq.f32.partialorder %v502, %v1784
          %vm1885 = vcmp.eq.f32.partialorder %v502, %v1785
          %vm1886 = vcmp.eq.f32.partialorder %v503, %v1782
          %vm1887 = vcmp.eq.f32.partialorder %v503, %v1783
          %vm1888 = vcmp.eq.f32.partialorder %v503, %v1784
          %vm1889 = vcmp.eq.f32.partialorder %v503, %v1785
          %vm1890 = vcmp.eq.f32.partialorder %v504, %v1782
          %vm1891 = vcmp.eq.f32.partialorder %v504, %v1783
          %vm1892 = vcmp.eq.f32.partialorder %v504, %v1784
          %vm1893 = vcmp.eq.f32.partialorder %v504, %v1785
          %vm1894 = vcmp.eq.f32.partialorder %v505, %v1782
          %vm1895 = vcmp.eq.f32.partialorder %v505, %v1783
          %vm1896 = vcmp.eq.f32.partialorder %v505, %v1784
          %vm1897 = vcmp.eq.f32.partialorder %v505, %v1785
          %vm1898 = vcmp.eq.f32.partialorder %v506, %v1782
          %vm1899 = vcmp.eq.f32.partialorder %v506, %v1783
          %vm1900 = vcmp.eq.f32.partialorder %v506, %v1784
          %vm1901 = vcmp.eq.f32.partialorder %v506, %v1785
          %vm1902 = vcmp.eq.f32.partialorder %v507, %v1782
          %vm1903 = vcmp.eq.f32.partialorder %v507, %v1783
          %vm1904 = vcmp.eq.f32.partialorder %v507, %v1784
          %vm1905 = vcmp.eq.f32.partialorder %v507, %v1785
          %vm1906 = vcmp.eq.f32.partialorder %v508, %v1782
          %vm1907 = vcmp.eq.f32.partialorder %v508, %v1783
          %vm1908 = vcmp.eq.f32.partialorder %v508, %v1784
          %vm1909 = vcmp.eq.f32.partialorder %v508, %v1785
          %vm1910 = vcmp.eq.f32.partialorder %v509, %v1782
          %vm1911 = vcmp.eq.f32.partialorder %v509, %v1783
          %vm1912 = vcmp.eq.f32.partialorder %v509, %v1784
          %vm1913 = vcmp.eq.f32.partialorder %v509, %v1785
          %vm1914 = vcmp.eq.f32.partialorder %v510, %v1782
          %vm1915 = vcmp.eq.f32.partialorder %v510, %v1783
          %vm1916 = vcmp.eq.f32.partialorder %v510, %v1784
          %vm1917 = vcmp.eq.f32.partialorder %v510, %v1785
          %vm1918 = vcmp.eq.f32.partialorder %v511, %v1782
          %vm1919 = vcmp.eq.f32.partialorder %v511, %v1783
          %vm1920 = vcmp.eq.f32.partialorder %v511, %v1784
          %vm1921 = vcmp.eq.f32.partialorder %v511, %v1785
          %vm1922 = vcmp.eq.f32.partialorder %v512, %v1782
          %vm1923 = vcmp.eq.f32.partialorder %v512, %v1783
          %vm1924 = vcmp.eq.f32.partialorder %v512, %v1784
          %vm1925 = vcmp.eq.f32.partialorder %v512, %v1785
          %vm1926 = vcmp.eq.f32.partialorder %v513, %v1782
          %vm1927 = vcmp.eq.f32.partialorder %v513, %v1783
          %vm1928 = vcmp.eq.f32.partialorder %v513, %v1784
          %vm1929 = vcmp.eq.f32.partialorder %v513, %v1785
          %vm1930 = vcmp.eq.f32.partialorder %v514, %v1782
          %vm1931 = vcmp.eq.f32.partialorder %v514, %v1783
          %vm1932 = vcmp.eq.f32.partialorder %v514, %v1784
          %vm1933 = vcmp.eq.f32.partialorder %v514, %v1785
          %vm1934 = vcmp.eq.f32.partialorder %v515, %v1782
          %vm1935 = vcmp.eq.f32.partialorder %v515, %v1783
          %vm1936 = vcmp.eq.f32.partialorder %v515, %v1784
          %vm1937 = vcmp.eq.f32.partialorder %v515, %v1785
          %vm1938 = vcmp.eq.f32.partialorder %v516, %v1782
          %vm1939 = vcmp.eq.f32.partialorder %v516, %v1783
          %vm1940 = vcmp.eq.f32.partialorder %v516, %v1784
          %vm1941 = vcmp.eq.f32.partialorder %v516, %v1785
          %vm1942 = vcmp.eq.f32.partialorder %v517, %v1782
          %vm1943 = vcmp.eq.f32.partialorder %v517, %v1783
          %vm1944 = vcmp.eq.f32.partialorder %v517, %v1784
          %vm1945 = vcmp.eq.f32.partialorder %v517, %v1785
          %vm1946 = vcmp.eq.f32.partialorder %v518, %v1782
          %vm1947 = vcmp.eq.f32.partialorder %v518, %v1783
          %vm1948 = vcmp.eq.f32.partialorder %v518, %v1784
          %vm1949 = vcmp.eq.f32.partialorder %v518, %v1785
          %vm1950 = vcmp.eq.f32.partialorder %v519, %v1782
          %vm1951 = vcmp.eq.f32.partialorder %v519, %v1783
          %vm1952 = vcmp.eq.f32.partialorder %v519, %v1784
          %vm1953 = vcmp.eq.f32.partialorder %v519, %v1785
          %vm1954 = vcmp.eq.f32.partialorder %v520, %v1782
          %vm1955 = vcmp.eq.f32.partialorder %v520, %v1783
          %vm1956 = vcmp.eq.f32.partialorder %v520, %v1784
          %vm1957 = vcmp.eq.f32.partialorder %v520, %v1785
          %vm1958 = vcmp.eq.f32.partialorder %v521, %v1782
          %vm1959 = vcmp.eq.f32.partialorder %v521, %v1783
          %vm1960 = vcmp.eq.f32.partialorder %v521, %v1784
          %vm1961 = vcmp.eq.f32.partialorder %v521, %v1785
          %vm1962 = vcmp.eq.f32.partialorder %v522, %v1782
          %vm1963 = vcmp.eq.f32.partialorder %v522, %v1783
          %vm1964 = vcmp.eq.f32.partialorder %v522, %v1784
          %vm1965 = vcmp.eq.f32.partialorder %v522, %v1785
          %vm1966 = vcmp.eq.f32.partialorder %v523, %v1782
          %vm1967 = vcmp.eq.f32.partialorder %v523, %v1783
          %vm1968 = vcmp.eq.f32.partialorder %v523, %v1784
          %vm1969 = vcmp.eq.f32.partialorder %v523, %v1785
          %vm1970 = vcmp.eq.f32.partialorder %v524, %v1782
          %vm1971 = vcmp.eq.f32.partialorder %v524, %v1783
          %vm1972 = vcmp.eq.f32.partialorder %v524, %v1784
          %vm1973 = vcmp.eq.f32.partialorder %v524, %v1785
          %vm1974 = vcmp.eq.f32.partialorder %v525, %v1782
          %vm1975 = vcmp.eq.f32.partialorder %v525, %v1783
          %vm1976 = vcmp.eq.f32.partialorder %v525, %v1784
          %vm1977 = vcmp.eq.f32.partialorder %v525, %v1785
          %vm1978 = vcmp.eq.f32.partialorder %v526, %v1782
          %vm1979 = vcmp.eq.f32.partialorder %v526, %v1783
          %vm1980 = vcmp.eq.f32.partialorder %v526, %v1784
          %vm1981 = vcmp.eq.f32.partialorder %v526, %v1785
          %vm1982 = vcmp.eq.f32.partialorder %v527, %v1782
          %vm1983 = vcmp.eq.f32.partialorder %v527, %v1783
          %vm1984 = vcmp.eq.f32.partialorder %v527, %v1784
          %vm1985 = vcmp.eq.f32.partialorder %v527, %v1785
          %vm1986 = vcmp.eq.f32.partialorder %v528, %v1782
          %vm1987 = vcmp.eq.f32.partialorder %v528, %v1783
          %vm1988 = vcmp.eq.f32.partialorder %v528, %v1784
          %vm1989 = vcmp.eq.f32.partialorder %v528, %v1785
          %vm1990 = vcmp.eq.f32.partialorder %v529, %v1782
          %vm1991 = vcmp.eq.f32.partialorder %v529, %v1783
          %vm1992 = vcmp.eq.f32.partialorder %v529, %v1784
          %vm1993 = vcmp.eq.f32.partialorder %v529, %v1785
          %vm1994 = vcmp.eq.f32.partialorder %v530, %v1782
          %vm1995 = vcmp.eq.f32.partialorder %v530, %v1783
          %vm1996 = vcmp.eq.f32.partialorder %v530, %v1784
          %vm1997 = vcmp.eq.f32.partialorder %v530, %v1785
          %vm1998 = vcmp.eq.f32.partialorder %v531, %v1782
          %vm1999 = vcmp.eq.f32.partialorder %v531, %v1783
          %vm2000 = vcmp.eq.f32.partialorder %v531, %v1784
          %vm2001 = vcmp.eq.f32.partialorder %v531, %v1785
          %vm2002 = vcmp.eq.f32.partialorder %v532, %v1782
          %vm2003 = vcmp.eq.f32.partialorder %v532, %v1783
          %vm2004 = vcmp.eq.f32.partialorder %v532, %v1784
          %vm2005 = vcmp.eq.f32.partialorder %v532, %v1785
          %vm2006 = vcmp.eq.f32.partialorder %v533, %v1782
          %vm2007 = vcmp.eq.f32.partialorder %v533, %v1783
          %vm2008 = vcmp.eq.f32.partialorder %v533, %v1784
          %vm2009 = vcmp.eq.f32.partialorder %v533, %v1785
          %vm2010 = vcmp.eq.f32.partialorder %v534, %v1782
          %vm2011 = vcmp.eq.f32.partialorder %v534, %v1783
          %vm2012 = vcmp.eq.f32.partialorder %v534, %v1784
          %vm2013 = vcmp.eq.f32.partialorder %v534, %v1785
          %vm2014 = vcmp.eq.f32.partialorder %v535, %v1782
          %vm2015 = vcmp.eq.f32.partialorder %v535, %v1783
          %vm2016 = vcmp.eq.f32.partialorder %v535, %v1784
          %vm2017 = vcmp.eq.f32.partialorder %v535, %v1785
          %vm2018 = vcmp.eq.f32.partialorder %v536, %v1782
          %vm2019 = vcmp.eq.f32.partialorder %v536, %v1783
          %vm2020 = vcmp.eq.f32.partialorder %v536, %v1784
          %vm2021 = vcmp.eq.f32.partialorder %v536, %v1785
          %vm2022 = vcmp.eq.f32.partialorder %v537, %v1782
          %vm2023 = vcmp.eq.f32.partialorder %v537, %v1783
          %vm2024 = vcmp.eq.f32.partialorder %v537, %v1784
          %vm2025 = vcmp.eq.f32.partialorder %v537, %v1785
          %vm2026 = vcmp.eq.f32.partialorder %v538, %v1782
          %vm2027 = vcmp.eq.f32.partialorder %v538, %v1783
          %vm2028 = vcmp.eq.f32.partialorder %v538, %v1784
          %vm2029 = vcmp.eq.f32.partialorder %v538, %v1785
          %vm2030 = vcmp.eq.f32.partialorder %v539, %v1782
          %vm2031 = vcmp.eq.f32.partialorder %v539, %v1783
          %vm2032 = vcmp.eq.f32.partialorder %v539, %v1784
          %vm2033 = vcmp.eq.f32.partialorder %v539, %v1785
          %vm2034 = vcmp.eq.f32.partialorder %v540, %v1782
          %vm2035 = vcmp.eq.f32.partialorder %v540, %v1783
          %vm2036 = vcmp.eq.f32.partialorder %v540, %v1784
          %vm2037 = vcmp.eq.f32.partialorder %v540, %v1785
          %vm2038 = vcmp.eq.f32.partialorder %v541, %v1782
          %vm2039 = vcmp.eq.f32.partialorder %v541, %v1783
          %vm2040 = vcmp.eq.f32.partialorder %v541, %v1784
          %vm2041 = vcmp.eq.f32.partialorder %v541, %v1785
          %v2042 = vsel %vm1786, 1.0, 0.0
          %v2043 = vsel %vm1787, 1.0, 0.0
          %v2044 = vsel %vm1788, 1.0, 0.0
          %v2045 = vsel %vm1789, 1.0, 0.0
          %v2046 = vsel %vm1790, 1.0, 0.0
          %v2047 = vsel %vm1791, 1.0, 0.0
          %v2048 = vsel %vm1792, 1.0, 0.0
          %v2049 = vsel %vm1793, 1.0, 0.0
          %v2050 = vsel %vm1794, 1.0, 0.0
          %v2051 = vsel %vm1795, 1.0, 0.0
          %v2052 = vsel %vm1796, 1.0, 0.0
          %v2053 = vsel %vm1797, 1.0, 0.0
          %v2054 = vsel %vm1798, 1.0, 0.0
          %v2055 = vsel %vm1799, 1.0, 0.0
          %v2056 = vsel %vm1800, 1.0, 0.0
          %v2057 = vsel %vm1801, 1.0, 0.0
          %v2058 = vsel %vm1802, 1.0, 0.0
          %v2059 = vsel %vm1803, 1.0, 0.0
          %v2060 = vsel %vm1804, 1.0, 0.0
          %v2061 = vsel %vm1805, 1.0, 0.0
          %v2062 = vsel %vm1806, 1.0, 0.0
          %v2063 = vsel %vm1807, 1.0, 0.0
          %v2064 = vsel %vm1808, 1.0, 0.0
          %v2065 = vsel %vm1809, 1.0, 0.0
          %v2066 = vsel %vm1810, 1.0, 0.0
          %v2067 = vsel %vm1811, 1.0, 0.0
          %v2068 = vsel %vm1812, 1.0, 0.0
          %v2069 = vsel %vm1813, 1.0, 0.0
          %v2070 = vsel %vm1814, 1.0, 0.0
          %v2071 = vsel %vm1815, 1.0, 0.0
          %v2072 = vsel %vm1816, 1.0, 0.0
          %v2073 = vsel %vm1817, 1.0, 0.0
          %v2074 = vsel %vm1818, 1.0, 0.0
          %v2075 = vsel %vm1819, 1.0, 0.0
          %v2076 = vsel %vm1820, 1.0, 0.0
          %v2077 = vsel %vm1821, 1.0, 0.0
          %v2078 = vsel %vm1822, 1.0, 0.0
          %v2079 = vsel %vm1823, 1.0, 0.0
          %v2080 = vsel %vm1824, 1.0, 0.0
          %v2081 = vsel %vm1825, 1.0, 0.0
          %v2082 = vsel %vm1826, 1.0, 0.0
          %v2083 = vsel %vm1827, 1.0, 0.0
          %v2084 = vsel %vm1828, 1.0, 0.0
          %v2085 = vsel %vm1829, 1.0, 0.0
          %v2086 = vsel %vm1830, 1.0, 0.0
          %v2087 = vsel %vm1831, 1.0, 0.0
          %v2088 = vsel %vm1832, 1.0, 0.0
          %v2089 = vsel %vm1833, 1.0, 0.0
          %v2090 = vsel %vm1834, 1.0, 0.0
          %v2091 = vsel %vm1835, 1.0, 0.0
          %v2092 = vsel %vm1836, 1.0, 0.0
          %v2093 = vsel %vm1837, 1.0, 0.0
          %v2094 = vsel %vm1838, 1.0, 0.0
          %v2095 = vsel %vm1839, 1.0, 0.0
          %v2096 = vsel %vm1840, 1.0, 0.0
          %v2097 = vsel %vm1841, 1.0, 0.0
          %v2098 = vsel %vm1842, 1.0, 0.0
          %v2099 = vsel %vm1843, 1.0, 0.0
          %v2100 = vsel %vm1844, 1.0, 0.0
          %v2101 = vsel %vm1845, 1.0, 0.0
          %v2102 = vsel %vm1846, 1.0, 0.0
          %v2103 = vsel %vm1847, 1.0, 0.0
          %v2104 = vsel %vm1848, 1.0, 0.0
          %v2105 = vsel %vm1849, 1.0, 0.0
          %v2106 = vsel %vm1850, 1.0, 0.0
          %v2107 = vsel %vm1851, 1.0, 0.0
          %v2108 = vsel %vm1852, 1.0, 0.0
          %v2109 = vsel %vm1853, 1.0, 0.0
          %v2110 = vsel %vm1854, 1.0, 0.0
          %v2111 = vsel %vm1855, 1.0, 0.0
          %v2112 = vsel %vm1856, 1.0, 0.0
          %v2113 = vsel %vm1857, 1.0, 0.0
          %v2114 = vsel %vm1858, 1.0, 0.0
          %v2115 = vsel %vm1859, 1.0, 0.0
          %v2116 = vsel %vm1860, 1.0, 0.0
          %v2117 = vsel %vm1861, 1.0, 0.0
          %v2118 = vsel %vm1862, 1.0, 0.0
          %v2119 = vsel %vm1863, 1.0, 0.0
          %v2120 = vsel %vm1864, 1.0, 0.0
          %v2121 = vsel %vm1865, 1.0, 0.0
          %v2122 = vsel %vm1866, 1.0, 0.0
          %v2123 = vsel %vm1867, 1.0, 0.0
          %v2124 = vsel %vm1868, 1.0, 0.0
          %v2125 = vsel %vm1869, 1.0, 0.0
          %v2126 = vsel %vm1870, 1.0, 0.0
          %v2127 = vsel %vm1871, 1.0, 0.0
          %v2128 = vsel %vm1872, 1.0, 0.0
          %v2129 = vsel %vm1873, 1.0, 0.0
          %v2130 = vsel %vm1874, 1.0, 0.0
          %v2131 = vsel %vm1875, 1.0, 0.0
          %v2132 = vsel %vm1876, 1.0, 0.0
          %v2133 = vsel %vm1877, 1.0, 0.0
          %v2134 = vsel %vm1878, 1.0, 0.0
          %v2135 = vsel %vm1879, 1.0, 0.0
          %v2136 = vsel %vm1880, 1.0, 0.0
          %v2137 = vsel %vm1881, 1.0, 0.0
          %v2138 = vsel %vm1882, 1.0, 0.0
          %v2139 = vsel %vm1883, 1.0, 0.0
          %v2140 = vsel %vm1884, 1.0, 0.0
          %v2141 = vsel %vm1885, 1.0, 0.0
          %v2142 = vsel %vm1886, 1.0, 0.0
          %v2143 = vsel %vm1887, 1.0, 0.0
          %v2144 = vsel %vm1888, 1.0, 0.0
          %v2145 = vsel %vm1889, 1.0, 0.0
          %v2146 = vsel %vm1890, 1.0, 0.0
          %v2147 = vsel %vm1891, 1.0, 0.0
          %v2148 = vsel %vm1892, 1.0, 0.0
          %v2149 = vsel %vm1893, 1.0, 0.0
          %v2150 = vsel %vm1894, 1.0, 0.0
          %v2151 = vsel %vm1895, 1.0, 0.0
          %v2152 = vsel %vm1896, 1.0, 0.0
          %v2153 = vsel %vm1897, 1.0, 0.0
          %v2154 = vsel %vm1898, 1.0, 0.0
          %v2155 = vsel %vm1899, 1.0, 0.0
          %v2156 = vsel %vm1900, 1.0, 0.0
          %v2157 = vsel %vm1901, 1.0, 0.0
          %v2158 = vsel %vm1902, 1.0, 0.0
          %v2159 = vsel %vm1903, 1.0, 0.0
          %v2160 = vsel %vm1904, 1.0, 0.0
          %v2161 = vsel %vm1905, 1.0, 0.0
          %v2162 = vsel %vm1906, 1.0, 0.0
          %v2163 = vsel %vm1907, 1.0, 0.0
          %v2164 = vsel %vm1908, 1.0, 0.0
          %v2165 = vsel %vm1909, 1.0, 0.0
          %v2166 = vsel %vm1910, 1.0, 0.0
          %v2167 = vsel %vm1911, 1.0, 0.0
          %v2168 = vsel %vm1912, 1.0, 0.0
          %v2169 = vsel %vm1913, 1.0, 0.0
          %v2170 = vsel %vm1914, 1.0, 0.0
          %v2171 = vsel %vm1915, 1.0, 0.0
          %v2172 = vsel %vm1916, 1.0, 0.0
          %v2173 = vsel %vm1917, 1.0, 0.0
          %v2174 = vsel %vm1918, 1.0, 0.0
          %v2175 = vsel %vm1919, 1.0, 0.0
          %v2176 = vsel %vm1920, 1.0, 0.0
          %v2177 = vsel %vm1921, 1.0, 0.0
          %v2178 = vsel %vm1922, 1.0, 0.0
          %v2179 = vsel %vm1923, 1.0, 0.0
          %v2180 = vsel %vm1924, 1.0, 0.0
          %v2181 = vsel %vm1925, 1.0, 0.0
          %v2182 = vsel %vm1926, 1.0, 0.0
          %v2183 = vsel %vm1927, 1.0, 0.0
          %v2184 = vsel %vm1928, 1.0, 0.0
          %v2185 = vsel %vm1929, 1.0, 0.0
          %v2186 = vsel %vm1930, 1.0, 0.0
          %v2187 = vsel %vm1931, 1.0, 0.0
          %v2188 = vsel %vm1932, 1.0, 0.0
          %v2189 = vsel %vm1933, 1.0, 0.0
          %v2190 = vsel %vm1934, 1.0, 0.0
          %v2191 = vsel %vm1935, 1.0, 0.0
          %v2192 = vsel %vm1936, 1.0, 0.0
          %v2193 = vsel %vm1937, 1.0, 0.0
          %v2194 = vsel %vm1938, 1.0, 0.0
          %v2195 = vsel %vm1939, 1.0, 0.0
          %v2196 = vsel %vm1940, 1.0, 0.0
          %v2197 = vsel %vm1941, 1.0, 0.0
          %v2198 = vsel %vm1942, 1.0, 0.0
          %v2199 = vsel %vm1943, 1.0, 0.0
          %v2200 = vsel %vm1944, 1.0, 0.0
          %v2201 = vsel %vm1945, 1.0, 0.0
          %v2202 = vsel %vm1946, 1.0, 0.0
          %v2203 = vsel %vm1947, 1.0, 0.0
          %v2204 = vsel %vm1948, 1.0, 0.0
          %v2205 = vsel %vm1949, 1.0, 0.0
          %v2206 = vsel %vm1950, 1.0, 0.0
          %v2207 = vsel %vm1951, 1.0, 0.0
          %v2208 = vsel %vm1952, 1.0, 0.0
          %v2209 = vsel %vm1953, 1.0, 0.0
          %v2210 = vsel %vm1954, 1.0, 0.0
          %v2211 = vsel %vm1955, 1.0, 0.0
          %v2212 = vsel %vm1956, 1.0, 0.0
          %v2213 = vsel %vm1957, 1.0, 0.0
          %v2214 = vsel %vm1958, 1.0, 0.0
          %v2215 = vsel %vm1959, 1.0, 0.0
          %v2216 = vsel %vm1960, 1.0, 0.0
          %v2217 = vsel %vm1961, 1.0, 0.0
          %v2218 = vsel %vm1962, 1.0, 0.0
          %v2219 = vsel %vm1963, 1.0, 0.0
          %v2220 = vsel %vm1964, 1.0, 0.0
          %v2221 = vsel %vm1965, 1.0, 0.0
          %v2222 = vsel %vm1966, 1.0, 0.0
          %v2223 = vsel %vm1967, 1.0, 0.0
          %v2224 = vsel %vm1968, 1.0, 0.0
          %v2225 = vsel %vm1969, 1.0, 0.0
          %v2226 = vsel %vm1970, 1.0, 0.0
          %v2227 = vsel %vm1971, 1.0, 0.0
          %v2228 = vsel %vm1972, 1.0, 0.0
          %v2229 = vsel %vm1973, 1.0, 0.0
          %v2230 = vsel %vm1974, 1.0, 0.0
          %v2231 = vsel %vm1975, 1.0, 0.0
          %v2232 = vsel %vm1976, 1.0, 0.0
          %v2233 = vsel %vm1977, 1.0, 0.0
          %v2234 = vsel %vm1978, 1.0, 0.0
          %v2235 = vsel %vm1979, 1.0, 0.0
          %v2236 = vsel %vm1980, 1.0, 0.0
          %v2237 = vsel %vm1981, 1.0, 0.0
          %v2238 = vsel %vm1982, 1.0, 0.0
          %v2239 = vsel %vm1983, 1.0, 0.0
          %v2240 = vsel %vm1984, 1.0, 0.0
          %v2241 = vsel %vm1985, 1.0, 0.0
          %v2242 = vsel %vm1986, 1.0, 0.0
          %v2243 = vsel %vm1987, 1.0, 0.0
          %v2244 = vsel %vm1988, 1.0, 0.0
          %v2245 = vsel %vm1989, 1.0, 0.0
          %v2246 = vsel %vm1990, 1.0, 0.0
          %v2247 = vsel %vm1991, 1.0, 0.0
          %v2248 = vsel %vm1992, 1.0, 0.0
          %v2249 = vsel %vm1993, 1.0, 0.0
          %v2250 = vsel %vm1994, 1.0, 0.0
          %v2251 = vsel %vm1995, 1.0, 0.0
          %v2252 = vsel %vm1996, 1.0, 0.0
          %v2253 = vsel %vm1997, 1.0, 0.0
          %v2254 = vsel %vm1998, 1.0, 0.0
          %v2255 = vsel %vm1999, 1.0, 0.0
          %v2256 = vsel %vm2000, 1.0, 0.0
          %v2257 = vsel %vm2001, 1.0, 0.0
          %v2258 = vsel %vm2002, 1.0, 0.0
          %v2259 = vsel %vm2003, 1.0, 0.0
          %v2260 = vsel %vm2004, 1.0, 0.0
          %v2261 = vsel %vm2005, 1.0, 0.0
          %v2262 = vsel %vm2006, 1.0, 0.0
          %v2263 = vsel %vm2007, 1.0, 0.0
          %v2264 = vsel %vm2008, 1.0, 0.0
          %v2265 = vsel %vm2009, 1.0, 0.0
          %v2266 = vsel %vm2010, 1.0, 0.0
          %v2267 = vsel %vm2011, 1.0, 0.0
          %v2268 = vsel %vm2012, 1.0, 0.0
          %v2269 = vsel %vm2013, 1.0, 0.0
          %v2270 = vsel %vm2014, 1.0, 0.0
          %v2271 = vsel %vm2015, 1.0, 0.0
          %v2272 = vsel %vm2016, 1.0, 0.0
          %v2273 = vsel %vm2017, 1.0, 0.0
          %v2274 = vsel %vm2018, 1.0, 0.0
          %v2275 = vsel %vm2019, 1.0, 0.0
          %v2276 = vsel %vm2020, 1.0, 0.0
          %v2277 = vsel %vm2021, 1.0, 0.0
          %v2278 = vsel %vm2022, 1.0, 0.0
          %v2279 = vsel %vm2023, 1.0, 0.0
          %v2280 = vsel %vm2024, 1.0, 0.0
          %v2281 = vsel %vm2025, 1.0, 0.0
          %v2282 = vsel %vm2026, 1.0, 0.0
          %v2283 = vsel %vm2027, 1.0, 0.0
          %v2284 = vsel %vm2028, 1.0, 0.0
          %v2285 = vsel %vm2029, 1.0, 0.0
          %v2286 = vsel %vm2030, 1.0, 0.0
          %v2287 = vsel %vm2031, 1.0, 0.0
          %v2288 = vsel %vm2032, 1.0, 0.0
          %v2289 = vsel %vm2033, 1.0, 0.0
          %v2290 = vsel %vm2034, 1.0, 0.0
          %v2291 = vsel %vm2035, 1.0, 0.0
          %v2292 = vsel %vm2036, 1.0, 0.0
          %v2293 = vsel %vm2037, 1.0, 0.0
          %v2294 = vsel %vm2038, 1.0, 0.0
          %v2295 = vsel %vm2039, 1.0, 0.0
          %v2296 = vsel %vm2040, 1.0, 0.0
          %v2297 = vsel %vm2041, 1.0, 0.0
          %v2298 = vld [vmem:[#allocation2] sm:$0x7f]
          %v2299 = vld [vmem:[#allocation2 + $0x8] sm:$0x7f]
          %v2300 = vld [vmem:[#allocation2 + $0x10] sm:$0x7f]
          %v2301 = vld [vmem:[#allocation2 + $0x18] sm:$0x7f]
          %2302 = vmatpush.msra.mxu0 %v2102
          %2303 = vmatpush.msra.mxu0 %v2098
          %2304 = vmatpush.msra.mxu0 %v2094
          %2305 = vmatpush.msra.mxu0 %v2090
          %2306 = vmatpush.msra.mxu0 %v2086
          %2307 = vmatpush.msra.mxu0 %v2082
          %2308 = vmatpush.msra.mxu0 %v2078
          %2309 = vmatpush.msra.mxu0 %v2074
          %2310 = vmatpush.msra.mxu0 %v2070
          %2311 = vmatpush.msra.mxu0 %v2066
          %2312 = vmatpush.msra.mxu0 %v2062
          %2313 = vmatpush.msra.mxu0 %v2058
          %2314 = vmatpush.msra.mxu0 %v2054
          %2315 = vmatpush.msra.mxu0 %v2050
          %2316 = vmatpush.msra.mxu0 %v2046
          %2317 = vmatpush.msra.mxu0 %v2042
          %v2318 = vand.u32 %v2298, 4294901760
          %v2319 = vsub.f32 %v2298, %v2318
          %v2320 = vand.u32 %v2319, 4294901760
          %v2321 = vsub.f32 %v2319, %v2320
          %v2322 = vand.u32 %v2321, 4294901760
          %2323 = vmatmul.f32.gmra.mxu0 %v2322
          %v2324 = vpop.f32.mrf.mxu0
          %v2325 = vadd.f32 0.0, %v2324
          %2326 = vdwg.mxu0
          %v2327 = vsub.f32 %v2102, %v2102
          %v2328 = vand.u32 %v2327, 4294901760
          %v2329 = vsub.f32 %v2327, %v2328
          %v2330 = vand.u32 %v2329, 4294901760
          %2331 = vmatpush.msra.mxu0 %v2330
          %v2332 = vsub.f32 %v2098, %v2098
          %v2333 = vand.u32 %v2332, 4294901760
          %v2334 = vsub.f32 %v2332, %v2333
          %v2335 = vand.u32 %v2334, 4294901760
          %2336 = vmatpush.msra.mxu0 %v2335
          %v2337 = vsub.f32 %v2094, %v2094
          %v2338 = vand.u32 %v2337, 4294901760
          %v2339 = vsub.f32 %v2337, %v2338
          %v2340 = vand.u32 %v2339, 4294901760
          %2341 = vmatpush.msra.mxu0 %v2340
          %v2342 = vsub.f32 %v2090, %v2090
          %v2343 = vand.u32 %v2342, 4294901760
          %v2344 = vsub.f32 %v2342, %v2343
          %v2345 = vand.u32 %v2344, 4294901760
          %2346 = vmatpush.msra.mxu0 %v2345
          %v2347 = vsub.f32 %v2086, %v2086
          %v2348 = vand.u32 %v2347, 4294901760
          %v2349 = vsub.f32 %v2347, %v2348
          %v2350 = vand.u32 %v2349, 4294901760
          %2351 = vmatpush.msra.mxu0 %v2350
          %v2352 = vsub.f32 %v2082, %v2082
          %v2353 = vand.u32 %v2352, 4294901760
          %v2354 = vsub.f32 %v2352, %v2353
          %v2355 = vand.u32 %v2354, 4294901760
          %2356 = vmatpush.msra.mxu0 %v2355
          %v2357 = vsub.f32 %v2078, %v2078
          %v2358 = vand.u32 %v2357, 4294901760
          %v2359 = vsub.f32 %v2357, %v2358
          %v2360 = vand.u32 %v2359, 4294901760
          %2361 = vmatpush.msra.mxu0 %v2360
          %v2362 = vsub.f32 %v2074, %v2074
          %v2363 = vand.u32 %v2362, 4294901760
          %v2364 = vsub.f32 %v2362, %v2363
          %v2365 = vand.u32 %v2364, 4294901760
          %2366 = vmatpush.msra.mxu0 %v2365
          %v2367 = vsub.f32 %v2070, %v2070
          %v2368 = vand.u32 %v2367, 4294901760
          %v2369 = vsub.f32 %v2367, %v2368
          %v2370 = vand.u32 %v2369, 4294901760
          %2371 = vmatpush.msra.mxu0 %v2370
          %v2372 = vsub.f32 %v2066, %v2066
          %v2373 = vand.u32 %v2372, 4294901760
          %v2374 = vsub.f32 %v2372, %v2373
          %v2375 = vand.u32 %v2374, 4294901760
          %2376 = vmatpush.msra.mxu0 %v2375
          %v2377 = vsub.f32 %v2062, %v2062
          %v2378 = vand.u32 %v2377, 4294901760
          %v2379 = vsub.f32 %v2377, %v2378
          %v2380 = vand.u32 %v2379, 4294901760
          %2381 = vmatpush.msra.mxu0 %v2380
          %v2382 = vsub.f32 %v2058, %v2058
          %v2383 = vand.u32 %v2382, 4294901760
          %v2384 = vsub.f32 %v2382, %v2383
          %v2385 = vand.u32 %v2384, 4294901760
          %2386 = vmatpush.msra.mxu0 %v2385
          %v2387 = vsub.f32 %v2054, %v2054
          %v2388 = vand.u32 %v2387, 4294901760
          %v2389 = vsub.f32 %v2387, %v2388
          %v2390 = vand.u32 %v2389, 4294901760
          %2391 = vmatpush.msra.mxu0 %v2390
          %v2392 = vsub.f32 %v2050, %v2050
          %v2393 = vand.u32 %v2392, 4294901760
          %v2394 = vsub.f32 %v2392, %v2393
          %v2395 = vand.u32 %v2394, 4294901760
          %2396 = vmatpush.msra.mxu0 %v2395
          %v2397 = vsub.f32 %v2046, %v2046
          %v2398 = vand.u32 %v2397, 4294901760
          %v2399 = vsub.f32 %v2397, %v2398
          %v2400 = vand.u32 %v2399, 4294901760
          %2401 = vmatpush.msra.mxu0 %v2400
          %v2402 = vsub.f32 %v2042, %v2042
          %v2403 = vand.u32 %v2402, 4294901760
          %v2404 = vsub.f32 %v2402, %v2403
          %v2405 = vand.u32 %v2404, 4294901760
          %2406 = vmatpush.msra.mxu0 %v2405
          %v2407 = vand.u32 %v2298, 4294901760
          %2408 = vmatmul.f32.gmra.mxu0 %v2407
          %v2409 = vpop.f32.mrf.mxu0
          %v2410 = vadd.f32 %v2325, %v2409
          %2411 = vdwg.mxu0
          %v2412 = vsub.f32 %v2102, %v2102
          %2413 = vmatpush.msra.mxu0 %v2412
          %v2414 = vsub.f32 %v2098, %v2098
          %2415 = vmatpush.msra.mxu0 %v2414
          %v2416 = vsub.f32 %v2094, %v2094
          %2417 = vmatpush.msra.mxu0 %v2416
          %v2418 = vsub.f32 %v2090, %v2090
          %2419 = vmatpush.msra.mxu0 %v2418
          %v2420 = vsub.f32 %v2086, %v2086
          %2421 = vmatpush.msra.mxu0 %v2420
          %v2422 = vsub.f32 %v2082, %v2082
          %2423 = vmatpush.msra.mxu0 %v2422
          %v2424 = vsub.f32 %v2078, %v2078
          %2425 = vmatpush.msra.mxu0 %v2424
          %v2426 = vsub.f32 %v2074, %v2074
          %2427 = vmatpush.msra.mxu0 %v2426
          %v2428 = vsub.f32 %v2070, %v2070
          %2429 = vmatpush.msra.mxu0 %v2428
          %v2430 = vsub.f32 %v2066, %v2066
          %2431 = vmatpush.msra.mxu0 %v2430
          %v2432 = vsub.f32 %v2062, %v2062
          %2433 = vmatpush.msra.mxu0 %v2432
          %v2434 = vsub.f32 %v2058, %v2058
          %2435 = vmatpush.msra.mxu0 %v2434
          %v2436 = vsub.f32 %v2054, %v2054
          %2437 = vmatpush.msra.mxu0 %v2436
          %v2438 = vsub.f32 %v2050, %v2050
          %2439 = vmatpush.msra.mxu0 %v2438
          %v2440 = vsub.f32 %v2046, %v2046
          %2441 = vmatpush.msra.mxu0 %v2440
          %v2442 = vsub.f32 %v2042, %v2042
          %2443 = vmatpush.msra.mxu0 %v2442
          %v2444 = vand.u32 %v2298, 4294901760
          %v2445 = vsub.f32 %v2298, %v2444
          %2446 = vmatmul.f32.gmra.mxu0 %v2445
          %v2447 = vpop.f32.mrf.mxu0
          %v2448 = vadd.f32 %v2410, %v2447
          %2449 = vdwg.mxu0
          %2450 = vmatpush.msra.mxu0 %v2102
          %2451 = vmatpush.msra.mxu0 %v2098
          %2452 = vmatpush.msra.mxu0 %v2094
          %2453 = vmatpush.msra.mxu0 %v2090
          %2454 = vmatpush.msra.mxu0 %v2086
          %2455 = vmatpush.msra.mxu0 %v2082
          %2456 = vmatpush.msra.mxu0 %v2078
          %2457 = vmatpush.msra.mxu0 %v2074
          %2458 = vmatpush.msra.mxu0 %v2070
          %2459 = vmatpush.msra.mxu0 %v2066
          %2460 = vmatpush.msra.mxu0 %v2062
          %2461 = vmatpush.msra.mxu0 %v2058
          %2462 = vmatpush.msra.mxu0 %v2054
          %2463 = vmatpush.msra.mxu0 %v2050
          %2464 = vmatpush.msra.mxu0 %v2046
          %2465 = vmatpush.msra.mxu0 %v2042
          %v2466 = vand.u32 %v2298, 4294901760
          %v2467 = vsub.f32 %v2298, %v2466
          %v2468 = vand.u32 %v2467, 4294901760
          %2469 = vmatmul.f32.gmra.mxu0 %v2468
          %v2470 = vpop.f32.mrf.mxu0
          %v2471 = vadd.f32 %v2448, %v2470
          %2472 = vdwg.mxu0
          %v2473 = vsub.f32 %v2102, %v2102
          %v2474 = vand.u32 %v2473, 4294901760
          %2475 = vmatpush.msra.mxu0 %v2474
          %v2476 = vsub.f32 %v2098, %v2098
          %v2477 = vand.u32 %v2476, 4294901760
          %2478 = vmatpush.msra.mxu0 %v2477
          %v2479 = vsub.f32 %v2094, %v2094
          %v2480 = vand.u32 %v2479, 4294901760
          %2481 = vmatpush.msra.mxu0 %v2480
          %v2482 = vsub.f32 %v2090, %v2090
          %v2483 = vand.u32 %v2482, 4294901760
          %2484 = vmatpush.msra.mxu0 %v2483
          %v2485 = vsub.f32 %v2086, %v2086
          %v2486 = vand.u32 %v2485, 4294901760
          %2487 = vmatpush.msra.mxu0 %v2486
          %v2488 = vsub.f32 %v2082, %v2082
          %v2489 = vand.u32 %v2488, 4294901760
          %2490 = vmatpush.msra.mxu0 %v2489
          %v2491 = vsub.f32 %v2078, %v2078
          %v2492 = vand.u32 %v2491, 4294901760
          %2493 = vmatpush.msra.mxu0 %v2492
          %v2494 = vsub.f32 %v2074, %v2074
          %v2495 = vand.u32 %v2494, 4294901760
          %2496 = vmatpush.msra.mxu0 %v2495
          %v2497 = vsub.f32 %v2070, %v2070
          %v2498 = vand.u32 %v2497, 4294901760
          %2499 = vmatpush.msra.mxu0 %v2498
          %v2500 = vsub.f32 %v2066, %v2066
          %v2501 = vand.u32 %v2500, 4294901760
          %2502 = vmatpush.msra.mxu0 %v2501
          %v2503 = vsub.f32 %v2062, %v2062
          %v2504 = vand.u32 %v2503, 4294901760
          %2505 = vmatpush.msra.mxu0 %v2504
          %v2506 = vsub.f32 %v2058, %v2058
          %v2507 = vand.u32 %v2506, 4294901760
          %2508 = vmatpush.msra.mxu0 %v2507
          %v2509 = vsub.f32 %v2054, %v2054
          %v2510 = vand.u32 %v2509, 4294901760
          %2511 = vmatpush.msra.mxu0 %v2510
          %v2512 = vsub.f32 %v2050, %v2050
          %v2513 = vand.u32 %v2512, 4294901760
          %2514 = vmatpush.msra.mxu0 %v2513
          %v2515 = vsub.f32 %v2046, %v2046
          %v2516 = vand.u32 %v2515, 4294901760
          %2517 = vmatpush.msra.mxu0 %v2516
          %v2518 = vsub.f32 %v2042, %v2042
          %v2519 = vand.u32 %v2518, 4294901760
          %2520 = vmatpush.msra.mxu0 %v2519
          %v2521 = vand.u32 %v2298, 4294901760
          %2522 = vmatmul.f32.gmra.mxu0 %v2521
          %v2523 = vpop.f32.mrf.mxu0
          %v2524 = vadd.f32 %v2471, %v2523
          %2525 = vdwg.mxu0
          %2526 = vmatpush.msra.mxu0 %v2102
          %2527 = vmatpush.msra.mxu0 %v2098
          %2528 = vmatpush.msra.mxu0 %v2094
          %2529 = vmatpush.msra.mxu0 %v2090
          %2530 = vmatpush.msra.mxu0 %v2086
          %2531 = vmatpush.msra.mxu0 %v2082
          %2532 = vmatpush.msra.mxu0 %v2078
          %2533 = vmatpush.msra.mxu0 %v2074
          %2534 = vmatpush.msra.mxu0 %v2070
          %2535 = vmatpush.msra.mxu0 %v2066
          %2536 = vmatpush.msra.mxu0 %v2062
          %2537 = vmatpush.msra.mxu0 %v2058
          %2538 = vmatpush.msra.mxu0 %v2054
          %2539 = vmatpush.msra.mxu0 %v2050
          %2540 = vmatpush.msra.mxu0 %v2046
          %2541 = vmatpush.msra.mxu0 %v2042
          %v2542 = vand.u32 %v2298, 4294901760
          %2543 = vmatmul.f32.gmra.mxu0 %v2542
          %v2544 = vpop.f32.mrf.mxu0
          %v2545 = vadd.f32 %v2524, %v2544
          %2546 = vdwg.mxu0
          %2547 = vmatpush.msra.mxu0 %v2166
          %2548 = vmatpush.msra.mxu0 %v2162
          %2549 = vmatpush.msra.mxu0 %v2158
          %2550 = vmatpush.msra.mxu0 %v2154
          %2551 = vmatpush.msra.mxu0 %v2150
          %2552 = vmatpush.msra.mxu0 %v2146
          %2553 = vmatpush.msra.mxu0 %v2142
          %2554 = vmatpush.msra.mxu0 %v2138
          %2555 = vmatpush.msra.mxu0 %v2134
          %2556 = vmatpush.msra.mxu0 %v2130
          %2557 = vmatpush.msra.mxu0 %v2126
          %2558 = vmatpush.msra.mxu0 %v2122
          %2559 = vmatpush.msra.mxu0 %v2118
          %2560 = vmatpush.msra.mxu0 %v2114
          %2561 = vmatpush.msra.mxu0 %v2110
          %2562 = vmatpush.msra.mxu0 %v2106
          %v2563 = vand.u32 %v2299, 4294901760
          %v2564 = vsub.f32 %v2299, %v2563
          %v2565 = vand.u32 %v2564, 4294901760
          %v2566 = vsub.f32 %v2564, %v2565
          %v2567 = vand.u32 %v2566, 4294901760
          %2568 = vmatmul.f32.gmra.mxu0 %v2567
          %v2569 = vpop.f32.mrf.mxu0
          %v2570 = vadd.f32 %v2545, %v2569
          %2571 = vdwg.mxu0
          %v2572 = vsub.f32 %v2166, %v2166
          %v2573 = vand.u32 %v2572, 4294901760
          %v2574 = vsub.f32 %v2572, %v2573
          %v2575 = vand.u32 %v2574, 4294901760
          %2576 = vmatpush.msra.mxu0 %v2575
          %v2577 = vsub.f32 %v2162, %v2162
          %v2578 = vand.u32 %v2577, 4294901760
          %v2579 = vsub.f32 %v2577, %v2578
          %v2580 = vand.u32 %v2579, 4294901760
          %2581 = vmatpush.msra.mxu0 %v2580
          %v2582 = vsub.f32 %v2158, %v2158
          %v2583 = vand.u32 %v2582, 4294901760
          %v2584 = vsub.f32 %v2582, %v2583
          %v2585 = vand.u32 %v2584, 4294901760
          %2586 = vmatpush.msra.mxu0 %v2585
          %v2587 = vsub.f32 %v2154, %v2154
          %v2588 = vand.u32 %v2587, 4294901760
          %v2589 = vsub.f32 %v2587, %v2588
          %v2590 = vand.u32 %v2589, 4294901760
          %2591 = vmatpush.msra.mxu0 %v2590
          %v2592 = vsub.f32 %v2150, %v2150
          %v2593 = vand.u32 %v2592, 4294901760
          %v2594 = vsub.f32 %v2592, %v2593
          %v2595 = vand.u32 %v2594, 4294901760
          %2596 = vmatpush.msra.mxu0 %v2595
          %v2597 = vsub.f32 %v2146, %v2146
          %v2598 = vand.u32 %v2597, 4294901760
          %v2599 = vsub.f32 %v2597, %v2598
          %v2600 = vand.u32 %v2599, 4294901760
          %2601 = vmatpush.msra.mxu0 %v2600
          %v2602 = vsub.f32 %v2142, %v2142
          %v2603 = vand.u32 %v2602, 4294901760
          %v2604 = vsub.f32 %v2602, %v2603
          %v2605 = vand.u32 %v2604, 4294901760
          %2606 = vmatpush.msra.mxu0 %v2605
          %v2607 = vsub.f32 %v2138, %v2138
          %v2608 = vand.u32 %v2607, 4294901760
          %v2609 = vsub.f32 %v2607, %v2608
          %v2610 = vand.u32 %v2609, 4294901760
          %2611 = vmatpush.msra.mxu0 %v2610
          %v2612 = vsub.f32 %v2134, %v2134
          %v2613 = vand.u32 %v2612, 4294901760
          %v2614 = vsub.f32 %v2612, %v2613
          %v2615 = vand.u32 %v2614, 4294901760
          %2616 = vmatpush.msra.mxu0 %v2615
          %v2617 = vsub.f32 %v2130, %v2130
          %v2618 = vand.u32 %v2617, 4294901760
          %v2619 = vsub.f32 %v2617, %v2618
          %v2620 = vand.u32 %v2619, 4294901760
          %2621 = vmatpush.msra.mxu0 %v2620
          %v2622 = vsub.f32 %v2126, %v2126
          %v2623 = vand.u32 %v2622, 4294901760
          %v2624 = vsub.f32 %v2622, %v2623
          %v2625 = vand.u32 %v2624, 4294901760
          %2626 = vmatpush.msra.mxu0 %v2625
          %v2627 = vsub.f32 %v2122, %v2122
          %v2628 = vand.u32 %v2627, 4294901760
          %v2629 = vsub.f32 %v2627, %v2628
          %v2630 = vand.u32 %v2629, 4294901760
          %2631 = vmatpush.msra.mxu0 %v2630
          %v2632 = vsub.f32 %v2118, %v2118
          %v2633 = vand.u32 %v2632, 4294901760
          %v2634 = vsub.f32 %v2632, %v2633
          %v2635 = vand.u32 %v2634, 4294901760
          %2636 = vmatpush.msra.mxu0 %v2635
          %v2637 = vsub.f32 %v2114, %v2114
          %v2638 = vand.u32 %v2637, 4294901760
          %v2639 = vsub.f32 %v2637, %v2638
          %v2640 = vand.u32 %v2639, 4294901760
          %2641 = vmatpush.msra.mxu0 %v2640
          %v2642 = vsub.f32 %v2110, %v2110
          %v2643 = vand.u32 %v2642, 4294901760
          %v2644 = vsub.f32 %v2642, %v2643
          %v2645 = vand.u32 %v2644, 4294901760
          %2646 = vmatpush.msra.mxu0 %v2645
          %v2647 = vsub.f32 %v2106, %v2106
          %v2648 = vand.u32 %v2647, 4294901760
          %v2649 = vsub.f32 %v2647, %v2648
          %v2650 = vand.u32 %v2649, 4294901760
          %2651 = vmatpush.msra.mxu0 %v2650
          %v2652 = vand.u32 %v2299, 4294901760
          %2653 = vmatmul.f32.gmra.mxu0 %v2652
          %v2654 = vpop.f32.mrf.mxu0
          %v2655 = vadd.f32 %v2570, %v2654
          %2656 = vdwg.mxu0
          %v2657 = vsub.f32 %v2166, %v2166
          %2658 = vmatpush.msra.mxu0 %v2657
          %v2659 = vsub.f32 %v2162, %v2162
          %2660 = vmatpush.msra.mxu0 %v2659
          %v2661 = vsub.f32 %v2158, %v2158
          %2662 = vmatpush.msra.mxu0 %v2661
          %v2663 = vsub.f32 %v2154, %v2154
          %2664 = vmatpush.msra.mxu0 %v2663
          %v2665 = vsub.f32 %v2150, %v2150
          %2666 = vmatpush.msra.mxu0 %v2665
          %v2667 = vsub.f32 %v2146, %v2146
          %2668 = vmatpush.msra.mxu0 %v2667
          %v2669 = vsub.f32 %v2142, %v2142
          %2670 = vmatpush.msra.mxu0 %v2669
          %v2671 = vsub.f32 %v2138, %v2138
          %2672 = vmatpush.msra.mxu0 %v2671
          %v2673 = vsub.f32 %v2134, %v2134
          %2674 = vmatpush.msra.mxu0 %v2673
          %v2675 = vsub.f32 %v2130, %v2130
          %2676 = vmatpush.msra.mxu0 %v2675
          %v2677 = vsub.f32 %v2126, %v2126
          %2678 = vmatpush.msra.mxu0 %v2677
          %v2679 = vsub.f32 %v2122, %v2122
          %2680 = vmatpush.msra.mxu0 %v2679
          %v2681 = vsub.f32 %v2118, %v2118
          %2682 = vmatpush.msra.mxu0 %v2681
          %v2683 = vsub.f32 %v2114, %v2114
          %2684 = vmatpush.msra.mxu0 %v2683
          %v2685 = vsub.f32 %v2110, %v2110
          %2686 = vmatpush.msra.mxu0 %v2685
          %v2687 = vsub.f32 %v2106, %v2106
          %2688 = vmatpush.msra.mxu0 %v2687
          %v2689 = vand.u32 %v2299, 4294901760
          %v2690 = vsub.f32 %v2299, %v2689
          %2691 = vmatmul.f32.gmra.mxu0 %v2690
          %v2692 = vpop.f32.mrf.mxu0
          %v2693 = vadd.f32 %v2655, %v2692
          %2694 = vdwg.mxu0
          %2695 = vmatpush.msra.mxu0 %v2166
          %2696 = vmatpush.msra.mxu0 %v2162
          %2697 = vmatpush.msra.mxu0 %v2158
          %2698 = vmatpush.msra.mxu0 %v2154
          %2699 = vmatpush.msra.mxu0 %v2150
          %2700 = vmatpush.msra.mxu0 %v2146
          %2701 = vmatpush.msra.mxu0 %v2142
          %2702 = vmatpush.msra.mxu0 %v2138
          %2703 = vmatpush.msra.mxu0 %v2134
          %2704 = vmatpush.msra.mxu0 %v2130
          %2705 = vmatpush.msra.mxu0 %v2126
          %2706 = vmatpush.msra.mxu0 %v2122
          %2707 = vmatpush.msra.mxu0 %v2118
          %2708 = vmatpush.msra.mxu0 %v2114
          %2709 = vmatpush.msra.mxu0 %v2110
          %2710 = vmatpush.msra.mxu0 %v2106
          %v2711 = vand.u32 %v2299, 4294901760
          %v2712 = vsub.f32 %v2299, %v2711
          %v2713 = vand.u32 %v2712, 4294901760
          %2714 = vmatmul.f32.gmra.mxu0 %v2713
          %v2715 = vpop.f32.mrf.mxu0
          %v2716 = vadd.f32 %v2693, %v2715
          %2717 = vdwg.mxu0
          %v2718 = vsub.f32 %v2166, %v2166
          %v2719 = vand.u32 %v2718, 4294901760
          %2720 = vmatpush.msra.mxu0 %v2719
          %v2721 = vsub.f32 %v2162, %v2162
          %v2722 = vand.u32 %v2721, 4294901760
          %2723 = vmatpush.msra.mxu0 %v2722
          %v2724 = vsub.f32 %v2158, %v2158
          %v2725 = vand.u32 %v2724, 4294901760
          %2726 = vmatpush.msra.mxu0 %v2725
          %v2727 = vsub.f32 %v2154, %v2154
          %v2728 = vand.u32 %v2727, 4294901760
          %2729 = vmatpush.msra.mxu0 %v2728
          %v2730 = vsub.f32 %v2150, %v2150
          %v2731 = vand.u32 %v2730, 4294901760
          %2732 = vmatpush.msra.mxu0 %v2731
          %v2733 = vsub.f32 %v2146, %v2146
          %v2734 = vand.u32 %v2733, 4294901760
          %2735 = vmatpush.msra.mxu0 %v2734
          %v2736 = vsub.f32 %v2142, %v2142
          %v2737 = vand.u32 %v2736, 4294901760
          %2738 = vmatpush.msra.mxu0 %v2737
          %v2739 = vsub.f32 %v2138, %v2138
          %v2740 = vand.u32 %v2739, 4294901760
          %2741 = vmatpush.msra.mxu0 %v2740
          %v2742 = vsub.f32 %v2134, %v2134
          %v2743 = vand.u32 %v2742, 4294901760
          %2744 = vmatpush.msra.mxu0 %v2743
          %v2745 = vsub.f32 %v2130, %v2130
          %v2746 = vand.u32 %v2745, 4294901760
          %2747 = vmatpush.msra.mxu0 %v2746
          %v2748 = vsub.f32 %v2126, %v2126
          %v2749 = vand.u32 %v2748, 4294901760
          %2750 = vmatpush.msra.mxu0 %v2749
          %v2751 = vsub.f32 %v2122, %v2122
          %v2752 = vand.u32 %v2751, 4294901760
          %2753 = vmatpush.msra.mxu0 %v2752
          %v2754 = vsub.f32 %v2118, %v2118
          %v2755 = vand.u32 %v2754, 4294901760
          %2756 = vmatpush.msra.mxu0 %v2755
          %v2757 = vsub.f32 %v2114, %v2114
          %v2758 = vand.u32 %v2757, 4294901760
          %2759 = vmatpush.msra.mxu0 %v2758
          %v2760 = vsub.f32 %v2110, %v2110
          %v2761 = vand.u32 %v2760, 4294901760
          %2762 = vmatpush.msra.mxu0 %v2761
          %v2763 = vsub.f32 %v2106, %v2106
          %v2764 = vand.u32 %v2763, 4294901760
          %2765 = vmatpush.msra.mxu0 %v2764
          %v2766 = vand.u32 %v2299, 4294901760
          %2767 = vmatmul.f32.gmra.mxu0 %v2766
          %v2768 = vpop.f32.mrf.mxu0
          %v2769 = vadd.f32 %v2716, %v2768
          %2770 = vdwg.mxu0
          %2771 = vmatpush.msra.mxu0 %v2166
          %2772 = vmatpush.msra.mxu0 %v2162
          %2773 = vmatpush.msra.mxu0 %v2158
          %2774 = vmatpush.msra.mxu0 %v2154
          %2775 = vmatpush.msra.mxu0 %v2150
          %2776 = vmatpush.msra.mxu0 %v2146
          %2777 = vmatpush.msra.mxu0 %v2142
          %2778 = vmatpush.msra.mxu0 %v2138
          %2779 = vmatpush.msra.mxu0 %v2134
          %2780 = vmatpush.msra.mxu0 %v2130
          %2781 = vmatpush.msra.mxu0 %v2126
          %2782 = vmatpush.msra.mxu0 %v2122
          %2783 = vmatpush.msra.mxu0 %v2118
          %2784 = vmatpush.msra.mxu0 %v2114
          %2785 = vmatpush.msra.mxu0 %v2110
          %2786 = vmatpush.msra.mxu0 %v2106
          %v2787 = vand.u32 %v2299, 4294901760
          %2788 = vmatmul.f32.gmra.mxu0 %v2787
          %v2789 = vpop.f32.mrf.mxu0
          %v2790 = vadd.f32 %v2769, %v2789
          %2791 = vdwg.mxu0
          %2792 = vmatpush.msra.mxu0 %v2230
          %2793 = vmatpush.msra.mxu0 %v2226
          %2794 = vmatpush.msra.mxu0 %v2222
          %2795 = vmatpush.msra.mxu0 %v2218
          %2796 = vmatpush.msra.mxu0 %v2214
          %2797 = vmatpush.msra.mxu0 %v2210
          %2798 = vmatpush.msra.mxu0 %v2206
          %2799 = vmatpush.msra.mxu0 %v2202
          %2800 = vmatpush.msra.mxu0 %v2198
          %2801 = vmatpush.msra.mxu0 %v2194
          %2802 = vmatpush.msra.mxu0 %v2190
          %2803 = vmatpush.msra.mxu0 %v2186
          %2804 = vmatpush.msra.mxu0 %v2182
          %2805 = vmatpush.msra.mxu0 %v2178
          %2806 = vmatpush.msra.mxu0 %v2174
          %2807 = vmatpush.msra.mxu0 %v2170
          %v2808 = vand.u32 %v2300, 4294901760
          %v2809 = vsub.f32 %v2300, %v2808
          %v2810 = vand.u32 %v2809, 4294901760
          %v2811 = vsub.f32 %v2809, %v2810
          %v2812 = vand.u32 %v2811, 4294901760
          %2813 = vmatmul.f32.gmra.mxu0 %v2812
          %v2814 = vpop.f32.mrf.mxu0
          %v2815 = vadd.f32 %v2790, %v2814
          %2816 = vdwg.mxu0
          %v2817 = vsub.f32 %v2230, %v2230
          %v2818 = vand.u32 %v2817, 4294901760
          %v2819 = vsub.f32 %v2817, %v2818
          %v2820 = vand.u32 %v2819, 4294901760
          %2821 = vmatpush.msra.mxu0 %v2820
          %v2822 = vsub.f32 %v2226, %v2226
          %v2823 = vand.u32 %v2822, 4294901760
          %v2824 = vsub.f32 %v2822, %v2823
          %v2825 = vand.u32 %v2824, 4294901760
          %2826 = vmatpush.msra.mxu0 %v2825
          %v2827 = vsub.f32 %v2222, %v2222
          %v2828 = vand.u32 %v2827, 4294901760
          %v2829 = vsub.f32 %v2827, %v2828
          %v2830 = vand.u32 %v2829, 4294901760
          %2831 = vmatpush.msra.mxu0 %v2830
          %v2832 = vsub.f32 %v2218, %v2218
          %v2833 = vand.u32 %v2832, 4294901760
          %v2834 = vsub.f32 %v2832, %v2833
          %v2835 = vand.u32 %v2834, 4294901760
          %2836 = vmatpush.msra.mxu0 %v2835
          %v2837 = vsub.f32 %v2214, %v2214
          %v2838 = vand.u32 %v2837, 4294901760
          %v2839 = vsub.f32 %v2837, %v2838
          %v2840 = vand.u32 %v2839, 4294901760
          %2841 = vmatpush.msra.mxu0 %v2840
          %v2842 = vsub.f32 %v2210, %v2210
          %v2843 = vand.u32 %v2842, 4294901760
          %v2844 = vsub.f32 %v2842, %v2843
          %v2845 = vand.u32 %v2844, 4294901760
          %2846 = vmatpush.msra.mxu0 %v2845
          %v2847 = vsub.f32 %v2206, %v2206
          %v2848 = vand.u32 %v2847, 4294901760
          %v2849 = vsub.f32 %v2847, %v2848
          %v2850 = vand.u32 %v2849, 4294901760
          %2851 = vmatpush.msra.mxu0 %v2850
          %v2852 = vsub.f32 %v2202, %v2202
          %v2853 = vand.u32 %v2852, 4294901760
          %v2854 = vsub.f32 %v2852, %v2853
          %v2855 = vand.u32 %v2854, 4294901760
          %2856 = vmatpush.msra.mxu0 %v2855
          %v2857 = vsub.f32 %v2198, %v2198
          %v2858 = vand.u32 %v2857, 4294901760
          %v2859 = vsub.f32 %v2857, %v2858
          %v2860 = vand.u32 %v2859, 4294901760
          %2861 = vmatpush.msra.mxu0 %v2860
          %v2862 = vsub.f32 %v2194, %v2194
          %v2863 = vand.u32 %v2862, 4294901760
          %v2864 = vsub.f32 %v2862, %v2863
          %v2865 = vand.u32 %v2864, 4294901760
          %2866 = vmatpush.msra.mxu0 %v2865
          %v2867 = vsub.f32 %v2190, %v2190
          %v2868 = vand.u32 %v2867, 4294901760
          %v2869 = vsub.f32 %v2867, %v2868
          %v2870 = vand.u32 %v2869, 4294901760
          %2871 = vmatpush.msra.mxu0 %v2870
          %v2872 = vsub.f32 %v2186, %v2186
          %v2873 = vand.u32 %v2872, 4294901760
          %v2874 = vsub.f32 %v2872, %v2873
          %v2875 = vand.u32 %v2874, 4294901760
          %2876 = vmatpush.msra.mxu0 %v2875
          %v2877 = vsub.f32 %v2182, %v2182
          %v2878 = vand.u32 %v2877, 4294901760
          %v2879 = vsub.f32 %v2877, %v2878
          %v2880 = vand.u32 %v2879, 4294901760
          %2881 = vmatpush.msra.mxu0 %v2880
          %v2882 = vsub.f32 %v2178, %v2178
          %v2883 = vand.u32 %v2882, 4294901760
          %v2884 = vsub.f32 %v2882, %v2883
          %v2885 = vand.u32 %v2884, 4294901760
          %2886 = vmatpush.msra.mxu0 %v2885
          %v2887 = vsub.f32 %v2174, %v2174
          %v2888 = vand.u32 %v2887, 4294901760
          %v2889 = vsub.f32 %v2887, %v2888
          %v2890 = vand.u32 %v2889, 4294901760
          %2891 = vmatpush.msra.mxu0 %v2890
          %v2892 = vsub.f32 %v2170, %v2170
          %v2893 = vand.u32 %v2892, 4294901760
          %v2894 = vsub.f32 %v2892, %v2893
          %v2895 = vand.u32 %v2894, 4294901760
          %2896 = vmatpush.msra.mxu0 %v2895
          %v2897 = vand.u32 %v2300, 4294901760
          %2898 = vmatmul.f32.gmra.mxu0 %v2897
          %v2899 = vpop.f32.mrf.mxu0
          %v2900 = vadd.f32 %v2815, %v2899
          %2901 = vdwg.mxu0
          %v2902 = vsub.f32 %v2230, %v2230
          %2903 = vmatpush.msra.mxu0 %v2902
          %v2904 = vsub.f32 %v2226, %v2226
          %2905 = vmatpush.msra.mxu0 %v2904
          %v2906 = vsub.f32 %v2222, %v2222
          %2907 = vmatpush.msra.mxu0 %v2906
          %v2908 = vsub.f32 %v2218, %v2218
          %2909 = vmatpush.msra.mxu0 %v2908
          %v2910 = vsub.f32 %v2214, %v2214
          %2911 = vmatpush.msra.mxu0 %v2910
          %v2912 = vsub.f32 %v2210, %v2210
          %2913 = vmatpush.msra.mxu0 %v2912
          %v2914 = vsub.f32 %v2206, %v2206
          %2915 = vmatpush.msra.mxu0 %v2914
          %v2916 = vsub.f32 %v2202, %v2202
          %2917 = vmatpush.msra.mxu0 %v2916
          %v2918 = vsub.f32 %v2198, %v2198
          %2919 = vmatpush.msra.mxu0 %v2918
          %v2920 = vsub.f32 %v2194, %v2194
          %2921 = vmatpush.msra.mxu0 %v2920
          %v2922 = vsub.f32 %v2190, %v2190
          %2923 = vmatpush.msra.mxu0 %v2922
          %v2924 = vsub.f32 %v2186, %v2186
          %2925 = vmatpush.msra.mxu0 %v2924
          %v2926 = vsub.f32 %v2182, %v2182
          %2927 = vmatpush.msra.mxu0 %v2926
          %v2928 = vsub.f32 %v2178, %v2178
          %2929 = vmatpush.msra.mxu0 %v2928
          %v2930 = vsub.f32 %v2174, %v2174
          %2931 = vmatpush.msra.mxu0 %v2930
          %v2932 = vsub.f32 %v2170, %v2170
          %2933 = vmatpush.msra.mxu0 %v2932
          %v2934 = vand.u32 %v2300, 4294901760
          %v2935 = vsub.f32 %v2300, %v2934
          %2936 = vmatmul.f32.gmra.mxu0 %v2935
          %v2937 = vpop.f32.mrf.mxu0
          %v2938 = vadd.f32 %v2900, %v2937
          %2939 = vdwg.mxu0
          %2940 = vmatpush.msra.mxu0 %v2230
          %2941 = vmatpush.msra.mxu0 %v2226
          %2942 = vmatpush.msra.mxu0 %v2222
          %2943 = vmatpush.msra.mxu0 %v2218
          %2944 = vmatpush.msra.mxu0 %v2214
          %2945 = vmatpush.msra.mxu0 %v2210
          %2946 = vmatpush.msra.mxu0 %v2206
          %2947 = vmatpush.msra.mxu0 %v2202
          %2948 = vmatpush.msra.mxu0 %v2198
          %2949 = vmatpush.msra.mxu0 %v2194
          %2950 = vmatpush.msra.mxu0 %v2190
          %2951 = vmatpush.msra.mxu0 %v2186
          %2952 = vmatpush.msra.mxu0 %v2182
          %2953 = vmatpush.msra.mxu0 %v2178
          %2954 = vmatpush.msra.mxu0 %v2174
          %2955 = vmatpush.msra.mxu0 %v2170
          %v2956 = vand.u32 %v2300, 4294901760
          %v2957 = vsub.f32 %v2300, %v2956
          %v2958 = vand.u32 %v2957, 4294901760
          %2959 = vmatmul.f32.gmra.mxu0 %v2958
          %v2960 = vpop.f32.mrf.mxu0
          %v2961 = vadd.f32 %v2938, %v2960
          %2962 = vdwg.mxu0
          %v2963 = vsub.f32 %v2230, %v2230
          %v2964 = vand.u32 %v2963, 4294901760
          %2965 = vmatpush.msra.mxu0 %v2964
          %v2966 = vsub.f32 %v2226, %v2226
          %v2967 = vand.u32 %v2966, 4294901760
          %2968 = vmatpush.msra.mxu0 %v2967
          %v2969 = vsub.f32 %v2222, %v2222
          %v2970 = vand.u32 %v2969, 4294901760
          %2971 = vmatpush.msra.mxu0 %v2970
          %v2972 = vsub.f32 %v2218, %v2218
          %v2973 = vand.u32 %v2972, 4294901760
          %2974 = vmatpush.msra.mxu0 %v2973
          %v2975 = vsub.f32 %v2214, %v2214
          %v2976 = vand.u32 %v2975, 4294901760
          %2977 = vmatpush.msra.mxu0 %v2976
          %v2978 = vsub.f32 %v2210, %v2210
          %v2979 = vand.u32 %v2978, 4294901760
          %2980 = vmatpush.msra.mxu0 %v2979
          %v2981 = vsub.f32 %v2206, %v2206
          %v2982 = vand.u32 %v2981, 4294901760
          %2983 = vmatpush.msra.mxu0 %v2982
          %v2984 = vsub.f32 %v2202, %v2202
          %v2985 = vand.u32 %v2984, 4294901760
          %2986 = vmatpush.msra.mxu0 %v2985
          %v2987 = vsub.f32 %v2198, %v2198
          %v2988 = vand.u32 %v2987, 4294901760
          %2989 = vmatpush.msra.mxu0 %v2988
          %v2990 = vsub.f32 %v2194, %v2194
          %v2991 = vand.u32 %v2990, 4294901760
          %2992 = vmatpush.msra.mxu0 %v2991
          %v2993 = vsub.f32 %v2190, %v2190
          %v2994 = vand.u32 %v2993, 4294901760
          %2995 = vmatpush.msra.mxu0 %v2994
          %v2996 = vsub.f32 %v2186, %v2186
          %v2997 = vand.u32 %v2996, 4294901760
          %2998 = vmatpush.msra.mxu0 %v2997
          %v2999 = vsub.f32 %v2182, %v2182
          %v3000 = vand.u32 %v2999, 4294901760
          %3001 = vmatpush.msra.mxu0 %v3000
          %v3002 = vsub.f32 %v2178, %v2178
          %v3003 = vand.u32 %v3002, 4294901760
          %3004 = vmatpush.msra.mxu0 %v3003
          %v3005 = vsub.f32 %v2174, %v2174
          %v3006 = vand.u32 %v3005, 4294901760
          %3007 = vmatpush.msra.mxu0 %v3006
          %v3008 = vsub.f32 %v2170, %v2170
          %v3009 = vand.u32 %v3008, 4294901760
          %3010 = vmatpush.msra.mxu0 %v3009
          %v3011 = vand.u32 %v2300, 4294901760
          %3012 = vmatmul.f32.gmra.mxu0 %v3011
          %v3013 = vpop.f32.mrf.mxu0
          %v3014 = vadd.f32 %v2961, %v3013
          %3015 = vdwg.mxu0
          %3016 = vmatpush.msra.mxu0 %v2230
          %3017 = vmatpush.msra.mxu0 %v2226
          %3018 = vmatpush.msra.mxu0 %v2222
          %3019 = vmatpush.msra.mxu0 %v2218
          %3020 = vmatpush.msra.mxu0 %v2214
          %3021 = vmatpush.msra.mxu0 %v2210
          %3022 = vmatpush.msra.mxu0 %v2206
          %3023 = vmatpush.msra.mxu0 %v2202
          %3024 = vmatpush.msra.mxu0 %v2198
          %3025 = vmatpush.msra.mxu0 %v2194
          %3026 = vmatpush.msra.mxu0 %v2190
          %3027 = vmatpush.msra.mxu0 %v2186
          %3028 = vmatpush.msra.mxu0 %v2182
          %3029 = vmatpush.msra.mxu0 %v2178
          %3030 = vmatpush.msra.mxu0 %v2174
          %3031 = vmatpush.msra.mxu0 %v2170
          %v3032 = vand.u32 %v2300, 4294901760
          %3033 = vmatmul.f32.gmra.mxu0 %v3032
          %v3034 = vpop.f32.mrf.mxu0
          %v3035 = vadd.f32 %v3014, %v3034
          %3036 = vdwg.mxu0
          %3037 = vmatpush.msra.mxu0 %v2294
          %3038 = vmatpush.msra.mxu0 %v2290
          %3039 = vmatpush.msra.mxu0 %v2286
          %3040 = vmatpush.msra.mxu0 %v2282
          %3041 = vmatpush.msra.mxu0 %v2278
          %3042 = vmatpush.msra.mxu0 %v2274
          %3043 = vmatpush.msra.mxu0 %v2270
          %3044 = vmatpush.msra.mxu0 %v2266
          %3045 = vmatpush.msra.mxu0 %v2262
          %3046 = vmatpush.msra.mxu0 %v2258
          %3047 = vmatpush.msra.mxu0 %v2254
          %3048 = vmatpush.msra.mxu0 %v2250
          %3049 = vmatpush.msra.mxu0 %v2246
          %3050 = vmatpush.msra.mxu0 %v2242
          %3051 = vmatpush.msra.mxu0 %v2238
          %3052 = vmatpush.msra.mxu0 %v2234
          %v3053 = vand.u32 %v2301, 4294901760
          %v3054 = vsub.f32 %v2301, %v3053
          %v3055 = vand.u32 %v3054, 4294901760
          %v3056 = vsub.f32 %v3054, %v3055
          %v3057 = vand.u32 %v3056, 4294901760
          %3058 = vmatmul.f32.gmra.mxu0 %v3057
          %v3059 = vpop.f32.mrf.mxu0
          %v3060 = vadd.f32 %v3035, %v3059
          %3061 = vdwg.mxu0
          %v3062 = vsub.f32 %v2294, %v2294
          %v3063 = vand.u32 %v3062, 4294901760
          %v3064 = vsub.f32 %v3062, %v3063
          %v3065 = vand.u32 %v3064, 4294901760
          %3066 = vmatpush.msra.mxu0 %v3065
          %v3067 = vsub.f32 %v2290, %v2290
          %v3068 = vand.u32 %v3067, 4294901760
          %v3069 = vsub.f32 %v3067, %v3068
          %v3070 = vand.u32 %v3069, 4294901760
          %3071 = vmatpush.msra.mxu0 %v3070
          %v3072 = vsub.f32 %v2286, %v2286
          %v3073 = vand.u32 %v3072, 4294901760
          %v3074 = vsub.f32 %v3072, %v3073
          %v3075 = vand.u32 %v3074, 4294901760
          %3076 = vmatpush.msra.mxu0 %v3075
          %v3077 = vsub.f32 %v2282, %v2282
          %v3078 = vand.u32 %v3077, 4294901760
          %v3079 = vsub.f32 %v3077, %v3078
          %v3080 = vand.u32 %v3079, 4294901760
          %3081 = vmatpush.msra.mxu0 %v3080
          %v3082 = vsub.f32 %v2278, %v2278
          %v3083 = vand.u32 %v3082, 4294901760
          %v3084 = vsub.f32 %v3082, %v3083
          %v3085 = vand.u32 %v3084, 4294901760
          %3086 = vmatpush.msra.mxu0 %v3085
          %v3087 = vsub.f32 %v2274, %v2274
          %v3088 = vand.u32 %v3087, 4294901760
          %v3089 = vsub.f32 %v3087, %v3088
          %v3090 = vand.u32 %v3089, 4294901760
          %3091 = vmatpush.msra.mxu0 %v3090
          %v3092 = vsub.f32 %v2270, %v2270
          %v3093 = vand.u32 %v3092, 4294901760
          %v3094 = vsub.f32 %v3092, %v3093
          %v3095 = vand.u32 %v3094, 4294901760
          %3096 = vmatpush.msra.mxu0 %v3095
          %v3097 = vsub.f32 %v2266, %v2266
          %v3098 = vand.u32 %v3097, 4294901760
          %v3099 = vsub.f32 %v3097, %v3098
          %v3100 = vand.u32 %v3099, 4294901760
          %3101 = vmatpush.msra.mxu0 %v3100
          %v3102 = vsub.f32 %v2262, %v2262
          %v3103 = vand.u32 %v3102, 4294901760
          %v3104 = vsub.f32 %v3102, %v3103
          %v3105 = vand.u32 %v3104, 4294901760
          %3106 = vmatpush.msra.mxu0 %v3105
          %v3107 = vsub.f32 %v2258, %v2258
          %v3108 = vand.u32 %v3107, 4294901760
          %v3109 = vsub.f32 %v3107, %v3108
          %v3110 = vand.u32 %v3109, 4294901760
          %3111 = vmatpush.msra.mxu0 %v3110
          %v3112 = vsub.f32 %v2254, %v2254
          %v3113 = vand.u32 %v3112, 4294901760
          %v3114 = vsub.f32 %v3112, %v3113
          %v3115 = vand.u32 %v3114, 4294901760
          %3116 = vmatpush.msra.mxu0 %v3115
          %v3117 = vsub.f32 %v2250, %v2250
          %v3118 = vand.u32 %v3117, 4294901760
          %v3119 = vsub.f32 %v3117, %v3118
          %v3120 = vand.u32 %v3119, 4294901760
          %3121 = vmatpush.msra.mxu0 %v3120
          %v3122 = vsub.f32 %v2246, %v2246
          %v3123 = vand.u32 %v3122, 4294901760
          %v3124 = vsub.f32 %v3122, %v3123
          %v3125 = vand.u32 %v3124, 4294901760
          %3126 = vmatpush.msra.mxu0 %v3125
          %v3127 = vsub.f32 %v2242, %v2242
          %v3128 = vand.u32 %v3127, 4294901760
          %v3129 = vsub.f32 %v3127, %v3128
          %v3130 = vand.u32 %v3129, 4294901760
          %3131 = vmatpush.msra.mxu0 %v3130
          %v3132 = vsub.f32 %v2238, %v2238
          %v3133 = vand.u32 %v3132, 4294901760
          %v3134 = vsub.f32 %v3132, %v3133
          %v3135 = vand.u32 %v3134, 4294901760
          %3136 = vmatpush.msra.mxu0 %v3135
          %v3137 = vsub.f32 %v2234, %v2234
          %v3138 = vand.u32 %v3137, 4294901760
          %v3139 = vsub.f32 %v3137, %v3138
          %v3140 = vand.u32 %v3139, 4294901760
          %3141 = vmatpush.msra.mxu0 %v3140
          %v3142 = vand.u32 %v2301, 4294901760
          %3143 = vmatmul.f32.gmra.mxu0 %v3142
          %v3144 = vpop.f32.mrf.mxu0
          %v3145 = vadd.f32 %v3060, %v3144
          %3146 = vdwg.mxu0
          %v3147 = vsub.f32 %v2294, %v2294
          %3148 = vmatpush.msra.mxu0 %v3147
          %v3149 = vsub.f32 %v2290, %v2290
          %3150 = vmatpush.msra.mxu0 %v3149
          %v3151 = vsub.f32 %v2286, %v2286
          %3152 = vmatpush.msra.mxu0 %v3151
          %v3153 = vsub.f32 %v2282, %v2282
          %3154 = vmatpush.msra.mxu0 %v3153
          %v3155 = vsub.f32 %v2278, %v2278
          %3156 = vmatpush.msra.mxu0 %v3155
          %v3157 = vsub.f32 %v2274, %v2274
          %3158 = vmatpush.msra.mxu0 %v3157
          %v3159 = vsub.f32 %v2270, %v2270
          %3160 = vmatpush.msra.mxu0 %v3159
          %v3161 = vsub.f32 %v2266, %v2266
          %3162 = vmatpush.msra.mxu0 %v3161
          %v3163 = vsub.f32 %v2262, %v2262
          %3164 = vmatpush.msra.mxu0 %v3163
          %v3165 = vsub.f32 %v2258, %v2258
          %3166 = vmatpush.msra.mxu0 %v3165
          %v3167 = vsub.f32 %v2254, %v2254
          %3168 = vmatpush.msra.mxu0 %v3167
          %v3169 = vsub.f32 %v2250, %v2250
          %3170 = vmatpush.msra.mxu0 %v3169
          %v3171 = vsub.f32 %v2246, %v2246
          %3172 = vmatpush.msra.mxu0 %v3171
          %v3173 = vsub.f32 %v2242, %v2242
          %3174 = vmatpush.msra.mxu0 %v3173
          %v3175 = vsub.f32 %v2238, %v2238
          %3176 = vmatpush.msra.mxu0 %v3175
          %v3177 = vsub.f32 %v2234, %v2234
          %3178 = vmatpush.msra.mxu0 %v3177
          %v3179 = vand.u32 %v2301, 4294901760
          %v3180 = vsub.f32 %v2301, %v3179
          %3181 = vmatmul.f32.gmra.mxu0 %v3180
          %v3182 = vpop.f32.mrf.mxu0
          %v3183 = vadd.f32 %v3145, %v3182
          %3184 = vdwg.mxu0
          %3185 = vmatpush.msra.mxu0 %v2294
          %3186 = vmatpush.msra.mxu0 %v2290
          %3187 = vmatpush.msra.mxu0 %v2286
          %3188 = vmatpush.msra.mxu0 %v2282
          %3189 = vmatpush.msra.mxu0 %v2278
          %3190 = vmatpush.msra.mxu0 %v2274
          %3191 = vmatpush.msra.mxu0 %v2270
          %3192 = vmatpush.msra.mxu0 %v2266
          %3193 = vmatpush.msra.mxu0 %v2262
          %3194 = vmatpush.msra.mxu0 %v2258
          %3195 = vmatpush.msra.mxu0 %v2254
          %3196 = vmatpush.msra.mxu0 %v2250
          %3197 = vmatpush.msra.mxu0 %v2246
          %3198 = vmatpush.msra.mxu0 %v2242
          %3199 = vmatpush.msra.mxu0 %v2238
          %3200 = vmatpush.msra.mxu0 %v2234
          %v3201 = vand.u32 %v2301, 4294901760
          %v3202 = vsub.f32 %v2301, %v3201
          %v3203 = vand.u32 %v3202, 4294901760
          %3204 = vmatmul.f32.gmra.mxu0 %v3203
          %v3205 = vpop.f32.mrf.mxu0
          %v3206 = vadd.f32 %v3183, %v3205
          %3207 = vdwg.mxu0
          %v3208 = vsub.f32 %v2294, %v2294
          %v3209 = vand.u32 %v3208, 4294901760
          %3210 = vmatpush.msra.mxu0 %v3209
          %v3211 = vsub.f32 %v2290, %v2290
          %v3212 = vand.u32 %v3211, 4294901760
          %3213 = vmatpush.msra.mxu0 %v3212
          %v3214 = vsub.f32 %v2286, %v2286
          %v3215 = vand.u32 %v3214, 4294901760
          %3216 = vmatpush.msra.mxu0 %v3215
          %v3217 = vsub.f32 %v2282, %v2282
          %v3218 = vand.u32 %v3217, 4294901760
          %3219 = vmatpush.msra.mxu0 %v3218
          %v3220 = vsub.f32 %v2278, %v2278
          %v3221 = vand.u32 %v3220, 4294901760
          %3222 = vmatpush.msra.mxu0 %v3221
          %v3223 = vsub.f32 %v2274, %v2274
          %v3224 = vand.u32 %v3223, 4294901760
          %3225 = vmatpush.msra.mxu0 %v3224
          %v3226 = vsub.f32 %v2270, %v2270
          %v3227 = vand.u32 %v3226, 4294901760
          %3228 = vmatpush.msra.mxu0 %v3227
          %v3229 = vsub.f32 %v2266, %v2266
          %v3230 = vand.u32 %v3229, 4294901760
          %3231 = vmatpush.msra.mxu0 %v3230
          %v3232 = vsub.f32 %v2262, %v2262
          %v3233 = vand.u32 %v3232, 4294901760
          %3234 = vmatpush.msra.mxu0 %v3233
          %v3235 = vsub.f32 %v2258, %v2258
          %v3236 = vand.u32 %v3235, 4294901760
          %3237 = vmatpush.msra.mxu0 %v3236
          %v3238 = vsub.f32 %v2254, %v2254
          %v3239 = vand.u32 %v3238, 4294901760
          %3240 = vmatpush.msra.mxu0 %v3239
          %v3241 = vsub.f32 %v2250, %v2250
          %v3242 = vand.u32 %v3241, 4294901760
          %3243 = vmatpush.msra.mxu0 %v3242
          %v3244 = vsub.f32 %v2246, %v2246
          %v3245 = vand.u32 %v3244, 4294901760
          %3246 = vmatpush.msra.mxu0 %v3245
          %v3247 = vsub.f32 %v2242, %v2242
          %v3248 = vand.u32 %v3247, 4294901760
          %3249 = vmatpush.msra.mxu0 %v3248
          %v3250 = vsub.f32 %v2238, %v2238
          %v3251 = vand.u32 %v3250, 4294901760
          %3252 = vmatpush.msra.mxu0 %v3251
          %v3253 = vsub.f32 %v2234, %v2234
          %v3254 = vand.u32 %v3253, 4294901760
          %3255 = vmatpush.msra.mxu0 %v3254
          %v3256 = vand.u32 %v2301, 4294901760
          %3257 = vmatmul.f32.gmra.mxu0 %v3256
          %v3258 = vpop.f32.mrf.mxu0
          %v3259 = vadd.f32 %v3206, %v3258
          %3260 = vdwg.mxu0
          %3261 = vmatpush.msra.mxu0 %v2294
          %3262 = vmatpush.msra.mxu0 %v2290
          %3263 = vmatpush.msra.mxu0 %v2286
          %3264 = vmatpush.msra.mxu0 %v2282
          %3265 = vmatpush.msra.mxu0 %v2278
          %3266 = vmatpush.msra.mxu0 %v2274
          %3267 = vmatpush.msra.mxu0 %v2270
          %3268 = vmatpush.msra.mxu0 %v2266
          %3269 = vmatpush.msra.mxu0 %v2262
          %3270 = vmatpush.msra.mxu0 %v2258
          %3271 = vmatpush.msra.mxu0 %v2254
          %3272 = vmatpush.msra.mxu0 %v2250
          %3273 = vmatpush.msra.mxu0 %v2246
          %3274 = vmatpush.msra.mxu0 %v2242
          %3275 = vmatpush.msra.mxu0 %v2238
          %3276 = vmatpush.msra.mxu0 %v2234
          %v3277 = vand.u32 %v2301, 4294901760
          %3278 = vmatmul.f32.gmra.mxu0 %v3277
          %v3279 = vpop.f32.mrf.mxu0
          %v3280 = vadd.f32 %v3259, %v3279
          %3281 = vdwg.mxu0
          %3282 = vmatpush.msra.mxu0 %v2103
          %3283 = vmatpush.msra.mxu0 %v2099
          %3284 = vmatpush.msra.mxu0 %v2095
          %3285 = vmatpush.msra.mxu0 %v2091
          %3286 = vmatpush.msra.mxu0 %v2087
          %3287 = vmatpush.msra.mxu0 %v2083
          %3288 = vmatpush.msra.mxu0 %v2079
          %3289 = vmatpush.msra.mxu0 %v2075
          %3290 = vmatpush.msra.mxu0 %v2071
          %3291 = vmatpush.msra.mxu0 %v2067
          %3292 = vmatpush.msra.mxu0 %v2063
          %3293 = vmatpush.msra.mxu0 %v2059
          %3294 = vmatpush.msra.mxu0 %v2055
          %3295 = vmatpush.msra.mxu0 %v2051
          %3296 = vmatpush.msra.mxu0 %v2047
          %3297 = vmatpush.msra.mxu0 %v2043
          %v3298 = vand.u32 %v2298, 4294901760
          %v3299 = vsub.f32 %v2298, %v3298
          %v3300 = vand.u32 %v3299, 4294901760
          %v3301 = vsub.f32 %v3299, %v3300
          %v3302 = vand.u32 %v3301, 4294901760
          %3303 = vmatmul.f32.gmra.mxu0 %v3302
          %v3304 = vpop.f32.mrf.mxu0
          %v3305 = vadd.f32 0.0, %v3304
          %3306 = vdwg.mxu0
          %v3307 = vsub.f32 %v2103, %v2103
          %v3308 = vand.u32 %v3307, 4294901760
          %v3309 = vsub.f32 %v3307, %v3308
          %v3310 = vand.u32 %v3309, 4294901760
          %3311 = vmatpush.msra.mxu0 %v3310
          %v3312 = vsub.f32 %v2099, %v2099
          %v3313 = vand.u32 %v3312, 4294901760
          %v3314 = vsub.f32 %v3312, %v3313
          %v3315 = vand.u32 %v3314, 4294901760
          %3316 = vmatpush.msra.mxu0 %v3315
          %v3317 = vsub.f32 %v2095, %v2095
          %v3318 = vand.u32 %v3317, 4294901760
          %v3319 = vsub.f32 %v3317, %v3318
          %v3320 = vand.u32 %v3319, 4294901760
          %3321 = vmatpush.msra.mxu0 %v3320
          %v3322 = vsub.f32 %v2091, %v2091
          %v3323 = vand.u32 %v3322, 4294901760
          %v3324 = vsub.f32 %v3322, %v3323
          %v3325 = vand.u32 %v3324, 4294901760
          %3326 = vmatpush.msra.mxu0 %v3325
          %v3327 = vsub.f32 %v2087, %v2087
          %v3328 = vand.u32 %v3327, 4294901760
          %v3329 = vsub.f32 %v3327, %v3328
          %v3330 = vand.u32 %v3329, 4294901760
          %3331 = vmatpush.msra.mxu0 %v3330
          %v3332 = vsub.f32 %v2083, %v2083
          %v3333 = vand.u32 %v3332, 4294901760
          %v3334 = vsub.f32 %v3332, %v3333
          %v3335 = vand.u32 %v3334, 4294901760
          %3336 = vmatpush.msra.mxu0 %v3335
          %v3337 = vsub.f32 %v2079, %v2079
          %v3338 = vand.u32 %v3337, 4294901760
          %v3339 = vsub.f32 %v3337, %v3338
          %v3340 = vand.u32 %v3339, 4294901760
          %3341 = vmatpush.msra.mxu0 %v3340
          %v3342 = vsub.f32 %v2075, %v2075
          %v3343 = vand.u32 %v3342, 4294901760
          %v3344 = vsub.f32 %v3342, %v3343
          %v3345 = vand.u32 %v3344, 4294901760
          %3346 = vmatpush.msra.mxu0 %v3345
          %v3347 = vsub.f32 %v2071, %v2071
          %v3348 = vand.u32 %v3347, 4294901760
          %v3349 = vsub.f32 %v3347, %v3348
          %v3350 = vand.u32 %v3349, 4294901760
          %3351 = vmatpush.msra.mxu0 %v3350
          %v3352 = vsub.f32 %v2067, %v2067
          %v3353 = vand.u32 %v3352, 4294901760
          %v3354 = vsub.f32 %v3352, %v3353
          %v3355 = vand.u32 %v3354, 4294901760
          %3356 = vmatpush.msra.mxu0 %v3355
          %v3357 = vsub.f32 %v2063, %v2063
          %v3358 = vand.u32 %v3357, 4294901760
          %v3359 = vsub.f32 %v3357, %v3358
          %v3360 = vand.u32 %v3359, 4294901760
          %3361 = vmatpush.msra.mxu0 %v3360
          %v3362 = vsub.f32 %v2059, %v2059
          %v3363 = vand.u32 %v3362, 4294901760
          %v3364 = vsub.f32 %v3362, %v3363
          %v3365 = vand.u32 %v3364, 4294901760
          %3366 = vmatpush.msra.mxu0 %v3365
          %v3367 = vsub.f32 %v2055, %v2055
          %v3368 = vand.u32 %v3367, 4294901760
          %v3369 = vsub.f32 %v3367, %v3368
          %v3370 = vand.u32 %v3369, 4294901760
          %3371 = vmatpush.msra.mxu0 %v3370
          %v3372 = vsub.f32 %v2051, %v2051
          %v3373 = vand.u32 %v3372, 4294901760
          %v3374 = vsub.f32 %v3372, %v3373
          %v3375 = vand.u32 %v3374, 4294901760
          %3376 = vmatpush.msra.mxu0 %v3375
          %v3377 = vsub.f32 %v2047, %v2047
          %v3378 = vand.u32 %v3377, 4294901760
          %v3379 = vsub.f32 %v3377, %v3378
          %v3380 = vand.u32 %v3379, 4294901760
          %3381 = vmatpush.msra.mxu0 %v3380
          %v3382 = vsub.f32 %v2043, %v2043
          %v3383 = vand.u32 %v3382, 4294901760
          %v3384 = vsub.f32 %v3382, %v3383
          %v3385 = vand.u32 %v3384, 4294901760
          %3386 = vmatpush.msra.mxu0 %v3385
          %v3387 = vand.u32 %v2298, 4294901760
          %3388 = vmatmul.f32.gmra.mxu0 %v3387
          %v3389 = vpop.f32.mrf.mxu0
          %v3390 = vadd.f32 %v3305, %v3389
          %3391 = vdwg.mxu0
          %v3392 = vsub.f32 %v2103, %v2103
          %3393 = vmatpush.msra.mxu0 %v3392
          %v3394 = vsub.f32 %v2099, %v2099
          %3395 = vmatpush.msra.mxu0 %v3394
          %v3396 = vsub.f32 %v2095, %v2095
          %3397 = vmatpush.msra.mxu0 %v3396
          %v3398 = vsub.f32 %v2091, %v2091
          %3399 = vmatpush.msra.mxu0 %v3398
          %v3400 = vsub.f32 %v2087, %v2087
          %3401 = vmatpush.msra.mxu0 %v3400
          %v3402 = vsub.f32 %v2083, %v2083
          %3403 = vmatpush.msra.mxu0 %v3402
          %v3404 = vsub.f32 %v2079, %v2079
          %3405 = vmatpush.msra.mxu0 %v3404
          %v3406 = vsub.f32 %v2075, %v2075
          %3407 = vmatpush.msra.mxu0 %v3406
          %v3408 = vsub.f32 %v2071, %v2071
          %3409 = vmatpush.msra.mxu0 %v3408
          %v3410 = vsub.f32 %v2067, %v2067
          %3411 = vmatpush.msra.mxu0 %v3410
          %v3412 = vsub.f32 %v2063, %v2063
          %3413 = vmatpush.msra.mxu0 %v3412
          %v3414 = vsub.f32 %v2059, %v2059
          %3415 = vmatpush.msra.mxu0 %v3414
          %v3416 = vsub.f32 %v2055, %v2055
          %3417 = vmatpush.msra.mxu0 %v3416
          %v3418 = vsub.f32 %v2051, %v2051
          %3419 = vmatpush.msra.mxu0 %v3418
          %v3420 = vsub.f32 %v2047, %v2047
          %3421 = vmatpush.msra.mxu0 %v3420
          %v3422 = vsub.f32 %v2043, %v2043
          %3423 = vmatpush.msra.mxu0 %v3422
          %v3424 = vand.u32 %v2298, 4294901760
          %v3425 = vsub.f32 %v2298, %v3424
          %3426 = vmatmul.f32.gmra.mxu0 %v3425
          %v3427 = vpop.f32.mrf.mxu0
          %v3428 = vadd.f32 %v3390, %v3427
          %3429 = vdwg.mxu0
          %3430 = vmatpush.msra.mxu0 %v2103
          %3431 = vmatpush.msra.mxu0 %v2099
          %3432 = vmatpush.msra.mxu0 %v2095
          %3433 = vmatpush.msra.mxu0 %v2091
          %3434 = vmatpush.msra.mxu0 %v2087
          %3435 = vmatpush.msra.mxu0 %v2083
          %3436 = vmatpush.msra.mxu0 %v2079
          %3437 = vmatpush.msra.mxu0 %v2075
          %3438 = vmatpush.msra.mxu0 %v2071
          %3439 = vmatpush.msra.mxu0 %v2067
          %3440 = vmatpush.msra.mxu0 %v2063
          %3441 = vmatpush.msra.mxu0 %v2059
          %3442 = vmatpush.msra.mxu0 %v2055
          %3443 = vmatpush.msra.mxu0 %v2051
          %3444 = vmatpush.msra.mxu0 %v2047
          %3445 = vmatpush.msra.mxu0 %v2043
          %v3446 = vand.u32 %v2298, 4294901760
          %v3447 = vsub.f32 %v2298, %v3446
          %v3448 = vand.u32 %v3447, 4294901760
          %3449 = vmatmul.f32.gmra.mxu0 %v3448
          %v3450 = vpop.f32.mrf.mxu0
          %v3451 = vadd.f32 %v3428, %v3450
          %3452 = vdwg.mxu0
          %v3453 = vsub.f32 %v2103, %v2103
          %v3454 = vand.u32 %v3453, 4294901760
          %3455 = vmatpush.msra.mxu0 %v3454
          %v3456 = vsub.f32 %v2099, %v2099
          %v3457 = vand.u32 %v3456, 4294901760
          %3458 = vmatpush.msra.mxu0 %v3457
          %v3459 = vsub.f32 %v2095, %v2095
          %v3460 = vand.u32 %v3459, 4294901760
          %3461 = vmatpush.msra.mxu0 %v3460
          %v3462 = vsub.f32 %v2091, %v2091
          %v3463 = vand.u32 %v3462, 4294901760
          %3464 = vmatpush.msra.mxu0 %v3463
          %v3465 = vsub.f32 %v2087, %v2087
          %v3466 = vand.u32 %v3465, 4294901760
          %3467 = vmatpush.msra.mxu0 %v3466
          %v3468 = vsub.f32 %v2083, %v2083
          %v3469 = vand.u32 %v3468, 4294901760
          %3470 = vmatpush.msra.mxu0 %v3469
          %v3471 = vsub.f32 %v2079, %v2079
          %v3472 = vand.u32 %v3471, 4294901760
          %3473 = vmatpush.msra.mxu0 %v3472
          %v3474 = vsub.f32 %v2075, %v2075
          %v3475 = vand.u32 %v3474, 4294901760
          %3476 = vmatpush.msra.mxu0 %v3475
          %v3477 = vsub.f32 %v2071, %v2071
          %v3478 = vand.u32 %v3477, 4294901760
          %3479 = vmatpush.msra.mxu0 %v3478
          %v3480 = vsub.f32 %v2067, %v2067
          %v3481 = vand.u32 %v3480, 4294901760
          %3482 = vmatpush.msra.mxu0 %v3481
          %v3483 = vsub.f32 %v2063, %v2063
          %v3484 = vand.u32 %v3483, 4294901760
          %3485 = vmatpush.msra.mxu0 %v3484
          %v3486 = vsub.f32 %v2059, %v2059
          %v3487 = vand.u32 %v3486, 4294901760
          %3488 = vmatpush.msra.mxu0 %v3487
          %v3489 = vsub.f32 %v2055, %v2055
          %v3490 = vand.u32 %v3489, 4294901760
          %3491 = vmatpush.msra.mxu0 %v3490
          %v3492 = vsub.f32 %v2051, %v2051
          %v3493 = vand.u32 %v3492, 4294901760
          %3494 = vmatpush.msra.mxu0 %v3493
          %v3495 = vsub.f32 %v2047, %v2047
          %v3496 = vand.u32 %v3495, 4294901760
          %3497 = vmatpush.msra.mxu0 %v3496
          %v3498 = vsub.f32 %v2043, %v2043
          %v3499 = vand.u32 %v3498, 4294901760
          %3500 = vmatpush.msra.mxu0 %v3499
          %v3501 = vand.u32 %v2298, 4294901760
          %3502 = vmatmul.f32.gmra.mxu0 %v3501
          %v3503 = vpop.f32.mrf.mxu0
          %v3504 = vadd.f32 %v3451, %v3503
          %3505 = vdwg.mxu0
          %3506 = vmatpush.msra.mxu0 %v2103
          %3507 = vmatpush.msra.mxu0 %v2099
          %3508 = vmatpush.msra.mxu0 %v2095
          %3509 = vmatpush.msra.mxu0 %v2091
          %3510 = vmatpush.msra.mxu0 %v2087
          %3511 = vmatpush.msra.mxu0 %v2083
          %3512 = vmatpush.msra.mxu0 %v2079
          %3513 = vmatpush.msra.mxu0 %v2075
          %3514 = vmatpush.msra.mxu0 %v2071
          %3515 = vmatpush.msra.mxu0 %v2067
          %3516 = vmatpush.msra.mxu0 %v2063
          %3517 = vmatpush.msra.mxu0 %v2059
          %3518 = vmatpush.msra.mxu0 %v2055
          %3519 = vmatpush.msra.mxu0 %v2051
          %3520 = vmatpush.msra.mxu0 %v2047
          %3521 = vmatpush.msra.mxu0 %v2043
          %v3522 = vand.u32 %v2298, 4294901760
          %3523 = vmatmul.f32.gmra.mxu0 %v3522
          %v3524 = vpop.f32.mrf.mxu0
          %v3525 = vadd.f32 %v3504, %v3524
          %3526 = vdwg.mxu0
          %3527 = vmatpush.msra.mxu0 %v2167
          %3528 = vmatpush.msra.mxu0 %v2163
          %3529 = vmatpush.msra.mxu0 %v2159
          %3530 = vmatpush.msra.mxu0 %v2155
          %3531 = vmatpush.msra.mxu0 %v2151
          %3532 = vmatpush.msra.mxu0 %v2147
          %3533 = vmatpush.msra.mxu0 %v2143
          %3534 = vmatpush.msra.mxu0 %v2139
          %3535 = vmatpush.msra.mxu0 %v2135
          %3536 = vmatpush.msra.mxu0 %v2131
          %3537 = vmatpush.msra.mxu0 %v2127
          %3538 = vmatpush.msra.mxu0 %v2123
          %3539 = vmatpush.msra.mxu0 %v2119
          %3540 = vmatpush.msra.mxu0 %v2115
          %3541 = vmatpush.msra.mxu0 %v2111
          %3542 = vmatpush.msra.mxu0 %v2107
          %v3543 = vand.u32 %v2299, 4294901760
          %v3544 = vsub.f32 %v2299, %v3543
          %v3545 = vand.u32 %v3544, 4294901760
          %v3546 = vsub.f32 %v3544, %v3545
          %v3547 = vand.u32 %v3546, 4294901760
          %3548 = vmatmul.f32.gmra.mxu0 %v3547
          %v3549 = vpop.f32.mrf.mxu0
          %v3550 = vadd.f32 %v3525, %v3549
          %3551 = vdwg.mxu0
          %v3552 = vsub.f32 %v2167, %v2167
          %v3553 = vand.u32 %v3552, 4294901760
          %v3554 = vsub.f32 %v3552, %v3553
          %v3555 = vand.u32 %v3554, 4294901760
          %3556 = vmatpush.msra.mxu0 %v3555
          %v3557 = vsub.f32 %v2163, %v2163
          %v3558 = vand.u32 %v3557, 4294901760
          %v3559 = vsub.f32 %v3557, %v3558
          %v3560 = vand.u32 %v3559, 4294901760
          %3561 = vmatpush.msra.mxu0 %v3560
          %v3562 = vsub.f32 %v2159, %v2159
          %v3563 = vand.u32 %v3562, 4294901760
          %v3564 = vsub.f32 %v3562, %v3563
          %v3565 = vand.u32 %v3564, 4294901760
          %3566 = vmatpush.msra.mxu0 %v3565
          %v3567 = vsub.f32 %v2155, %v2155
          %v3568 = vand.u32 %v3567, 4294901760
          %v3569 = vsub.f32 %v3567, %v3568
          %v3570 = vand.u32 %v3569, 4294901760
          %3571 = vmatpush.msra.mxu0 %v3570
          %v3572 = vsub.f32 %v2151, %v2151
          %v3573 = vand.u32 %v3572, 4294901760
          %v3574 = vsub.f32 %v3572, %v3573
          %v3575 = vand.u32 %v3574, 4294901760
          %3576 = vmatpush.msra.mxu0 %v3575
          %v3577 = vsub.f32 %v2147, %v2147
          %v3578 = vand.u32 %v3577, 4294901760
          %v3579 = vsub.f32 %v3577, %v3578
          %v3580 = vand.u32 %v3579, 4294901760
          %3581 = vmatpush.msra.mxu0 %v3580
          %v3582 = vsub.f32 %v2143, %v2143
          %v3583 = vand.u32 %v3582, 4294901760
          %v3584 = vsub.f32 %v3582, %v3583
          %v3585 = vand.u32 %v3584, 4294901760
          %3586 = vmatpush.msra.mxu0 %v3585
          %v3587 = vsub.f32 %v2139, %v2139
          %v3588 = vand.u32 %v3587, 4294901760
          %v3589 = vsub.f32 %v3587, %v3588
          %v3590 = vand.u32 %v3589, 4294901760
          %3591 = vmatpush.msra.mxu0 %v3590
          %v3592 = vsub.f32 %v2135, %v2135
          %v3593 = vand.u32 %v3592, 4294901760
          %v3594 = vsub.f32 %v3592, %v3593
          %v3595 = vand.u32 %v3594, 4294901760
          %3596 = vmatpush.msra.mxu0 %v3595
          %v3597 = vsub.f32 %v2131, %v2131
          %v3598 = vand.u32 %v3597, 4294901760
          %v3599 = vsub.f32 %v3597, %v3598
          %v3600 = vand.u32 %v3599, 4294901760
          %3601 = vmatpush.msra.mxu0 %v3600
          %v3602 = vsub.f32 %v2127, %v2127
          %v3603 = vand.u32 %v3602, 4294901760
          %v3604 = vsub.f32 %v3602, %v3603
          %v3605 = vand.u32 %v3604, 4294901760
          %3606 = vmatpush.msra.mxu0 %v3605
          %v3607 = vsub.f32 %v2123, %v2123
          %v3608 = vand.u32 %v3607, 4294901760
          %v3609 = vsub.f32 %v3607, %v3608
          %v3610 = vand.u32 %v3609, 4294901760
          %3611 = vmatpush.msra.mxu0 %v3610
          %v3612 = vsub.f32 %v2119, %v2119
          %v3613 = vand.u32 %v3612, 4294901760
          %v3614 = vsub.f32 %v3612, %v3613
          %v3615 = vand.u32 %v3614, 4294901760
          %3616 = vmatpush.msra.mxu0 %v3615
          %v3617 = vsub.f32 %v2115, %v2115
          %v3618 = vand.u32 %v3617, 4294901760
          %v3619 = vsub.f32 %v3617, %v3618
          %v3620 = vand.u32 %v3619, 4294901760
          %3621 = vmatpush.msra.mxu0 %v3620
          %v3622 = vsub.f32 %v2111, %v2111
          %v3623 = vand.u32 %v3622, 4294901760
          %v3624 = vsub.f32 %v3622, %v3623
          %v3625 = vand.u32 %v3624, 4294901760
          %3626 = vmatpush.msra.mxu0 %v3625
          %v3627 = vsub.f32 %v2107, %v2107
          %v3628 = vand.u32 %v3627, 4294901760
          %v3629 = vsub.f32 %v3627, %v3628
          %v3630 = vand.u32 %v3629, 4294901760
          %3631 = vmatpush.msra.mxu0 %v3630
          %v3632 = vand.u32 %v2299, 4294901760
          %3633 = vmatmul.f32.gmra.mxu0 %v3632
          %v3634 = vpop.f32.mrf.mxu0
          %v3635 = vadd.f32 %v3550, %v3634
          %3636 = vdwg.mxu0
          %v3637 = vsub.f32 %v2167, %v2167
          %3638 = vmatpush.msra.mxu0 %v3637
          %v3639 = vsub.f32 %v2163, %v2163
          %3640 = vmatpush.msra.mxu0 %v3639
          %v3641 = vsub.f32 %v2159, %v2159
          %3642 = vmatpush.msra.mxu0 %v3641
          %v3643 = vsub.f32 %v2155, %v2155
          %3644 = vmatpush.msra.mxu0 %v3643
          %v3645 = vsub.f32 %v2151, %v2151
          %3646 = vmatpush.msra.mxu0 %v3645
          %v3647 = vsub.f32 %v2147, %v2147
          %3648 = vmatpush.msra.mxu0 %v3647
          %v3649 = vsub.f32 %v2143, %v2143
          %3650 = vmatpush.msra.mxu0 %v3649
          %v3651 = vsub.f32 %v2139, %v2139
          %3652 = vmatpush.msra.mxu0 %v3651
          %v3653 = vsub.f32 %v2135, %v2135
          %3654 = vmatpush.msra.mxu0 %v3653
          %v3655 = vsub.f32 %v2131, %v2131
          %3656 = vmatpush.msra.mxu0 %v3655
          %v3657 = vsub.f32 %v2127, %v2127
          %3658 = vmatpush.msra.mxu0 %v3657
          %v3659 = vsub.f32 %v2123, %v2123
          %3660 = vmatpush.msra.mxu0 %v3659
          %v3661 = vsub.f32 %v2119, %v2119
          %3662 = vmatpush.msra.mxu0 %v3661
          %v3663 = vsub.f32 %v2115, %v2115
          %3664 = vmatpush.msra.mxu0 %v3663
          %v3665 = vsub.f32 %v2111, %v2111
          %3666 = vmatpush.msra.mxu0 %v3665
          %v3667 = vsub.f32 %v2107, %v2107
          %3668 = vmatpush.msra.mxu0 %v3667
          %v3669 = vand.u32 %v2299, 4294901760
          %v3670 = vsub.f32 %v2299, %v3669
          %3671 = vmatmul.f32.gmra.mxu0 %v3670
          %v3672 = vpop.f32.mrf.mxu0
          %v3673 = vadd.f32 %v3635, %v3672
          %3674 = vdwg.mxu0
          %3675 = vmatpush.msra.mxu0 %v2167
          %3676 = vmatpush.msra.mxu0 %v2163
          %3677 = vmatpush.msra.mxu0 %v2159
          %3678 = vmatpush.msra.mxu0 %v2155
          %3679 = vmatpush.msra.mxu0 %v2151
          %3680 = vmatpush.msra.mxu0 %v2147
          %3681 = vmatpush.msra.mxu0 %v2143
          %3682 = vmatpush.msra.mxu0 %v2139
          %3683 = vmatpush.msra.mxu0 %v2135
          %3684 = vmatpush.msra.mxu0 %v2131
          %3685 = vmatpush.msra.mxu0 %v2127
          %3686 = vmatpush.msra.mxu0 %v2123
          %3687 = vmatpush.msra.mxu0 %v2119
          %3688 = vmatpush.msra.mxu0 %v2115
          %3689 = vmatpush.msra.mxu0 %v2111
          %3690 = vmatpush.msra.mxu0 %v2107
          %v3691 = vand.u32 %v2299, 4294901760
          %v3692 = vsub.f32 %v2299, %v3691
          %v3693 = vand.u32 %v3692, 4294901760
          %3694 = vmatmul.f32.gmra.mxu0 %v3693
          %v3695 = vpop.f32.mrf.mxu0
          %v3696 = vadd.f32 %v3673, %v3695
          %3697 = vdwg.mxu0
          %v3698 = vsub.f32 %v2167, %v2167
          %v3699 = vand.u32 %v3698, 4294901760
          %3700 = vmatpush.msra.mxu0 %v3699
          %v3701 = vsub.f32 %v2163, %v2163
          %v3702 = vand.u32 %v3701, 4294901760
          %3703 = vmatpush.msra.mxu0 %v3702
          %v3704 = vsub.f32 %v2159, %v2159
          %v3705 = vand.u32 %v3704, 4294901760
          %3706 = vmatpush.msra.mxu0 %v3705
          %v3707 = vsub.f32 %v2155, %v2155
          %v3708 = vand.u32 %v3707, 4294901760
          %3709 = vmatpush.msra.mxu0 %v3708
          %v3710 = vsub.f32 %v2151, %v2151
          %v3711 = vand.u32 %v3710, 4294901760
          %3712 = vmatpush.msra.mxu0 %v3711
          %v3713 = vsub.f32 %v2147, %v2147
          %v3714 = vand.u32 %v3713, 4294901760
          %3715 = vmatpush.msra.mxu0 %v3714
          %v3716 = vsub.f32 %v2143, %v2143
          %v3717 = vand.u32 %v3716, 4294901760
          %3718 = vmatpush.msra.mxu0 %v3717
          %v3719 = vsub.f32 %v2139, %v2139
          %v3720 = vand.u32 %v3719, 4294901760
          %3721 = vmatpush.msra.mxu0 %v3720
          %v3722 = vsub.f32 %v2135, %v2135
          %v3723 = vand.u32 %v3722, 4294901760
          %3724 = vmatpush.msra.mxu0 %v3723
          %v3725 = vsub.f32 %v2131, %v2131
          %v3726 = vand.u32 %v3725, 4294901760
          %3727 = vmatpush.msra.mxu0 %v3726
          %v3728 = vsub.f32 %v2127, %v2127
          %v3729 = vand.u32 %v3728, 4294901760
          %3730 = vmatpush.msra.mxu0 %v3729
          %v3731 = vsub.f32 %v2123, %v2123
          %v3732 = vand.u32 %v3731, 4294901760
          %3733 = vmatpush.msra.mxu0 %v3732
          %v3734 = vsub.f32 %v2119, %v2119
          %v3735 = vand.u32 %v3734, 4294901760
          %3736 = vmatpush.msra.mxu0 %v3735
          %v3737 = vsub.f32 %v2115, %v2115
          %v3738 = vand.u32 %v3737, 4294901760
          %3739 = vmatpush.msra.mxu0 %v3738
          %v3740 = vsub.f32 %v2111, %v2111
          %v3741 = vand.u32 %v3740, 4294901760
          %3742 = vmatpush.msra.mxu0 %v3741
          %v3743 = vsub.f32 %v2107, %v2107
          %v3744 = vand.u32 %v3743, 4294901760
          %3745 = vmatpush.msra.mxu0 %v3744
          %v3746 = vand.u32 %v2299, 4294901760
          %3747 = vmatmul.f32.gmra.mxu0 %v3746
          %v3748 = vpop.f32.mrf.mxu0
          %v3749 = vadd.f32 %v3696, %v3748
          %3750 = vdwg.mxu0
          %3751 = vmatpush.msra.mxu0 %v2167
          %3752 = vmatpush.msra.mxu0 %v2163
          %3753 = vmatpush.msra.mxu0 %v2159
          %3754 = vmatpush.msra.mxu0 %v2155
          %3755 = vmatpush.msra.mxu0 %v2151
          %3756 = vmatpush.msra.mxu0 %v2147
          %3757 = vmatpush.msra.mxu0 %v2143
          %3758 = vmatpush.msra.mxu0 %v2139
          %3759 = vmatpush.msra.mxu0 %v2135
          %3760 = vmatpush.msra.mxu0 %v2131
          %3761 = vmatpush.msra.mxu0 %v2127
          %3762 = vmatpush.msra.mxu0 %v2123
          %3763 = vmatpush.msra.mxu0 %v2119
          %3764 = vmatpush.msra.mxu0 %v2115
          %3765 = vmatpush.msra.mxu0 %v2111
          %3766 = vmatpush.msra.mxu0 %v2107
          %v3767 = vand.u32 %v2299, 4294901760
          %3768 = vmatmul.f32.gmra.mxu0 %v3767
          %v3769 = vpop.f32.mrf.mxu0
          %v3770 = vadd.f32 %v3749, %v3769
          %3771 = vdwg.mxu0
          %3772 = vmatpush.msra.mxu0 %v2231
          %3773 = vmatpush.msra.mxu0 %v2227
          %3774 = vmatpush.msra.mxu0 %v2223
          %3775 = vmatpush.msra.mxu0 %v2219
          %3776 = vmatpush.msra.mxu0 %v2215
          %3777 = vmatpush.msra.mxu0 %v2211
          %3778 = vmatpush.msra.mxu0 %v2207
          %3779 = vmatpush.msra.mxu0 %v2203
          %3780 = vmatpush.msra.mxu0 %v2199
          %3781 = vmatpush.msra.mxu0 %v2195
          %3782 = vmatpush.msra.mxu0 %v2191
          %3783 = vmatpush.msra.mxu0 %v2187
          %3784 = vmatpush.msra.mxu0 %v2183
          %3785 = vmatpush.msra.mxu0 %v2179
          %3786 = vmatpush.msra.mxu0 %v2175
          %3787 = vmatpush.msra.mxu0 %v2171
          %v3788 = vand.u32 %v2300, 4294901760
          %v3789 = vsub.f32 %v2300, %v3788
          %v3790 = vand.u32 %v3789, 4294901760
          %v3791 = vsub.f32 %v3789, %v3790
          %v3792 = vand.u32 %v3791, 4294901760
          %3793 = vmatmul.f32.gmra.mxu0 %v3792
          %v3794 = vpop.f32.mrf.mxu0
          %v3795 = vadd.f32 %v3770, %v3794
          %3796 = vdwg.mxu0
          %v3797 = vsub.f32 %v2231, %v2231
          %v3798 = vand.u32 %v3797, 4294901760
          %v3799 = vsub.f32 %v3797, %v3798
          %v3800 = vand.u32 %v3799, 4294901760
          %3801 = vmatpush.msra.mxu0 %v3800
          %v3802 = vsub.f32 %v2227, %v2227
          %v3803 = vand.u32 %v3802, 4294901760
          %v3804 = vsub.f32 %v3802, %v3803
          %v3805 = vand.u32 %v3804, 4294901760
          %3806 = vmatpush.msra.mxu0 %v3805
          %v3807 = vsub.f32 %v2223, %v2223
          %v3808 = vand.u32 %v3807, 4294901760
          %v3809 = vsub.f32 %v3807, %v3808
          %v3810 = vand.u32 %v3809, 4294901760
          %3811 = vmatpush.msra.mxu0 %v3810
          %v3812 = vsub.f32 %v2219, %v2219
          %v3813 = vand.u32 %v3812, 4294901760
          %v3814 = vsub.f32 %v3812, %v3813
          %v3815 = vand.u32 %v3814, 4294901760
          %3816 = vmatpush.msra.mxu0 %v3815
          %v3817 = vsub.f32 %v2215, %v2215
          %v3818 = vand.u32 %v3817, 4294901760
          %v3819 = vsub.f32 %v3817, %v3818
          %v3820 = vand.u32 %v3819, 4294901760
          %3821 = vmatpush.msra.mxu0 %v3820
          %v3822 = vsub.f32 %v2211, %v2211
          %v3823 = vand.u32 %v3822, 4294901760
          %v3824 = vsub.f32 %v3822, %v3823
          %v3825 = vand.u32 %v3824, 4294901760
          %3826 = vmatpush.msra.mxu0 %v3825
          %v3827 = vsub.f32 %v2207, %v2207
          %v3828 = vand.u32 %v3827, 4294901760
          %v3829 = vsub.f32 %v3827, %v3828
          %v3830 = vand.u32 %v3829, 4294901760
          %3831 = vmatpush.msra.mxu0 %v3830
          %v3832 = vsub.f32 %v2203, %v2203
          %v3833 = vand.u32 %v3832, 4294901760
          %v3834 = vsub.f32 %v3832, %v3833
          %v3835 = vand.u32 %v3834, 4294901760
          %3836 = vmatpush.msra.mxu0 %v3835
          %v3837 = vsub.f32 %v2199, %v2199
          %v3838 = vand.u32 %v3837, 4294901760
          %v3839 = vsub.f32 %v3837, %v3838
          %v3840 = vand.u32 %v3839, 4294901760
          %3841 = vmatpush.msra.mxu0 %v3840
          %v3842 = vsub.f32 %v2195, %v2195
          %v3843 = vand.u32 %v3842, 4294901760
          %v3844 = vsub.f32 %v3842, %v3843
          %v3845 = vand.u32 %v3844, 4294901760
          %3846 = vmatpush.msra.mxu0 %v3845
          %v3847 = vsub.f32 %v2191, %v2191
          %v3848 = vand.u32 %v3847, 4294901760
          %v3849 = vsub.f32 %v3847, %v3848
          %v3850 = vand.u32 %v3849, 4294901760
          %3851 = vmatpush.msra.mxu0 %v3850
          %v3852 = vsub.f32 %v2187, %v2187
          %v3853 = vand.u32 %v3852, 4294901760
          %v3854 = vsub.f32 %v3852, %v3853
          %v3855 = vand.u32 %v3854, 4294901760
          %3856 = vmatpush.msra.mxu0 %v3855
          %v3857 = vsub.f32 %v2183, %v2183
          %v3858 = vand.u32 %v3857, 4294901760
          %v3859 = vsub.f32 %v3857, %v3858
          %v3860 = vand.u32 %v3859, 4294901760
          %3861 = vmatpush.msra.mxu0 %v3860
          %v3862 = vsub.f32 %v2179, %v2179
          %v3863 = vand.u32 %v3862, 4294901760
          %v3864 = vsub.f32 %v3862, %v3863
          %v3865 = vand.u32 %v3864, 4294901760
          %3866 = vmatpush.msra.mxu0 %v3865
          %v3867 = vsub.f32 %v2175, %v2175
          %v3868 = vand.u32 %v3867, 4294901760
          %v3869 = vsub.f32 %v3867, %v3868
          %v3870 = vand.u32 %v3869, 4294901760
          %3871 = vmatpush.msra.mxu0 %v3870
          %v3872 = vsub.f32 %v2171, %v2171
          %v3873 = vand.u32 %v3872, 4294901760
          %v3874 = vsub.f32 %v3872, %v3873
          %v3875 = vand.u32 %v3874, 4294901760
          %3876 = vmatpush.msra.mxu0 %v3875
          %v3877 = vand.u32 %v2300, 4294901760
          %3878 = vmatmul.f32.gmra.mxu0 %v3877
          %v3879 = vpop.f32.mrf.mxu0
          %v3880 = vadd.f32 %v3795, %v3879
          %3881 = vdwg.mxu0
          %v3882 = vsub.f32 %v2231, %v2231
          %3883 = vmatpush.msra.mxu0 %v3882
          %v3884 = vsub.f32 %v2227, %v2227
          %3885 = vmatpush.msra.mxu0 %v3884
          %v3886 = vsub.f32 %v2223, %v2223
          %3887 = vmatpush.msra.mxu0 %v3886
          %v3888 = vsub.f32 %v2219, %v2219
          %3889 = vmatpush.msra.mxu0 %v3888
          %v3890 = vsub.f32 %v2215, %v2215
          %3891 = vmatpush.msra.mxu0 %v3890
          %v3892 = vsub.f32 %v2211, %v2211
          %3893 = vmatpush.msra.mxu0 %v3892
          %v3894 = vsub.f32 %v2207, %v2207
          %3895 = vmatpush.msra.mxu0 %v3894
          %v3896 = vsub.f32 %v2203, %v2203
          %3897 = vmatpush.msra.mxu0 %v3896
          %v3898 = vsub.f32 %v2199, %v2199
          %3899 = vmatpush.msra.mxu0 %v3898
          %v3900 = vsub.f32 %v2195, %v2195
          %3901 = vmatpush.msra.mxu0 %v3900
          %v3902 = vsub.f32 %v2191, %v2191
          %3903 = vmatpush.msra.mxu0 %v3902
          %v3904 = vsub.f32 %v2187, %v2187
          %3905 = vmatpush.msra.mxu0 %v3904
          %v3906 = vsub.f32 %v2183, %v2183
          %3907 = vmatpush.msra.mxu0 %v3906
          %v3908 = vsub.f32 %v2179, %v2179
          %3909 = vmatpush.msra.mxu0 %v3908
          %v3910 = vsub.f32 %v2175, %v2175
          %3911 = vmatpush.msra.mxu0 %v3910
          %v3912 = vsub.f32 %v2171, %v2171
          %3913 = vmatpush.msra.mxu0 %v3912
          %v3914 = vand.u32 %v2300, 4294901760
          %v3915 = vsub.f32 %v2300, %v3914
          %3916 = vmatmul.f32.gmra.mxu0 %v3915
          %v3917 = vpop.f32.mrf.mxu0
          %v3918 = vadd.f32 %v3880, %v3917
          %3919 = vdwg.mxu0
          %3920 = vmatpush.msra.mxu0 %v2231
          %3921 = vmatpush.msra.mxu0 %v2227
          %3922 = vmatpush.msra.mxu0 %v2223
          %3923 = vmatpush.msra.mxu0 %v2219
          %3924 = vmatpush.msra.mxu0 %v2215
          %3925 = vmatpush.msra.mxu0 %v2211
          %3926 = vmatpush.msra.mxu0 %v2207
          %3927 = vmatpush.msra.mxu0 %v2203
          %3928 = vmatpush.msra.mxu0 %v2199
          %3929 = vmatpush.msra.mxu0 %v2195
          %3930 = vmatpush.msra.mxu0 %v2191
          %3931 = vmatpush.msra.mxu0 %v2187
          %3932 = vmatpush.msra.mxu0 %v2183
          %3933 = vmatpush.msra.mxu0 %v2179
          %3934 = vmatpush.msra.mxu0 %v2175
          %3935 = vmatpush.msra.mxu0 %v2171
          %v3936 = vand.u32 %v2300, 4294901760
          %v3937 = vsub.f32 %v2300, %v3936
          %v3938 = vand.u32 %v3937, 4294901760
          %3939 = vmatmul.f32.gmra.mxu0 %v3938
          %v3940 = vpop.f32.mrf.mxu0
          %v3941 = vadd.f32 %v3918, %v3940
          %3942 = vdwg.mxu0
          %v3943 = vsub.f32 %v2231, %v2231
          %v3944 = vand.u32 %v3943, 4294901760
          %3945 = vmatpush.msra.mxu0 %v3944
          %v3946 = vsub.f32 %v2227, %v2227
          %v3947 = vand.u32 %v3946, 4294901760
          %3948 = vmatpush.msra.mxu0 %v3947
          %v3949 = vsub.f32 %v2223, %v2223
          %v3950 = vand.u32 %v3949, 4294901760
          %3951 = vmatpush.msra.mxu0 %v3950
          %v3952 = vsub.f32 %v2219, %v2219
          %v3953 = vand.u32 %v3952, 4294901760
          %3954 = vmatpush.msra.mxu0 %v3953
          %v3955 = vsub.f32 %v2215, %v2215
          %v3956 = vand.u32 %v3955, 4294901760
          %3957 = vmatpush.msra.mxu0 %v3956
          %v3958 = vsub.f32 %v2211, %v2211
          %v3959 = vand.u32 %v3958, 4294901760
          %3960 = vmatpush.msra.mxu0 %v3959
          %v3961 = vsub.f32 %v2207, %v2207
          %v3962 = vand.u32 %v3961, 4294901760
          %3963 = vmatpush.msra.mxu0 %v3962
          %v3964 = vsub.f32 %v2203, %v2203
          %v3965 = vand.u32 %v3964, 4294901760
          %3966 = vmatpush.msra.mxu0 %v3965
          %v3967 = vsub.f32 %v2199, %v2199
          %v3968 = vand.u32 %v3967, 4294901760
          %3969 = vmatpush.msra.mxu0 %v3968
          %v3970 = vsub.f32 %v2195, %v2195
          %v3971 = vand.u32 %v3970, 4294901760
          %3972 = vmatpush.msra.mxu0 %v3971
          %v3973 = vsub.f32 %v2191, %v2191
          %v3974 = vand.u32 %v3973, 4294901760
          %3975 = vmatpush.msra.mxu0 %v3974
          %v3976 = vsub.f32 %v2187, %v2187
          %v3977 = vand.u32 %v3976, 4294901760
          %3978 = vmatpush.msra.mxu0 %v3977
          %v3979 = vsub.f32 %v2183, %v2183
          %v3980 = vand.u32 %v3979, 4294901760
          %3981 = vmatpush.msra.mxu0 %v3980
          %v3982 = vsub.f32 %v2179, %v2179
          %v3983 = vand.u32 %v3982, 4294901760
          %3984 = vmatpush.msra.mxu0 %v3983
          %v3985 = vsub.f32 %v2175, %v2175
          %v3986 = vand.u32 %v3985, 4294901760
          %3987 = vmatpush.msra.mxu0 %v3986
          %v3988 = vsub.f32 %v2171, %v2171
          %v3989 = vand.u32 %v3988, 4294901760
          %3990 = vmatpush.msra.mxu0 %v3989
          %v3991 = vand.u32 %v2300, 4294901760
          %3992 = vmatmul.f32.gmra.mxu0 %v3991
          %v3993 = vpop.f32.mrf.mxu0
          %v3994 = vadd.f32 %v3941, %v3993
          %3995 = vdwg.mxu0
          %3996 = vmatpush.msra.mxu0 %v2231
          %3997 = vmatpush.msra.mxu0 %v2227
          %3998 = vmatpush.msra.mxu0 %v2223
          %3999 = vmatpush.msra.mxu0 %v2219
          %4000 = vmatpush.msra.mxu0 %v2215
          %4001 = vmatpush.msra.mxu0 %v2211
          %4002 = vmatpush.msra.mxu0 %v2207
          %4003 = vmatpush.msra.mxu0 %v2203
          %4004 = vmatpush.msra.mxu0 %v2199
          %4005 = vmatpush.msra.mxu0 %v2195
          %4006 = vmatpush.msra.mxu0 %v2191
          %4007 = vmatpush.msra.mxu0 %v2187
          %4008 = vmatpush.msra.mxu0 %v2183
          %4009 = vmatpush.msra.mxu0 %v2179
          %4010 = vmatpush.msra.mxu0 %v2175
          %4011 = vmatpush.msra.mxu0 %v2171
          %v4012 = vand.u32 %v2300, 4294901760
          %4013 = vmatmul.f32.gmra.mxu0 %v4012
          %v4014 = vpop.f32.mrf.mxu0
          %v4015 = vadd.f32 %v3994, %v4014
          %4016 = vdwg.mxu0
          %4017 = vmatpush.msra.mxu0 %v2295
          %4018 = vmatpush.msra.mxu0 %v2291
          %4019 = vmatpush.msra.mxu0 %v2287
          %4020 = vmatpush.msra.mxu0 %v2283
          %4021 = vmatpush.msra.mxu0 %v2279
          %4022 = vmatpush.msra.mxu0 %v2275
          %4023 = vmatpush.msra.mxu0 %v2271
          %4024 = vmatpush.msra.mxu0 %v2267
          %4025 = vmatpush.msra.mxu0 %v2263
          %4026 = vmatpush.msra.mxu0 %v2259
          %4027 = vmatpush.msra.mxu0 %v2255
          %4028 = vmatpush.msra.mxu0 %v2251
          %4029 = vmatpush.msra.mxu0 %v2247
          %4030 = vmatpush.msra.mxu0 %v2243
          %4031 = vmatpush.msra.mxu0 %v2239
          %4032 = vmatpush.msra.mxu0 %v2235
          %v4033 = vand.u32 %v2301, 4294901760
          %v4034 = vsub.f32 %v2301, %v4033
          %v4035 = vand.u32 %v4034, 4294901760
          %v4036 = vsub.f32 %v4034, %v4035
          %v4037 = vand.u32 %v4036, 4294901760
          %4038 = vmatmul.f32.gmra.mxu0 %v4037
          %v4039 = vpop.f32.mrf.mxu0
          %v4040 = vadd.f32 %v4015, %v4039
          %4041 = vdwg.mxu0
          %v4042 = vsub.f32 %v2295, %v2295
          %v4043 = vand.u32 %v4042, 4294901760
          %v4044 = vsub.f32 %v4042, %v4043
          %v4045 = vand.u32 %v4044, 4294901760
          %4046 = vmatpush.msra.mxu0 %v4045
          %v4047 = vsub.f32 %v2291, %v2291
          %v4048 = vand.u32 %v4047, 4294901760
          %v4049 = vsub.f32 %v4047, %v4048
          %v4050 = vand.u32 %v4049, 4294901760
          %4051 = vmatpush.msra.mxu0 %v4050
          %v4052 = vsub.f32 %v2287, %v2287
          %v4053 = vand.u32 %v4052, 4294901760
          %v4054 = vsub.f32 %v4052, %v4053
          %v4055 = vand.u32 %v4054, 4294901760
          %4056 = vmatpush.msra.mxu0 %v4055
          %v4057 = vsub.f32 %v2283, %v2283
          %v4058 = vand.u32 %v4057, 4294901760
          %v4059 = vsub.f32 %v4057, %v4058
          %v4060 = vand.u32 %v4059, 4294901760
          %4061 = vmatpush.msra.mxu0 %v4060
          %v4062 = vsub.f32 %v2279, %v2279
          %v4063 = vand.u32 %v4062, 4294901760
          %v4064 = vsub.f32 %v4062, %v4063
          %v4065 = vand.u32 %v4064, 4294901760
          %4066 = vmatpush.msra.mxu0 %v4065
          %v4067 = vsub.f32 %v2275, %v2275
          %v4068 = vand.u32 %v4067, 4294901760
          %v4069 = vsub.f32 %v4067, %v4068
          %v4070 = vand.u32 %v4069, 4294901760
          %4071 = vmatpush.msra.mxu0 %v4070
          %v4072 = vsub.f32 %v2271, %v2271
          %v4073 = vand.u32 %v4072, 4294901760
          %v4074 = vsub.f32 %v4072, %v4073
          %v4075 = vand.u32 %v4074, 4294901760
          %4076 = vmatpush.msra.mxu0 %v4075
          %v4077 = vsub.f32 %v2267, %v2267
          %v4078 = vand.u32 %v4077, 4294901760
          %v4079 = vsub.f32 %v4077, %v4078
          %v4080 = vand.u32 %v4079, 4294901760
          %4081 = vmatpush.msra.mxu0 %v4080
          %v4082 = vsub.f32 %v2263, %v2263
          %v4083 = vand.u32 %v4082, 4294901760
          %v4084 = vsub.f32 %v4082, %v4083
          %v4085 = vand.u32 %v4084, 4294901760
          %4086 = vmatpush.msra.mxu0 %v4085
          %v4087 = vsub.f32 %v2259, %v2259
          %v4088 = vand.u32 %v4087, 4294901760
          %v4089 = vsub.f32 %v4087, %v4088
          %v4090 = vand.u32 %v4089, 4294901760
          %4091 = vmatpush.msra.mxu0 %v4090
          %v4092 = vsub.f32 %v2255, %v2255
          %v4093 = vand.u32 %v4092, 4294901760
          %v4094 = vsub.f32 %v4092, %v4093
          %v4095 = vand.u32 %v4094, 4294901760
          %4096 = vmatpush.msra.mxu0 %v4095
          %v4097 = vsub.f32 %v2251, %v2251
          %v4098 = vand.u32 %v4097, 4294901760
          %v4099 = vsub.f32 %v4097, %v4098
          %v4100 = vand.u32 %v4099, 4294901760
          %4101 = vmatpush.msra.mxu0 %v4100
          %v4102 = vsub.f32 %v2247, %v2247
          %v4103 = vand.u32 %v4102, 4294901760
          %v4104 = vsub.f32 %v4102, %v4103
          %v4105 = vand.u32 %v4104, 4294901760
          %4106 = vmatpush.msra.mxu0 %v4105
          %v4107 = vsub.f32 %v2243, %v2243
          %v4108 = vand.u32 %v4107, 4294901760
          %v4109 = vsub.f32 %v4107, %v4108
          %v4110 = vand.u32 %v4109, 4294901760
          %4111 = vmatpush.msra.mxu0 %v4110
          %v4112 = vsub.f32 %v2239, %v2239
          %v4113 = vand.u32 %v4112, 4294901760
          %v4114 = vsub.f32 %v4112, %v4113
          %v4115 = vand.u32 %v4114, 4294901760
          %4116 = vmatpush.msra.mxu0 %v4115
          %v4117 = vsub.f32 %v2235, %v2235
          %v4118 = vand.u32 %v4117, 4294901760
          %v4119 = vsub.f32 %v4117, %v4118
          %v4120 = vand.u32 %v4119, 4294901760
          %4121 = vmatpush.msra.mxu0 %v4120
          %v4122 = vand.u32 %v2301, 4294901760
          %4123 = vmatmul.f32.gmra.mxu0 %v4122
          %v4124 = vpop.f32.mrf.mxu0
          %v4125 = vadd.f32 %v4040, %v4124
          %4126 = vdwg.mxu0
          %v4127 = vsub.f32 %v2295, %v2295
          %4128 = vmatpush.msra.mxu0 %v4127
          %v4129 = vsub.f32 %v2291, %v2291
          %4130 = vmatpush.msra.mxu0 %v4129
          %v4131 = vsub.f32 %v2287, %v2287
          %4132 = vmatpush.msra.mxu0 %v4131
          %v4133 = vsub.f32 %v2283, %v2283
          %4134 = vmatpush.msra.mxu0 %v4133
          %v4135 = vsub.f32 %v2279, %v2279
          %4136 = vmatpush.msra.mxu0 %v4135
          %v4137 = vsub.f32 %v2275, %v2275
          %4138 = vmatpush.msra.mxu0 %v4137
          %v4139 = vsub.f32 %v2271, %v2271
          %4140 = vmatpush.msra.mxu0 %v4139
          %v4141 = vsub.f32 %v2267, %v2267
          %4142 = vmatpush.msra.mxu0 %v4141
          %v4143 = vsub.f32 %v2263, %v2263
          %4144 = vmatpush.msra.mxu0 %v4143
          %v4145 = vsub.f32 %v2259, %v2259
          %4146 = vmatpush.msra.mxu0 %v4145
          %v4147 = vsub.f32 %v2255, %v2255
          %4148 = vmatpush.msra.mxu0 %v4147
          %v4149 = vsub.f32 %v2251, %v2251
          %4150 = vmatpush.msra.mxu0 %v4149
          %v4151 = vsub.f32 %v2247, %v2247
          %4152 = vmatpush.msra.mxu0 %v4151
          %v4153 = vsub.f32 %v2243, %v2243
          %4154 = vmatpush.msra.mxu0 %v4153
          %v4155 = vsub.f32 %v2239, %v2239
          %4156 = vmatpush.msra.mxu0 %v4155
          %v4157 = vsub.f32 %v2235, %v2235
          %4158 = vmatpush.msra.mxu0 %v4157
          %v4159 = vand.u32 %v2301, 4294901760
          %v4160 = vsub.f32 %v2301, %v4159
          %4161 = vmatmul.f32.gmra.mxu0 %v4160
          %v4162 = vpop.f32.mrf.mxu0
          %v4163 = vadd.f32 %v4125, %v4162
          %4164 = vdwg.mxu0
          %4165 = vmatpush.msra.mxu0 %v2295
          %4166 = vmatpush.msra.mxu0 %v2291
          %4167 = vmatpush.msra.mxu0 %v2287
          %4168 = vmatpush.msra.mxu0 %v2283
          %4169 = vmatpush.msra.mxu0 %v2279
          %4170 = vmatpush.msra.mxu0 %v2275
          %4171 = vmatpush.msra.mxu0 %v2271
          %4172 = vmatpush.msra.mxu0 %v2267
          %4173 = vmatpush.msra.mxu0 %v2263
          %4174 = vmatpush.msra.mxu0 %v2259
          %4175 = vmatpush.msra.mxu0 %v2255
          %4176 = vmatpush.msra.mxu0 %v2251
          %4177 = vmatpush.msra.mxu0 %v2247
          %4178 = vmatpush.msra.mxu0 %v2243
          %4179 = vmatpush.msra.mxu0 %v2239
          %4180 = vmatpush.msra.mxu0 %v2235
          %v4181 = vand.u32 %v2301, 4294901760
          %v4182 = vsub.f32 %v2301, %v4181
          %v4183 = vand.u32 %v4182, 4294901760
          %4184 = vmatmul.f32.gmra.mxu0 %v4183
          %v4185 = vpop.f32.mrf.mxu0
          %v4186 = vadd.f32 %v4163, %v4185
          %4187 = vdwg.mxu0
          %v4188 = vsub.f32 %v2295, %v2295
          %v4189 = vand.u32 %v4188, 4294901760
          %4190 = vmatpush.msra.mxu0 %v4189
          %v4191 = vsub.f32 %v2291, %v2291
          %v4192 = vand.u32 %v4191, 4294901760
          %4193 = vmatpush.msra.mxu0 %v4192
          %v4194 = vsub.f32 %v2287, %v2287
          %v4195 = vand.u32 %v4194, 4294901760
          %4196 = vmatpush.msra.mxu0 %v4195
          %v4197 = vsub.f32 %v2283, %v2283
          %v4198 = vand.u32 %v4197, 4294901760
          %4199 = vmatpush.msra.mxu0 %v4198
          %v4200 = vsub.f32 %v2279, %v2279
          %v4201 = vand.u32 %v4200, 4294901760
          %4202 = vmatpush.msra.mxu0 %v4201
          %v4203 = vsub.f32 %v2275, %v2275
          %v4204 = vand.u32 %v4203, 4294901760
          %4205 = vmatpush.msra.mxu0 %v4204
          %v4206 = vsub.f32 %v2271, %v2271
          %v4207 = vand.u32 %v4206, 4294901760
          %4208 = vmatpush.msra.mxu0 %v4207
          %v4209 = vsub.f32 %v2267, %v2267
          %v4210 = vand.u32 %v4209, 4294901760
          %4211 = vmatpush.msra.mxu0 %v4210
          %v4212 = vsub.f32 %v2263, %v2263
          %v4213 = vand.u32 %v4212, 4294901760
          %4214 = vmatpush.msra.mxu0 %v4213
          %v4215 = vsub.f32 %v2259, %v2259
          %v4216 = vand.u32 %v4215, 4294901760
          %4217 = vmatpush.msra.mxu0 %v4216
          %v4218 = vsub.f32 %v2255, %v2255
          %v4219 = vand.u32 %v4218, 4294901760
          %4220 = vmatpush.msra.mxu0 %v4219
          %v4221 = vsub.f32 %v2251, %v2251
          %v4222 = vand.u32 %v4221, 4294901760
          %4223 = vmatpush.msra.mxu0 %v4222
          %v4224 = vsub.f32 %v2247, %v2247
          %v4225 = vand.u32 %v4224, 4294901760
          %4226 = vmatpush.msra.mxu0 %v4225
          %v4227 = vsub.f32 %v2243, %v2243
          %v4228 = vand.u32 %v4227, 4294901760
          %4229 = vmatpush.msra.mxu0 %v4228
          %v4230 = vsub.f32 %v2239, %v2239
          %v4231 = vand.u32 %v4230, 4294901760
          %4232 = vmatpush.msra.mxu0 %v4231
          %v4233 = vsub.f32 %v2235, %v2235
          %v4234 = vand.u32 %v4233, 4294901760
          %4235 = vmatpush.msra.mxu0 %v4234
          %v4236 = vand.u32 %v2301, 4294901760
          %4237 = vmatmul.f32.gmra.mxu0 %v4236
          %v4238 = vpop.f32.mrf.mxu0
          %v4239 = vadd.f32 %v4186, %v4238
          %4240 = vdwg.mxu0
          %4241 = vmatpush.msra.mxu0 %v2295
          %4242 = vmatpush.msra.mxu0 %v2291
          %4243 = vmatpush.msra.mxu0 %v2287
          %4244 = vmatpush.msra.mxu0 %v2283
          %4245 = vmatpush.msra.mxu0 %v2279
          %4246 = vmatpush.msra.mxu0 %v2275
          %4247 = vmatpush.msra.mxu0 %v2271
          %4248 = vmatpush.msra.mxu0 %v2267
          %4249 = vmatpush.msra.mxu0 %v2263
          %4250 = vmatpush.msra.mxu0 %v2259
          %4251 = vmatpush.msra.mxu0 %v2255
          %4252 = vmatpush.msra.mxu0 %v2251
          %4253 = vmatpush.msra.mxu0 %v2247
          %4254 = vmatpush.msra.mxu0 %v2243
          %4255 = vmatpush.msra.mxu0 %v2239
          %4256 = vmatpush.msra.mxu0 %v2235
          %v4257 = vand.u32 %v2301, 4294901760
          %4258 = vmatmul.f32.gmra.mxu0 %v4257
          %v4259 = vpop.f32.mrf.mxu0
          %v4260 = vadd.f32 %v4239, %v4259
          %4261 = vdwg.mxu0
          %4262 = vmatpush.msra.mxu0 %v2104
          %4263 = vmatpush.msra.mxu0 %v2100
          %4264 = vmatpush.msra.mxu0 %v2096
          %4265 = vmatpush.msra.mxu0 %v2092
          %4266 = vmatpush.msra.mxu0 %v2088
          %4267 = vmatpush.msra.mxu0 %v2084
          %4268 = vmatpush.msra.mxu0 %v2080
          %4269 = vmatpush.msra.mxu0 %v2076
          %4270 = vmatpush.msra.mxu0 %v2072
          %4271 = vmatpush.msra.mxu0 %v2068
          %4272 = vmatpush.msra.mxu0 %v2064
          %4273 = vmatpush.msra.mxu0 %v2060
          %4274 = vmatpush.msra.mxu0 %v2056
          %4275 = vmatpush.msra.mxu0 %v2052
          %4276 = vmatpush.msra.mxu0 %v2048
          %4277 = vmatpush.msra.mxu0 %v2044
          %v4278 = vand.u32 %v2298, 4294901760
          %v4279 = vsub.f32 %v2298, %v4278
          %v4280 = vand.u32 %v4279, 4294901760
          %v4281 = vsub.f32 %v4279, %v4280
          %v4282 = vand.u32 %v4281, 4294901760
          %4283 = vmatmul.f32.gmra.mxu0 %v4282
          %v4284 = vpop.f32.mrf.mxu0
          %v4285 = vadd.f32 0.0, %v4284
          %4286 = vdwg.mxu0
          %v4287 = vsub.f32 %v2104, %v2104
          %v4288 = vand.u32 %v4287, 4294901760
          %v4289 = vsub.f32 %v4287, %v4288
          %v4290 = vand.u32 %v4289, 4294901760
          %4291 = vmatpush.msra.mxu0 %v4290
          %v4292 = vsub.f32 %v2100, %v2100
          %v4293 = vand.u32 %v4292, 4294901760
          %v4294 = vsub.f32 %v4292, %v4293
          %v4295 = vand.u32 %v4294, 4294901760
          %4296 = vmatpush.msra.mxu0 %v4295
          %v4297 = vsub.f32 %v2096, %v2096
          %v4298 = vand.u32 %v4297, 4294901760
          %v4299 = vsub.f32 %v4297, %v4298
          %v4300 = vand.u32 %v4299, 4294901760
          %4301 = vmatpush.msra.mxu0 %v4300
          %v4302 = vsub.f32 %v2092, %v2092
          %v4303 = vand.u32 %v4302, 4294901760
          %v4304 = vsub.f32 %v4302, %v4303
          %v4305 = vand.u32 %v4304, 4294901760
          %4306 = vmatpush.msra.mxu0 %v4305
          %v4307 = vsub.f32 %v2088, %v2088
          %v4308 = vand.u32 %v4307, 4294901760
          %v4309 = vsub.f32 %v4307, %v4308
          %v4310 = vand.u32 %v4309, 4294901760
          %4311 = vmatpush.msra.mxu0 %v4310
          %v4312 = vsub.f32 %v2084, %v2084
          %v4313 = vand.u32 %v4312, 4294901760
          %v4314 = vsub.f32 %v4312, %v4313
          %v4315 = vand.u32 %v4314, 4294901760
          %4316 = vmatpush.msra.mxu0 %v4315
          %v4317 = vsub.f32 %v2080, %v2080
          %v4318 = vand.u32 %v4317, 4294901760
          %v4319 = vsub.f32 %v4317, %v4318
          %v4320 = vand.u32 %v4319, 4294901760
          %4321 = vmatpush.msra.mxu0 %v4320
          %v4322 = vsub.f32 %v2076, %v2076
          %v4323 = vand.u32 %v4322, 4294901760
          %v4324 = vsub.f32 %v4322, %v4323
          %v4325 = vand.u32 %v4324, 4294901760
          %4326 = vmatpush.msra.mxu0 %v4325
          %v4327 = vsub.f32 %v2072, %v2072
          %v4328 = vand.u32 %v4327, 4294901760
          %v4329 = vsub.f32 %v4327, %v4328
          %v4330 = vand.u32 %v4329, 4294901760
          %4331 = vmatpush.msra.mxu0 %v4330
          %v4332 = vsub.f32 %v2068, %v2068
          %v4333 = vand.u32 %v4332, 4294901760
          %v4334 = vsub.f32 %v4332, %v4333
          %v4335 = vand.u32 %v4334, 4294901760
          %4336 = vmatpush.msra.mxu0 %v4335
          %v4337 = vsub.f32 %v2064, %v2064
          %v4338 = vand.u32 %v4337, 4294901760
          %v4339 = vsub.f32 %v4337, %v4338
          %v4340 = vand.u32 %v4339, 4294901760
          %4341 = vmatpush.msra.mxu0 %v4340
          %v4342 = vsub.f32 %v2060, %v2060
          %v4343 = vand.u32 %v4342, 4294901760
          %v4344 = vsub.f32 %v4342, %v4343
          %v4345 = vand.u32 %v4344, 4294901760
          %4346 = vmatpush.msra.mxu0 %v4345
          %v4347 = vsub.f32 %v2056, %v2056
          %v4348 = vand.u32 %v4347, 4294901760
          %v4349 = vsub.f32 %v4347, %v4348
          %v4350 = vand.u32 %v4349, 4294901760
          %4351 = vmatpush.msra.mxu0 %v4350
          %v4352 = vsub.f32 %v2052, %v2052
          %v4353 = vand.u32 %v4352, 4294901760
          %v4354 = vsub.f32 %v4352, %v4353
          %v4355 = vand.u32 %v4354, 4294901760
          %4356 = vmatpush.msra.mxu0 %v4355
          %v4357 = vsub.f32 %v2048, %v2048
          %v4358 = vand.u32 %v4357, 4294901760
          %v4359 = vsub.f32 %v4357, %v4358
          %v4360 = vand.u32 %v4359, 4294901760
          %4361 = vmatpush.msra.mxu0 %v4360
          %v4362 = vsub.f32 %v2044, %v2044
          %v4363 = vand.u32 %v4362, 4294901760
          %v4364 = vsub.f32 %v4362, %v4363
          %v4365 = vand.u32 %v4364, 4294901760
          %4366 = vmatpush.msra.mxu0 %v4365
          %v4367 = vand.u32 %v2298, 4294901760
          %4368 = vmatmul.f32.gmra.mxu0 %v4367
          %v4369 = vpop.f32.mrf.mxu0
          %v4370 = vadd.f32 %v4285, %v4369
          %4371 = vdwg.mxu0
          %v4372 = vsub.f32 %v2104, %v2104
          %4373 = vmatpush.msra.mxu0 %v4372
          %v4374 = vsub.f32 %v2100, %v2100
          %4375 = vmatpush.msra.mxu0 %v4374
          %v4376 = vsub.f32 %v2096, %v2096
          %4377 = vmatpush.msra.mxu0 %v4376
          %v4378 = vsub.f32 %v2092, %v2092
          %4379 = vmatpush.msra.mxu0 %v4378
          %v4380 = vsub.f32 %v2088, %v2088
          %4381 = vmatpush.msra.mxu0 %v4380
          %v4382 = vsub.f32 %v2084, %v2084
          %4383 = vmatpush.msra.mxu0 %v4382
          %v4384 = vsub.f32 %v2080, %v2080
          %4385 = vmatpush.msra.mxu0 %v4384
          %v4386 = vsub.f32 %v2076, %v2076
          %4387 = vmatpush.msra.mxu0 %v4386
          %v4388 = vsub.f32 %v2072, %v2072
          %4389 = vmatpush.msra.mxu0 %v4388
          %v4390 = vsub.f32 %v2068, %v2068
          %4391 = vmatpush.msra.mxu0 %v4390
          %v4392 = vsub.f32 %v2064, %v2064
          %4393 = vmatpush.msra.mxu0 %v4392
          %v4394 = vsub.f32 %v2060, %v2060
          %4395 = vmatpush.msra.mxu0 %v4394
          %v4396 = vsub.f32 %v2056, %v2056
          %4397 = vmatpush.msra.mxu0 %v4396
          %v4398 = vsub.f32 %v2052, %v2052
          %4399 = vmatpush.msra.mxu0 %v4398
          %v4400 = vsub.f32 %v2048, %v2048
          %4401 = vmatpush.msra.mxu0 %v4400
          %v4402 = vsub.f32 %v2044, %v2044
          %4403 = vmatpush.msra.mxu0 %v4402
          %v4404 = vand.u32 %v2298, 4294901760
          %v4405 = vsub.f32 %v2298, %v4404
          %4406 = vmatmul.f32.gmra.mxu0 %v4405
          %v4407 = vpop.f32.mrf.mxu0
          %v4408 = vadd.f32 %v4370, %v4407
          %4409 = vdwg.mxu0
          %4410 = vmatpush.msra.mxu0 %v2104
          %4411 = vmatpush.msra.mxu0 %v2100
          %4412 = vmatpush.msra.mxu0 %v2096
          %4413 = vmatpush.msra.mxu0 %v2092
          %4414 = vmatpush.msra.mxu0 %v2088
          %4415 = vmatpush.msra.mxu0 %v2084
          %4416 = vmatpush.msra.mxu0 %v2080
          %4417 = vmatpush.msra.mxu0 %v2076
          %4418 = vmatpush.msra.mxu0 %v2072
          %4419 = vmatpush.msra.mxu0 %v2068
          %4420 = vmatpush.msra.mxu0 %v2064
          %4421 = vmatpush.msra.mxu0 %v2060
          %4422 = vmatpush.msra.mxu0 %v2056
          %4423 = vmatpush.msra.mxu0 %v2052
          %4424 = vmatpush.msra.mxu0 %v2048
          %4425 = vmatpush.msra.mxu0 %v2044
          %v4426 = vand.u32 %v2298, 4294901760
          %v4427 = vsub.f32 %v2298, %v4426
          %v4428 = vand.u32 %v4427, 4294901760
          %4429 = vmatmul.f32.gmra.mxu0 %v4428
          %v4430 = vpop.f32.mrf.mxu0
          %v4431 = vadd.f32 %v4408, %v4430
          %4432 = vdwg.mxu0
          %v4433 = vsub.f32 %v2104, %v2104
          %v4434 = vand.u32 %v4433, 4294901760
          %4435 = vmatpush.msra.mxu0 %v4434
          %v4436 = vsub.f32 %v2100, %v2100
          %v4437 = vand.u32 %v4436, 4294901760
          %4438 = vmatpush.msra.mxu0 %v4437
          %v4439 = vsub.f32 %v2096, %v2096
          %v4440 = vand.u32 %v4439, 4294901760
          %4441 = vmatpush.msra.mxu0 %v4440
          %v4442 = vsub.f32 %v2092, %v2092
          %v4443 = vand.u32 %v4442, 4294901760
          %4444 = vmatpush.msra.mxu0 %v4443
          %v4445 = vsub.f32 %v2088, %v2088
          %v4446 = vand.u32 %v4445, 4294901760
          %4447 = vmatpush.msra.mxu0 %v4446
          %v4448 = vsub.f32 %v2084, %v2084
          %v4449 = vand.u32 %v4448, 4294901760
          %4450 = vmatpush.msra.mxu0 %v4449
          %v4451 = vsub.f32 %v2080, %v2080
          %v4452 = vand.u32 %v4451, 4294901760
          %4453 = vmatpush.msra.mxu0 %v4452
          %v4454 = vsub.f32 %v2076, %v2076
          %v4455 = vand.u32 %v4454, 4294901760
          %4456 = vmatpush.msra.mxu0 %v4455
          %v4457 = vsub.f32 %v2072, %v2072
          %v4458 = vand.u32 %v4457, 4294901760
          %4459 = vmatpush.msra.mxu0 %v4458
          %v4460 = vsub.f32 %v2068, %v2068
          %v4461 = vand.u32 %v4460, 4294901760
          %4462 = vmatpush.msra.mxu0 %v4461
          %v4463 = vsub.f32 %v2064, %v2064
          %v4464 = vand.u32 %v4463, 4294901760
          %4465 = vmatpush.msra.mxu0 %v4464
          %v4466 = vsub.f32 %v2060, %v2060
          %v4467 = vand.u32 %v4466, 4294901760
          %4468 = vmatpush.msra.mxu0 %v4467
          %v4469 = vsub.f32 %v2056, %v2056
          %v4470 = vand.u32 %v4469, 4294901760
          %4471 = vmatpush.msra.mxu0 %v4470
          %v4472 = vsub.f32 %v2052, %v2052
          %v4473 = vand.u32 %v4472, 4294901760
          %4474 = vmatpush.msra.mxu0 %v4473
          %v4475 = vsub.f32 %v2048, %v2048
          %v4476 = vand.u32 %v4475, 4294901760
          %4477 = vmatpush.msra.mxu0 %v4476
          %v4478 = vsub.f32 %v2044, %v2044
          %v4479 = vand.u32 %v4478, 4294901760
          %4480 = vmatpush.msra.mxu0 %v4479
          %v4481 = vand.u32 %v2298, 4294901760
          %4482 = vmatmul.f32.gmra.mxu0 %v4481
          %v4483 = vpop.f32.mrf.mxu0
          %v4484 = vadd.f32 %v4431, %v4483
          %4485 = vdwg.mxu0
          %4486 = vmatpush.msra.mxu0 %v2104
          %4487 = vmatpush.msra.mxu0 %v2100
          %4488 = vmatpush.msra.mxu0 %v2096
          %4489 = vmatpush.msra.mxu0 %v2092
          %4490 = vmatpush.msra.mxu0 %v2088
          %4491 = vmatpush.msra.mxu0 %v2084
          %4492 = vmatpush.msra.mxu0 %v2080
          %4493 = vmatpush.msra.mxu0 %v2076
          %4494 = vmatpush.msra.mxu0 %v2072
          %4495 = vmatpush.msra.mxu0 %v2068
          %4496 = vmatpush.msra.mxu0 %v2064
          %4497 = vmatpush.msra.mxu0 %v2060
          %4498 = vmatpush.msra.mxu0 %v2056
          %4499 = vmatpush.msra.mxu0 %v2052
          %4500 = vmatpush.msra.mxu0 %v2048
          %4501 = vmatpush.msra.mxu0 %v2044
          %v4502 = vand.u32 %v2298, 4294901760
          %4503 = vmatmul.f32.gmra.mxu0 %v4502
          %v4504 = vpop.f32.mrf.mxu0
          %v4505 = vadd.f32 %v4484, %v4504
          %4506 = vdwg.mxu0
          %4507 = vmatpush.msra.mxu0 %v2168
          %4508 = vmatpush.msra.mxu0 %v2164
          %4509 = vmatpush.msra.mxu0 %v2160
          %4510 = vmatpush.msra.mxu0 %v2156
          %4511 = vmatpush.msra.mxu0 %v2152
          %4512 = vmatpush.msra.mxu0 %v2148
          %4513 = vmatpush.msra.mxu0 %v2144
          %4514 = vmatpush.msra.mxu0 %v2140
          %4515 = vmatpush.msra.mxu0 %v2136
          %4516 = vmatpush.msra.mxu0 %v2132
          %4517 = vmatpush.msra.mxu0 %v2128
          %4518 = vmatpush.msra.mxu0 %v2124
          %4519 = vmatpush.msra.mxu0 %v2120
          %4520 = vmatpush.msra.mxu0 %v2116
          %4521 = vmatpush.msra.mxu0 %v2112
          %4522 = vmatpush.msra.mxu0 %v2108
          %v4523 = vand.u32 %v2299, 4294901760
          %v4524 = vsub.f32 %v2299, %v4523
          %v4525 = vand.u32 %v4524, 4294901760
          %v4526 = vsub.f32 %v4524, %v4525
          %v4527 = vand.u32 %v4526, 4294901760
          %4528 = vmatmul.f32.gmra.mxu0 %v4527
          %v4529 = vpop.f32.mrf.mxu0
          %v4530 = vadd.f32 %v4505, %v4529
          %4531 = vdwg.mxu0
          %v4532 = vsub.f32 %v2168, %v2168
          %v4533 = vand.u32 %v4532, 4294901760
          %v4534 = vsub.f32 %v4532, %v4533
          %v4535 = vand.u32 %v4534, 4294901760
          %4536 = vmatpush.msra.mxu0 %v4535
          %v4537 = vsub.f32 %v2164, %v2164
          %v4538 = vand.u32 %v4537, 4294901760
          %v4539 = vsub.f32 %v4537, %v4538
          %v4540 = vand.u32 %v4539, 4294901760
          %4541 = vmatpush.msra.mxu0 %v4540
          %v4542 = vsub.f32 %v2160, %v2160
          %v4543 = vand.u32 %v4542, 4294901760
          %v4544 = vsub.f32 %v4542, %v4543
          %v4545 = vand.u32 %v4544, 4294901760
          %4546 = vmatpush.msra.mxu0 %v4545
          %v4547 = vsub.f32 %v2156, %v2156
          %v4548 = vand.u32 %v4547, 4294901760
          %v4549 = vsub.f32 %v4547, %v4548
          %v4550 = vand.u32 %v4549, 4294901760
          %4551 = vmatpush.msra.mxu0 %v4550
          %v4552 = vsub.f32 %v2152, %v2152
          %v4553 = vand.u32 %v4552, 4294901760
          %v4554 = vsub.f32 %v4552, %v4553
          %v4555 = vand.u32 %v4554, 4294901760
          %4556 = vmatpush.msra.mxu0 %v4555
          %v4557 = vsub.f32 %v2148, %v2148
          %v4558 = vand.u32 %v4557, 4294901760
          %v4559 = vsub.f32 %v4557, %v4558
          %v4560 = vand.u32 %v4559, 4294901760
          %4561 = vmatpush.msra.mxu0 %v4560
          %v4562 = vsub.f32 %v2144, %v2144
          %v4563 = vand.u32 %v4562, 4294901760
          %v4564 = vsub.f32 %v4562, %v4563
          %v4565 = vand.u32 %v4564, 4294901760
          %4566 = vmatpush.msra.mxu0 %v4565
          %v4567 = vsub.f32 %v2140, %v2140
          %v4568 = vand.u32 %v4567, 4294901760
          %v4569 = vsub.f32 %v4567, %v4568
          %v4570 = vand.u32 %v4569, 4294901760
          %4571 = vmatpush.msra.mxu0 %v4570
          %v4572 = vsub.f32 %v2136, %v2136
          %v4573 = vand.u32 %v4572, 4294901760
          %v4574 = vsub.f32 %v4572, %v4573
          %v4575 = vand.u32 %v4574, 4294901760
          %4576 = vmatpush.msra.mxu0 %v4575
          %v4577 = vsub.f32 %v2132, %v2132
          %v4578 = vand.u32 %v4577, 4294901760
          %v4579 = vsub.f32 %v4577, %v4578
          %v4580 = vand.u32 %v4579, 4294901760
          %4581 = vmatpush.msra.mxu0 %v4580
          %v4582 = vsub.f32 %v2128, %v2128
          %v4583 = vand.u32 %v4582, 4294901760
          %v4584 = vsub.f32 %v4582, %v4583
          %v4585 = vand.u32 %v4584, 4294901760
          %4586 = vmatpush.msra.mxu0 %v4585
          %v4587 = vsub.f32 %v2124, %v2124
          %v4588 = vand.u32 %v4587, 4294901760
          %v4589 = vsub.f32 %v4587, %v4588
          %v4590 = vand.u32 %v4589, 4294901760
          %4591 = vmatpush.msra.mxu0 %v4590
          %v4592 = vsub.f32 %v2120, %v2120
          %v4593 = vand.u32 %v4592, 4294901760
          %v4594 = vsub.f32 %v4592, %v4593
          %v4595 = vand.u32 %v4594, 4294901760
          %4596 = vmatpush.msra.mxu0 %v4595
          %v4597 = vsub.f32 %v2116, %v2116
          %v4598 = vand.u32 %v4597, 4294901760
          %v4599 = vsub.f32 %v4597, %v4598
          %v4600 = vand.u32 %v4599, 4294901760
          %4601 = vmatpush.msra.mxu0 %v4600
          %v4602 = vsub.f32 %v2112, %v2112
          %v4603 = vand.u32 %v4602, 4294901760
          %v4604 = vsub.f32 %v4602, %v4603
          %v4605 = vand.u32 %v4604, 4294901760
          %4606 = vmatpush.msra.mxu0 %v4605
          %v4607 = vsub.f32 %v2108, %v2108
          %v4608 = vand.u32 %v4607, 4294901760
          %v4609 = vsub.f32 %v4607, %v4608
          %v4610 = vand.u32 %v4609, 4294901760
          %4611 = vmatpush.msra.mxu0 %v4610
          %v4612 = vand.u32 %v2299, 4294901760
          %4613 = vmatmul.f32.gmra.mxu0 %v4612
          %v4614 = vpop.f32.mrf.mxu0
          %v4615 = vadd.f32 %v4530, %v4614
          %4616 = vdwg.mxu0
          %v4617 = vsub.f32 %v2168, %v2168
          %4618 = vmatpush.msra.mxu0 %v4617
          %v4619 = vsub.f32 %v2164, %v2164
          %4620 = vmatpush.msra.mxu0 %v4619
          %v4621 = vsub.f32 %v2160, %v2160
          %4622 = vmatpush.msra.mxu0 %v4621
          %v4623 = vsub.f32 %v2156, %v2156
          %4624 = vmatpush.msra.mxu0 %v4623
          %v4625 = vsub.f32 %v2152, %v2152
          %4626 = vmatpush.msra.mxu0 %v4625
          %v4627 = vsub.f32 %v2148, %v2148
          %4628 = vmatpush.msra.mxu0 %v4627
          %v4629 = vsub.f32 %v2144, %v2144
          %4630 = vmatpush.msra.mxu0 %v4629
          %v4631 = vsub.f32 %v2140, %v2140
          %4632 = vmatpush.msra.mxu0 %v4631
          %v4633 = vsub.f32 %v2136, %v2136
          %4634 = vmatpush.msra.mxu0 %v4633
          %v4635 = vsub.f32 %v2132, %v2132
          %4636 = vmatpush.msra.mxu0 %v4635
          %v4637 = vsub.f32 %v2128, %v2128
          %4638 = vmatpush.msra.mxu0 %v4637
          %v4639 = vsub.f32 %v2124, %v2124
          %4640 = vmatpush.msra.mxu0 %v4639
          %v4641 = vsub.f32 %v2120, %v2120
          %4642 = vmatpush.msra.mxu0 %v4641
          %v4643 = vsub.f32 %v2116, %v2116
          %4644 = vmatpush.msra.mxu0 %v4643
          %v4645 = vsub.f32 %v2112, %v2112
          %4646 = vmatpush.msra.mxu0 %v4645
          %v4647 = vsub.f32 %v2108, %v2108
          %4648 = vmatpush.msra.mxu0 %v4647
          %v4649 = vand.u32 %v2299, 4294901760
          %v4650 = vsub.f32 %v2299, %v4649
          %4651 = vmatmul.f32.gmra.mxu0 %v4650
          %v4652 = vpop.f32.mrf.mxu0
          %v4653 = vadd.f32 %v4615, %v4652
          %4654 = vdwg.mxu0
          %4655 = vmatpush.msra.mxu0 %v2168
          %4656 = vmatpush.msra.mxu0 %v2164
          %4657 = vmatpush.msra.mxu0 %v2160
          %4658 = vmatpush.msra.mxu0 %v2156
          %4659 = vmatpush.msra.mxu0 %v2152
          %4660 = vmatpush.msra.mxu0 %v2148
          %4661 = vmatpush.msra.mxu0 %v2144
          %4662 = vmatpush.msra.mxu0 %v2140
          %4663 = vmatpush.msra.mxu0 %v2136
          %4664 = vmatpush.msra.mxu0 %v2132
          %4665 = vmatpush.msra.mxu0 %v2128
          %4666 = vmatpush.msra.mxu0 %v2124
          %4667 = vmatpush.msra.mxu0 %v2120
          %4668 = vmatpush.msra.mxu0 %v2116
          %4669 = vmatpush.msra.mxu0 %v2112
          %4670 = vmatpush.msra.mxu0 %v2108
          %v4671 = vand.u32 %v2299, 4294901760
          %v4672 = vsub.f32 %v2299, %v4671
          %v4673 = vand.u32 %v4672, 4294901760
          %4674 = vmatmul.f32.gmra.mxu0 %v4673
          %v4675 = vpop.f32.mrf.mxu0
          %v4676 = vadd.f32 %v4653, %v4675
          %4677 = vdwg.mxu0
          %v4678 = vsub.f32 %v2168, %v2168
          %v4679 = vand.u32 %v4678, 4294901760
          %4680 = vmatpush.msra.mxu0 %v4679
          %v4681 = vsub.f32 %v2164, %v2164
          %v4682 = vand.u32 %v4681, 4294901760
          %4683 = vmatpush.msra.mxu0 %v4682
          %v4684 = vsub.f32 %v2160, %v2160
          %v4685 = vand.u32 %v4684, 4294901760
          %4686 = vmatpush.msra.mxu0 %v4685
          %v4687 = vsub.f32 %v2156, %v2156
          %v4688 = vand.u32 %v4687, 4294901760
          %4689 = vmatpush.msra.mxu0 %v4688
          %v4690 = vsub.f32 %v2152, %v2152
          %v4691 = vand.u32 %v4690, 4294901760
          %4692 = vmatpush.msra.mxu0 %v4691
          %v4693 = vsub.f32 %v2148, %v2148
          %v4694 = vand.u32 %v4693, 4294901760
          %4695 = vmatpush.msra.mxu0 %v4694
          %v4696 = vsub.f32 %v2144, %v2144
          %v4697 = vand.u32 %v4696, 4294901760
          %4698 = vmatpush.msra.mxu0 %v4697
          %v4699 = vsub.f32 %v2140, %v2140
          %v4700 = vand.u32 %v4699, 4294901760
          %4701 = vmatpush.msra.mxu0 %v4700
          %v4702 = vsub.f32 %v2136, %v2136
          %v4703 = vand.u32 %v4702, 4294901760
          %4704 = vmatpush.msra.mxu0 %v4703
          %v4705 = vsub.f32 %v2132, %v2132
          %v4706 = vand.u32 %v4705, 4294901760
          %4707 = vmatpush.msra.mxu0 %v4706
          %v4708 = vsub.f32 %v2128, %v2128
          %v4709 = vand.u32 %v4708, 4294901760
          %4710 = vmatpush.msra.mxu0 %v4709
          %v4711 = vsub.f32 %v2124, %v2124
          %v4712 = vand.u32 %v4711, 4294901760
          %4713 = vmatpush.msra.mxu0 %v4712
          %v4714 = vsub.f32 %v2120, %v2120
          %v4715 = vand.u32 %v4714, 4294901760
          %4716 = vmatpush.msra.mxu0 %v4715
          %v4717 = vsub.f32 %v2116, %v2116
          %v4718 = vand.u32 %v4717, 4294901760
          %4719 = vmatpush.msra.mxu0 %v4718
          %v4720 = vsub.f32 %v2112, %v2112
          %v4721 = vand.u32 %v4720, 4294901760
          %4722 = vmatpush.msra.mxu0 %v4721
          %v4723 = vsub.f32 %v2108, %v2108
          %v4724 = vand.u32 %v4723, 4294901760
          %4725 = vmatpush.msra.mxu0 %v4724
          %v4726 = vand.u32 %v2299, 4294901760
          %4727 = vmatmul.f32.gmra.mxu0 %v4726
          %v4728 = vpop.f32.mrf.mxu0
          %v4729 = vadd.f32 %v4676, %v4728
          %4730 = vdwg.mxu0
          %4731 = vmatpush.msra.mxu0 %v2168
          %4732 = vmatpush.msra.mxu0 %v2164
          %4733 = vmatpush.msra.mxu0 %v2160
          %4734 = vmatpush.msra.mxu0 %v2156
          %4735 = vmatpush.msra.mxu0 %v2152
          %4736 = vmatpush.msra.mxu0 %v2148
          %4737 = vmatpush.msra.mxu0 %v2144
          %4738 = vmatpush.msra.mxu0 %v2140
          %4739 = vmatpush.msra.mxu0 %v2136
          %4740 = vmatpush.msra.mxu0 %v2132
          %4741 = vmatpush.msra.mxu0 %v2128
          %4742 = vmatpush.msra.mxu0 %v2124
          %4743 = vmatpush.msra.mxu0 %v2120
          %4744 = vmatpush.msra.mxu0 %v2116
          %4745 = vmatpush.msra.mxu0 %v2112
          %4746 = vmatpush.msra.mxu0 %v2108
          %v4747 = vand.u32 %v2299, 4294901760
          %4748 = vmatmul.f32.gmra.mxu0 %v4747
          %v4749 = vpop.f32.mrf.mxu0
          %v4750 = vadd.f32 %v4729, %v4749
          %4751 = vdwg.mxu0
          %4752 = vmatpush.msra.mxu0 %v2232
          %4753 = vmatpush.msra.mxu0 %v2228
          %4754 = vmatpush.msra.mxu0 %v2224
          %4755 = vmatpush.msra.mxu0 %v2220
          %4756 = vmatpush.msra.mxu0 %v2216
          %4757 = vmatpush.msra.mxu0 %v2212
          %4758 = vmatpush.msra.mxu0 %v2208
          %4759 = vmatpush.msra.mxu0 %v2204
          %4760 = vmatpush.msra.mxu0 %v2200
          %4761 = vmatpush.msra.mxu0 %v2196
          %4762 = vmatpush.msra.mxu0 %v2192
          %4763 = vmatpush.msra.mxu0 %v2188
          %4764 = vmatpush.msra.mxu0 %v2184
          %4765 = vmatpush.msra.mxu0 %v2180
          %4766 = vmatpush.msra.mxu0 %v2176
          %4767 = vmatpush.msra.mxu0 %v2172
          %v4768 = vand.u32 %v2300, 4294901760
          %v4769 = vsub.f32 %v2300, %v4768
          %v4770 = vand.u32 %v4769, 4294901760
          %v4771 = vsub.f32 %v4769, %v4770
          %v4772 = vand.u32 %v4771, 4294901760
          %4773 = vmatmul.f32.gmra.mxu0 %v4772
          %v4774 = vpop.f32.mrf.mxu0
          %v4775 = vadd.f32 %v4750, %v4774
          %4776 = vdwg.mxu0
          %v4777 = vsub.f32 %v2232, %v2232
          %v4778 = vand.u32 %v4777, 4294901760
          %v4779 = vsub.f32 %v4777, %v4778
          %v4780 = vand.u32 %v4779, 4294901760
          %4781 = vmatpush.msra.mxu0 %v4780
          %v4782 = vsub.f32 %v2228, %v2228
          %v4783 = vand.u32 %v4782, 4294901760
          %v4784 = vsub.f32 %v4782, %v4783
          %v4785 = vand.u32 %v4784, 4294901760
          %4786 = vmatpush.msra.mxu0 %v4785
          %v4787 = vsub.f32 %v2224, %v2224
          %v4788 = vand.u32 %v4787, 4294901760
          %v4789 = vsub.f32 %v4787, %v4788
          %v4790 = vand.u32 %v4789, 4294901760
          %4791 = vmatpush.msra.mxu0 %v4790
          %v4792 = vsub.f32 %v2220, %v2220
          %v4793 = vand.u32 %v4792, 4294901760
          %v4794 = vsub.f32 %v4792, %v4793
          %v4795 = vand.u32 %v4794, 4294901760
          %4796 = vmatpush.msra.mxu0 %v4795
          %v4797 = vsub.f32 %v2216, %v2216
          %v4798 = vand.u32 %v4797, 4294901760
          %v4799 = vsub.f32 %v4797, %v4798
          %v4800 = vand.u32 %v4799, 4294901760
          %4801 = vmatpush.msra.mxu0 %v4800
          %v4802 = vsub.f32 %v2212, %v2212
          %v4803 = vand.u32 %v4802, 4294901760
          %v4804 = vsub.f32 %v4802, %v4803
          %v4805 = vand.u32 %v4804, 4294901760
          %4806 = vmatpush.msra.mxu0 %v4805
          %v4807 = vsub.f32 %v2208, %v2208
          %v4808 = vand.u32 %v4807, 4294901760
          %v4809 = vsub.f32 %v4807, %v4808
          %v4810 = vand.u32 %v4809, 4294901760
          %4811 = vmatpush.msra.mxu0 %v4810
          %v4812 = vsub.f32 %v2204, %v2204
          %v4813 = vand.u32 %v4812, 4294901760
          %v4814 = vsub.f32 %v4812, %v4813
          %v4815 = vand.u32 %v4814, 4294901760
          %4816 = vmatpush.msra.mxu0 %v4815
          %v4817 = vsub.f32 %v2200, %v2200
          %v4818 = vand.u32 %v4817, 4294901760
          %v4819 = vsub.f32 %v4817, %v4818
          %v4820 = vand.u32 %v4819, 4294901760
          %4821 = vmatpush.msra.mxu0 %v4820
          %v4822 = vsub.f32 %v2196, %v2196
          %v4823 = vand.u32 %v4822, 4294901760
          %v4824 = vsub.f32 %v4822, %v4823
          %v4825 = vand.u32 %v4824, 4294901760
          %4826 = vmatpush.msra.mxu0 %v4825
          %v4827 = vsub.f32 %v2192, %v2192
          %v4828 = vand.u32 %v4827, 4294901760
          %v4829 = vsub.f32 %v4827, %v4828
          %v4830 = vand.u32 %v4829, 4294901760
          %4831 = vmatpush.msra.mxu0 %v4830
          %v4832 = vsub.f32 %v2188, %v2188
          %v4833 = vand.u32 %v4832, 4294901760
          %v4834 = vsub.f32 %v4832, %v4833
          %v4835 = vand.u32 %v4834, 4294901760
          %4836 = vmatpush.msra.mxu0 %v4835
          %v4837 = vsub.f32 %v2184, %v2184
          %v4838 = vand.u32 %v4837, 4294901760
          %v4839 = vsub.f32 %v4837, %v4838
          %v4840 = vand.u32 %v4839, 4294901760
          %4841 = vmatpush.msra.mxu0 %v4840
          %v4842 = vsub.f32 %v2180, %v2180
          %v4843 = vand.u32 %v4842, 4294901760
          %v4844 = vsub.f32 %v4842, %v4843
          %v4845 = vand.u32 %v4844, 4294901760
          %4846 = vmatpush.msra.mxu0 %v4845
          %v4847 = vsub.f32 %v2176, %v2176
          %v4848 = vand.u32 %v4847, 4294901760
          %v4849 = vsub.f32 %v4847, %v4848
          %v4850 = vand.u32 %v4849, 4294901760
          %4851 = vmatpush.msra.mxu0 %v4850
          %v4852 = vsub.f32 %v2172, %v2172
          %v4853 = vand.u32 %v4852, 4294901760
          %v4854 = vsub.f32 %v4852, %v4853
          %v4855 = vand.u32 %v4854, 4294901760
          %4856 = vmatpush.msra.mxu0 %v4855
          %v4857 = vand.u32 %v2300, 4294901760
          %4858 = vmatmul.f32.gmra.mxu0 %v4857
          %v4859 = vpop.f32.mrf.mxu0
          %v4860 = vadd.f32 %v4775, %v4859
          %4861 = vdwg.mxu0
          %v4862 = vsub.f32 %v2232, %v2232
          %4863 = vmatpush.msra.mxu0 %v4862
          %v4864 = vsub.f32 %v2228, %v2228
          %4865 = vmatpush.msra.mxu0 %v4864
          %v4866 = vsub.f32 %v2224, %v2224
          %4867 = vmatpush.msra.mxu0 %v4866
          %v4868 = vsub.f32 %v2220, %v2220
          %4869 = vmatpush.msra.mxu0 %v4868
          %v4870 = vsub.f32 %v2216, %v2216
          %4871 = vmatpush.msra.mxu0 %v4870
          %v4872 = vsub.f32 %v2212, %v2212
          %4873 = vmatpush.msra.mxu0 %v4872
          %v4874 = vsub.f32 %v2208, %v2208
          %4875 = vmatpush.msra.mxu0 %v4874
          %v4876 = vsub.f32 %v2204, %v2204
          %4877 = vmatpush.msra.mxu0 %v4876
          %v4878 = vsub.f32 %v2200, %v2200
          %4879 = vmatpush.msra.mxu0 %v4878
          %v4880 = vsub.f32 %v2196, %v2196
          %4881 = vmatpush.msra.mxu0 %v4880
          %v4882 = vsub.f32 %v2192, %v2192
          %4883 = vmatpush.msra.mxu0 %v4882
          %v4884 = vsub.f32 %v2188, %v2188
          %4885 = vmatpush.msra.mxu0 %v4884
          %v4886 = vsub.f32 %v2184, %v2184
          %4887 = vmatpush.msra.mxu0 %v4886
          %v4888 = vsub.f32 %v2180, %v2180
          %4889 = vmatpush.msra.mxu0 %v4888
          %v4890 = vsub.f32 %v2176, %v2176
          %4891 = vmatpush.msra.mxu0 %v4890
          %v4892 = vsub.f32 %v2172, %v2172
          %4893 = vmatpush.msra.mxu0 %v4892
          %v4894 = vand.u32 %v2300, 4294901760
          %v4895 = vsub.f32 %v2300, %v4894
          %4896 = vmatmul.f32.gmra.mxu0 %v4895
          %v4897 = vpop.f32.mrf.mxu0
          %v4898 = vadd.f32 %v4860, %v4897
          %4899 = vdwg.mxu0
          %4900 = vmatpush.msra.mxu0 %v2232
          %4901 = vmatpush.msra.mxu0 %v2228
          %4902 = vmatpush.msra.mxu0 %v2224
          %4903 = vmatpush.msra.mxu0 %v2220
          %4904 = vmatpush.msra.mxu0 %v2216
          %4905 = vmatpush.msra.mxu0 %v2212
          %4906 = vmatpush.msra.mxu0 %v2208
          %4907 = vmatpush.msra.mxu0 %v2204
          %4908 = vmatpush.msra.mxu0 %v2200
          %4909 = vmatpush.msra.mxu0 %v2196
          %4910 = vmatpush.msra.mxu0 %v2192
          %4911 = vmatpush.msra.mxu0 %v2188
          %4912 = vmatpush.msra.mxu0 %v2184
          %4913 = vmatpush.msra.mxu0 %v2180
          %4914 = vmatpush.msra.mxu0 %v2176
          %4915 = vmatpush.msra.mxu0 %v2172
          %v4916 = vand.u32 %v2300, 4294901760
          %v4917 = vsub.f32 %v2300, %v4916
          %v4918 = vand.u32 %v4917, 4294901760
          %4919 = vmatmul.f32.gmra.mxu0 %v4918
          %v4920 = vpop.f32.mrf.mxu0
          %v4921 = vadd.f32 %v4898, %v4920
          %4922 = vdwg.mxu0
          %v4923 = vsub.f32 %v2232, %v2232
          %v4924 = vand.u32 %v4923, 4294901760
          %4925 = vmatpush.msra.mxu0 %v4924
          %v4926 = vsub.f32 %v2228, %v2228
          %v4927 = vand.u32 %v4926, 4294901760
          %4928 = vmatpush.msra.mxu0 %v4927
          %v4929 = vsub.f32 %v2224, %v2224
          %v4930 = vand.u32 %v4929, 4294901760
          %4931 = vmatpush.msra.mxu0 %v4930
          %v4932 = vsub.f32 %v2220, %v2220
          %v4933 = vand.u32 %v4932, 4294901760
          %4934 = vmatpush.msra.mxu0 %v4933
          %v4935 = vsub.f32 %v2216, %v2216
          %v4936 = vand.u32 %v4935, 4294901760
          %4937 = vmatpush.msra.mxu0 %v4936
          %v4938 = vsub.f32 %v2212, %v2212
          %v4939 = vand.u32 %v4938, 4294901760
          %4940 = vmatpush.msra.mxu0 %v4939
          %v4941 = vsub.f32 %v2208, %v2208
          %v4942 = vand.u32 %v4941, 4294901760
          %4943 = vmatpush.msra.mxu0 %v4942
          %v4944 = vsub.f32 %v2204, %v2204
          %v4945 = vand.u32 %v4944, 4294901760
          %4946 = vmatpush.msra.mxu0 %v4945
          %v4947 = vsub.f32 %v2200, %v2200
          %v4948 = vand.u32 %v4947, 4294901760
          %4949 = vmatpush.msra.mxu0 %v4948
          %v4950 = vsub.f32 %v2196, %v2196
          %v4951 = vand.u32 %v4950, 4294901760
          %4952 = vmatpush.msra.mxu0 %v4951
          %v4953 = vsub.f32 %v2192, %v2192
          %v4954 = vand.u32 %v4953, 4294901760
          %4955 = vmatpush.msra.mxu0 %v4954
          %v4956 = vsub.f32 %v2188, %v2188
          %v4957 = vand.u32 %v4956, 4294901760
          %4958 = vmatpush.msra.mxu0 %v4957
          %v4959 = vsub.f32 %v2184, %v2184
          %v4960 = vand.u32 %v4959, 4294901760
          %4961 = vmatpush.msra.mxu0 %v4960
          %v4962 = vsub.f32 %v2180, %v2180
          %v4963 = vand.u32 %v4962, 4294901760
          %4964 = vmatpush.msra.mxu0 %v4963
          %v4965 = vsub.f32 %v2176, %v2176
          %v4966 = vand.u32 %v4965, 4294901760
          %4967 = vmatpush.msra.mxu0 %v4966
          %v4968 = vsub.f32 %v2172, %v2172
          %v4969 = vand.u32 %v4968, 4294901760
          %4970 = vmatpush.msra.mxu0 %v4969
          %v4971 = vand.u32 %v2300, 4294901760
          %4972 = vmatmul.f32.gmra.mxu0 %v4971
          %v4973 = vpop.f32.mrf.mxu0
          %v4974 = vadd.f32 %v4921, %v4973
          %4975 = vdwg.mxu0
          %4976 = vmatpush.msra.mxu0 %v2232
          %4977 = vmatpush.msra.mxu0 %v2228
          %4978 = vmatpush.msra.mxu0 %v2224
          %4979 = vmatpush.msra.mxu0 %v2220
          %4980 = vmatpush.msra.mxu0 %v2216
          %4981 = vmatpush.msra.mxu0 %v2212
          %4982 = vmatpush.msra.mxu0 %v2208
          %4983 = vmatpush.msra.mxu0 %v2204
          %4984 = vmatpush.msra.mxu0 %v2200
          %4985 = vmatpush.msra.mxu0 %v2196
          %4986 = vmatpush.msra.mxu0 %v2192
          %4987 = vmatpush.msra.mxu0 %v2188
          %4988 = vmatpush.msra.mxu0 %v2184
          %4989 = vmatpush.msra.mxu0 %v2180
          %4990 = vmatpush.msra.mxu0 %v2176
          %4991 = vmatpush.msra.mxu0 %v2172
          %v4992 = vand.u32 %v2300, 4294901760
          %4993 = vmatmul.f32.gmra.mxu0 %v4992
          %v4994 = vpop.f32.mrf.mxu0
          %v4995 = vadd.f32 %v4974, %v4994
          %4996 = vdwg.mxu0
          %4997 = vmatpush.msra.mxu0 %v2296
          %4998 = vmatpush.msra.mxu0 %v2292
          %4999 = vmatpush.msra.mxu0 %v2288
          %5000 = vmatpush.msra.mxu0 %v2284
          %5001 = vmatpush.msra.mxu0 %v2280
          %5002 = vmatpush.msra.mxu0 %v2276
          %5003 = vmatpush.msra.mxu0 %v2272
          %5004 = vmatpush.msra.mxu0 %v2268
          %5005 = vmatpush.msra.mxu0 %v2264
          %5006 = vmatpush.msra.mxu0 %v2260
          %5007 = vmatpush.msra.mxu0 %v2256
          %5008 = vmatpush.msra.mxu0 %v2252
          %5009 = vmatpush.msra.mxu0 %v2248
          %5010 = vmatpush.msra.mxu0 %v2244
          %5011 = vmatpush.msra.mxu0 %v2240
          %5012 = vmatpush.msra.mxu0 %v2236
          %v5013 = vand.u32 %v2301, 4294901760
          %v5014 = vsub.f32 %v2301, %v5013
          %v5015 = vand.u32 %v5014, 4294901760
          %v5016 = vsub.f32 %v5014, %v5015
          %v5017 = vand.u32 %v5016, 4294901760
          %5018 = vmatmul.f32.gmra.mxu0 %v5017
          %v5019 = vpop.f32.mrf.mxu0
          %v5020 = vadd.f32 %v4995, %v5019
          %5021 = vdwg.mxu0
          %v5022 = vsub.f32 %v2296, %v2296
          %v5023 = vand.u32 %v5022, 4294901760
          %v5024 = vsub.f32 %v5022, %v5023
          %v5025 = vand.u32 %v5024, 4294901760
          %5026 = vmatpush.msra.mxu0 %v5025
          %v5027 = vsub.f32 %v2292, %v2292
          %v5028 = vand.u32 %v5027, 4294901760
          %v5029 = vsub.f32 %v5027, %v5028
          %v5030 = vand.u32 %v5029, 4294901760
          %5031 = vmatpush.msra.mxu0 %v5030
          %v5032 = vsub.f32 %v2288, %v2288
          %v5033 = vand.u32 %v5032, 4294901760
          %v5034 = vsub.f32 %v5032, %v5033
          %v5035 = vand.u32 %v5034, 4294901760
          %5036 = vmatpush.msra.mxu0 %v5035
          %v5037 = vsub.f32 %v2284, %v2284
          %v5038 = vand.u32 %v5037, 4294901760
          %v5039 = vsub.f32 %v5037, %v5038
          %v5040 = vand.u32 %v5039, 4294901760
          %5041 = vmatpush.msra.mxu0 %v5040
          %v5042 = vsub.f32 %v2280, %v2280
          %v5043 = vand.u32 %v5042, 4294901760
          %v5044 = vsub.f32 %v5042, %v5043
          %v5045 = vand.u32 %v5044, 4294901760
          %5046 = vmatpush.msra.mxu0 %v5045
          %v5047 = vsub.f32 %v2276, %v2276
          %v5048 = vand.u32 %v5047, 4294901760
          %v5049 = vsub.f32 %v5047, %v5048
          %v5050 = vand.u32 %v5049, 4294901760
          %5051 = vmatpush.msra.mxu0 %v5050
          %v5052 = vsub.f32 %v2272, %v2272
          %v5053 = vand.u32 %v5052, 4294901760
          %v5054 = vsub.f32 %v5052, %v5053
          %v5055 = vand.u32 %v5054, 4294901760
          %5056 = vmatpush.msra.mxu0 %v5055
          %v5057 = vsub.f32 %v2268, %v2268
          %v5058 = vand.u32 %v5057, 4294901760
          %v5059 = vsub.f32 %v5057, %v5058
          %v5060 = vand.u32 %v5059, 4294901760
          %5061 = vmatpush.msra.mxu0 %v5060
          %v5062 = vsub.f32 %v2264, %v2264
          %v5063 = vand.u32 %v5062, 4294901760
          %v5064 = vsub.f32 %v5062, %v5063
          %v5065 = vand.u32 %v5064, 4294901760
          %5066 = vmatpush.msra.mxu0 %v5065
          %v5067 = vsub.f32 %v2260, %v2260
          %v5068 = vand.u32 %v5067, 4294901760
          %v5069 = vsub.f32 %v5067, %v5068
          %v5070 = vand.u32 %v5069, 4294901760
          %5071 = vmatpush.msra.mxu0 %v5070
          %v5072 = vsub.f32 %v2256, %v2256
          %v5073 = vand.u32 %v5072, 4294901760
          %v5074 = vsub.f32 %v5072, %v5073
          %v5075 = vand.u32 %v5074, 4294901760
          %5076 = vmatpush.msra.mxu0 %v5075
          %v5077 = vsub.f32 %v2252, %v2252
          %v5078 = vand.u32 %v5077, 4294901760
          %v5079 = vsub.f32 %v5077, %v5078
          %v5080 = vand.u32 %v5079, 4294901760
          %5081 = vmatpush.msra.mxu0 %v5080
          %v5082 = vsub.f32 %v2248, %v2248
          %v5083 = vand.u32 %v5082, 4294901760
          %v5084 = vsub.f32 %v5082, %v5083
          %v5085 = vand.u32 %v5084, 4294901760
          %5086 = vmatpush.msra.mxu0 %v5085
          %v5087 = vsub.f32 %v2244, %v2244
          %v5088 = vand.u32 %v5087, 4294901760
          %v5089 = vsub.f32 %v5087, %v5088
          %v5090 = vand.u32 %v5089, 4294901760
          %5091 = vmatpush.msra.mxu0 %v5090
          %v5092 = vsub.f32 %v2240, %v2240
          %v5093 = vand.u32 %v5092, 4294901760
          %v5094 = vsub.f32 %v5092, %v5093
          %v5095 = vand.u32 %v5094, 4294901760
          %5096 = vmatpush.msra.mxu0 %v5095
          %v5097 = vsub.f32 %v2236, %v2236
          %v5098 = vand.u32 %v5097, 4294901760
          %v5099 = vsub.f32 %v5097, %v5098
          %v5100 = vand.u32 %v5099, 4294901760
          %5101 = vmatpush.msra.mxu0 %v5100
          %v5102 = vand.u32 %v2301, 4294901760
          %5103 = vmatmul.f32.gmra.mxu0 %v5102
          %v5104 = vpop.f32.mrf.mxu0
          %v5105 = vadd.f32 %v5020, %v5104
          %5106 = vdwg.mxu0
          %v5107 = vsub.f32 %v2296, %v2296
          %5108 = vmatpush.msra.mxu0 %v5107
          %v5109 = vsub.f32 %v2292, %v2292
          %5110 = vmatpush.msra.mxu0 %v5109
          %v5111 = vsub.f32 %v2288, %v2288
          %5112 = vmatpush.msra.mxu0 %v5111
          %v5113 = vsub.f32 %v2284, %v2284
          %5114 = vmatpush.msra.mxu0 %v5113
          %v5115 = vsub.f32 %v2280, %v2280
          %5116 = vmatpush.msra.mxu0 %v5115
          %v5117 = vsub.f32 %v2276, %v2276
          %5118 = vmatpush.msra.mxu0 %v5117
          %v5119 = vsub.f32 %v2272, %v2272
          %5120 = vmatpush.msra.mxu0 %v5119
          %v5121 = vsub.f32 %v2268, %v2268
          %5122 = vmatpush.msra.mxu0 %v5121
          %v5123 = vsub.f32 %v2264, %v2264
          %5124 = vmatpush.msra.mxu0 %v5123
          %v5125 = vsub.f32 %v2260, %v2260
          %5126 = vmatpush.msra.mxu0 %v5125
          %v5127 = vsub.f32 %v2256, %v2256
          %5128 = vmatpush.msra.mxu0 %v5127
          %v5129 = vsub.f32 %v2252, %v2252
          %5130 = vmatpush.msra.mxu0 %v5129
          %v5131 = vsub.f32 %v2248, %v2248
          %5132 = vmatpush.msra.mxu0 %v5131
          %v5133 = vsub.f32 %v2244, %v2244
          %5134 = vmatpush.msra.mxu0 %v5133
          %v5135 = vsub.f32 %v2240, %v2240
          %5136 = vmatpush.msra.mxu0 %v5135
          %v5137 = vsub.f32 %v2236, %v2236
          %5138 = vmatpush.msra.mxu0 %v5137
          %v5139 = vand.u32 %v2301, 4294901760
          %v5140 = vsub.f32 %v2301, %v5139
          %5141 = vmatmul.f32.gmra.mxu0 %v5140
          %v5142 = vpop.f32.mrf.mxu0
          %v5143 = vadd.f32 %v5105, %v5142
          %5144 = vdwg.mxu0
          %5145 = vmatpush.msra.mxu0 %v2296
          %5146 = vmatpush.msra.mxu0 %v2292
          %5147 = vmatpush.msra.mxu0 %v2288
          %5148 = vmatpush.msra.mxu0 %v2284
          %5149 = vmatpush.msra.mxu0 %v2280
          %5150 = vmatpush.msra.mxu0 %v2276
          %5151 = vmatpush.msra.mxu0 %v2272
          %5152 = vmatpush.msra.mxu0 %v2268
          %5153 = vmatpush.msra.mxu0 %v2264
          %5154 = vmatpush.msra.mxu0 %v2260
          %5155 = vmatpush.msra.mxu0 %v2256
          %5156 = vmatpush.msra.mxu0 %v2252
          %5157 = vmatpush.msra.mxu0 %v2248
          %5158 = vmatpush.msra.mxu0 %v2244
          %5159 = vmatpush.msra.mxu0 %v2240
          %5160 = vmatpush.msra.mxu0 %v2236
          %v5161 = vand.u32 %v2301, 4294901760
          %v5162 = vsub.f32 %v2301, %v5161
          %v5163 = vand.u32 %v5162, 4294901760
          %5164 = vmatmul.f32.gmra.mxu0 %v5163
          %v5165 = vpop.f32.mrf.mxu0
          %v5166 = vadd.f32 %v5143, %v5165
          %5167 = vdwg.mxu0
          %v5168 = vsub.f32 %v2296, %v2296
          %v5169 = vand.u32 %v5168, 4294901760
          %5170 = vmatpush.msra.mxu0 %v5169
          %v5171 = vsub.f32 %v2292, %v2292
          %v5172 = vand.u32 %v5171, 4294901760
          %5173 = vmatpush.msra.mxu0 %v5172
          %v5174 = vsub.f32 %v2288, %v2288
          %v5175 = vand.u32 %v5174, 4294901760
          %5176 = vmatpush.msra.mxu0 %v5175
          %v5177 = vsub.f32 %v2284, %v2284
          %v5178 = vand.u32 %v5177, 4294901760
          %5179 = vmatpush.msra.mxu0 %v5178
          %v5180 = vsub.f32 %v2280, %v2280
          %v5181 = vand.u32 %v5180, 4294901760
          %5182 = vmatpush.msra.mxu0 %v5181
          %v5183 = vsub.f32 %v2276, %v2276
          %v5184 = vand.u32 %v5183, 4294901760
          %5185 = vmatpush.msra.mxu0 %v5184
          %v5186 = vsub.f32 %v2272, %v2272
          %v5187 = vand.u32 %v5186, 4294901760
          %5188 = vmatpush.msra.mxu0 %v5187
          %v5189 = vsub.f32 %v2268, %v2268
          %v5190 = vand.u32 %v5189, 4294901760
          %5191 = vmatpush.msra.mxu0 %v5190
          %v5192 = vsub.f32 %v2264, %v2264
          %v5193 = vand.u32 %v5192, 4294901760
          %5194 = vmatpush.msra.mxu0 %v5193
          %v5195 = vsub.f32 %v2260, %v2260
          %v5196 = vand.u32 %v5195, 4294901760
          %5197 = vmatpush.msra.mxu0 %v5196
          %v5198 = vsub.f32 %v2256, %v2256
          %v5199 = vand.u32 %v5198, 4294901760
          %5200 = vmatpush.msra.mxu0 %v5199
          %v5201 = vsub.f32 %v2252, %v2252
          %v5202 = vand.u32 %v5201, 4294901760
          %5203 = vmatpush.msra.mxu0 %v5202
          %v5204 = vsub.f32 %v2248, %v2248
          %v5205 = vand.u32 %v5204, 4294901760
          %5206 = vmatpush.msra.mxu0 %v5205
          %v5207 = vsub.f32 %v2244, %v2244
          %v5208 = vand.u32 %v5207, 4294901760
          %5209 = vmatpush.msra.mxu0 %v5208
          %v5210 = vsub.f32 %v2240, %v2240
          %v5211 = vand.u32 %v5210, 4294901760
          %5212 = vmatpush.msra.mxu0 %v5211
          %v5213 = vsub.f32 %v2236, %v2236
          %v5214 = vand.u32 %v5213, 4294901760
          %5215 = vmatpush.msra.mxu0 %v5214
          %v5216 = vand.u32 %v2301, 4294901760
          %5217 = vmatmul.f32.gmra.mxu0 %v5216
          %v5218 = vpop.f32.mrf.mxu0
          %v5219 = vadd.f32 %v5166, %v5218
          %5220 = vdwg.mxu0
          %5221 = vmatpush.msra.mxu0 %v2296
          %5222 = vmatpush.msra.mxu0 %v2292
          %5223 = vmatpush.msra.mxu0 %v2288
          %5224 = vmatpush.msra.mxu0 %v2284
          %5225 = vmatpush.msra.mxu0 %v2280
          %5226 = vmatpush.msra.mxu0 %v2276
          %5227 = vmatpush.msra.mxu0 %v2272
          %5228 = vmatpush.msra.mxu0 %v2268
          %5229 = vmatpush.msra.mxu0 %v2264
          %5230 = vmatpush.msra.mxu0 %v2260
          %5231 = vmatpush.msra.mxu0 %v2256
          %5232 = vmatpush.msra.mxu0 %v2252
          %5233 = vmatpush.msra.mxu0 %v2248
          %5234 = vmatpush.msra.mxu0 %v2244
          %5235 = vmatpush.msra.mxu0 %v2240
          %5236 = vmatpush.msra.mxu0 %v2236
          %v5237 = vand.u32 %v2301, 4294901760
          %5238 = vmatmul.f32.gmra.mxu0 %v5237
          %v5239 = vpop.f32.mrf.mxu0
          %v5240 = vadd.f32 %v5219, %v5239
          %5241 = vdwg.mxu0
          %5242 = vmatpush.msra.mxu0 %v2105
          %5243 = vmatpush.msra.mxu0 %v2101
          %5244 = vmatpush.msra.mxu0 %v2097
          %5245 = vmatpush.msra.mxu0 %v2093
          %5246 = vmatpush.msra.mxu0 %v2089
          %5247 = vmatpush.msra.mxu0 %v2085
          %5248 = vmatpush.msra.mxu0 %v2081
          %5249 = vmatpush.msra.mxu0 %v2077
          %5250 = vmatpush.msra.mxu0 %v2073
          %5251 = vmatpush.msra.mxu0 %v2069
          %5252 = vmatpush.msra.mxu0 %v2065
          %5253 = vmatpush.msra.mxu0 %v2061
          %5254 = vmatpush.msra.mxu0 %v2057
          %5255 = vmatpush.msra.mxu0 %v2053
          %5256 = vmatpush.msra.mxu0 %v2049
          %5257 = vmatpush.msra.mxu0 %v2045
          %v5258 = vand.u32 %v2298, 4294901760
          %v5259 = vsub.f32 %v2298, %v5258
          %v5260 = vand.u32 %v5259, 4294901760
          %v5261 = vsub.f32 %v5259, %v5260
          %v5262 = vand.u32 %v5261, 4294901760
          %5263 = vmatmul.f32.gmra.mxu0 %v5262
          %v5264 = vpop.f32.mrf.mxu0
          %v5265 = vadd.f32 0.0, %v5264
          %5266 = vdwg.mxu0
          %v5267 = vsub.f32 %v2105, %v2105
          %v5268 = vand.u32 %v5267, 4294901760
          %v5269 = vsub.f32 %v5267, %v5268
          %v5270 = vand.u32 %v5269, 4294901760
          %5271 = vmatpush.msra.mxu0 %v5270
          %v5272 = vsub.f32 %v2101, %v2101
          %v5273 = vand.u32 %v5272, 4294901760
          %v5274 = vsub.f32 %v5272, %v5273
          %v5275 = vand.u32 %v5274, 4294901760
          %5276 = vmatpush.msra.mxu0 %v5275
          %v5277 = vsub.f32 %v2097, %v2097
          %v5278 = vand.u32 %v5277, 4294901760
          %v5279 = vsub.f32 %v5277, %v5278
          %v5280 = vand.u32 %v5279, 4294901760
          %5281 = vmatpush.msra.mxu0 %v5280
          %v5282 = vsub.f32 %v2093, %v2093
          %v5283 = vand.u32 %v5282, 4294901760
          %v5284 = vsub.f32 %v5282, %v5283
          %v5285 = vand.u32 %v5284, 4294901760
          %5286 = vmatpush.msra.mxu0 %v5285
          %v5287 = vsub.f32 %v2089, %v2089
          %v5288 = vand.u32 %v5287, 4294901760
          %v5289 = vsub.f32 %v5287, %v5288
          %v5290 = vand.u32 %v5289, 4294901760
          %5291 = vmatpush.msra.mxu0 %v5290
          %v5292 = vsub.f32 %v2085, %v2085
          %v5293 = vand.u32 %v5292, 4294901760
          %v5294 = vsub.f32 %v5292, %v5293
          %v5295 = vand.u32 %v5294, 4294901760
          %5296 = vmatpush.msra.mxu0 %v5295
          %v5297 = vsub.f32 %v2081, %v2081
          %v5298 = vand.u32 %v5297, 4294901760
          %v5299 = vsub.f32 %v5297, %v5298
          %v5300 = vand.u32 %v5299, 4294901760
          %5301 = vmatpush.msra.mxu0 %v5300
          %v5302 = vsub.f32 %v2077, %v2077
          %v5303 = vand.u32 %v5302, 4294901760
          %v5304 = vsub.f32 %v5302, %v5303
          %v5305 = vand.u32 %v5304, 4294901760
          %5306 = vmatpush.msra.mxu0 %v5305
          %v5307 = vsub.f32 %v2073, %v2073
          %v5308 = vand.u32 %v5307, 4294901760
          %v5309 = vsub.f32 %v5307, %v5308
          %v5310 = vand.u32 %v5309, 4294901760
          %5311 = vmatpush.msra.mxu0 %v5310
          %v5312 = vsub.f32 %v2069, %v2069
          %v5313 = vand.u32 %v5312, 4294901760
          %v5314 = vsub.f32 %v5312, %v5313
          %v5315 = vand.u32 %v5314, 4294901760
          %5316 = vmatpush.msra.mxu0 %v5315
          %v5317 = vsub.f32 %v2065, %v2065
          %v5318 = vand.u32 %v5317, 4294901760
          %v5319 = vsub.f32 %v5317, %v5318
          %v5320 = vand.u32 %v5319, 4294901760
          %5321 = vmatpush.msra.mxu0 %v5320
          %v5322 = vsub.f32 %v2061, %v2061
          %v5323 = vand.u32 %v5322, 4294901760
          %v5324 = vsub.f32 %v5322, %v5323
          %v5325 = vand.u32 %v5324, 4294901760
          %5326 = vmatpush.msra.mxu0 %v5325
          %v5327 = vsub.f32 %v2057, %v2057
          %v5328 = vand.u32 %v5327, 4294901760
          %v5329 = vsub.f32 %v5327, %v5328
          %v5330 = vand.u32 %v5329, 4294901760
          %5331 = vmatpush.msra.mxu0 %v5330
          %v5332 = vsub.f32 %v2053, %v2053
          %v5333 = vand.u32 %v5332, 4294901760
          %v5334 = vsub.f32 %v5332, %v5333
          %v5335 = vand.u32 %v5334, 4294901760
          %5336 = vmatpush.msra.mxu0 %v5335
          %v5337 = vsub.f32 %v2049, %v2049
          %v5338 = vand.u32 %v5337, 4294901760
          %v5339 = vsub.f32 %v5337, %v5338
          %v5340 = vand.u32 %v5339, 4294901760
          %5341 = vmatpush.msra.mxu0 %v5340
          %v5342 = vsub.f32 %v2045, %v2045
          %v5343 = vand.u32 %v5342, 4294901760
          %v5344 = vsub.f32 %v5342, %v5343
          %v5345 = vand.u32 %v5344, 4294901760
          %5346 = vmatpush.msra.mxu0 %v5345
          %v5347 = vand.u32 %v2298, 4294901760
          %5348 = vmatmul.f32.gmra.mxu0 %v5347
          %v5349 = vpop.f32.mrf.mxu0
          %v5350 = vadd.f32 %v5265, %v5349
          %5351 = vdwg.mxu0
          %v5352 = vsub.f32 %v2105, %v2105
          %5353 = vmatpush.msra.mxu0 %v5352
          %v5354 = vsub.f32 %v2101, %v2101
          %5355 = vmatpush.msra.mxu0 %v5354
          %v5356 = vsub.f32 %v2097, %v2097
          %5357 = vmatpush.msra.mxu0 %v5356
          %v5358 = vsub.f32 %v2093, %v2093
          %5359 = vmatpush.msra.mxu0 %v5358
          %v5360 = vsub.f32 %v2089, %v2089
          %5361 = vmatpush.msra.mxu0 %v5360
          %v5362 = vsub.f32 %v2085, %v2085
          %5363 = vmatpush.msra.mxu0 %v5362
          %v5364 = vsub.f32 %v2081, %v2081
          %5365 = vmatpush.msra.mxu0 %v5364
          %v5366 = vsub.f32 %v2077, %v2077
          %5367 = vmatpush.msra.mxu0 %v5366
          %v5368 = vsub.f32 %v2073, %v2073
          %5369 = vmatpush.msra.mxu0 %v5368
          %v5370 = vsub.f32 %v2069, %v2069
          %5371 = vmatpush.msra.mxu0 %v5370
          %v5372 = vsub.f32 %v2065, %v2065
          %5373 = vmatpush.msra.mxu0 %v5372
          %v5374 = vsub.f32 %v2061, %v2061
          %5375 = vmatpush.msra.mxu0 %v5374
          %v5376 = vsub.f32 %v2057, %v2057
          %5377 = vmatpush.msra.mxu0 %v5376
          %v5378 = vsub.f32 %v2053, %v2053
          %5379 = vmatpush.msra.mxu0 %v5378
          %v5380 = vsub.f32 %v2049, %v2049
          %5381 = vmatpush.msra.mxu0 %v5380
          %v5382 = vsub.f32 %v2045, %v2045
          %5383 = vmatpush.msra.mxu0 %v5382
          %v5384 = vand.u32 %v2298, 4294901760
          %v5385 = vsub.f32 %v2298, %v5384
          %5386 = vmatmul.f32.gmra.mxu0 %v5385
          %v5387 = vpop.f32.mrf.mxu0
          %v5388 = vadd.f32 %v5350, %v5387
          %5389 = vdwg.mxu0
          %5390 = vmatpush.msra.mxu0 %v2105
          %5391 = vmatpush.msra.mxu0 %v2101
          %5392 = vmatpush.msra.mxu0 %v2097
          %5393 = vmatpush.msra.mxu0 %v2093
          %5394 = vmatpush.msra.mxu0 %v2089
          %5395 = vmatpush.msra.mxu0 %v2085
          %5396 = vmatpush.msra.mxu0 %v2081
          %5397 = vmatpush.msra.mxu0 %v2077
          %5398 = vmatpush.msra.mxu0 %v2073
          %5399 = vmatpush.msra.mxu0 %v2069
          %5400 = vmatpush.msra.mxu0 %v2065
          %5401 = vmatpush.msra.mxu0 %v2061
          %5402 = vmatpush.msra.mxu0 %v2057
          %5403 = vmatpush.msra.mxu0 %v2053
          %5404 = vmatpush.msra.mxu0 %v2049
          %5405 = vmatpush.msra.mxu0 %v2045
          %v5406 = vand.u32 %v2298, 4294901760
          %v5407 = vsub.f32 %v2298, %v5406
          %v5408 = vand.u32 %v5407, 4294901760
          %5409 = vmatmul.f32.gmra.mxu0 %v5408
          %v5410 = vpop.f32.mrf.mxu0
          %v5411 = vadd.f32 %v5388, %v5410
          %5412 = vdwg.mxu0
          %v5413 = vsub.f32 %v2105, %v2105
          %v5414 = vand.u32 %v5413, 4294901760
          %5415 = vmatpush.msra.mxu0 %v5414
          %v5416 = vsub.f32 %v2101, %v2101
          %v5417 = vand.u32 %v5416, 4294901760
          %5418 = vmatpush.msra.mxu0 %v5417
          %v5419 = vsub.f32 %v2097, %v2097
          %v5420 = vand.u32 %v5419, 4294901760
          %5421 = vmatpush.msra.mxu0 %v5420
          %v5422 = vsub.f32 %v2093, %v2093
          %v5423 = vand.u32 %v5422, 4294901760
          %5424 = vmatpush.msra.mxu0 %v5423
          %v5425 = vsub.f32 %v2089, %v2089
          %v5426 = vand.u32 %v5425, 4294901760
          %5427 = vmatpush.msra.mxu0 %v5426
          %v5428 = vsub.f32 %v2085, %v2085
          %v5429 = vand.u32 %v5428, 4294901760
          %5430 = vmatpush.msra.mxu0 %v5429
          %v5431 = vsub.f32 %v2081, %v2081
          %v5432 = vand.u32 %v5431, 4294901760
          %5433 = vmatpush.msra.mxu0 %v5432
          %v5434 = vsub.f32 %v2077, %v2077
          %v5435 = vand.u32 %v5434, 4294901760
          %5436 = vmatpush.msra.mxu0 %v5435
          %v5437 = vsub.f32 %v2073, %v2073
          %v5438 = vand.u32 %v5437, 4294901760
          %5439 = vmatpush.msra.mxu0 %v5438
          %v5440 = vsub.f32 %v2069, %v2069
          %v5441 = vand.u32 %v5440, 4294901760
          %5442 = vmatpush.msra.mxu0 %v5441
          %v5443 = vsub.f32 %v2065, %v2065
          %v5444 = vand.u32 %v5443, 4294901760
          %5445 = vmatpush.msra.mxu0 %v5444
          %v5446 = vsub.f32 %v2061, %v2061
          %v5447 = vand.u32 %v5446, 4294901760
          %5448 = vmatpush.msra.mxu0 %v5447
          %v5449 = vsub.f32 %v2057, %v2057
          %v5450 = vand.u32 %v5449, 4294901760
          %5451 = vmatpush.msra.mxu0 %v5450
          %v5452 = vsub.f32 %v2053, %v2053
          %v5453 = vand.u32 %v5452, 4294901760
          %5454 = vmatpush.msra.mxu0 %v5453
          %v5455 = vsub.f32 %v2049, %v2049
          %v5456 = vand.u32 %v5455, 4294901760
          %5457 = vmatpush.msra.mxu0 %v5456
          %v5458 = vsub.f32 %v2045, %v2045
          %v5459 = vand.u32 %v5458, 4294901760
          %5460 = vmatpush.msra.mxu0 %v5459
          %v5461 = vand.u32 %v2298, 4294901760
          %5462 = vmatmul.f32.gmra.mxu0 %v5461
          %v5463 = vpop.f32.mrf.mxu0
          %v5464 = vadd.f32 %v5411, %v5463
          %5465 = vdwg.mxu0
          %5466 = vmatpush.msra.mxu0 %v2105
          %5467 = vmatpush.msra.mxu0 %v2101
          %5468 = vmatpush.msra.mxu0 %v2097
          %5469 = vmatpush.msra.mxu0 %v2093
          %5470 = vmatpush.msra.mxu0 %v2089
          %5471 = vmatpush.msra.mxu0 %v2085
          %5472 = vmatpush.msra.mxu0 %v2081
          %5473 = vmatpush.msra.mxu0 %v2077
          %5474 = vmatpush.msra.mxu0 %v2073
          %5475 = vmatpush.msra.mxu0 %v2069
          %5476 = vmatpush.msra.mxu0 %v2065
          %5477 = vmatpush.msra.mxu0 %v2061
          %5478 = vmatpush.msra.mxu0 %v2057
          %5479 = vmatpush.msra.mxu0 %v2053
          %5480 = vmatpush.msra.mxu0 %v2049
          %5481 = vmatpush.msra.mxu0 %v2045
          %v5482 = vand.u32 %v2298, 4294901760
          %5483 = vmatmul.f32.gmra.mxu0 %v5482
          %v5484 = vpop.f32.mrf.mxu0
          %v5485 = vadd.f32 %v5464, %v5484
          %5486 = vdwg.mxu0
          %5487 = vmatpush.msra.mxu0 %v2169
          %5488 = vmatpush.msra.mxu0 %v2165
          %5489 = vmatpush.msra.mxu0 %v2161
          %5490 = vmatpush.msra.mxu0 %v2157
          %5491 = vmatpush.msra.mxu0 %v2153
          %5492 = vmatpush.msra.mxu0 %v2149
          %5493 = vmatpush.msra.mxu0 %v2145
          %5494 = vmatpush.msra.mxu0 %v2141
          %5495 = vmatpush.msra.mxu0 %v2137
          %5496 = vmatpush.msra.mxu0 %v2133
          %5497 = vmatpush.msra.mxu0 %v2129
          %5498 = vmatpush.msra.mxu0 %v2125
          %5499 = vmatpush.msra.mxu0 %v2121
          %5500 = vmatpush.msra.mxu0 %v2117
          %5501 = vmatpush.msra.mxu0 %v2113
          %5502 = vmatpush.msra.mxu0 %v2109
          %v5503 = vand.u32 %v2299, 4294901760
          %v5504 = vsub.f32 %v2299, %v5503
          %v5505 = vand.u32 %v5504, 4294901760
          %v5506 = vsub.f32 %v5504, %v5505
          %v5507 = vand.u32 %v5506, 4294901760
          %5508 = vmatmul.f32.gmra.mxu0 %v5507
          %v5509 = vpop.f32.mrf.mxu0
          %v5510 = vadd.f32 %v5485, %v5509
          %5511 = vdwg.mxu0
          %v5512 = vsub.f32 %v2169, %v2169
          %v5513 = vand.u32 %v5512, 4294901760
          %v5514 = vsub.f32 %v5512, %v5513
          %v5515 = vand.u32 %v5514, 4294901760
          %5516 = vmatpush.msra.mxu0 %v5515
          %v5517 = vsub.f32 %v2165, %v2165
          %v5518 = vand.u32 %v5517, 4294901760
          %v5519 = vsub.f32 %v5517, %v5518
          %v5520 = vand.u32 %v5519, 4294901760
          %5521 = vmatpush.msra.mxu0 %v5520
          %v5522 = vsub.f32 %v2161, %v2161
          %v5523 = vand.u32 %v5522, 4294901760
          %v5524 = vsub.f32 %v5522, %v5523
          %v5525 = vand.u32 %v5524, 4294901760
          %5526 = vmatpush.msra.mxu0 %v5525
          %v5527 = vsub.f32 %v2157, %v2157
          %v5528 = vand.u32 %v5527, 4294901760
          %v5529 = vsub.f32 %v5527, %v5528
          %v5530 = vand.u32 %v5529, 4294901760
          %5531 = vmatpush.msra.mxu0 %v5530
          %v5532 = vsub.f32 %v2153, %v2153
          %v5533 = vand.u32 %v5532, 4294901760
          %v5534 = vsub.f32 %v5532, %v5533
          %v5535 = vand.u32 %v5534, 4294901760
          %5536 = vmatpush.msra.mxu0 %v5535
          %v5537 = vsub.f32 %v2149, %v2149
          %v5538 = vand.u32 %v5537, 4294901760
          %v5539 = vsub.f32 %v5537, %v5538
          %v5540 = vand.u32 %v5539, 4294901760
          %5541 = vmatpush.msra.mxu0 %v5540
          %v5542 = vsub.f32 %v2145, %v2145
          %v5543 = vand.u32 %v5542, 4294901760
          %v5544 = vsub.f32 %v5542, %v5543
          %v5545 = vand.u32 %v5544, 4294901760
          %5546 = vmatpush.msra.mxu0 %v5545
          %v5547 = vsub.f32 %v2141, %v2141
          %v5548 = vand.u32 %v5547, 4294901760
          %v5549 = vsub.f32 %v5547, %v5548
          %v5550 = vand.u32 %v5549, 4294901760
          %5551 = vmatpush.msra.mxu0 %v5550
          %v5552 = vsub.f32 %v2137, %v2137
          %v5553 = vand.u32 %v5552, 4294901760
          %v5554 = vsub.f32 %v5552, %v5553
          %v5555 = vand.u32 %v5554, 4294901760
          %5556 = vmatpush.msra.mxu0 %v5555
          %v5557 = vsub.f32 %v2133, %v2133
          %v5558 = vand.u32 %v5557, 4294901760
          %v5559 = vsub.f32 %v5557, %v5558
          %v5560 = vand.u32 %v5559, 4294901760
          %5561 = vmatpush.msra.mxu0 %v5560
          %v5562 = vsub.f32 %v2129, %v2129
          %v5563 = vand.u32 %v5562, 4294901760
          %v5564 = vsub.f32 %v5562, %v5563
          %v5565 = vand.u32 %v5564, 4294901760
          %5566 = vmatpush.msra.mxu0 %v5565
          %v5567 = vsub.f32 %v2125, %v2125
          %v5568 = vand.u32 %v5567, 4294901760
          %v5569 = vsub.f32 %v5567, %v5568
          %v5570 = vand.u32 %v5569, 4294901760
          %5571 = vmatpush.msra.mxu0 %v5570
          %v5572 = vsub.f32 %v2121, %v2121
          %v5573 = vand.u32 %v5572, 4294901760
          %v5574 = vsub.f32 %v5572, %v5573
          %v5575 = vand.u32 %v5574, 4294901760
          %5576 = vmatpush.msra.mxu0 %v5575
          %v5577 = vsub.f32 %v2117, %v2117
          %v5578 = vand.u32 %v5577, 4294901760
          %v5579 = vsub.f32 %v5577, %v5578
          %v5580 = vand.u32 %v5579, 4294901760
          %5581 = vmatpush.msra.mxu0 %v5580
          %v5582 = vsub.f32 %v2113, %v2113
          %v5583 = vand.u32 %v5582, 4294901760
          %v5584 = vsub.f32 %v5582, %v5583
          %v5585 = vand.u32 %v5584, 4294901760
          %5586 = vmatpush.msra.mxu0 %v5585
          %v5587 = vsub.f32 %v2109, %v2109
          %v5588 = vand.u32 %v5587, 4294901760
          %v5589 = vsub.f32 %v5587, %v5588
          %v5590 = vand.u32 %v5589, 4294901760
          %5591 = vmatpush.msra.mxu0 %v5590
          %v5592 = vand.u32 %v2299, 4294901760
          %5593 = vmatmul.f32.gmra.mxu0 %v5592
          %v5594 = vpop.f32.mrf.mxu0
          %v5595 = vadd.f32 %v5510, %v5594
          %5596 = vdwg.mxu0
          %v5597 = vsub.f32 %v2169, %v2169
          %5598 = vmatpush.msra.mxu0 %v5597
          %v5599 = vsub.f32 %v2165, %v2165
          %5600 = vmatpush.msra.mxu0 %v5599
          %v5601 = vsub.f32 %v2161, %v2161
          %5602 = vmatpush.msra.mxu0 %v5601
          %v5603 = vsub.f32 %v2157, %v2157
          %5604 = vmatpush.msra.mxu0 %v5603
          %v5605 = vsub.f32 %v2153, %v2153
          %5606 = vmatpush.msra.mxu0 %v5605
          %v5607 = vsub.f32 %v2149, %v2149
          %5608 = vmatpush.msra.mxu0 %v5607
          %v5609 = vsub.f32 %v2145, %v2145
          %5610 = vmatpush.msra.mxu0 %v5609
          %v5611 = vsub.f32 %v2141, %v2141
          %5612 = vmatpush.msra.mxu0 %v5611
          %v5613 = vsub.f32 %v2137, %v2137
          %5614 = vmatpush.msra.mxu0 %v5613
          %v5615 = vsub.f32 %v2133, %v2133
          %5616 = vmatpush.msra.mxu0 %v5615
          %v5617 = vsub.f32 %v2129, %v2129
          %5618 = vmatpush.msra.mxu0 %v5617
          %v5619 = vsub.f32 %v2125, %v2125
          %5620 = vmatpush.msra.mxu0 %v5619
          %v5621 = vsub.f32 %v2121, %v2121
          %5622 = vmatpush.msra.mxu0 %v5621
          %v5623 = vsub.f32 %v2117, %v2117
          %5624 = vmatpush.msra.mxu0 %v5623
          %v5625 = vsub.f32 %v2113, %v2113
          %5626 = vmatpush.msra.mxu0 %v5625
          %v5627 = vsub.f32 %v2109, %v2109
          %5628 = vmatpush.msra.mxu0 %v5627
          %v5629 = vand.u32 %v2299, 4294901760
          %v5630 = vsub.f32 %v2299, %v5629
          %5631 = vmatmul.f32.gmra.mxu0 %v5630
          %v5632 = vpop.f32.mrf.mxu0
          %v5633 = vadd.f32 %v5595, %v5632
          %5634 = vdwg.mxu0
          %5635 = vmatpush.msra.mxu0 %v2169
          %5636 = vmatpush.msra.mxu0 %v2165
          %5637 = vmatpush.msra.mxu0 %v2161
          %5638 = vmatpush.msra.mxu0 %v2157
          %5639 = vmatpush.msra.mxu0 %v2153
          %5640 = vmatpush.msra.mxu0 %v2149
          %5641 = vmatpush.msra.mxu0 %v2145
          %5642 = vmatpush.msra.mxu0 %v2141
          %5643 = vmatpush.msra.mxu0 %v2137
          %5644 = vmatpush.msra.mxu0 %v2133
          %5645 = vmatpush.msra.mxu0 %v2129
          %5646 = vmatpush.msra.mxu0 %v2125
          %5647 = vmatpush.msra.mxu0 %v2121
          %5648 = vmatpush.msra.mxu0 %v2117
          %5649 = vmatpush.msra.mxu0 %v2113
          %5650 = vmatpush.msra.mxu0 %v2109
          %v5651 = vand.u32 %v2299, 4294901760
          %v5652 = vsub.f32 %v2299, %v5651
          %v5653 = vand.u32 %v5652, 4294901760
          %5654 = vmatmul.f32.gmra.mxu0 %v5653
          %v5655 = vpop.f32.mrf.mxu0
          %v5656 = vadd.f32 %v5633, %v5655
          %5657 = vdwg.mxu0
          %v5658 = vsub.f32 %v2169, %v2169
          %v5659 = vand.u32 %v5658, 4294901760
          %5660 = vmatpush.msra.mxu0 %v5659
          %v5661 = vsub.f32 %v2165, %v2165
          %v5662 = vand.u32 %v5661, 4294901760
          %5663 = vmatpush.msra.mxu0 %v5662
          %v5664 = vsub.f32 %v2161, %v2161
          %v5665 = vand.u32 %v5664, 4294901760
          %5666 = vmatpush.msra.mxu0 %v5665
          %v5667 = vsub.f32 %v2157, %v2157
          %v5668 = vand.u32 %v5667, 4294901760
          %5669 = vmatpush.msra.mxu0 %v5668
          %v5670 = vsub.f32 %v2153, %v2153
          %v5671 = vand.u32 %v5670, 4294901760
          %5672 = vmatpush.msra.mxu0 %v5671
          %v5673 = vsub.f32 %v2149, %v2149
          %v5674 = vand.u32 %v5673, 4294901760
          %5675 = vmatpush.msra.mxu0 %v5674
          %v5676 = vsub.f32 %v2145, %v2145
          %v5677 = vand.u32 %v5676, 4294901760
          %5678 = vmatpush.msra.mxu0 %v5677
          %v5679 = vsub.f32 %v2141, %v2141
          %v5680 = vand.u32 %v5679, 4294901760
          %5681 = vmatpush.msra.mxu0 %v5680
          %v5682 = vsub.f32 %v2137, %v2137
          %v5683 = vand.u32 %v5682, 4294901760
          %5684 = vmatpush.msra.mxu0 %v5683
          %v5685 = vsub.f32 %v2133, %v2133
          %v5686 = vand.u32 %v5685, 4294901760
          %5687 = vmatpush.msra.mxu0 %v5686
          %v5688 = vsub.f32 %v2129, %v2129
          %v5689 = vand.u32 %v5688, 4294901760
          %5690 = vmatpush.msra.mxu0 %v5689
          %v5691 = vsub.f32 %v2125, %v2125
          %v5692 = vand.u32 %v5691, 4294901760
          %5693 = vmatpush.msra.mxu0 %v5692
          %v5694 = vsub.f32 %v2121, %v2121
          %v5695 = vand.u32 %v5694, 4294901760
          %5696 = vmatpush.msra.mxu0 %v5695
          %v5697 = vsub.f32 %v2117, %v2117
          %v5698 = vand.u32 %v5697, 4294901760
          %5699 = vmatpush.msra.mxu0 %v5698
          %v5700 = vsub.f32 %v2113, %v2113
          %v5701 = vand.u32 %v5700, 4294901760
          %5702 = vmatpush.msra.mxu0 %v5701
          %v5703 = vsub.f32 %v2109, %v2109
          %v5704 = vand.u32 %v5703, 4294901760
          %5705 = vmatpush.msra.mxu0 %v5704
          %v5706 = vand.u32 %v2299, 4294901760
          %5707 = vmatmul.f32.gmra.mxu0 %v5706
          %v5708 = vpop.f32.mrf.mxu0
          %v5709 = vadd.f32 %v5656, %v5708
          %5710 = vdwg.mxu0
          %5711 = vmatpush.msra.mxu0 %v2169
          %5712 = vmatpush.msra.mxu0 %v2165
          %5713 = vmatpush.msra.mxu0 %v2161
          %5714 = vmatpush.msra.mxu0 %v2157
          %5715 = vmatpush.msra.mxu0 %v2153
          %5716 = vmatpush.msra.mxu0 %v2149
          %5717 = vmatpush.msra.mxu0 %v2145
          %5718 = vmatpush.msra.mxu0 %v2141
          %5719 = vmatpush.msra.mxu0 %v2137
          %5720 = vmatpush.msra.mxu0 %v2133
          %5721 = vmatpush.msra.mxu0 %v2129
          %5722 = vmatpush.msra.mxu0 %v2125
          %5723 = vmatpush.msra.mxu0 %v2121
          %5724 = vmatpush.msra.mxu0 %v2117
          %5725 = vmatpush.msra.mxu0 %v2113
          %5726 = vmatpush.msra.mxu0 %v2109
          %v5727 = vand.u32 %v2299, 4294901760
          %5728 = vmatmul.f32.gmra.mxu0 %v5727
          %v5729 = vpop.f32.mrf.mxu0
          %v5730 = vadd.f32 %v5709, %v5729
          %5731 = vdwg.mxu0
          %5732 = vmatpush.msra.mxu0 %v2233
          %5733 = vmatpush.msra.mxu0 %v2229
          %5734 = vmatpush.msra.mxu0 %v2225
          %5735 = vmatpush.msra.mxu0 %v2221
          %5736 = vmatpush.msra.mxu0 %v2217
          %5737 = vmatpush.msra.mxu0 %v2213
          %5738 = vmatpush.msra.mxu0 %v2209
          %5739 = vmatpush.msra.mxu0 %v2205
          %5740 = vmatpush.msra.mxu0 %v2201
          %5741 = vmatpush.msra.mxu0 %v2197
          %5742 = vmatpush.msra.mxu0 %v2193
          %5743 = vmatpush.msra.mxu0 %v2189
          %5744 = vmatpush.msra.mxu0 %v2185
          %5745 = vmatpush.msra.mxu0 %v2181
          %5746 = vmatpush.msra.mxu0 %v2177
          %5747 = vmatpush.msra.mxu0 %v2173
          %v5748 = vand.u32 %v2300, 4294901760
          %v5749 = vsub.f32 %v2300, %v5748
          %v5750 = vand.u32 %v5749, 4294901760
          %v5751 = vsub.f32 %v5749, %v5750
          %v5752 = vand.u32 %v5751, 4294901760
          %5753 = vmatmul.f32.gmra.mxu0 %v5752
          %v5754 = vpop.f32.mrf.mxu0
          %v5755 = vadd.f32 %v5730, %v5754
          %5756 = vdwg.mxu0
          %v5757 = vsub.f32 %v2233, %v2233
          %v5758 = vand.u32 %v5757, 4294901760
          %v5759 = vsub.f32 %v5757, %v5758
          %v5760 = vand.u32 %v5759, 4294901760
          %5761 = vmatpush.msra.mxu0 %v5760
          %v5762 = vsub.f32 %v2229, %v2229
          %v5763 = vand.u32 %v5762, 4294901760
          %v5764 = vsub.f32 %v5762, %v5763
          %v5765 = vand.u32 %v5764, 4294901760
          %5766 = vmatpush.msra.mxu0 %v5765
          %v5767 = vsub.f32 %v2225, %v2225
          %v5768 = vand.u32 %v5767, 4294901760
          %v5769 = vsub.f32 %v5767, %v5768
          %v5770 = vand.u32 %v5769, 4294901760
          %5771 = vmatpush.msra.mxu0 %v5770
          %v5772 = vsub.f32 %v2221, %v2221
          %v5773 = vand.u32 %v5772, 4294901760
          %v5774 = vsub.f32 %v5772, %v5773
          %v5775 = vand.u32 %v5774, 4294901760
          %5776 = vmatpush.msra.mxu0 %v5775
          %v5777 = vsub.f32 %v2217, %v2217
          %v5778 = vand.u32 %v5777, 4294901760
          %v5779 = vsub.f32 %v5777, %v5778
          %v5780 = vand.u32 %v5779, 4294901760
          %5781 = vmatpush.msra.mxu0 %v5780
          %v5782 = vsub.f32 %v2213, %v2213
          %v5783 = vand.u32 %v5782, 4294901760
          %v5784 = vsub.f32 %v5782, %v5783
          %v5785 = vand.u32 %v5784, 4294901760
          %5786 = vmatpush.msra.mxu0 %v5785
          %v5787 = vsub.f32 %v2209, %v2209
          %v5788 = vand.u32 %v5787, 4294901760
          %v5789 = vsub.f32 %v5787, %v5788
          %v5790 = vand.u32 %v5789, 4294901760
          %5791 = vmatpush.msra.mxu0 %v5790
          %v5792 = vsub.f32 %v2205, %v2205
          %v5793 = vand.u32 %v5792, 4294901760
          %v5794 = vsub.f32 %v5792, %v5793
          %v5795 = vand.u32 %v5794, 4294901760
          %5796 = vmatpush.msra.mxu0 %v5795
          %v5797 = vsub.f32 %v2201, %v2201
          %v5798 = vand.u32 %v5797, 4294901760
          %v5799 = vsub.f32 %v5797, %v5798
          %v5800 = vand.u32 %v5799, 4294901760
          %5801 = vmatpush.msra.mxu0 %v5800
          %v5802 = vsub.f32 %v2197, %v2197
          %v5803 = vand.u32 %v5802, 4294901760
          %v5804 = vsub.f32 %v5802, %v5803
          %v5805 = vand.u32 %v5804, 4294901760
          %5806 = vmatpush.msra.mxu0 %v5805
          %v5807 = vsub.f32 %v2193, %v2193
          %v5808 = vand.u32 %v5807, 4294901760
          %v5809 = vsub.f32 %v5807, %v5808
          %v5810 = vand.u32 %v5809, 4294901760
          %5811 = vmatpush.msra.mxu0 %v5810
          %v5812 = vsub.f32 %v2189, %v2189
          %v5813 = vand.u32 %v5812, 4294901760
          %v5814 = vsub.f32 %v5812, %v5813
          %v5815 = vand.u32 %v5814, 4294901760
          %5816 = vmatpush.msra.mxu0 %v5815
          %v5817 = vsub.f32 %v2185, %v2185
          %v5818 = vand.u32 %v5817, 4294901760
          %v5819 = vsub.f32 %v5817, %v5818
          %v5820 = vand.u32 %v5819, 4294901760
          %5821 = vmatpush.msra.mxu0 %v5820
          %v5822 = vsub.f32 %v2181, %v2181
          %v5823 = vand.u32 %v5822, 4294901760
          %v5824 = vsub.f32 %v5822, %v5823
          %v5825 = vand.u32 %v5824, 4294901760
          %5826 = vmatpush.msra.mxu0 %v5825
          %v5827 = vsub.f32 %v2177, %v2177
          %v5828 = vand.u32 %v5827, 4294901760
          %v5829 = vsub.f32 %v5827, %v5828
          %v5830 = vand.u32 %v5829, 4294901760
          %5831 = vmatpush.msra.mxu0 %v5830
          %v5832 = vsub.f32 %v2173, %v2173
          %v5833 = vand.u32 %v5832, 4294901760
          %v5834 = vsub.f32 %v5832, %v5833
          %v5835 = vand.u32 %v5834, 4294901760
          %5836 = vmatpush.msra.mxu0 %v5835
          %v5837 = vand.u32 %v2300, 4294901760
          %5838 = vmatmul.f32.gmra.mxu0 %v5837
          %v5839 = vpop.f32.mrf.mxu0
          %v5840 = vadd.f32 %v5755, %v5839
          %5841 = vdwg.mxu0
          %v5842 = vsub.f32 %v2233, %v2233
          %5843 = vmatpush.msra.mxu0 %v5842
          %v5844 = vsub.f32 %v2229, %v2229
          %5845 = vmatpush.msra.mxu0 %v5844
          %v5846 = vsub.f32 %v2225, %v2225
          %5847 = vmatpush.msra.mxu0 %v5846
          %v5848 = vsub.f32 %v2221, %v2221
          %5849 = vmatpush.msra.mxu0 %v5848
          %v5850 = vsub.f32 %v2217, %v2217
          %5851 = vmatpush.msra.mxu0 %v5850
          %v5852 = vsub.f32 %v2213, %v2213
          %5853 = vmatpush.msra.mxu0 %v5852
          %v5854 = vsub.f32 %v2209, %v2209
          %5855 = vmatpush.msra.mxu0 %v5854
          %v5856 = vsub.f32 %v2205, %v2205
          %5857 = vmatpush.msra.mxu0 %v5856
          %v5858 = vsub.f32 %v2201, %v2201
          %5859 = vmatpush.msra.mxu0 %v5858
          %v5860 = vsub.f32 %v2197, %v2197
          %5861 = vmatpush.msra.mxu0 %v5860
          %v5862 = vsub.f32 %v2193, %v2193
          %5863 = vmatpush.msra.mxu0 %v5862
          %v5864 = vsub.f32 %v2189, %v2189
          %5865 = vmatpush.msra.mxu0 %v5864
          %v5866 = vsub.f32 %v2185, %v2185
          %5867 = vmatpush.msra.mxu0 %v5866
          %v5868 = vsub.f32 %v2181, %v2181
          %5869 = vmatpush.msra.mxu0 %v5868
          %v5870 = vsub.f32 %v2177, %v2177
          %5871 = vmatpush.msra.mxu0 %v5870
          %v5872 = vsub.f32 %v2173, %v2173
          %5873 = vmatpush.msra.mxu0 %v5872
          %v5874 = vand.u32 %v2300, 4294901760
          %v5875 = vsub.f32 %v2300, %v5874
          %5876 = vmatmul.f32.gmra.mxu0 %v5875
          %v5877 = vpop.f32.mrf.mxu0
          %v5878 = vadd.f32 %v5840, %v5877
          %5879 = vdwg.mxu0
          %5880 = vmatpush.msra.mxu0 %v2233
          %5881 = vmatpush.msra.mxu0 %v2229
          %5882 = vmatpush.msra.mxu0 %v2225
          %5883 = vmatpush.msra.mxu0 %v2221
          %5884 = vmatpush.msra.mxu0 %v2217
          %5885 = vmatpush.msra.mxu0 %v2213
          %5886 = vmatpush.msra.mxu0 %v2209
          %5887 = vmatpush.msra.mxu0 %v2205
          %5888 = vmatpush.msra.mxu0 %v2201
          %5889 = vmatpush.msra.mxu0 %v2197
          %5890 = vmatpush.msra.mxu0 %v2193
          %5891 = vmatpush.msra.mxu0 %v2189
          %5892 = vmatpush.msra.mxu0 %v2185
          %5893 = vmatpush.msra.mxu0 %v2181
          %5894 = vmatpush.msra.mxu0 %v2177
          %5895 = vmatpush.msra.mxu0 %v2173
          %v5896 = vand.u32 %v2300, 4294901760
          %v5897 = vsub.f32 %v2300, %v5896
          %v5898 = vand.u32 %v5897, 4294901760
          %5899 = vmatmul.f32.gmra.mxu0 %v5898
          %v5900 = vpop.f32.mrf.mxu0
          %v5901 = vadd.f32 %v5878, %v5900
          %5902 = vdwg.mxu0
          %v5903 = vsub.f32 %v2233, %v2233
          %v5904 = vand.u32 %v5903, 4294901760
          %5905 = vmatpush.msra.mxu0 %v5904
          %v5906 = vsub.f32 %v2229, %v2229
          %v5907 = vand.u32 %v5906, 4294901760
          %5908 = vmatpush.msra.mxu0 %v5907
          %v5909 = vsub.f32 %v2225, %v2225
          %v5910 = vand.u32 %v5909, 4294901760
          %5911 = vmatpush.msra.mxu0 %v5910
          %v5912 = vsub.f32 %v2221, %v2221
          %v5913 = vand.u32 %v5912, 4294901760
          %5914 = vmatpush.msra.mxu0 %v5913
          %v5915 = vsub.f32 %v2217, %v2217
          %v5916 = vand.u32 %v5915, 4294901760
          %5917 = vmatpush.msra.mxu0 %v5916
          %v5918 = vsub.f32 %v2213, %v2213
          %v5919 = vand.u32 %v5918, 4294901760
          %5920 = vmatpush.msra.mxu0 %v5919
          %v5921 = vsub.f32 %v2209, %v2209
          %v5922 = vand.u32 %v5921, 4294901760
          %5923 = vmatpush.msra.mxu0 %v5922
          %v5924 = vsub.f32 %v2205, %v2205
          %v5925 = vand.u32 %v5924, 4294901760
          %5926 = vmatpush.msra.mxu0 %v5925
          %v5927 = vsub.f32 %v2201, %v2201
          %v5928 = vand.u32 %v5927, 4294901760
          %5929 = vmatpush.msra.mxu0 %v5928
          %v5930 = vsub.f32 %v2197, %v2197
          %v5931 = vand.u32 %v5930, 4294901760
          %5932 = vmatpush.msra.mxu0 %v5931
          %v5933 = vsub.f32 %v2193, %v2193
          %v5934 = vand.u32 %v5933, 4294901760
          %5935 = vmatpush.msra.mxu0 %v5934
          %v5936 = vsub.f32 %v2189, %v2189
          %v5937 = vand.u32 %v5936, 4294901760
          %5938 = vmatpush.msra.mxu0 %v5937
          %v5939 = vsub.f32 %v2185, %v2185
          %v5940 = vand.u32 %v5939, 4294901760
          %5941 = vmatpush.msra.mxu0 %v5940
          %v5942 = vsub.f32 %v2181, %v2181
          %v5943 = vand.u32 %v5942, 4294901760
          %5944 = vmatpush.msra.mxu0 %v5943
          %v5945 = vsub.f32 %v2177, %v2177
          %v5946 = vand.u32 %v5945, 4294901760
          %5947 = vmatpush.msra.mxu0 %v5946
          %v5948 = vsub.f32 %v2173, %v2173
          %v5949 = vand.u32 %v5948, 4294901760
          %5950 = vmatpush.msra.mxu0 %v5949
          %v5951 = vand.u32 %v2300, 4294901760
          %5952 = vmatmul.f32.gmra.mxu0 %v5951
          %v5953 = vpop.f32.mrf.mxu0
          %v5954 = vadd.f32 %v5901, %v5953
          %5955 = vdwg.mxu0
          %5956 = vmatpush.msra.mxu0 %v2233
          %5957 = vmatpush.msra.mxu0 %v2229
          %5958 = vmatpush.msra.mxu0 %v2225
          %5959 = vmatpush.msra.mxu0 %v2221
          %5960 = vmatpush.msra.mxu0 %v2217
          %5961 = vmatpush.msra.mxu0 %v2213
          %5962 = vmatpush.msra.mxu0 %v2209
          %5963 = vmatpush.msra.mxu0 %v2205
          %5964 = vmatpush.msra.mxu0 %v2201
          %5965 = vmatpush.msra.mxu0 %v2197
          %5966 = vmatpush.msra.mxu0 %v2193
          %5967 = vmatpush.msra.mxu0 %v2189
          %5968 = vmatpush.msra.mxu0 %v2185
          %5969 = vmatpush.msra.mxu0 %v2181
          %5970 = vmatpush.msra.mxu0 %v2177
          %5971 = vmatpush.msra.mxu0 %v2173
          %v5972 = vand.u32 %v2300, 4294901760
          %5973 = vmatmul.f32.gmra.mxu0 %v5972
          %v5974 = vpop.f32.mrf.mxu0
          %v5975 = vadd.f32 %v5954, %v5974
          %5976 = vdwg.mxu0
          %5977 = vmatpush.msra.mxu0 %v2297
          %5978 = vmatpush.msra.mxu0 %v2293
          %5979 = vmatpush.msra.mxu0 %v2289
          %5980 = vmatpush.msra.mxu0 %v2285
          %5981 = vmatpush.msra.mxu0 %v2281
          %5982 = vmatpush.msra.mxu0 %v2277
          %5983 = vmatpush.msra.mxu0 %v2273
          %5984 = vmatpush.msra.mxu0 %v2269
          %5985 = vmatpush.msra.mxu0 %v2265
          %5986 = vmatpush.msra.mxu0 %v2261
          %5987 = vmatpush.msra.mxu0 %v2257
          %5988 = vmatpush.msra.mxu0 %v2253
          %5989 = vmatpush.msra.mxu0 %v2249
          %5990 = vmatpush.msra.mxu0 %v2245
          %5991 = vmatpush.msra.mxu0 %v2241
          %5992 = vmatpush.msra.mxu0 %v2237
          %v5993 = vand.u32 %v2301, 4294901760
          %v5994 = vsub.f32 %v2301, %v5993
          %v5995 = vand.u32 %v5994, 4294901760
          %v5996 = vsub.f32 %v5994, %v5995
          %v5997 = vand.u32 %v5996, 4294901760
          %5998 = vmatmul.f32.gmra.mxu0 %v5997
          %v5999 = vpop.f32.mrf.mxu0
          %v6000 = vadd.f32 %v5975, %v5999
          %6001 = vdwg.mxu0
          %v6002 = vsub.f32 %v2297, %v2297
          %v6003 = vand.u32 %v6002, 4294901760
          %v6004 = vsub.f32 %v6002, %v6003
          %v6005 = vand.u32 %v6004, 4294901760
          %6006 = vmatpush.msra.mxu0 %v6005
          %v6007 = vsub.f32 %v2293, %v2293
          %v6008 = vand.u32 %v6007, 4294901760
          %v6009 = vsub.f32 %v6007, %v6008
          %v6010 = vand.u32 %v6009, 4294901760
          %6011 = vmatpush.msra.mxu0 %v6010
          %v6012 = vsub.f32 %v2289, %v2289
          %v6013 = vand.u32 %v6012, 4294901760
          %v6014 = vsub.f32 %v6012, %v6013
          %v6015 = vand.u32 %v6014, 4294901760
          %6016 = vmatpush.msra.mxu0 %v6015
          %v6017 = vsub.f32 %v2285, %v2285
          %v6018 = vand.u32 %v6017, 4294901760
          %v6019 = vsub.f32 %v6017, %v6018
          %v6020 = vand.u32 %v6019, 4294901760
          %6021 = vmatpush.msra.mxu0 %v6020
          %v6022 = vsub.f32 %v2281, %v2281
          %v6023 = vand.u32 %v6022, 4294901760
          %v6024 = vsub.f32 %v6022, %v6023
          %v6025 = vand.u32 %v6024, 4294901760
          %6026 = vmatpush.msra.mxu0 %v6025
          %v6027 = vsub.f32 %v2277, %v2277
          %v6028 = vand.u32 %v6027, 4294901760
          %v6029 = vsub.f32 %v6027, %v6028
          %v6030 = vand.u32 %v6029, 4294901760
          %6031 = vmatpush.msra.mxu0 %v6030
          %v6032 = vsub.f32 %v2273, %v2273
          %v6033 = vand.u32 %v6032, 4294901760
          %v6034 = vsub.f32 %v6032, %v6033
          %v6035 = vand.u32 %v6034, 4294901760
          %6036 = vmatpush.msra.mxu0 %v6035
          %v6037 = vsub.f32 %v2269, %v2269
          %v6038 = vand.u32 %v6037, 4294901760
          %v6039 = vsub.f32 %v6037, %v6038
          %v6040 = vand.u32 %v6039, 4294901760
          %6041 = vmatpush.msra.mxu0 %v6040
          %v6042 = vsub.f32 %v2265, %v2265
          %v6043 = vand.u32 %v6042, 4294901760
          %v6044 = vsub.f32 %v6042, %v6043
          %v6045 = vand.u32 %v6044, 4294901760
          %6046 = vmatpush.msra.mxu0 %v6045
          %v6047 = vsub.f32 %v2261, %v2261
          %v6048 = vand.u32 %v6047, 4294901760
          %v6049 = vsub.f32 %v6047, %v6048
          %v6050 = vand.u32 %v6049, 4294901760
          %6051 = vmatpush.msra.mxu0 %v6050
          %v6052 = vsub.f32 %v2257, %v2257
          %v6053 = vand.u32 %v6052, 4294901760
          %v6054 = vsub.f32 %v6052, %v6053
          %v6055 = vand.u32 %v6054, 4294901760
          %6056 = vmatpush.msra.mxu0 %v6055
          %v6057 = vsub.f32 %v2253, %v2253
          %v6058 = vand.u32 %v6057, 4294901760
          %v6059 = vsub.f32 %v6057, %v6058
          %v6060 = vand.u32 %v6059, 4294901760
          %6061 = vmatpush.msra.mxu0 %v6060
          %v6062 = vsub.f32 %v2249, %v2249
          %v6063 = vand.u32 %v6062, 4294901760
          %v6064 = vsub.f32 %v6062, %v6063
          %v6065 = vand.u32 %v6064, 4294901760
          %6066 = vmatpush.msra.mxu0 %v6065
          %v6067 = vsub.f32 %v2245, %v2245
          %v6068 = vand.u32 %v6067, 4294901760
          %v6069 = vsub.f32 %v6067, %v6068
          %v6070 = vand.u32 %v6069, 4294901760
          %6071 = vmatpush.msra.mxu0 %v6070
          %v6072 = vsub.f32 %v2241, %v2241
          %v6073 = vand.u32 %v6072, 4294901760
          %v6074 = vsub.f32 %v6072, %v6073
          %v6075 = vand.u32 %v6074, 4294901760
          %6076 = vmatpush.msra.mxu0 %v6075
          %v6077 = vsub.f32 %v2237, %v2237
          %v6078 = vand.u32 %v6077, 4294901760
          %v6079 = vsub.f32 %v6077, %v6078
          %v6080 = vand.u32 %v6079, 4294901760
          %6081 = vmatpush.msra.mxu0 %v6080
          %v6082 = vand.u32 %v2301, 4294901760
          %6083 = vmatmul.f32.gmra.mxu0 %v6082
          %v6084 = vpop.f32.mrf.mxu0
          %v6085 = vadd.f32 %v6000, %v6084
          %6086 = vdwg.mxu0
          %v6087 = vsub.f32 %v2297, %v2297
          %6088 = vmatpush.msra.mxu0 %v6087
          %v6089 = vsub.f32 %v2293, %v2293
          %6090 = vmatpush.msra.mxu0 %v6089
          %v6091 = vsub.f32 %v2289, %v2289
          %6092 = vmatpush.msra.mxu0 %v6091
          %v6093 = vsub.f32 %v2285, %v2285
          %6094 = vmatpush.msra.mxu0 %v6093
          %v6095 = vsub.f32 %v2281, %v2281
          %6096 = vmatpush.msra.mxu0 %v6095
          %v6097 = vsub.f32 %v2277, %v2277
          %6098 = vmatpush.msra.mxu0 %v6097
          %v6099 = vsub.f32 %v2273, %v2273
          %6100 = vmatpush.msra.mxu0 %v6099
          %v6101 = vsub.f32 %v2269, %v2269
          %6102 = vmatpush.msra.mxu0 %v6101
          %v6103 = vsub.f32 %v2265, %v2265
          %6104 = vmatpush.msra.mxu0 %v6103
          %v6105 = vsub.f32 %v2261, %v2261
          %6106 = vmatpush.msra.mxu0 %v6105
          %v6107 = vsub.f32 %v2257, %v2257
          %6108 = vmatpush.msra.mxu0 %v6107
          %v6109 = vsub.f32 %v2253, %v2253
          %6110 = vmatpush.msra.mxu0 %v6109
          %v6111 = vsub.f32 %v2249, %v2249
          %6112 = vmatpush.msra.mxu0 %v6111
          %v6113 = vsub.f32 %v2245, %v2245
          %6114 = vmatpush.msra.mxu0 %v6113
          %v6115 = vsub.f32 %v2241, %v2241
          %6116 = vmatpush.msra.mxu0 %v6115
          %v6117 = vsub.f32 %v2237, %v2237
          %6118 = vmatpush.msra.mxu0 %v6117
          %v6119 = vand.u32 %v2301, 4294901760
          %v6120 = vsub.f32 %v2301, %v6119
          %6121 = vmatmul.f32.gmra.mxu0 %v6120
          %v6122 = vpop.f32.mrf.mxu0
          %v6123 = vadd.f32 %v6085, %v6122
          %6124 = vdwg.mxu0
          %6125 = vmatpush.msra.mxu0 %v2297
          %6126 = vmatpush.msra.mxu0 %v2293
          %6127 = vmatpush.msra.mxu0 %v2289
          %6128 = vmatpush.msra.mxu0 %v2285
          %6129 = vmatpush.msra.mxu0 %v2281
          %6130 = vmatpush.msra.mxu0 %v2277
          %6131 = vmatpush.msra.mxu0 %v2273
          %6132 = vmatpush.msra.mxu0 %v2269
          %6133 = vmatpush.msra.mxu0 %v2265
          %6134 = vmatpush.msra.mxu0 %v2261
          %6135 = vmatpush.msra.mxu0 %v2257
          %6136 = vmatpush.msra.mxu0 %v2253
          %6137 = vmatpush.msra.mxu0 %v2249
          %6138 = vmatpush.msra.mxu0 %v2245
          %6139 = vmatpush.msra.mxu0 %v2241
          %6140 = vmatpush.msra.mxu0 %v2237
          %v6141 = vand.u32 %v2301, 4294901760
          %v6142 = vsub.f32 %v2301, %v6141
          %v6143 = vand.u32 %v6142, 4294901760
          %6144 = vmatmul.f32.gmra.mxu0 %v6143
          %v6145 = vpop.f32.mrf.mxu0
          %v6146 = vadd.f32 %v6123, %v6145
          %6147 = vdwg.mxu0
          %v6148 = vsub.f32 %v2297, %v2297
          %v6149 = vand.u32 %v6148, 4294901760
          %6150 = vmatpush.msra.mxu0 %v6149
          %v6151 = vsub.f32 %v2293, %v2293
          %v6152 = vand.u32 %v6151, 4294901760
          %6153 = vmatpush.msra.mxu0 %v6152
          %v6154 = vsub.f32 %v2289, %v2289
          %v6155 = vand.u32 %v6154, 4294901760
          %6156 = vmatpush.msra.mxu0 %v6155
          %v6157 = vsub.f32 %v2285, %v2285
          %v6158 = vand.u32 %v6157, 4294901760
          %6159 = vmatpush.msra.mxu0 %v6158
          %v6160 = vsub.f32 %v2281, %v2281
          %v6161 = vand.u32 %v6160, 4294901760
          %6162 = vmatpush.msra.mxu0 %v6161
          %v6163 = vsub.f32 %v2277, %v2277
          %v6164 = vand.u32 %v6163, 4294901760
          %6165 = vmatpush.msra.mxu0 %v6164
          %v6166 = vsub.f32 %v2273, %v2273
          %v6167 = vand.u32 %v6166, 4294901760
          %6168 = vmatpush.msra.mxu0 %v6167
          %v6169 = vsub.f32 %v2269, %v2269
          %v6170 = vand.u32 %v6169, 4294901760
          %6171 = vmatpush.msra.mxu0 %v6170
          %v6172 = vsub.f32 %v2265, %v2265
          %v6173 = vand.u32 %v6172, 4294901760
          %6174 = vmatpush.msra.mxu0 %v6173
          %v6175 = vsub.f32 %v2261, %v2261
          %v6176 = vand.u32 %v6175, 4294901760
          %6177 = vmatpush.msra.mxu0 %v6176
          %v6178 = vsub.f32 %v2257, %v2257
          %v6179 = vand.u32 %v6178, 4294901760
          %6180 = vmatpush.msra.mxu0 %v6179
          %v6181 = vsub.f32 %v2253, %v2253
          %v6182 = vand.u32 %v6181, 4294901760
          %6183 = vmatpush.msra.mxu0 %v6182
          %v6184 = vsub.f32 %v2249, %v2249
          %v6185 = vand.u32 %v6184, 4294901760
          %6186 = vmatpush.msra.mxu0 %v6185
          %v6187 = vsub.f32 %v2245, %v2245
          %v6188 = vand.u32 %v6187, 4294901760
          %6189 = vmatpush.msra.mxu0 %v6188
          %v6190 = vsub.f32 %v2241, %v2241
          %v6191 = vand.u32 %v6190, 4294901760
          %6192 = vmatpush.msra.mxu0 %v6191
          %v6193 = vsub.f32 %v2237, %v2237
          %v6194 = vand.u32 %v6193, 4294901760
          %6195 = vmatpush.msra.mxu0 %v6194
          %v6196 = vand.u32 %v2301, 4294901760
          %6197 = vmatmul.f32.gmra.mxu0 %v6196
          %v6198 = vpop.f32.mrf.mxu0
          %v6199 = vadd.f32 %v6146, %v6198
          %6200 = vdwg.mxu0
          %6201 = vmatpush.msra.mxu0 %v2297
          %6202 = vmatpush.msra.mxu0 %v2293
          %6203 = vmatpush.msra.mxu0 %v2289
          %6204 = vmatpush.msra.mxu0 %v2285
          %6205 = vmatpush.msra.mxu0 %v2281
          %6206 = vmatpush.msra.mxu0 %v2277
          %6207 = vmatpush.msra.mxu0 %v2273
          %6208 = vmatpush.msra.mxu0 %v2269
          %6209 = vmatpush.msra.mxu0 %v2265
          %6210 = vmatpush.msra.mxu0 %v2261
          %6211 = vmatpush.msra.mxu0 %v2257
          %6212 = vmatpush.msra.mxu0 %v2253
          %6213 = vmatpush.msra.mxu0 %v2249
          %6214 = vmatpush.msra.mxu0 %v2245
          %6215 = vmatpush.msra.mxu0 %v2241
          %6216 = vmatpush.msra.mxu0 %v2237
          %v6217 = vand.u32 %v2301, 4294901760
          %6218 = vmatmul.f32.gmra.mxu0 %v6217
          %v6219 = vpop.f32.mrf.mxu0
          %v6220 = vadd.f32 %v6199, %v6219
          %6221 = vdwg.mxu0
          %6222 = vst [vmem:[%s236] sm:$0x7f] %v3280
          %6223 = vst [vmem:[%s236 + $0x8] sm:$0x7f] %v4260
          %6224 = vst [vmem:[%s236 + $0x10] sm:$0x7f] %v5240
          %6225 = vst [vmem:[%s236 + $0x18] sm:$0x7f] %v6220
          %vm6226 = vcmp.lt.f32.partialorder %v1741, 0.5
          %v6227 = vsel %vm6226, 1, 0
          %6228 = vset.pattern.permute.xlu0 0
          %6229 = vperm.xlu0 %6228, %v6227
          %v6230 = vpop.permute.xlu0 %6229
          %v6231 = vperm.slane %v6230, 0
          %6232 = vst [vmem:[%s219] sm:$0x1] %v6231
        $region40: #{tpu_custom_call.1} parent=27 // pred_fallthru
          _
        %p6233 = scmp.lt.s32.totalorder %s24, 1
        %s6234 = scalar_select %p6233, %s24, 1
        %p6235 = scmp.lt.s32.totalorder %s25, 2
        %s6236 = scalar_select %p6235, %s25, 2
        %s6237 = smul.addr %s6236, 4
        %s6238 = smul.addr %s6234, 12
        %s6239 = sadd.s32 %s6237, %s6238
        %s6240 = smul.addr %s6239, 8
        %s6241 = scalar_lea.vmem %s2, %s6240
        %s6242 = sand.u32 %s125, 1
        %s6243 = scalar_lea.sflag [#allocation5], %s6242
        %s6244 = sand.u32 %s125, 1
        %s6245 = scalar_lea.vmem [#allocation7], %s6244
        // Predicated region
        $region41: #{tpu_custom_call.1} parent=27 // pred_check
          %p6246 = pneg %p107
        $region42: #{tpu_custom_call.1} parent=27 // pred_check_branch
          %6248 = sbr.rel (%p6246) target = $region44
        $region43: #{tpu_custom_call.1} parent=27 // pred_region
          _
        $region44: #{tpu_custom_call.1} parent=27 // pred_fallthru
          _
        // Predicated region
        $region45: #{tpu_custom_call.1} parent=27 // pred_check
          %p6249 = pneg %p135
        $region46: #{tpu_custom_call.1} parent=27 // pred_check_branch
          %6251 = sbr.rel (%p6249) target = $region48
        $region47: #{tpu_custom_call.1} parent=27 // pred_region
          %6253 = vsyncadd %s6243, 0
          %s6254 = smul.addr %s24, 3
          %s6255 = sadd.s32 %s25, %s6254
          %s6256 = scalar_lea.hbm %s3, %s6255
          %s6258 = sshll.u32 %s6245, 4
          %s6259 = int_to_ptr.vmem [resolvable:$true] %s6258
          %s6260 = sshll.u32 %s6256, 4
          %s6261 = int_to_ptr.hbm [resolvable:$true] %s6260
          %6263 = dma.vmem_to_hbm [thread:$0]  %s6259, 16, %s6261, %s6243
        $region48: #{tpu_custom_call.1} parent=27 // pred_fallthru
          _
      $region28: #{tpu_custom_call.1} parent=5 // pred_fallthru
        _
      %p6264 = scmp.le.s32.totalorder 2, %s14
      // Predicated region
      $region49: #{tpu_custom_call.1} parent=5 // pred_check
        %p6265 = pneg %p6264
      $region50: #{tpu_custom_call.1} parent=5 // pred_check_branch
        %6267 = sbr.rel (%p6265) target = $region52
      $region51: #{tpu_custom_call.1} parent=5 // pred_region
        %s6268 = ssub.s32 %s14, 2
        // Predicated region
        $region53: #{tpu_custom_call.1} parent=51 // pred_check
          %p6269 = pneg %p113
        $region54: #{tpu_custom_call.1} parent=51 // pred_check_branch
          %6271 = sbr.rel (%p6269) target = $region56
        $region55: #{tpu_custom_call.1} parent=51 // pred_region
          %p6272 = scmp.lt.s32.totalorder %s27, 1
          %s6273 = scalar_select %p6272, %s27, 1
          %p6274 = scmp.lt.s32.totalorder %s28, 2
          %s6275 = scalar_select %p6274, %s28, 2
          %s6276 = smul.addr %s6275, 4
          %s6277 = smul.addr %s6273, 12
          %s6278 = sadd.s32 %s6276, %s6277
          %s6279 = smul.addr %s6278, 8
          %s6280 = scalar_lea.vmem %s2, %s6279
        $region56: #{tpu_custom_call.1} parent=51 // pred_fallthru
          _
        // Predicated region
        $region57: #{tpu_custom_call.1} parent=51 // pred_check
          %p6281 = pneg %p141
        $region58: #{tpu_custom_call.1} parent=51 // pred_check_branch
          %6283 = sbr.rel (%p6281) target = $region60
        $region59: #{tpu_custom_call.1} parent=51 // pred_region
          %s6284 = sand.u32 %s126, 1
          %s6285 = scalar_lea.sflag [#allocation5], %s6284
          %s6286 = sand.u32 %s126, 1
          %s6287 = scalar_lea.vmem [#allocation7], %s6286
          %6289 = dma.done %s6285, 16
        $region60: #{tpu_custom_call.1} parent=51 // pred_fallthru
          _
      $region52: #{tpu_custom_call.1} parent=5 // pred_fallthru
        _
    $region6: #{tpu_custom_call.1} parent=1 // loop_footer
      %s18 = sadd.s32 1, %s14
    $region7: #{tpu_custom_call.1} parent=1 // loop_footer_branch
      %13 = sbr.rel target = $region3
    $region8: #{tpu_custom_call.1} parent=1 // loop_exit
      _
    %6290 = vsyncpa [#allocation5], 1
    %s6291 = scalar_lea.sflag [#allocation5], 1
    %6292 = vsyncpa %s6291, 1
    %6293 = vsyncpa [#allocation6], 1
    %s6294 = scalar_lea.sflag [#allocation6], 1
    %6295 = vsyncpa %s6294, 1

</llo_original>
